<compile_context>
chip_gen: v5e
topology: v5e:2x2
jax: 0.10.0
libtpu: 0.0.40
codegen_flags: <defaults>
</compile_context>

<pallas_src>
import jax
import jax.numpy as jnp
from jax import lax
from jax.experimental import pallas as pl
from jax.experimental.pallas import tpu as pltpu


# -----------------------------------------------------------------------------
# Host-side quad-tree (Morton) layout of (N, 1, 32, 32) images.
# Per batch tile of nb samples the kernel slab is (4*nb, 256):
#   rows  : (r4, c4, n_local)                 coarsest 2x2 quadrant, then sample
#   lanes : (r3,c3, r2,c2, r1,c1, r0,c0)      remaining 4 quad-tree levels
# Full kernel I/O array: (T, 4*nb, 256), T = number of batch tiles.
# -----------------------------------------------------------------------------
_FWD_PERM = (0, 2, 7, 1, 3, 8, 4, 9, 5, 10, 6, 11)
_INV_PERM = [0] * 12
for _i, _p in enumerate(_FWD_PERM):
    _INV_PERM[_p] = _i
_INV_PERM = tuple(_INV_PERM)


def _round_up(a, b):
    return (a + b - 1) // b * b


def _to_kernel_layout(x, n_pad, nb):
    n = x.shape[0]
    if n_pad != n:
        pad = jnp.zeros((n_pad - n,) + x.shape[1:], x.dtype)
        x = jnp.concatenate([x, pad], axis=0)
    t = n_pad // nb
    v = x.reshape(t, nb, 2, 2, 2, 2, 2, 2, 2, 2, 2, 2)
    v = jnp.transpose(v, _FWD_PERM)
    return v.reshape(t, 4 * nb, 256)


def _from_kernel_layout(y, n, nb):
    t = y.shape[0]
    v = y.reshape(t, 2, 2, nb, 2, 2, 2, 2, 2, 2, 2, 2)
    v = jnp.transpose(v, _INV_PERM)
    return v.reshape(t * nb, 1, 32, 32)[:n]


# -----------------------------------------------------------------------------
# Fused 10-layer kernel.  x_ref/o_ref: (4*nb, 256); weights/bias resident VMEM.
# -----------------------------------------------------------------------------
def _autoencoder_kernel(x_ref,
                        w1, w2, w3, w4, w5, w6, w7, w8, w9, w10,
                        b_ref, o_ref,
                        h1024, h512, h256, h128):
    nb = x_ref.shape[0] // 4     # samples per tile (rows per (r4, c4) quadrant)

    def dense(x, w_ref, row, relu=True):
        w = w_ref[...]
        nout = w.shape[1]
        y = jnp.dot(x, w, preferred_element_type=jnp.float32)
        y = y + b_ref[row:row + 1, :nout]
        if relu:
            y = jnp.maximum(y, 0.0)
        return y

    # ------------------------------ encoder ------------------------------
    h1024[...] = dense(x_ref[...], w1, 0)      # conv1 (folded x64)   (4nb, 1024)
    h512[...] = dense(h1024[...], w2, 1)       # conv2 (folded x16)   (4nb,  512)
    h256[...] = dense(h512[...], w3, 2)        # conv3 (folded x4)    (4nb,  256)
    h128[...] = dense(h256[...], w4, 3)        # conv4                (4nb,  128)

    # conv5: its 2x2 patch lives in the 4 coarse row blocks -> fused K-split.
    z = b_ref[4:5, :256]
    for j in range(4):
        z = z + jnp.dot(h128[j * nb:(j + 1) * nb, :],
                        w5[j * 128:(j + 1) * 128, :],
                        preferred_element_type=jnp.float32)
    z = jnp.maximum(z, 0.0)                    # latent               (nb, 256)

    # ------------------------------ decoder ------------------------------
    # deconv1: each output pixel (column block) becomes a row block of the
    # next layer's input -> fused depth-to-space, no intermediate copy.
    for j in range(4):
        blk = jnp.dot(z, w6[:, j * 128:(j + 1) * 128],
                      preferred_element_type=jnp.float32)
        blk = blk + b_ref[5:6, j * 128:(j + 1) * 128]
        h128[j * nb:(j + 1) * nb, :] = jnp.maximum(blk, 0.0)      # (4nb, 128)

    h256[...] = dense(h128[...], w7, 6)        # deconv2              (4nb,  256)
    h512[...] = dense(h256[...], w8, 7)        # deconv3 (folded x4)  (4nb,  512)
    h1024[...] = dense(h512[...], w9, 8)       # deconv4 (folded x16) (4nb, 1024)
    o_ref[...] = dense(h1024[...], w10, 9, relu=False)  # deconv5 (x64) + Identity


# -----------------------------------------------------------------------------
# Weight / bias re-layout (one time, outside the hot path).
# -----------------------------------------------------------------------------
def _conv_w_to_mat(w):
    # PyTorch Conv2d weight (OC, IC, 2, 2) -> (4*IC, OC), K ordered (kh, kw, ic).
    oc, ic = w.shape[0], w.shape[1]
    return jnp.transpose(w, (2, 3, 1, 0)).reshape(4 * ic, oc)


def _convT_w_to_mat(w):
    # PyTorch ConvTranspose2d weight (IC, OC, 2, 2) -> (IC, 4*OC), N ordered (kh, kw, oc).
    ic, oc = w.shape[0], w.shape[1]
    return jnp.transpose(w, (0, 2, 3, 1)).reshape(ic, 4 * oc)


def _fold(m, copies):
    # Block-diagonal replication over `copies` consecutive lane groups
    # (= finer quad-tree levels folded into the lane dimension).
    if copies == 1:
        return m
    return jnp.kron(jnp.eye(copies, dtype=m.dtype), m)


_ENC_FOLD = (64, 16, 4, 1, 1)
_DEC_FOLD = (1, 1, 4, 16, 64)


def prepare_kernel_params(params):
    enc, dec = params
    ws, bs = [], []
    for (w, b), c in zip(enc, _ENC_FOLD):
        ws.append(_fold(_conv_w_to_mat(w), c))
        bs.append(b)
    for (w, b), c in zip(dec, _DEC_FOLD):
        ws.append(_fold(_convT_w_to_mat(w), c))
        bs.append(b)
    # Channel is always the fastest lane group, so bias = tile(b, width / oc).
    bias = jnp.zeros((10, 1024), jnp.float32)
    for i, (wm, b) in enumerate(zip(ws, bs)):
        nout = wm.shape[1]
        bias = bias.at[i, :nout].set(jnp.tile(b, nout // b.shape[0]))
    ws = tuple(w.astype(jnp.float32) for w in ws)
    return ws, bias


# -----------------------------------------------------------------------------
# Forward wrapper: batch-tiled grid, one fused kernel per tile.
# -----------------------------------------------------------------------------
def conv_autoencoder_forward(x, kernel_params, batch_tile=128):
    ws, bias = kernel_params
    n, c, h, w = x.shape
    assert c == 1 and h == 32 and w == 32, "model expects (N, 1, 32, 32) inputs"

    # Batch tile: multiple of 8 (sublane alignment); pad N to a whole tile.
    nb = min(batch_tile, _round_up(n, 8))
    nb = _round_up(nb, 8)
    n_pad = _round_up(n, nb)
    t = n_pad // nb

    xk = _to_kernel_layout(x.astype(jnp.float32), n_pad, nb)     # (t, 4*nb, 256)

    f32 = jnp.float32
    io_spec = pl.BlockSpec((None, 4 * nb, 256), lambda i: (i, 0, 0))
    # Weights / bias table: constant-index blocks -> copied to VMEM once and
    # resident across all grid steps.
    w_specs = [pl.BlockSpec(wm.shape, lambda i: (0, 0)) for wm in ws]
    b_spec = pl.BlockSpec(bias.shape, lambda i: (0, 0))

    scratch_shapes = [
        pltpu.VMEM((4 * nb, 1024), f32),   # conv1 out  /  deconv4 out
        pltpu.VMEM((4 * nb, 512), f32),    # conv2 out  /  deconv3 out
        pltpu.VMEM((4 * nb, 256), f32),    # conv3 out  /  deconv2 out
        pltpu.VMEM((4 * nb, 128), f32),    # conv4 out  /  deconv1 out
    ]

    mkn = [(4 * nb, 256, 1024), (4 * nb, 1024, 512), (4 * nb, 512, 256),
           (4 * nb, 256, 128), (nb, 512, 256), (nb, 256, 512),
           (4 * nb, 128, 256), (4 * nb, 256, 512), (4 * nb, 512, 1024),
           (4 * nb, 1024, 256)]
    flops = int(t * sum(2 * m_ * k_ * n_ for m_, k_, n_ in mkn))
    bytes_accessed = int(4 * (2 * xk.size + sum(wm.size for wm in ws) + bias.size))

    out = pl.pallas_call(
        _autoencoder_kernel,
        out_shape=jax.ShapeDtypeStruct((t, 4 * nb, 256), f32),
        grid=(t,),
        in_specs=[io_spec] + w_specs + [b_spec],
        out_specs=io_spec,
        scratch_shapes=scratch_shapes,
        compiler_params=pltpu.CompilerParams(
            dimension_semantics=("parallel",),
            vmem_limit_bytes=32 * 1024 * 1024),
        cost_estimate=pl.CostEstimate(
            flops=flops, transcendentals=0, bytes_accessed=bytes_accessed),
    )(xk, *ws, bias)

    return _from_kernel_layout(out, n, nb)


# -----------------------------------------------------------------------------
# Parameter init (deterministic, PyTorch default-init distributions).
# -----------------------------------------------------------------------------
def _init_conv(key, oc, ic):
    kw, kb = jax.random.split(key)
    bound = 1.0 / jnp.sqrt(ic * 4)             # fan_in = IC * kH * kW
    w = jax.random.uniform(kw, (oc, ic, 2, 2), jnp.float32, -bound, bound)
    b = jax.random.uniform(kb, (oc,), jnp.float32, -bound, bound)
    return w, b


def _init_convT(key, ic, oc):
    kw, kb = jax.random.split(key)
    bound = 1.0 / jnp.sqrt(oc * 4)              # fan_in = weight.size(1) * kH * kW
    w = jax.random.uniform(kw, (ic, oc, 2, 2), jnp.float32, -bound, bound)
    b = jax.random.uniform(kb, (oc,), jnp.float32, -bound, bound)
    return w, b


def init_params(seed=0):
    key = jax.random.PRNGKey(seed)
    keys = jax.random.split(key, 10)
    enc_ch = [(1, 16), (16, 32), (32, 64), (64, 128), (128, 256)]
    dec_ch = [(256, 128), (128, 64), (64, 32), (32, 16), (16, 1)]
    enc = [_init_conv(keys[i], oc, ic) for i, (ic, oc) in enumerate(enc_ch)]
    dec = [_init_convT(keys[5 + i], ic, oc) for i, (ic, oc) in enumerate(dec_ch)]
    return enc, dec


# -----------------------------------------------------------------------------
# Pure-JAX (non-Pallas) reference for a correctness self-check.
# -----------------------------------------------------------------------------
def _conv2d_ref(x, w, b):
    n, c, h, wd = x.shape
    oc = w.shape[0]
    ho, wo = h // 2, wd // 2
    p = x.reshape(n, c, ho, 2, wo, 2).transpose(0, 2, 4, 1, 3, 5)
    p = p.reshape(n * ho * wo, c * 4)
    out = jnp.dot(p, w.reshape(oc, c * 4).T, precision=lax.Precision.HIGHEST) + b
    return out.reshape(n, ho, wo, oc).transpose(0, 3, 1, 2)


def _convT2d_ref(x, w, b):
    n, c, h, wd = x.shape
    oc = w.shape[1]
    xm = x.transpose(0, 2, 3, 1).reshape(n * h * wd, c)
    out = jnp.dot(xm, w.reshape(c, oc * 4), precision=lax.Precision.HIGHEST)
    out = out + jnp.broadcast_to(b[:, None], (oc, 4)).reshape(oc * 4)
    out = out.reshape(n, h, wd, oc, 2, 2).transpose(0, 3, 1, 4, 2, 5)
    return out.reshape(n, oc, 2 * h, 2 * wd)


def reference_forward(x, params):
    enc, dec = params
    for w, b in enc:
        x = jnp.maximum(_conv2d_ref(x, w, b), 0.0)
    for i, (w, b) in enumerate(dec):
        x = _convT2d_ref(x, w, b)
        if i < len(dec) - 1:
            x = jnp.maximum(x, 0.0)
    return x


if __name__ == "__main__":
    key = jax.random.PRNGKey(0)
    x = jax.random.normal(key, (2, 1, 32, 32), dtype=jnp.float32)

    params = init_params(seed=0)
    kernel_params = prepare_kernel_params(params)

    fwd = jax.jit(conv_autoencoder_forward)
    out = fwd(x, kernel_params)
    jax.block_until_ready(out)

    assert out.shape == x.shape, (out.shape, x.shape)
    assert out.dtype == jnp.float32

    ref = jax.jit(lambda xx: reference_forward(xx, params))(x)
    jax.block_until_ready(ref)
    max_err = float(jnp.max(jnp.abs(out - ref)))
    assert max_err < 5e-3, f"kernel/reference mismatch: max abs err {max_err}"

    print("KERNEL_OK")
</pallas_src>

<mosaic_0001>
module attributes {stable_mosaic.version = 11 : i64} {
  func.func @_autoencoder_kernel(%arg0: i32, %arg1: memref<1x32x256xf32, #tpu.memory_space<vmem>>, %arg2: memref<256x1024xf32, #tpu.memory_space<vmem>>, %arg3: memref<1024x512xf32, #tpu.memory_space<vmem>>, %arg4: memref<512x256xf32, #tpu.memory_space<vmem>>, %arg5: memref<256x128xf32, #tpu.memory_space<vmem>>, %arg6: memref<512x256xf32, #tpu.memory_space<vmem>>, %arg7: memref<256x512xf32, #tpu.memory_space<vmem>>, %arg8: memref<128x256xf32, #tpu.memory_space<vmem>>, %arg9: memref<256x512xf32, #tpu.memory_space<vmem>>, %arg10: memref<512x1024xf32, #tpu.memory_space<vmem>>, %arg11: memref<1024x256xf32, #tpu.memory_space<vmem>>, %arg12: memref<10x1024xf32, #tpu.memory_space<vmem>>, %arg13: memref<1x32x256xf32, #tpu.memory_space<vmem>>, %arg14: memref<32x1024xf32, #tpu.memory_space<vmem>>, %arg15: memref<32x512xf32, #tpu.memory_space<vmem>>, %arg16: memref<32x256xf32, #tpu.memory_space<vmem>>, %arg17: memref<32x128xf32, #tpu.memory_space<vmem>>) attributes {dimension_semantics = [#tpu.dimension_semantics<parallel>], iteration_bounds = array<i64: 1>, scalar_prefetch = 0 : i64, scratch_operands = 4 : i64, tpu.core_type = #tpu.core_type<tc>, window_params = [{transform_indices = @transform_0, window_bounds = array<i64: 1, 32, 256>}, {pipeline_mode = #tpu.pipeline_mode<synchronous>, transform_indices = @transform_1, window_bounds = array<i64: 256, 1024>}, {pipeline_mode = #tpu.pipeline_mode<synchronous>, transform_indices = @transform_2, window_bounds = array<i64: 1024, 512>}, {pipeline_mode = #tpu.pipeline_mode<synchronous>, transform_indices = @transform_3, window_bounds = array<i64: 512, 256>}, {pipeline_mode = #tpu.pipeline_mode<synchronous>, transform_indices = @transform_4, window_bounds = array<i64: 256, 128>}, {pipeline_mode = #tpu.pipeline_mode<synchronous>, transform_indices = @transform_5, window_bounds = array<i64: 512, 256>}, {pipeline_mode = #tpu.pipeline_mode<synchronous>, transform_indices = @transform_6, window_bounds = array<i64: 256, 512>}, {pipeline_mode = #tpu.pipeline_mode<synchronous>, transform_indices = @transform_7, window_bounds = array<i64: 128, 256>}, {pipeline_mode = #tpu.pipeline_mode<synchronous>, transform_indices = @transform_8, window_bounds = array<i64: 256, 512>}, {pipeline_mode = #tpu.pipeline_mode<synchronous>, transform_indices = @transform_9, window_bounds = array<i64: 512, 1024>}, {pipeline_mode = #tpu.pipeline_mode<synchronous>, transform_indices = @transform_10, window_bounds = array<i64: 1024, 256>}, {pipeline_mode = #tpu.pipeline_mode<synchronous>, transform_indices = @transform_11, window_bounds = array<i64: 10, 1024>}, {transform_indices = @transform_12, window_bounds = array<i64: 1, 32, 256>}]} {
    %c0 = arith.constant 0 : index
    %c0_0 = arith.constant 0 : index
    %c0_1 = arith.constant 0 : index
    %0 = vector.load %arg1[%c0, %c0_0, %c0_1] : memref<1x32x256xf32, #tpu.memory_space<vmem>>, vector<1x32x256xf32>
    %1 = vector.shape_cast %0 : vector<1x32x256xf32> to vector<32x256xf32>
    %c0_2 = arith.constant 0 : index
    %c0_3 = arith.constant 0 : index
    %2 = vector.load %arg2[%c0_2, %c0_3] : memref<256x1024xf32, #tpu.memory_space<vmem>>, vector<256x1024xf32>
    %cst = arith.constant dense<0.000000e+00> : vector<32x1024xf32>
    %3 = tpu.matmul %1, %2, %cst {dimension_numbers = #tpu.dot_dimension_numbers<[1], [0], [0], [1], [0, 0, 1, 1], [], []>} : vector<32x256xf32>, vector<256x1024xf32>, vector<32x1024xf32> -> vector<32x1024xf32>
    %c0_4 = arith.constant 0 : index
    %c0_5 = arith.constant 0 : index
    %4 = vector.load %arg12[%c0_4, %c0_5] : memref<10x1024xf32, #tpu.memory_space<vmem>>, vector<1x1024xf32>
    %5 = vector.broadcast %4 : vector<1x1024xf32> to vector<32x1024xf32>
    %6 = arith.addf %3, %5 : vector<32x1024xf32>
    %cst_6 = arith.constant 0.000000e+00 : f32
    %7 = vector.broadcast %cst_6 : f32 to vector<32x1024xf32>
    %8 = arith.maximumf %6, %7 : vector<32x1024xf32>
    %c0_7 = arith.constant 0 : index
    %c0_8 = arith.constant 0 : index
    %9 = vector.load %arg14[%c0_7, %c0_8] : memref<32x1024xf32, #tpu.memory_space<vmem>>, vector<32x1024xf32>
    tpu.vector_store %arg14[%c0_7, %c0_8], %8 {strides = array<i32>} : memref<32x1024xf32, #tpu.memory_space<vmem>>, vector<32x1024xf32>,
    %c0_9 = arith.constant 0 : index
    %c0_10 = arith.constant 0 : index
    %10 = vector.load %arg14[%c0_9, %c0_10] : memref<32x1024xf32, #tpu.memory_space<vmem>>, vector<32x1024xf32>
    %c0_11 = arith.constant 0 : index
    %c0_12 = arith.constant 0 : index
    %11 = vector.load %arg3[%c0_11, %c0_12] : memref<1024x512xf32, #tpu.memory_space<vmem>>, vector<1024x512xf32>
    %cst_13 = arith.constant dense<0.000000e+00> : vector<32x512xf32>
    %12 = tpu.matmul %10, %11, %cst_13 {dimension_numbers = #tpu.dot_dimension_numbers<[1], [0], [0], [1], [0, 0, 1, 1], [], []>} : vector<32x1024xf32>, vector<1024x512xf32>, vector<32x512xf32> -> vector<32x512xf32>
    %c1 = arith.constant 1 : index
    %c0_14 = arith.constant 0 : index
    %13 = vector.load %arg12[%c1, %c0_14] : memref<10x1024xf32, #tpu.memory_space<vmem>>, vector<1x512xf32>
    %14 = vector.broadcast %13 : vector<1x512xf32> to vector<32x512xf32>
    %15 = arith.addf %12, %14 : vector<32x512xf32>
    %cst_15 = arith.constant 0.000000e+00 : f32
    %16 = vector.broadcast %cst_15 : f32 to vector<32x512xf32>
    %17 = arith.maximumf %15, %16 : vector<32x512xf32>
    %c0_16 = arith.constant 0 : index
    %c0_17 = arith.constant 0 : index
    %18 = vector.load %arg15[%c0_16, %c0_17] : memref<32x512xf32, #tpu.memory_space<vmem>>, vector<32x512xf32>
    tpu.vector_store %arg15[%c0_16, %c0_17], %17 {strides = array<i32>} : memref<32x512xf32, #tpu.memory_space<vmem>>, vector<32x512xf32>,
    %c0_18 = arith.constant 0 : index
    %c0_19 = arith.constant 0 : index
    %19 = vector.load %arg15[%c0_18, %c0_19] : memref<32x512xf32, #tpu.memory_space<vmem>>, vector<32x512xf32>
    %c0_20 = arith.constant 0 : index
    %c0_21 = arith.constant 0 : index
    %20 = vector.load %arg4[%c0_20, %c0_21] : memref<512x256xf32, #tpu.memory_space<vmem>>, vector<512x256xf32>
    %cst_22 = arith.constant dense<0.000000e+00> : vector<32x256xf32>
    %21 = tpu.matmul %19, %20, %cst_22 {dimension_numbers = #tpu.dot_dimension_numbers<[1], [0], [0], [1], [0, 0, 1, 1], [], []>} : vector<32x512xf32>, vector<512x256xf32>, vector<32x256xf32> -> vector<32x256xf32>
    %c2 = arith.constant 2 : index
    %c0_23 = arith.constant 0 : index
    %22 = vector.load %arg12[%c2, %c0_23] : memref<10x1024xf32, #tpu.memory_space<vmem>>, vector<1x256xf32>
    %23 = vector.broadcast %22 : vector<1x256xf32> to vector<32x256xf32>
    %24 = arith.addf %21, %23 : vector<32x256xf32>
    %cst_24 = arith.constant 0.000000e+00 : f32
    %25 = vector.broadcast %cst_24 : f32 to vector<32x256xf32>
    %26 = arith.maximumf %24, %25 : vector<32x256xf32>
    %c0_25 = arith.constant 0 : index
    %c0_26 = arith.constant 0 : index
    %27 = vector.load %arg16[%c0_25, %c0_26] : memref<32x256xf32, #tpu.memory_space<vmem>>, vector<32x256xf32>
    tpu.vector_store %arg16[%c0_25, %c0_26], %26 {strides = array<i32>} : memref<32x256xf32, #tpu.memory_space<vmem>>, vector<32x256xf32>,
    %c0_27 = arith.constant 0 : index
    %c0_28 = arith.constant 0 : index
    %28 = vector.load %arg16[%c0_27, %c0_28] : memref<32x256xf32, #tpu.memory_space<vmem>>, vector<32x256xf32>
    %c0_29 = arith.constant 0 : index
    %c0_30 = arith.constant 0 : index
    %29 = vector.load %arg5[%c0_29, %c0_30] : memref<256x128xf32, #tpu.memory_space<vmem>>, vector<256x128xf32>
    %cst_31 = arith.constant dense<0.000000e+00> : vector<32x128xf32>
    %30 = tpu.matmul %28, %29, %cst_31 {dimension_numbers = #tpu.dot_dimension_numbers<[1], [0], [0], [1], [0, 0, 1, 1], [], []>} : vector<32x256xf32>, vector<256x128xf32>, vector<32x128xf32> -> vector<32x128xf32>
    %c3 = arith.constant 3 : index
    %c0_32 = arith.constant 0 : index
    %31 = vector.load %arg12[%c3, %c0_32] : memref<10x1024xf32, #tpu.memory_space<vmem>>, vector<1x128xf32>
    %32 = vector.broadcast %31 : vector<1x128xf32> to vector<32x128xf32>
    %33 = arith.addf %30, %32 : vector<32x128xf32>
    %cst_33 = arith.constant 0.000000e+00 : f32
    %34 = vector.broadcast %cst_33 : f32 to vector<32x128xf32>
    %35 = arith.maximumf %33, %34 : vector<32x128xf32>
    %c0_34 = arith.constant 0 : index
    %c0_35 = arith.constant 0 : index
    %36 = vector.load %arg17[%c0_34, %c0_35] : memref<32x128xf32, #tpu.memory_space<vmem>>, vector<32x128xf32>
    tpu.vector_store %arg17[%c0_34, %c0_35], %35 {strides = array<i32>} : memref<32x128xf32, #tpu.memory_space<vmem>>, vector<32x128xf32>,
    %c4 = arith.constant 4 : index
    %c0_36 = arith.constant 0 : index
    %37 = vector.load %arg12[%c4, %c0_36] : memref<10x1024xf32, #tpu.memory_space<vmem>>, vector<1x256xf32>
    %c0_37 = arith.constant 0 : index
    %c0_38 = arith.constant 0 : index
    %38 = vector.load %arg17[%c0_37, %c0_38] : memref<32x128xf32, #tpu.memory_space<vmem>>, vector<8x128xf32>
    %c0_39 = arith.constant 0 : index
    %c0_40 = arith.constant 0 : index
    %39 = vector.load %arg6[%c0_39, %c0_40] : memref<512x256xf32, #tpu.memory_space<vmem>>, vector<128x256xf32>
    %cst_41 = arith.constant dense<0.000000e+00> : vector<8x256xf32>
    %40 = tpu.matmul %38, %39, %cst_41 {dimension_numbers = #tpu.dot_dimension_numbers<[1], [0], [0], [1], [0, 0, 1, 1], [], []>} : vector<8x128xf32>, vector<128x256xf32>, vector<8x256xf32> -> vector<8x256xf32>
    %41 = vector.broadcast %37 : vector<1x256xf32> to vector<8x256xf32>
    %42 = arith.addf %41, %40 : vector<8x256xf32>
    %c8 = arith.constant 8 : index
    %c0_42 = arith.constant 0 : index
    %43 = vector.load %arg17[%c8, %c0_42] : memref<32x128xf32, #tpu.memory_space<vmem>>, vector<8x128xf32>
    %c128 = arith.constant 128 : index
    %c0_43 = arith.constant 0 : index
    %44 = vector.load %arg6[%c128, %c0_43] : memref<512x256xf32, #tpu.memory_space<vmem>>, vector<128x256xf32>
    %cst_44 = arith.constant dense<0.000000e+00> : vector<8x256xf32>
    %45 = tpu.matmul %43, %44, %cst_44 {dimension_numbers = #tpu.dot_dimension_numbers<[1], [0], [0], [1], [0, 0, 1, 1], [], []>} : vector<8x128xf32>, vector<128x256xf32>, vector<8x256xf32> -> vector<8x256xf32>
    %46 = arith.addf %42, %45 : vector<8x256xf32>
    %c16 = arith.constant 16 : index
    %c0_45 = arith.constant 0 : index
    %47 = vector.load %arg17[%c16, %c0_45] : memref<32x128xf32, #tpu.memory_space<vmem>>, vector<8x128xf32>
    %c256 = arith.constant 256 : index
    %c0_46 = arith.constant 0 : index
    %48 = vector.load %arg6[%c256, %c0_46] : memref<512x256xf32, #tpu.memory_space<vmem>>, vector<128x256xf32>
    %cst_47 = arith.constant dense<0.000000e+00> : vector<8x256xf32>
    %49 = tpu.matmul %47, %48, %cst_47 {dimension_numbers = #tpu.dot_dimension_numbers<[1], [0], [0], [1], [0, 0, 1, 1], [], []>} : vector<8x128xf32>, vector<128x256xf32>, vector<8x256xf32> -> vector<8x256xf32>
    %50 = arith.addf %46, %49 : vector<8x256xf32>
    %c24 = arith.constant 24 : index
    %c0_48 = arith.constant 0 : index
    %51 = vector.load %arg17[%c24, %c0_48] : memref<32x128xf32, #tpu.memory_space<vmem>>, vector<8x128xf32>
    %c384 = arith.constant 384 : index
    %c0_49 = arith.constant 0 : index
    %52 = vector.load %arg6[%c384, %c0_49] : memref<512x256xf32, #tpu.memory_space<vmem>>, vector<128x256xf32>
    %cst_50 = arith.constant dense<0.000000e+00> : vector<8x256xf32>
    %53 = tpu.matmul %51, %52, %cst_50 {dimension_numbers = #tpu.dot_dimension_numbers<[1], [0], [0], [1], [0, 0, 1, 1], [], []>} : vector<8x128xf32>, vector<128x256xf32>, vector<8x256xf32> -> vector<8x256xf32>
    %54 = arith.addf %50, %53 : vector<8x256xf32>
    %cst_51 = arith.constant 0.000000e+00 : f32
    %55 = vector.broadcast %cst_51 : f32 to vector<8x256xf32>
    %56 = arith.maximumf %54, %55 : vector<8x256xf32>
    %c0_52 = arith.constant 0 : index
    %c0_53 = arith.constant 0 : index
    %57 = vector.load %arg7[%c0_52, %c0_53] : memref<256x512xf32, #tpu.memory_space<vmem>>, vector<256x128xf32>
    %cst_54 = arith.constant dense<0.000000e+00> : vector<8x128xf32>
    %58 = tpu.matmul %56, %57, %cst_54 {dimension_numbers = #tpu.dot_dimension_numbers<[1], [0], [0], [1], [0, 0, 1, 1], [], []>} : vector<8x256xf32>, vector<256x128xf32>, vector<8x128xf32> -> vector<8x128xf32>
    %c5 = arith.constant 5 : index
    %c0_55 = arith.constant 0 : index
    %59 = vector.load %arg12[%c5, %c0_55] : memref<10x1024xf32, #tpu.memory_space<vmem>>, vector<1x128xf32>
    %60 = vector.broadcast %59 : vector<1x128xf32> to vector<8x128xf32>
    %61 = arith.addf %58, %60 : vector<8x128xf32>
    %cst_56 = arith.constant 0.000000e+00 : f32
    %62 = vector.broadcast %cst_56 : f32 to vector<8x128xf32>
    %63 = arith.maximumf %61, %62 : vector<8x128xf32>
    %c0_57 = arith.constant 0 : index
    %c0_58 = arith.constant 0 : index
    %64 = vector.load %arg17[%c0_57, %c0_58] : memref<32x128xf32, #tpu.memory_space<vmem>>, vector<8x128xf32>
    tpu.vector_store %arg17[%c0_57, %c0_58], %63 {strides = array<i32>} : memref<32x128xf32, #tpu.memory_space<vmem>>, vector<8x128xf32>,
    %c0_59 = arith.constant 0 : index
    %c128_60 = arith.constant 128 : index
    %65 = vector.load %arg7[%c0_59, %c128_60] : memref<256x512xf32, #tpu.memory_space<vmem>>, vector<256x128xf32>
    %cst_61 = arith.constant dense<0.000000e+00> : vector<8x128xf32>
    %66 = tpu.matmul %56, %65, %cst_61 {dimension_numbers = #tpu.dot_dimension_numbers<[1], [0], [0], [1], [0, 0, 1, 1], [], []>} : vector<8x256xf32>, vector<256x128xf32>, vector<8x128xf32> -> vector<8x128xf32>
    %c5_62 = arith.constant 5 : index
    %c128_63 = arith.constant 128 : index
    %67 = vector.load %arg12[%c5_62, %c128_63] : memref<10x1024xf32, #tpu.memory_space<vmem>>, vector<1x128xf32>
    %68 = vector.broadcast %67 : vector<1x128xf32> to vector<8x128xf32>
    %69 = arith.addf %66, %68 : vector<8x128xf32>
    %cst_64 = arith.constant 0.000000e+00 : f32
    %70 = vector.broadcast %cst_64 : f32 to vector<8x128xf32>
    %71 = arith.maximumf %69, %70 : vector<8x128xf32>
    %c8_65 = arith.constant 8 : index
    %c0_66 = arith.constant 0 : index
    %72 = vector.load %arg17[%c8_65, %c0_66] : memref<32x128xf32, #tpu.memory_space<vmem>>, vector<8x128xf32>
    tpu.vector_store %arg17[%c8_65, %c0_66], %71 {strides = array<i32>} : memref<32x128xf32, #tpu.memory_space<vmem>>, vector<8x128xf32>,
    %c0_67 = arith.constant 0 : index
    %c256_68 = arith.constant 256 : index
    %73 = vector.load %arg7[%c0_67, %c256_68] : memref<256x512xf32, #tpu.memory_space<vmem>>, vector<256x128xf32>
    %cst_69 = arith.constant dense<0.000000e+00> : vector<8x128xf32>
    %74 = tpu.matmul %56, %73, %cst_69 {dimension_numbers = #tpu.dot_dimension_numbers<[1], [0], [0], [1], [0, 0, 1, 1], [], []>} : vector<8x256xf32>, vector<256x128xf32>, vector<8x128xf32> -> vector<8x128xf32>
    %c5_70 = arith.constant 5 : index
    %c256_71 = arith.constant 256 : index
    %75 = vector.load %arg12[%c5_70, %c256_71] : memref<10x1024xf32, #tpu.memory_space<vmem>>, vector<1x128xf32>
    %76 = vector.broadcast %75 : vector<1x128xf32> to vector<8x128xf32>
    %77 = arith.addf %74, %76 : vector<8x128xf32>
    %cst_72 = arith.constant 0.000000e+00 : f32
    %78 = vector.broadcast %cst_72 : f32 to vector<8x128xf32>
    %79 = arith.maximumf %77, %78 : vector<8x128xf32>
    %c16_73 = arith.constant 16 : index
    %c0_74 = arith.constant 0 : index
    %80 = vector.load %arg17[%c16_73, %c0_74] : memref<32x128xf32, #tpu.memory_space<vmem>>, vector<8x128xf32>
    tpu.vector_store %arg17[%c16_73, %c0_74], %79 {strides = array<i32>} : memref<32x128xf32, #tpu.memory_space<vmem>>, vector<8x128xf32>,
    %c0_75 = arith.constant 0 : index
    %c384_76 = arith.constant 384 : index
    %81 = vector.load %arg7[%c0_75, %c384_76] : memref<256x512xf32, #tpu.memory_space<vmem>>, vector<256x128xf32>
    %cst_77 = arith.constant dense<0.000000e+00> : vector<8x128xf32>
    %82 = tpu.matmul %56, %81, %cst_77 {dimension_numbers = #tpu.dot_dimension_numbers<[1], [0], [0], [1], [0, 0, 1, 1], [], []>} : vector<8x256xf32>, vector<256x128xf32>, vector<8x128xf32> -> vector<8x128xf32>
    %c5_78 = arith.constant 5 : index
    %c384_79 = arith.constant 384 : index
    %83 = vector.load %arg12[%c5_78, %c384_79] : memref<10x1024xf32, #tpu.memory_space<vmem>>, vector<1x128xf32>
    %84 = vector.broadcast %83 : vector<1x128xf32> to vector<8x128xf32>
    %85 = arith.addf %82, %84 : vector<8x128xf32>
    %cst_80 = arith.constant 0.000000e+00 : f32
    %86 = vector.broadcast %cst_80 : f32 to vector<8x128xf32>
    %87 = arith.maximumf %85, %86 : vector<8x128xf32>
    %c24_81 = arith.constant 24 : index
    %c0_82 = arith.constant 0 : index
    %88 = vector.load %arg17[%c24_81, %c0_82] : memref<32x128xf32, #tpu.memory_space<vmem>>, vector<8x128xf32>
    tpu.vector_store %arg17[%c24_81, %c0_82], %87 {strides = array<i32>} : memref<32x128xf32, #tpu.memory_space<vmem>>, vector<8x128xf32>,
    %c0_83 = arith.constant 0 : index
    %c0_84 = arith.constant 0 : index
    %89 = vector.load %arg17[%c0_83, %c0_84] : memref<32x128xf32, #tpu.memory_space<vmem>>, vector<32x128xf32>
    %c0_85 = arith.constant 0 : index
    %c0_86 = arith.constant 0 : index
    %90 = vector.load %arg8[%c0_85, %c0_86] : memref<128x256xf32, #tpu.memory_space<vmem>>, vector<128x256xf32>
    %cst_87 = arith.constant dense<0.000000e+00> : vector<32x256xf32>
    %91 = tpu.matmul %89, %90, %cst_87 {dimension_numbers = #tpu.dot_dimension_numbers<[1], [0], [0], [1], [0, 0, 1, 1], [], []>} : vector<32x128xf32>, vector<128x256xf32>, vector<32x256xf32> -> vector<32x256xf32>
    %c6 = arith.constant 6 : index
    %c0_88 = arith.constant 0 : index
    %92 = vector.load %arg12[%c6, %c0_88] : memref<10x1024xf32, #tpu.memory_space<vmem>>, vector<1x256xf32>
    %93 = vector.broadcast %92 : vector<1x256xf32> to vector<32x256xf32>
    %94 = arith.addf %91, %93 : vector<32x256xf32>
    %cst_89 = arith.constant 0.000000e+00 : f32
    %95 = vector.broadcast %cst_89 : f32 to vector<32x256xf32>
    %96 = arith.maximumf %94, %95 : vector<32x256xf32>
    %c0_90 = arith.constant 0 : index
    %c0_91 = arith.constant 0 : index
    %97 = vector.load %arg16[%c0_90, %c0_91] : memref<32x256xf32, #tpu.memory_space<vmem>>, vector<32x256xf32>
    tpu.vector_store %arg16[%c0_90, %c0_91], %96 {strides = array<i32>} : memref<32x256xf32, #tpu.memory_space<vmem>>, vector<32x256xf32>,
    %c0_92 = arith.constant 0 : index
    %c0_93 = arith.constant 0 : index
    %98 = vector.load %arg16[%c0_92, %c0_93] : memref<32x256xf32, #tpu.memory_space<vmem>>, vector<32x256xf32>
    %c0_94 = arith.constant 0 : index
    %c0_95 = arith.constant 0 : index
    %99 = vector.load %arg9[%c0_94, %c0_95] : memref<256x512xf32, #tpu.memory_space<vmem>>, vector<256x512xf32>
    %cst_96 = arith.constant dense<0.000000e+00> : vector<32x512xf32>
    %100 = tpu.matmul %98, %99, %cst_96 {dimension_numbers = #tpu.dot_dimension_numbers<[1], [0], [0], [1], [0, 0, 1, 1], [], []>} : vector<32x256xf32>, vector<256x512xf32>, vector<32x512xf32> -> vector<32x512xf32>
    %c7 = arith.constant 7 : index
    %c0_97 = arith.constant 0 : index
    %101 = vector.load %arg12[%c7, %c0_97] : memref<10x1024xf32, #tpu.memory_space<vmem>>, vector<1x512xf32>
    %102 = vector.broadcast %101 : vector<1x512xf32> to vector<32x512xf32>
    %103 = arith.addf %100, %102 : vector<32x512xf32>
    %cst_98 = arith.constant 0.000000e+00 : f32
    %104 = vector.broadcast %cst_98 : f32 to vector<32x512xf32>
    %105 = arith.maximumf %103, %104 : vector<32x512xf32>
    %c0_99 = arith.constant 0 : index
    %c0_100 = arith.constant 0 : index
    %106 = vector.load %arg15[%c0_99, %c0_100] : memref<32x512xf32, #tpu.memory_space<vmem>>, vector<32x512xf32>
    tpu.vector_store %arg15[%c0_99, %c0_100], %105 {strides = array<i32>} : memref<32x512xf32, #tpu.memory_space<vmem>>, vector<32x512xf32>,
    %c0_101 = arith.constant 0 : index
    %c0_102 = arith.constant 0 : index
    %107 = vector.load %arg15[%c0_101, %c0_102] : memref<32x512xf32, #tpu.memory_space<vmem>>, vector<32x512xf32>
    %c0_103 = arith.constant 0 : index
    %c0_104 = arith.constant 0 : index
    %108 = vector.load %arg10[%c0_103, %c0_104] : memref<512x1024xf32, #tpu.memory_space<vmem>>, vector<512x1024xf32>
    %cst_105 = arith.constant dense<0.000000e+00> : vector<32x1024xf32>
    %109 = tpu.matmul %107, %108, %cst_105 {dimension_numbers = #tpu.dot_dimension_numbers<[1], [0], [0], [1], [0, 0, 1, 1], [], []>} : vector<32x512xf32>, vector<512x1024xf32>, vector<32x1024xf32> -> vector<32x1024xf32>
    %c8_106 = arith.constant 8 : index
    %c0_107 = arith.constant 0 : index
    %110 = vector.load %arg12[%c8_106, %c0_107] : memref<10x1024xf32, #tpu.memory_space<vmem>>, vector<1x1024xf32>
    %111 = vector.broadcast %110 : vector<1x1024xf32> to vector<32x1024xf32>
    %112 = arith.addf %109, %111 : vector<32x1024xf32>
    %cst_108 = arith.constant 0.000000e+00 : f32
    %113 = vector.broadcast %cst_108 : f32 to vector<32x1024xf32>
    %114 = arith.maximumf %112, %113 : vector<32x1024xf32>
    %c0_109 = arith.constant 0 : index
    %c0_110 = arith.constant 0 : index
    %115 = vector.load %arg14[%c0_109, %c0_110] : memref<32x1024xf32, #tpu.memory_space<vmem>>, vector<32x1024xf32>
    tpu.vector_store %arg14[%c0_109, %c0_110], %114 {strides = array<i32>} : memref<32x1024xf32, #tpu.memory_space<vmem>>, vector<32x1024xf32>,
    %c0_111 = arith.constant 0 : index
    %c0_112 = arith.constant 0 : index
    %116 = vector.load %arg14[%c0_111, %c0_112] : memref<32x1024xf32, #tpu.memory_space<vmem>>, vector<32x1024xf32>
    %c0_113 = arith.constant 0 : index
    %c0_114 = arith.constant 0 : index
    %117 = vector.load %arg11[%c0_113, %c0_114] : memref<1024x256xf32, #tpu.memory_space<vmem>>, vector<1024x256xf32>
    %cst_115 = arith.constant dense<0.000000e+00> : vector<32x256xf32>
    %118 = tpu.matmul %116, %117, %cst_115 {dimension_numbers = #tpu.dot_dimension_numbers<[1], [0], [0], [1], [0, 0, 1, 1], [], []>} : vector<32x1024xf32>, vector<1024x256xf32>, vector<32x256xf32> -> vector<32x256xf32>
    %c9 = arith.constant 9 : index
    %c0_116 = arith.constant 0 : index
    %119 = vector.load %arg12[%c9, %c0_116] : memref<10x1024xf32, #tpu.memory_space<vmem>>, vector<1x256xf32>
    %120 = vector.broadcast %119 : vector<1x256xf32> to vector<32x256xf32>
    %121 = arith.addf %118, %120 : vector<32x256xf32>
    %c0_117 = arith.constant 0 : index
    %c0_118 = arith.constant 0 : index
    %c0_119 = arith.constant 0 : index
    %122 = vector.load %arg13[%c0_117, %c0_118, %c0_119] : memref<1x32x256xf32, #tpu.memory_space<vmem>>, vector<1x32x256xf32>
    %123 = vector.shape_cast %122 : vector<1x32x256xf32> to vector<32x256xf32>
    %124 = vector.shape_cast %121 : vector<32x256xf32> to vector<1x32x256xf32>
    tpu.vector_store %arg13[%c0_117, %c0_118, %c0_119], %124 {strides = array<i32>} : memref<1x32x256xf32, #tpu.memory_space<vmem>>, vector<1x32x256xf32>,
    return
  }
  func.func @transform_0(%arg0: i32) -> (i32, i32, i32) {
    %c0_i32 = arith.constant 0 : i32
    %c0_i32_0 = arith.constant 0 : i32
    %c0_i32_1 = arith.constant 0 : i32
    return %arg0, %c0_i32, %c0_i32_0 : i32, i32, i32
  }
  func.func @transform_1(%arg0: i32) -> (i32, i32) {
    %c0_i32 = arith.constant 0 : i32
    %c0_i32_0 = arith.constant 0 : i32
    %c0_i32_1 = arith.constant 0 : i32
    return %c0_i32, %c0_i32_0 : i32, i32
  }
  func.func @transform_2(%arg0: i32) -> (i32, i32) {
    %c0_i32 = arith.constant 0 : i32
    %c0_i32_0 = arith.constant 0 : i32
    %c0_i32_1 = arith.constant 0 : i32
    return %c0_i32, %c0_i32_0 : i32, i32
  }
  func.func @transform_3(%arg0: i32) -> (i32, i32) {
    %c0_i32 = arith.constant 0 : i32
    %c0_i32_0 = arith.constant 0 : i32
    %c0_i32_1 = arith.constant 0 : i32
    return %c0_i32, %c0_i32_0 : i32, i32
  }
  func.func @transform_4(%arg0: i32) -> (i32, i32) {
    %c0_i32 = arith.constant 0 : i32
    %c0_i32_0 = arith.constant 0 : i32
    %c0_i32_1 = arith.constant 0 : i32
    return %c0_i32, %c0_i32_0 : i32, i32
  }
  func.func @transform_5(%arg0: i32) -> (i32, i32) {
    %c0_i32 = arith.constant 0 : i32
    %c0_i32_0 = arith.constant 0 : i32
    %c0_i32_1 = arith.constant 0 : i32
    return %c0_i32, %c0_i32_0 : i32, i32
  }
  func.func @transform_6(%arg0: i32) -> (i32, i32) {
    %c0_i32 = arith.constant 0 : i32
    %c0_i32_0 = arith.constant 0 : i32
    %c0_i32_1 = arith.constant 0 : i32
    return %c0_i32, %c0_i32_0 : i32, i32
  }
  func.func @transform_7(%arg0: i32) -> (i32, i32) {
    %c0_i32 = arith.constant 0 : i32
    %c0_i32_0 = arith.constant 0 : i32
    %c0_i32_1 = arith.constant 0 : i32
    return %c0_i32, %c0_i32_0 : i32, i32
  }
  func.func @transform_8(%arg0: i32) -> (i32, i32) {
    %c0_i32 = arith.constant 0 : i32
    %c0_i32_0 = arith.constant 0 : i32
    %c0_i32_1 = arith.constant 0 : i32
    return %c0_i32, %c0_i32_0 : i32, i32
  }
  func.func @transform_9(%arg0: i32) -> (i32, i32) {
    %c0_i32 = arith.constant 0 : i32
    %c0_i32_0 = arith.constant 0 : i32
    %c0_i32_1 = arith.constant 0 : i32
    return %c0_i32, %c0_i32_0 : i32, i32
  }
  func.func @transform_10(%arg0: i32) -> (i32, i32) {
    %c0_i32 = arith.constant 0 : i32
    %c0_i32_0 = arith.constant 0 : i32
    %c0_i32_1 = arith.constant 0 : i32
    return %c0_i32, %c0_i32_0 : i32, i32
  }
  func.func @transform_11(%arg0: i32) -> (i32, i32) {
    %c0_i32 = arith.constant 0 : i32
    %c0_i32_0 = arith.constant 0 : i32
    %c0_i32_1 = arith.constant 0 : i32
    return %c0_i32, %c0_i32_0 : i32, i32
  }
  func.func @transform_12(%arg0: i32) -> (i32, i32, i32) {
    %c0_i32 = arith.constant 0 : i32
    %c0_i32_0 = arith.constant 0 : i32
    %c0_i32_1 = arith.constant 0 : i32
    return %arg0, %c0_i32, %c0_i32_0 : i32, i32, i32
  }
}

</mosaic_0001>

<llo_original>
// kernel: conv_autoencoder_forward.1
$region0: #{conv_autoencoder_forward.1}
  #allocation0 [shape = 'u32[]', space=smem, size = 0x4, offset = 0x4, fixed_abs, tag = 'smem constant byte address 0x4 - core index']
  #allocation1 [shape = 'u32[72,128]{1,0:T(1,128)}', space=vmem, size = 0x9000, scoped, tag = 'internal scratch']
  #allocation2 [shape = 'f32[32,1024]{1,0:T(8,128)}', space=vmem, size = 0x20000, scoped, tag = 'scratch operand']
  #allocation3 [shape = 'f32[32,512]{1,0:T(8,128)}', space=vmem, size = 0x10000, scoped, tag = 'scratch operand']
  #allocation4 [shape = 'f32[32,256]{1,0:T(8,128)}', space=vmem, size = 0x8000, scoped, tag = 'scratch operand']
  #allocation5 [shape = 'f32[32,128]{1,0:T(8,128)}', space=vmem, size = 0x4000, scoped, tag = 'scratch operand']
  %s0 = inlined_call_operand.vmem [shape: f32[1,32,256], index: 0, kind: input, shape index: {}]
  %s1 = inlined_call_operand.vmem [shape: f32[256,1024], index: 1, kind: input, shape index: {}]
  %s2 = inlined_call_operand.vmem [shape: f32[1024,512], index: 2, kind: input, shape index: {}]
  %s3 = inlined_call_operand.hbm [shape: f32[512,256], index: 3, kind: input, shape index: {}]
  %s4 = inlined_call_operand.vmem [shape: f32[256,128], index: 4, kind: input, shape index: {}]
  %s5 = inlined_call_operand.hbm [shape: f32[512,256], index: 5, kind: input, shape index: {}]
  %s6 = inlined_call_operand.hbm [shape: f32[256,512], index: 6, kind: input, shape index: {}]
  %s7 = inlined_call_operand.vmem [shape: f32[128,256], index: 7, kind: input, shape index: {}]
  %s8 = inlined_call_operand.hbm [shape: f32[256,512], index: 8, kind: input, shape index: {}]
  %s9 = inlined_call_operand.hbm [shape: f32[512,1024], index: 9, kind: input, shape index: {}]
  %s10 = inlined_call_operand.hbm [shape: f32[1024,256], index: 10, kind: input, shape index: {}]
  %s11 = inlined_call_operand.vmem [shape: f32[10,1024], index: 11, kind: input, shape index: {}]
  %s12 = inlined_call_operand.vmem [shape: f32[1,32,256], index: 12, kind: output, shape index: {}]
  %s13 = sld [smem:[#allocation0]]
  $region82: #{conv_autoencoder_forward.1} parent=0
    _
  %s15 = ssub.s32 1, %s13
  %s16 = scalar_select 0, %s15, %s13
  $region1: #{conv_autoencoder_forward.1} parent=0
    #allocation6 [shape = 'u8[524288]{0}', space=vmem, size = 0x80000, scoped, tag = 'input window, operand 3, single buffered']
    #allocation7 [shape = 's32[1]{0}', space=sflag, size = 0x4, scoped, tag = 'scoped memory for conv_autoencoder_forward.1']
    #allocation8 [shape = 'u8[524288]{0}', space=vmem, size = 0x80000, scoped, tag = 'input window, operand 5, single buffered']
    #allocation9 [shape = 's32[1]{0}', space=sflag, size = 0x4, scoped, tag = 'scoped memory for conv_autoencoder_forward.1']
    #allocation10 [shape = 'u8[524288]{0}', space=vmem, size = 0x80000, scoped, tag = 'input window, operand 6, single buffered']
    #allocation11 [shape = 'u8[524288]{0}', space=vmem, size = 0x80000, scoped, tag = 'input window, operand 8, single buffered']
    #allocation12 [shape = 's32[1]{0}', space=sflag, size = 0x4, scoped, tag = 'scoped memory for conv_autoencoder_forward.1']
    #allocation13 [shape = 'u8[2097152]{0}', space=vmem, size = 0x200000, scoped, tag = 'input window, operand 9, single buffered']
    #allocation14 [shape = 'u8[1048576]{0}', space=vmem, size = 0x100000, scoped, tag = 'input window, operand 10, single buffered']
    #allocation15 [shape = 's32[1]{0}', space=sflag, size = 0x4, scoped, tag = 'scoped memory for conv_autoencoder_forward.1']
    %17 = vsyncpa [#allocation7], 0
    %18 = vsyncpa [#allocation9], 0
    %19 = vsyncpa [#allocation12], 0
    %20 = vsyncpa [#allocation15], 0
    // Predicated region
    $region2: #{conv_autoencoder_forward.1} parent=1 // pred_check
      _
    $region3: #{conv_autoencoder_forward.1} parent=1 // pred_check_branch
      %22 = sbr.rel (0) target = $region5
    $region4: #{conv_autoencoder_forward.1} parent=1 // pred_region
      _
    $region5: #{conv_autoencoder_forward.1} parent=1 // pred_fallthru
      _
    // Predicated region
    $region6: #{conv_autoencoder_forward.1} parent=1 // pred_check
      _
    $region7: #{conv_autoencoder_forward.1} parent=1 // pred_check_branch
      %24 = sbr.rel (0) target = $region9
    $region8: #{conv_autoencoder_forward.1} parent=1 // pred_region
      _
    $region9: #{conv_autoencoder_forward.1} parent=1 // pred_fallthru
      _
    // Predicated region
    $region10: #{conv_autoencoder_forward.1} parent=1 // pred_check
      _
    $region11: #{conv_autoencoder_forward.1} parent=1 // pred_check_branch
      %26 = sbr.rel (0) target = $region13
    $region12: #{conv_autoencoder_forward.1} parent=1 // pred_region
      _
    $region13: #{conv_autoencoder_forward.1} parent=1 // pred_fallthru
      _
    // Predicated region
    $region14: #{conv_autoencoder_forward.1} parent=1 // pred_check
      _
    $region15: #{conv_autoencoder_forward.1} parent=1 // pred_check_branch
      %28 = sbr.rel (0) target = $region17
    $region16: #{conv_autoencoder_forward.1} parent=1 // pred_region
      %30 = vsyncadd [#allocation7], 0
      %s31 = sshll.u32 %s3, 4
      %s32 = int_to_ptr.hbm [resolvable:$true] %s31
      %s33 = sshll.u32 [#allocation6], 4
      %s34 = int_to_ptr.vmem [resolvable:$true] %s33
      %39 = dma.hbm_to_vmem [thread:$0]  %s32, 16384, %s34, [#allocation7], 256, 256, 16
    $region17: #{conv_autoencoder_forward.1} parent=1 // pred_fallthru
      _
    // Predicated region
    $region18: #{conv_autoencoder_forward.1} parent=1 // pred_check
      _
    $region19: #{conv_autoencoder_forward.1} parent=1 // pred_check_branch
      %41 = sbr.rel (0) target = $region21
    $region20: #{conv_autoencoder_forward.1} parent=1 // pred_region
      _
    $region21: #{conv_autoencoder_forward.1} parent=1 // pred_fallthru
      _
    // Predicated region
    $region22: #{conv_autoencoder_forward.1} parent=1 // pred_check
      _
    $region23: #{conv_autoencoder_forward.1} parent=1 // pred_check_branch
      %43 = sbr.rel (0) target = $region25
    $region24: #{conv_autoencoder_forward.1} parent=1 // pred_region
      %45 = vsyncadd [#allocation9], 0
      %s46 = sshll.u32 %s5, 4
      %s47 = int_to_ptr.hbm [resolvable:$true] %s46
      %s48 = sshll.u32 [#allocation8], 4
      %s49 = int_to_ptr.vmem [resolvable:$true] %s48
      %54 = dma.hbm_to_vmem [thread:$0]  %s47, 16384, %s49, [#allocation9], 256, 256, 16
    $region25: #{conv_autoencoder_forward.1} parent=1 // pred_fallthru
      _
    // Predicated region
    $region26: #{conv_autoencoder_forward.1} parent=1 // pred_check
      _
    $region27: #{conv_autoencoder_forward.1} parent=1 // pred_check_branch
      %56 = sbr.rel (0) target = $region29
    $region28: #{conv_autoencoder_forward.1} parent=1 // pred_region
      %58 = vsyncadd [#allocation9], 0
      %s59 = sshll.u32 %s6, 4
      %s60 = int_to_ptr.hbm [resolvable:$true] %s59
      %s61 = sshll.u32 [#allocation10], 4
      %s62 = int_to_ptr.vmem [resolvable:$true] %s61
      %67 = dma.hbm_to_vmem [thread:$0]  %s60, 16384, %s62, [#allocation9], 512, 512, 32
    $region29: #{conv_autoencoder_forward.1} parent=1 // pred_fallthru
      _
    // Predicated region
    $region30: #{conv_autoencoder_forward.1} parent=1 // pred_check
      _
    $region31: #{conv_autoencoder_forward.1} parent=1 // pred_check_branch
      %69 = sbr.rel (0) target = $region33
    $region32: #{conv_autoencoder_forward.1} parent=1 // pred_region
      _
    $region33: #{conv_autoencoder_forward.1} parent=1 // pred_fallthru
      _
    // Predicated region
    $region34: #{conv_autoencoder_forward.1} parent=1 // pred_check
      _
    $region35: #{conv_autoencoder_forward.1} parent=1 // pred_check_branch
      %71 = sbr.rel (0) target = $region37
    $region36: #{conv_autoencoder_forward.1} parent=1 // pred_region
      %73 = vsyncadd [#allocation12], 0
      %s74 = sshll.u32 %s8, 4
      %s75 = int_to_ptr.hbm [resolvable:$true] %s74
      %s76 = sshll.u32 [#allocation11], 4
      %s77 = int_to_ptr.vmem [resolvable:$true] %s76
      %82 = dma.hbm_to_vmem [thread:$0]  %s75, 16384, %s77, [#allocation12], 512, 512, 32
    $region37: #{conv_autoencoder_forward.1} parent=1 // pred_fallthru
      _
    // Predicated region
    $region38: #{conv_autoencoder_forward.1} parent=1 // pred_check
      _
    $region39: #{conv_autoencoder_forward.1} parent=1 // pred_check_branch
      %84 = sbr.rel (0) target = $region41
    $region40: #{conv_autoencoder_forward.1} parent=1 // pred_region
      %86 = vsyncadd [#allocation12], 0
      %s87 = sshll.u32 %s9, 4
      %s88 = int_to_ptr.hbm [resolvable:$true] %s87
      %s89 = sshll.u32 [#allocation13], 4
      %s90 = int_to_ptr.vmem [resolvable:$true] %s89
      %95 = dma.hbm_to_vmem [thread:$0]  %s88, 65536, %s90, [#allocation12], 1024, 1024, 64
    $region41: #{conv_autoencoder_forward.1} parent=1 // pred_fallthru
      _
    // Predicated region
    $region42: #{conv_autoencoder_forward.1} parent=1 // pred_check
      _
    $region43: #{conv_autoencoder_forward.1} parent=1 // pred_check_branch
      %97 = sbr.rel (0) target = $region45
    $region44: #{conv_autoencoder_forward.1} parent=1 // pred_region
      %99 = vsyncadd [#allocation15], 0
      %s100 = sshll.u32 %s10, 4
      %s101 = int_to_ptr.hbm [resolvable:$true] %s100
      %s102 = sshll.u32 [#allocation14], 4
      %s103 = int_to_ptr.vmem [resolvable:$true] %s102
      %108 = dma.hbm_to_vmem [thread:$0]  %s101, 32768, %s103, [#allocation15], 256, 256, 16
    $region45: #{conv_autoencoder_forward.1} parent=1 // pred_fallthru
      _
    // Predicated region
    $region46: #{conv_autoencoder_forward.1} parent=1 // pred_check
      _
    $region47: #{conv_autoencoder_forward.1} parent=1 // pred_check_branch
      %110 = sbr.rel (0) target = $region49
    $region48: #{conv_autoencoder_forward.1} parent=1 // pred_region
      _
    $region49: #{conv_autoencoder_forward.1} parent=1 // pred_fallthru
      _
    // Predicated region
    $region50: #{conv_autoencoder_forward.1} parent=1 // pred_check
      _
    $region51: #{conv_autoencoder_forward.1} parent=1 // pred_check_branch
      %112 = sbr.rel (0) target = $region53
    $region52: #{conv_autoencoder_forward.1} parent=1 // pred_region
      %114 = dma.done [#allocation7], 16384
    $region53: #{conv_autoencoder_forward.1} parent=1 // pred_fallthru
      _
    // Predicated region
    $region54: #{conv_autoencoder_forward.1} parent=1 // pred_check
      _
    $region55: #{conv_autoencoder_forward.1} parent=1 // pred_check_branch
      %116 = sbr.rel (0) target = $region57
    $region56: #{conv_autoencoder_forward.1} parent=1 // pred_region
      %118 = dma.done [#allocation9], 16384
    $region57: #{conv_autoencoder_forward.1} parent=1 // pred_fallthru
      _
    // Predicated region
    $region58: #{conv_autoencoder_forward.1} parent=1 // pred_check
      _
    $region59: #{conv_autoencoder_forward.1} parent=1 // pred_check_branch
      %120 = sbr.rel (0) target = $region61
    $region60: #{conv_autoencoder_forward.1} parent=1 // pred_region
      %122 = dma.done [#allocation9], 16384
    $region61: #{conv_autoencoder_forward.1} parent=1 // pred_fallthru
      _
    // Predicated region
    $region62: #{conv_autoencoder_forward.1} parent=1 // pred_check
      _
    $region63: #{conv_autoencoder_forward.1} parent=1 // pred_check_branch
      %124 = sbr.rel (0) target = $region65
    $region64: #{conv_autoencoder_forward.1} parent=1 // pred_region
      %126 = dma.done [#allocation12], 16384
    $region65: #{conv_autoencoder_forward.1} parent=1 // pred_fallthru
      _
    // Predicated region
    $region66: #{conv_autoencoder_forward.1} parent=1 // pred_check
      _
    $region67: #{conv_autoencoder_forward.1} parent=1 // pred_check_branch
      %128 = sbr.rel (0) target = $region69
    $region68: #{conv_autoencoder_forward.1} parent=1 // pred_region
      %130 = dma.done [#allocation12], 65536
    $region69: #{conv_autoencoder_forward.1} parent=1 // pred_fallthru
      _
    // Predicated region
    $region70: #{conv_autoencoder_forward.1} parent=1 // pred_check
      _
    $region71: #{conv_autoencoder_forward.1} parent=1 // pred_check_branch
      %132 = sbr.rel (0) target = $region73
    $region72: #{conv_autoencoder_forward.1} parent=1 // pred_region
      %134 = dma.done [#allocation15], 32768
    $region73: #{conv_autoencoder_forward.1} parent=1 // pred_fallthru
      _
    %v135 = vld [vmem:[%s0] sm:$0xff]
    %v136 = vld [vmem:[%s0 + $0x8] sm:$0xff]
    %v137 = vld [vmem:[%s0 + $0x10] sm:$0xff]
    %v138 = vld [vmem:[%s0 + $0x18] sm:$0xff]
    %v139 = vld [vmem:[%s0 + $0x20] sm:$0xff]
    %v140 = vld [vmem:[%s0 + $0x28] sm:$0xff]
    %v141 = vld [vmem:[%s0 + $0x30] sm:$0xff]
    %v142 = vld [vmem:[%s0 + $0x38] sm:$0xff]
    %v143 = vld [vmem:[%s1] sm:$0xff]
    %v144 = vld [vmem:[%s1 + $0x8] sm:$0xff]
    %v145 = vld [vmem:[%s1 + $0x10] sm:$0xff]
    %v146 = vld [vmem:[%s1 + $0x18] sm:$0xff]
    %v147 = vld [vmem:[%s1 + $0x20] sm:$0xff]
    %v148 = vld [vmem:[%s1 + $0x28] sm:$0xff]
    %v149 = vld [vmem:[%s1 + $0x30] sm:$0xff]
    %v150 = vld [vmem:[%s1 + $0x38] sm:$0xff]
    %v151 = vld [vmem:[%s1 + $0x40] sm:$0xff]
    %v152 = vld [vmem:[%s1 + $0x48] sm:$0xff]
    %v153 = vld [vmem:[%s1 + $0x50] sm:$0xff]
    %v154 = vld [vmem:[%s1 + $0x58] sm:$0xff]
    %v155 = vld [vmem:[%s1 + $0x60] sm:$0xff]
    %v156 = vld [vmem:[%s1 + $0x68] sm:$0xff]
    %v157 = vld [vmem:[%s1 + $0x70] sm:$0xff]
    %v158 = vld [vmem:[%s1 + $0x78] sm:$0xff]
    %v159 = vld [vmem:[%s1 + $0x80] sm:$0xff]
    %v160 = vld [vmem:[%s1 + $0x88] sm:$0xff]
    %v161 = vld [vmem:[%s1 + $0x90] sm:$0xff]
    %v162 = vld [vmem:[%s1 + $0x98] sm:$0xff]
    %v163 = vld [vmem:[%s1 + $0xa0] sm:$0xff]
    %v164 = vld [vmem:[%s1 + $0xa8] sm:$0xff]
    %v165 = vld [vmem:[%s1 + $0xb0] sm:$0xff]
    %v166 = vld [vmem:[%s1 + $0xb8] sm:$0xff]
    %v167 = vld [vmem:[%s1 + $0xc0] sm:$0xff]
    %v168 = vld [vmem:[%s1 + $0xc8] sm:$0xff]
    %v169 = vld [vmem:[%s1 + $0xd0] sm:$0xff]
    %v170 = vld [vmem:[%s1 + $0xd8] sm:$0xff]
    %v171 = vld [vmem:[%s1 + $0xe0] sm:$0xff]
    %v172 = vld [vmem:[%s1 + $0xe8] sm:$0xff]
    %v173 = vld [vmem:[%s1 + $0xf0] sm:$0xff]
    %v174 = vld [vmem:[%s1 + $0xf8] sm:$0xff]
    %v175 = vld [vmem:[%s1 + $0x100] sm:$0xff]
    %v176 = vld [vmem:[%s1 + $0x108] sm:$0xff]
    %v177 = vld [vmem:[%s1 + $0x110] sm:$0xff]
    %v178 = vld [vmem:[%s1 + $0x118] sm:$0xff]
    %v179 = vld [vmem:[%s1 + $0x120] sm:$0xff]
    %v180 = vld [vmem:[%s1 + $0x128] sm:$0xff]
    %v181 = vld [vmem:[%s1 + $0x130] sm:$0xff]
    %v182 = vld [vmem:[%s1 + $0x138] sm:$0xff]
    %v183 = vld [vmem:[%s1 + $0x140] sm:$0xff]
    %v184 = vld [vmem:[%s1 + $0x148] sm:$0xff]
    %v185 = vld [vmem:[%s1 + $0x150] sm:$0xff]
    %v186 = vld [vmem:[%s1 + $0x158] sm:$0xff]
    %v187 = vld [vmem:[%s1 + $0x160] sm:$0xff]
    %v188 = vld [vmem:[%s1 + $0x168] sm:$0xff]
    %v189 = vld [vmem:[%s1 + $0x170] sm:$0xff]
    %v190 = vld [vmem:[%s1 + $0x178] sm:$0xff]
    %v191 = vld [vmem:[%s1 + $0x180] sm:$0xff]
    %v192 = vld [vmem:[%s1 + $0x188] sm:$0xff]
    %v193 = vld [vmem:[%s1 + $0x190] sm:$0xff]
    %v194 = vld [vmem:[%s1 + $0x198] sm:$0xff]
    %v195 = vld [vmem:[%s1 + $0x1a0] sm:$0xff]
    %v196 = vld [vmem:[%s1 + $0x1a8] sm:$0xff]
    %v197 = vld [vmem:[%s1 + $0x1b0] sm:$0xff]
    %v198 = vld [vmem:[%s1 + $0x1b8] sm:$0xff]
    %v199 = vld [vmem:[%s1 + $0x1c0] sm:$0xff]
    %v200 = vld [vmem:[%s1 + $0x1c8] sm:$0xff]
    %v201 = vld [vmem:[%s1 + $0x1d0] sm:$0xff]
    %v202 = vld [vmem:[%s1 + $0x1d8] sm:$0xff]
    %v203 = vld [vmem:[%s1 + $0x1e0] sm:$0xff]
    %v204 = vld [vmem:[%s1 + $0x1e8] sm:$0xff]
    %v205 = vld [vmem:[%s1 + $0x1f0] sm:$0xff]
    %v206 = vld [vmem:[%s1 + $0x1f8] sm:$0xff]
    %v207 = vld [vmem:[%s1 + $0x200] sm:$0xff]
    %v208 = vld [vmem:[%s1 + $0x208] sm:$0xff]
    %v209 = vld [vmem:[%s1 + $0x210] sm:$0xff]
    %v210 = vld [vmem:[%s1 + $0x218] sm:$0xff]
    %v211 = vld [vmem:[%s1 + $0x220] sm:$0xff]
    %v212 = vld [vmem:[%s1 + $0x228] sm:$0xff]
    %v213 = vld [vmem:[%s1 + $0x230] sm:$0xff]
    %v214 = vld [vmem:[%s1 + $0x238] sm:$0xff]
    %v215 = vld [vmem:[%s1 + $0x240] sm:$0xff]
    %v216 = vld [vmem:[%s1 + $0x248] sm:$0xff]
    %v217 = vld [vmem:[%s1 + $0x250] sm:$0xff]
    %v218 = vld [vmem:[%s1 + $0x258] sm:$0xff]
    %v219 = vld [vmem:[%s1 + $0x260] sm:$0xff]
    %v220 = vld [vmem:[%s1 + $0x268] sm:$0xff]
    %v221 = vld [vmem:[%s1 + $0x270] sm:$0xff]
    %v222 = vld [vmem:[%s1 + $0x278] sm:$0xff]
    %v223 = vld [vmem:[%s1 + $0x280] sm:$0xff]
    %v224 = vld [vmem:[%s1 + $0x288] sm:$0xff]
    %v225 = vld [vmem:[%s1 + $0x290] sm:$0xff]
    %v226 = vld [vmem:[%s1 + $0x298] sm:$0xff]
    %v227 = vld [vmem:[%s1 + $0x2a0] sm:$0xff]
    %v228 = vld [vmem:[%s1 + $0x2a8] sm:$0xff]
    %v229 = vld [vmem:[%s1 + $0x2b0] sm:$0xff]
    %v230 = vld [vmem:[%s1 + $0x2b8] sm:$0xff]
    %v231 = vld [vmem:[%s1 + $0x2c0] sm:$0xff]
    %v232 = vld [vmem:[%s1 + $0x2c8] sm:$0xff]
    %v233 = vld [vmem:[%s1 + $0x2d0] sm:$0xff]
    %v234 = vld [vmem:[%s1 + $0x2d8] sm:$0xff]
    %v235 = vld [vmem:[%s1 + $0x2e0] sm:$0xff]
    %v236 = vld [vmem:[%s1 + $0x2e8] sm:$0xff]
    %v237 = vld [vmem:[%s1 + $0x2f0] sm:$0xff]
    %v238 = vld [vmem:[%s1 + $0x2f8] sm:$0xff]
    %v239 = vld [vmem:[%s1 + $0x300] sm:$0xff]
    %v240 = vld [vmem:[%s1 + $0x308] sm:$0xff]
    %v241 = vld [vmem:[%s1 + $0x310] sm:$0xff]
    %v242 = vld [vmem:[%s1 + $0x318] sm:$0xff]
    %v243 = vld [vmem:[%s1 + $0x320] sm:$0xff]
    %v244 = vld [vmem:[%s1 + $0x328] sm:$0xff]
    %v245 = vld [vmem:[%s1 + $0x330] sm:$0xff]
    %v246 = vld [vmem:[%s1 + $0x338] sm:$0xff]
    %v247 = vld [vmem:[%s1 + $0x340] sm:$0xff]
    %v248 = vld [vmem:[%s1 + $0x348] sm:$0xff]
    %v249 = vld [vmem:[%s1 + $0x350] sm:$0xff]
    %v250 = vld [vmem:[%s1 + $0x358] sm:$0xff]
    %v251 = vld [vmem:[%s1 + $0x360] sm:$0xff]
    %v252 = vld [vmem:[%s1 + $0x368] sm:$0xff]
    %v253 = vld [vmem:[%s1 + $0x370] sm:$0xff]
    %v254 = vld [vmem:[%s1 + $0x378] sm:$0xff]
    %v255 = vld [vmem:[%s1 + $0x380] sm:$0xff]
    %v256 = vld [vmem:[%s1 + $0x388] sm:$0xff]
    %v257 = vld [vmem:[%s1 + $0x390] sm:$0xff]
    %v258 = vld [vmem:[%s1 + $0x398] sm:$0xff]
    %v259 = vld [vmem:[%s1 + $0x3a0] sm:$0xff]
    %v260 = vld [vmem:[%s1 + $0x3a8] sm:$0xff]
    %v261 = vld [vmem:[%s1 + $0x3b0] sm:$0xff]
    %v262 = vld [vmem:[%s1 + $0x3b8] sm:$0xff]
    %v263 = vld [vmem:[%s1 + $0x3c0] sm:$0xff]
    %v264 = vld [vmem:[%s1 + $0x3c8] sm:$0xff]
    %v265 = vld [vmem:[%s1 + $0x3d0] sm:$0xff]
    %v266 = vld [vmem:[%s1 + $0x3d8] sm:$0xff]
    %v267 = vld [vmem:[%s1 + $0x3e0] sm:$0xff]
    %v268 = vld [vmem:[%s1 + $0x3e8] sm:$0xff]
    %v269 = vld [vmem:[%s1 + $0x3f0] sm:$0xff]
    %v270 = vld [vmem:[%s1 + $0x3f8] sm:$0xff]
    %v271 = vld [vmem:[%s1 + $0x400] sm:$0xff]
    %v272 = vld [vmem:[%s1 + $0x408] sm:$0xff]
    %v273 = vld [vmem:[%s1 + $0x410] sm:$0xff]
    %v274 = vld [vmem:[%s1 + $0x418] sm:$0xff]
    %v275 = vld [vmem:[%s1 + $0x420] sm:$0xff]
    %v276 = vld [vmem:[%s1 + $0x428] sm:$0xff]
    %v277 = vld [vmem:[%s1 + $0x430] sm:$0xff]
    %v278 = vld [vmem:[%s1 + $0x438] sm:$0xff]
    %v279 = vld [vmem:[%s1 + $0x440] sm:$0xff]
    %v280 = vld [vmem:[%s1 + $0x448] sm:$0xff]
    %v281 = vld [vmem:[%s1 + $0x450] sm:$0xff]
    %v282 = vld [vmem:[%s1 + $0x458] sm:$0xff]
    %v283 = vld [vmem:[%s1 + $0x460] sm:$0xff]
    %v284 = vld [vmem:[%s1 + $0x468] sm:$0xff]
    %v285 = vld [vmem:[%s1 + $0x470] sm:$0xff]
    %v286 = vld [vmem:[%s1 + $0x478] sm:$0xff]
    %v287 = vld [vmem:[%s1 + $0x480] sm:$0xff]
    %v288 = vld [vmem:[%s1 + $0x488] sm:$0xff]
    %v289 = vld [vmem:[%s1 + $0x490] sm:$0xff]
    %v290 = vld [vmem:[%s1 + $0x498] sm:$0xff]
    %v291 = vld [vmem:[%s1 + $0x4a0] sm:$0xff]
    %v292 = vld [vmem:[%s1 + $0x4a8] sm:$0xff]
    %v293 = vld [vmem:[%s1 + $0x4b0] sm:$0xff]
    %v294 = vld [vmem:[%s1 + $0x4b8] sm:$0xff]
    %v295 = vld [vmem:[%s1 + $0x4c0] sm:$0xff]
    %v296 = vld [vmem:[%s1 + $0x4c8] sm:$0xff]
    %v297 = vld [vmem:[%s1 + $0x4d0] sm:$0xff]
    %v298 = vld [vmem:[%s1 + $0x4d8] sm:$0xff]
    %v299 = vld [vmem:[%s1 + $0x4e0] sm:$0xff]
    %v300 = vld [vmem:[%s1 + $0x4e8] sm:$0xff]
    %v301 = vld [vmem:[%s1 + $0x4f0] sm:$0xff]
    %v302 = vld [vmem:[%s1 + $0x4f8] sm:$0xff]
    %v303 = vld [vmem:[%s1 + $0x500] sm:$0xff]
    %v304 = vld [vmem:[%s1 + $0x508] sm:$0xff]
    %v305 = vld [vmem:[%s1 + $0x510] sm:$0xff]
    %v306 = vld [vmem:[%s1 + $0x518] sm:$0xff]
    %v307 = vld [vmem:[%s1 + $0x520] sm:$0xff]
    %v308 = vld [vmem:[%s1 + $0x528] sm:$0xff]
    %v309 = vld [vmem:[%s1 + $0x530] sm:$0xff]
    %v310 = vld [vmem:[%s1 + $0x538] sm:$0xff]
    %v311 = vld [vmem:[%s1 + $0x540] sm:$0xff]
    %v312 = vld [vmem:[%s1 + $0x548] sm:$0xff]
    %v313 = vld [vmem:[%s1 + $0x550] sm:$0xff]
    %v314 = vld [vmem:[%s1 + $0x558] sm:$0xff]
    %v315 = vld [vmem:[%s1 + $0x560] sm:$0xff]
    %v316 = vld [vmem:[%s1 + $0x568] sm:$0xff]
    %v317 = vld [vmem:[%s1 + $0x570] sm:$0xff]
    %v318 = vld [vmem:[%s1 + $0x578] sm:$0xff]
    %v319 = vld [vmem:[%s1 + $0x580] sm:$0xff]
    %v320 = vld [vmem:[%s1 + $0x588] sm:$0xff]
    %v321 = vld [vmem:[%s1 + $0x590] sm:$0xff]
    %v322 = vld [vmem:[%s1 + $0x598] sm:$0xff]
    %v323 = vld [vmem:[%s1 + $0x5a0] sm:$0xff]
    %v324 = vld [vmem:[%s1 + $0x5a8] sm:$0xff]
    %v325 = vld [vmem:[%s1 + $0x5b0] sm:$0xff]
    %v326 = vld [vmem:[%s1 + $0x5b8] sm:$0xff]
    %v327 = vld [vmem:[%s1 + $0x5c0] sm:$0xff]
    %v328 = vld [vmem:[%s1 + $0x5c8] sm:$0xff]
    %v329 = vld [vmem:[%s1 + $0x5d0] sm:$0xff]
    %v330 = vld [vmem:[%s1 + $0x5d8] sm:$0xff]
    %v331 = vld [vmem:[%s1 + $0x5e0] sm:$0xff]
    %v332 = vld [vmem:[%s1 + $0x5e8] sm:$0xff]
    %v333 = vld [vmem:[%s1 + $0x5f0] sm:$0xff]
    %v334 = vld [vmem:[%s1 + $0x5f8] sm:$0xff]
    %v335 = vld [vmem:[%s1 + $0x600] sm:$0xff]
    %v336 = vld [vmem:[%s1 + $0x608] sm:$0xff]
    %v337 = vld [vmem:[%s1 + $0x610] sm:$0xff]
    %v338 = vld [vmem:[%s1 + $0x618] sm:$0xff]
    %v339 = vld [vmem:[%s1 + $0x620] sm:$0xff]
    %v340 = vld [vmem:[%s1 + $0x628] sm:$0xff]
    %v341 = vld [vmem:[%s1 + $0x630] sm:$0xff]
    %v342 = vld [vmem:[%s1 + $0x638] sm:$0xff]
    %v343 = vld [vmem:[%s1 + $0x640] sm:$0xff]
    %v344 = vld [vmem:[%s1 + $0x648] sm:$0xff]
    %v345 = vld [vmem:[%s1 + $0x650] sm:$0xff]
    %v346 = vld [vmem:[%s1 + $0x658] sm:$0xff]
    %v347 = vld [vmem:[%s1 + $0x660] sm:$0xff]
    %v348 = vld [vmem:[%s1 + $0x668] sm:$0xff]
    %v349 = vld [vmem:[%s1 + $0x670] sm:$0xff]
    %v350 = vld [vmem:[%s1 + $0x678] sm:$0xff]
    %v351 = vld [vmem:[%s1 + $0x680] sm:$0xff]
    %v352 = vld [vmem:[%s1 + $0x688] sm:$0xff]
    %v353 = vld [vmem:[%s1 + $0x690] sm:$0xff]
    %v354 = vld [vmem:[%s1 + $0x698] sm:$0xff]
    %v355 = vld [vmem:[%s1 + $0x6a0] sm:$0xff]
    %v356 = vld [vmem:[%s1 + $0x6a8] sm:$0xff]
    %v357 = vld [vmem:[%s1 + $0x6b0] sm:$0xff]
    %v358 = vld [vmem:[%s1 + $0x6b8] sm:$0xff]
    %v359 = vld [vmem:[%s1 + $0x6c0] sm:$0xff]
    %v360 = vld [vmem:[%s1 + $0x6c8] sm:$0xff]
    %v361 = vld [vmem:[%s1 + $0x6d0] sm:$0xff]
    %v362 = vld [vmem:[%s1 + $0x6d8] sm:$0xff]
    %v363 = vld [vmem:[%s1 + $0x6e0] sm:$0xff]
    %v364 = vld [vmem:[%s1 + $0x6e8] sm:$0xff]
    %v365 = vld [vmem:[%s1 + $0x6f0] sm:$0xff]
    %v366 = vld [vmem:[%s1 + $0x6f8] sm:$0xff]
    %v367 = vld [vmem:[%s1 + $0x700] sm:$0xff]
    %v368 = vld [vmem:[%s1 + $0x708] sm:$0xff]
    %v369 = vld [vmem:[%s1 + $0x710] sm:$0xff]
    %v370 = vld [vmem:[%s1 + $0x718] sm:$0xff]
    %v371 = vld [vmem:[%s1 + $0x720] sm:$0xff]
    %v372 = vld [vmem:[%s1 + $0x728] sm:$0xff]
    %v373 = vld [vmem:[%s1 + $0x730] sm:$0xff]
    %v374 = vld [vmem:[%s1 + $0x738] sm:$0xff]
    %v375 = vld [vmem:[%s1 + $0x740] sm:$0xff]
    %v376 = vld [vmem:[%s1 + $0x748] sm:$0xff]
    %v377 = vld [vmem:[%s1 + $0x750] sm:$0xff]
    %v378 = vld [vmem:[%s1 + $0x758] sm:$0xff]
    %v379 = vld [vmem:[%s1 + $0x760] sm:$0xff]
    %v380 = vld [vmem:[%s1 + $0x768] sm:$0xff]
    %v381 = vld [vmem:[%s1 + $0x770] sm:$0xff]
    %v382 = vld [vmem:[%s1 + $0x778] sm:$0xff]
    %v383 = vld [vmem:[%s1 + $0x780] sm:$0xff]
    %v384 = vld [vmem:[%s1 + $0x788] sm:$0xff]
    %v385 = vld [vmem:[%s1 + $0x790] sm:$0xff]
    %v386 = vld [vmem:[%s1 + $0x798] sm:$0xff]
    %v387 = vld [vmem:[%s1 + $0x7a0] sm:$0xff]
    %v388 = vld [vmem:[%s1 + $0x7a8] sm:$0xff]
    %v389 = vld [vmem:[%s1 + $0x7b0] sm:$0xff]
    %v390 = vld [vmem:[%s1 + $0x7b8] sm:$0xff]
    %v391 = vld [vmem:[%s1 + $0x7c0] sm:$0xff]
    %v392 = vld [vmem:[%s1 + $0x7c8] sm:$0xff]
    %v393 = vld [vmem:[%s1 + $0x7d0] sm:$0xff]
    %v394 = vld [vmem:[%s1 + $0x7d8] sm:$0xff]
    %v395 = vld [vmem:[%s1 + $0x7e0] sm:$0xff]
    %v396 = vld [vmem:[%s1 + $0x7e8] sm:$0xff]
    %v397 = vld [vmem:[%s1 + $0x7f0] sm:$0xff]
    %v398 = vld [vmem:[%s1 + $0x7f8] sm:$0xff]
    %v399 = vld [vmem:[%s11] ss:$8 sm:$0xf]
    %v400 = vld [vmem:[%s11] ss:$8 sm:$0xf0]
    %v401 = vor.u32 %v399, %v400
    %v403 = vperm.slane %v401, 0
    %v404 = vperm.slane %v401, 1
    %v405 = vperm.slane %v401, 2
    %v406 = vperm.slane %v401, 3
    %v407 = vperm.slane %v401, 4
    %v408 = vperm.slane %v401, 5
    %v409 = vperm.slane %v401, 6
    %v410 = vperm.slane %v401, 7
    %419 = vmatpush.msra.mxu0 %v263
    %420 = vmatpush.msra.mxu0 %v255
    %421 = vmatpush.msra.mxu0 %v247
    %422 = vmatpush.msra.mxu0 %v239
    %423 = vmatpush.msra.mxu0 %v231
    %424 = vmatpush.msra.mxu0 %v223
    %425 = vmatpush.msra.mxu0 %v215
    %426 = vmatpush.msra.mxu0 %v207
    %427 = vmatpush.msra.mxu0 %v199
    %428 = vmatpush.msra.mxu0 %v191
    %429 = vmatpush.msra.mxu0 %v183
    %430 = vmatpush.msra.mxu0 %v175
    %431 = vmatpush.msra.mxu0 %v167
    %432 = vmatpush.msra.mxu0 %v159
    %433 = vmatpush.msra.mxu0 %v151
    %434 = vmatpush.msra.mxu0 %v143
    %435 = vmatmul.f32.gmra.mxu0 %v135
    %v436 = vpop.f32.mrf.mxu0
    %v437 = vadd.f32 %v403, %v436
    %438 = vmatmul.f32.gmra.mxu0 %v137
    %v439 = vpop.f32.mrf.mxu0
    %v440 = vadd.f32 %v403, %v439
    %441 = vmatmul.f32.gmra.mxu0 %v139
    %v442 = vpop.f32.mrf.mxu0
    %v443 = vadd.f32 %v403, %v442
    %444 = vmatmul.f32.gmra.mxu0 %v141
    %v445 = vpop.f32.mrf.mxu0
    %v446 = vadd.f32 %v403, %v445
    %447 = vdwg.mxu0
    %448 = vmatpush.msra.mxu0 %v391
    %449 = vmatpush.msra.mxu0 %v383
    %450 = vmatpush.msra.mxu0 %v375
    %451 = vmatpush.msra.mxu0 %v367
    %452 = vmatpush.msra.mxu0 %v359
    %453 = vmatpush.msra.mxu0 %v351
    %454 = vmatpush.msra.mxu0 %v343
    %455 = vmatpush.msra.mxu0 %v335
    %456 = vmatpush.msra.mxu0 %v327
    %457 = vmatpush.msra.mxu0 %v319
    %458 = vmatpush.msra.mxu0 %v311
    %459 = vmatpush.msra.mxu0 %v303
    %460 = vmatpush.msra.mxu0 %v295
    %461 = vmatpush.msra.mxu0 %v287
    %462 = vmatpush.msra.mxu0 %v279
    %463 = vmatpush.msra.mxu0 %v271
    %464 = vmatmul.f32.gmra.mxu0 %v136
    %v465 = vpop.f32.mrf.mxu0
    %v466 = vadd.f32 %v437, %v465
    %467 = vmatmul.f32.gmra.mxu0 %v138
    %v468 = vpop.f32.mrf.mxu0
    %v469 = vadd.f32 %v440, %v468
    %470 = vmatmul.f32.gmra.mxu0 %v140
    %v471 = vpop.f32.mrf.mxu0
    %v472 = vadd.f32 %v443, %v471
    %473 = vmatmul.f32.gmra.mxu0 %v142
    %v474 = vpop.f32.mrf.mxu0
    %v475 = vadd.f32 %v446, %v474
    %476 = vdwg.mxu0
    %477 = vmatpush.msra.mxu0 %v264
    %478 = vmatpush.msra.mxu0 %v256
    %479 = vmatpush.msra.mxu0 %v248
    %480 = vmatpush.msra.mxu0 %v240
    %481 = vmatpush.msra.mxu0 %v232
    %482 = vmatpush.msra.mxu0 %v224
    %483 = vmatpush.msra.mxu0 %v216
    %484 = vmatpush.msra.mxu0 %v208
    %485 = vmatpush.msra.mxu0 %v200
    %486 = vmatpush.msra.mxu0 %v192
    %487 = vmatpush.msra.mxu0 %v184
    %488 = vmatpush.msra.mxu0 %v176
    %489 = vmatpush.msra.mxu0 %v168
    %490 = vmatpush.msra.mxu0 %v160
    %491 = vmatpush.msra.mxu0 %v152
    %492 = vmatpush.msra.mxu0 %v144
    %493 = vmatmul.f32.gmra.mxu0 %v135
    %v494 = vpop.f32.mrf.mxu0
    %v495 = vadd.f32 %v404, %v494
    %496 = vmatmul.f32.gmra.mxu0 %v137
    %v497 = vpop.f32.mrf.mxu0
    %v498 = vadd.f32 %v404, %v497
    %499 = vmatmul.f32.gmra.mxu0 %v139
    %v500 = vpop.f32.mrf.mxu0
    %v501 = vadd.f32 %v404, %v500
    %502 = vmatmul.f32.gmra.mxu0 %v141
    %v503 = vpop.f32.mrf.mxu0
    %v504 = vadd.f32 %v404, %v503
    %505 = vdwg.mxu0
    %506 = vmatpush.msra.mxu0 %v392
    %507 = vmatpush.msra.mxu0 %v384
    %508 = vmatpush.msra.mxu0 %v376
    %509 = vmatpush.msra.mxu0 %v368
    %510 = vmatpush.msra.mxu0 %v360
    %511 = vmatpush.msra.mxu0 %v352
    %512 = vmatpush.msra.mxu0 %v344
    %513 = vmatpush.msra.mxu0 %v336
    %514 = vmatpush.msra.mxu0 %v328
    %515 = vmatpush.msra.mxu0 %v320
    %516 = vmatpush.msra.mxu0 %v312
    %517 = vmatpush.msra.mxu0 %v304
    %518 = vmatpush.msra.mxu0 %v296
    %519 = vmatpush.msra.mxu0 %v288
    %520 = vmatpush.msra.mxu0 %v280
    %521 = vmatpush.msra.mxu0 %v272
    %522 = vmatmul.f32.gmra.mxu0 %v136
    %v523 = vpop.f32.mrf.mxu0
    %v524 = vadd.f32 %v495, %v523
    %525 = vmatmul.f32.gmra.mxu0 %v138
    %v526 = vpop.f32.mrf.mxu0
    %v527 = vadd.f32 %v498, %v526
    %528 = vmatmul.f32.gmra.mxu0 %v140
    %v529 = vpop.f32.mrf.mxu0
    %v530 = vadd.f32 %v501, %v529
    %531 = vmatmul.f32.gmra.mxu0 %v142
    %v532 = vpop.f32.mrf.mxu0
    %v533 = vadd.f32 %v504, %v532
    %534 = vdwg.mxu0
    %535 = vmatpush.msra.mxu0 %v265
    %536 = vmatpush.msra.mxu0 %v257
    %537 = vmatpush.msra.mxu0 %v249
    %538 = vmatpush.msra.mxu0 %v241
    %539 = vmatpush.msra.mxu0 %v233
    %540 = vmatpush.msra.mxu0 %v225
    %541 = vmatpush.msra.mxu0 %v217
    %542 = vmatpush.msra.mxu0 %v209
    %543 = vmatpush.msra.mxu0 %v201
    %544 = vmatpush.msra.mxu0 %v193
    %545 = vmatpush.msra.mxu0 %v185
    %546 = vmatpush.msra.mxu0 %v177
    %547 = vmatpush.msra.mxu0 %v169
    %548 = vmatpush.msra.mxu0 %v161
    %549 = vmatpush.msra.mxu0 %v153
    %550 = vmatpush.msra.mxu0 %v145
    %551 = vmatmul.f32.gmra.mxu0 %v135
    %v552 = vpop.f32.mrf.mxu0
    %v553 = vadd.f32 %v405, %v552
    %554 = vmatmul.f32.gmra.mxu0 %v137
    %v555 = vpop.f32.mrf.mxu0
    %v556 = vadd.f32 %v405, %v555
    %557 = vmatmul.f32.gmra.mxu0 %v139
    %v558 = vpop.f32.mrf.mxu0
    %v559 = vadd.f32 %v405, %v558
    %560 = vmatmul.f32.gmra.mxu0 %v141
    %v561 = vpop.f32.mrf.mxu0
    %v562 = vadd.f32 %v405, %v561
    %563 = vdwg.mxu0
    %564 = vmatpush.msra.mxu0 %v393
    %565 = vmatpush.msra.mxu0 %v385
    %566 = vmatpush.msra.mxu0 %v377
    %567 = vmatpush.msra.mxu0 %v369
    %568 = vmatpush.msra.mxu0 %v361
    %569 = vmatpush.msra.mxu0 %v353
    %570 = vmatpush.msra.mxu0 %v345
    %571 = vmatpush.msra.mxu0 %v337
    %572 = vmatpush.msra.mxu0 %v329
    %573 = vmatpush.msra.mxu0 %v321
    %574 = vmatpush.msra.mxu0 %v313
    %575 = vmatpush.msra.mxu0 %v305
    %576 = vmatpush.msra.mxu0 %v297
    %577 = vmatpush.msra.mxu0 %v289
    %578 = vmatpush.msra.mxu0 %v281
    %579 = vmatpush.msra.mxu0 %v273
    %580 = vmatmul.f32.gmra.mxu0 %v136
    %v581 = vpop.f32.mrf.mxu0
    %v582 = vadd.f32 %v553, %v581
    %583 = vmatmul.f32.gmra.mxu0 %v138
    %v584 = vpop.f32.mrf.mxu0
    %v585 = vadd.f32 %v556, %v584
    %586 = vmatmul.f32.gmra.mxu0 %v140
    %v587 = vpop.f32.mrf.mxu0
    %v588 = vadd.f32 %v559, %v587
    %589 = vmatmul.f32.gmra.mxu0 %v142
    %v590 = vpop.f32.mrf.mxu0
    %v591 = vadd.f32 %v562, %v590
    %592 = vdwg.mxu0
    %593 = vmatpush.msra.mxu0 %v266
    %594 = vmatpush.msra.mxu0 %v258
    %595 = vmatpush.msra.mxu0 %v250
    %596 = vmatpush.msra.mxu0 %v242
    %597 = vmatpush.msra.mxu0 %v234
    %598 = vmatpush.msra.mxu0 %v226
    %599 = vmatpush.msra.mxu0 %v218
    %600 = vmatpush.msra.mxu0 %v210
    %601 = vmatpush.msra.mxu0 %v202
    %602 = vmatpush.msra.mxu0 %v194
    %603 = vmatpush.msra.mxu0 %v186
    %604 = vmatpush.msra.mxu0 %v178
    %605 = vmatpush.msra.mxu0 %v170
    %606 = vmatpush.msra.mxu0 %v162
    %607 = vmatpush.msra.mxu0 %v154
    %608 = vmatpush.msra.mxu0 %v146
    %609 = vmatmul.f32.gmra.mxu0 %v135
    %v610 = vpop.f32.mrf.mxu0
    %v611 = vadd.f32 %v406, %v610
    %612 = vmatmul.f32.gmra.mxu0 %v137
    %v613 = vpop.f32.mrf.mxu0
    %v614 = vadd.f32 %v406, %v613
    %615 = vmatmul.f32.gmra.mxu0 %v139
    %v616 = vpop.f32.mrf.mxu0
    %v617 = vadd.f32 %v406, %v616
    %618 = vmatmul.f32.gmra.mxu0 %v141
    %v619 = vpop.f32.mrf.mxu0
    %v620 = vadd.f32 %v406, %v619
    %621 = vdwg.mxu0
    %622 = vmatpush.msra.mxu0 %v394
    %623 = vmatpush.msra.mxu0 %v386
    %624 = vmatpush.msra.mxu0 %v378
    %625 = vmatpush.msra.mxu0 %v370
    %626 = vmatpush.msra.mxu0 %v362
    %627 = vmatpush.msra.mxu0 %v354
    %628 = vmatpush.msra.mxu0 %v346
    %629 = vmatpush.msra.mxu0 %v338
    %630 = vmatpush.msra.mxu0 %v330
    %631 = vmatpush.msra.mxu0 %v322
    %632 = vmatpush.msra.mxu0 %v314
    %633 = vmatpush.msra.mxu0 %v306
    %634 = vmatpush.msra.mxu0 %v298
    %635 = vmatpush.msra.mxu0 %v290
    %636 = vmatpush.msra.mxu0 %v282
    %637 = vmatpush.msra.mxu0 %v274
    %638 = vmatmul.f32.gmra.mxu0 %v136
    %v639 = vpop.f32.mrf.mxu0
    %v640 = vadd.f32 %v611, %v639
    %641 = vmatmul.f32.gmra.mxu0 %v138
    %v642 = vpop.f32.mrf.mxu0
    %v643 = vadd.f32 %v614, %v642
    %644 = vmatmul.f32.gmra.mxu0 %v140
    %v645 = vpop.f32.mrf.mxu0
    %v646 = vadd.f32 %v617, %v645
    %647 = vmatmul.f32.gmra.mxu0 %v142
    %v648 = vpop.f32.mrf.mxu0
    %v649 = vadd.f32 %v620, %v648
    %650 = vdwg.mxu0
    %651 = vmatpush.msra.mxu0 %v267
    %652 = vmatpush.msra.mxu0 %v259
    %653 = vmatpush.msra.mxu0 %v251
    %654 = vmatpush.msra.mxu0 %v243
    %655 = vmatpush.msra.mxu0 %v235
    %656 = vmatpush.msra.mxu0 %v227
    %657 = vmatpush.msra.mxu0 %v219
    %658 = vmatpush.msra.mxu0 %v211
    %659 = vmatpush.msra.mxu0 %v203
    %660 = vmatpush.msra.mxu0 %v195
    %661 = vmatpush.msra.mxu0 %v187
    %662 = vmatpush.msra.mxu0 %v179
    %663 = vmatpush.msra.mxu0 %v171
    %664 = vmatpush.msra.mxu0 %v163
    %665 = vmatpush.msra.mxu0 %v155
    %666 = vmatpush.msra.mxu0 %v147
    %667 = vmatmul.f32.gmra.mxu0 %v135
    %v668 = vpop.f32.mrf.mxu0
    %v669 = vadd.f32 %v407, %v668
    %670 = vmatmul.f32.gmra.mxu0 %v137
    %v671 = vpop.f32.mrf.mxu0
    %v672 = vadd.f32 %v407, %v671
    %673 = vmatmul.f32.gmra.mxu0 %v139
    %v674 = vpop.f32.mrf.mxu0
    %v675 = vadd.f32 %v407, %v674
    %676 = vmatmul.f32.gmra.mxu0 %v141
    %v677 = vpop.f32.mrf.mxu0
    %v678 = vadd.f32 %v407, %v677
    %679 = vdwg.mxu0
    %680 = vmatpush.msra.mxu0 %v395
    %681 = vmatpush.msra.mxu0 %v387
    %682 = vmatpush.msra.mxu0 %v379
    %683 = vmatpush.msra.mxu0 %v371
    %684 = vmatpush.msra.mxu0 %v363
    %685 = vmatpush.msra.mxu0 %v355
    %686 = vmatpush.msra.mxu0 %v347
    %687 = vmatpush.msra.mxu0 %v339
    %688 = vmatpush.msra.mxu0 %v331
    %689 = vmatpush.msra.mxu0 %v323
    %690 = vmatpush.msra.mxu0 %v315
    %691 = vmatpush.msra.mxu0 %v307
    %692 = vmatpush.msra.mxu0 %v299
    %693 = vmatpush.msra.mxu0 %v291
    %694 = vmatpush.msra.mxu0 %v283
    %695 = vmatpush.msra.mxu0 %v275
    %696 = vmatmul.f32.gmra.mxu0 %v136
    %v697 = vpop.f32.mrf.mxu0
    %v698 = vadd.f32 %v669, %v697
    %699 = vmatmul.f32.gmra.mxu0 %v138
    %v700 = vpop.f32.mrf.mxu0
    %v701 = vadd.f32 %v672, %v700
    %702 = vmatmul.f32.gmra.mxu0 %v140
    %v703 = vpop.f32.mrf.mxu0
    %v704 = vadd.f32 %v675, %v703
    %705 = vmatmul.f32.gmra.mxu0 %v142
    %v706 = vpop.f32.mrf.mxu0
    %v707 = vadd.f32 %v678, %v706
    %708 = vdwg.mxu0
    %709 = vmatpush.msra.mxu0 %v268
    %710 = vmatpush.msra.mxu0 %v260
    %711 = vmatpush.msra.mxu0 %v252
    %712 = vmatpush.msra.mxu0 %v244
    %713 = vmatpush.msra.mxu0 %v236
    %714 = vmatpush.msra.mxu0 %v228
    %715 = vmatpush.msra.mxu0 %v220
    %716 = vmatpush.msra.mxu0 %v212
    %717 = vmatpush.msra.mxu0 %v204
    %718 = vmatpush.msra.mxu0 %v196
    %719 = vmatpush.msra.mxu0 %v188
    %720 = vmatpush.msra.mxu0 %v180
    %721 = vmatpush.msra.mxu0 %v172
    %722 = vmatpush.msra.mxu0 %v164
    %723 = vmatpush.msra.mxu0 %v156
    %724 = vmatpush.msra.mxu0 %v148
    %725 = vmatmul.f32.gmra.mxu0 %v135
    %v726 = vpop.f32.mrf.mxu0
    %v727 = vadd.f32 %v408, %v726
    %728 = vmatmul.f32.gmra.mxu0 %v137
    %v729 = vpop.f32.mrf.mxu0
    %v730 = vadd.f32 %v408, %v729
    %731 = vmatmul.f32.gmra.mxu0 %v139
    %v732 = vpop.f32.mrf.mxu0
    %v733 = vadd.f32 %v408, %v732
    %734 = vmatmul.f32.gmra.mxu0 %v141
    %v735 = vpop.f32.mrf.mxu0
    %v736 = vadd.f32 %v408, %v735
    %737 = vdwg.mxu0
    %738 = vmatpush.msra.mxu0 %v396
    %739 = vmatpush.msra.mxu0 %v388
    %740 = vmatpush.msra.mxu0 %v380
    %741 = vmatpush.msra.mxu0 %v372
    %742 = vmatpush.msra.mxu0 %v364
    %743 = vmatpush.msra.mxu0 %v356
    %744 = vmatpush.msra.mxu0 %v348
    %745 = vmatpush.msra.mxu0 %v340
    %746 = vmatpush.msra.mxu0 %v332
    %747 = vmatpush.msra.mxu0 %v324
    %748 = vmatpush.msra.mxu0 %v316
    %749 = vmatpush.msra.mxu0 %v308
    %750 = vmatpush.msra.mxu0 %v300
    %751 = vmatpush.msra.mxu0 %v292
    %752 = vmatpush.msra.mxu0 %v284
    %753 = vmatpush.msra.mxu0 %v276
    %754 = vmatmul.f32.gmra.mxu0 %v136
    %v755 = vpop.f32.mrf.mxu0
    %v756 = vadd.f32 %v727, %v755
    %757 = vmatmul.f32.gmra.mxu0 %v138
    %v758 = vpop.f32.mrf.mxu0
    %v759 = vadd.f32 %v730, %v758
    %760 = vmatmul.f32.gmra.mxu0 %v140
    %v761 = vpop.f32.mrf.mxu0
    %v762 = vadd.f32 %v733, %v761
    %763 = vmatmul.f32.gmra.mxu0 %v142
    %v764 = vpop.f32.mrf.mxu0
    %v765 = vadd.f32 %v736, %v764
    %766 = vdwg.mxu0
    %767 = vmatpush.msra.mxu0 %v269
    %768 = vmatpush.msra.mxu0 %v261
    %769 = vmatpush.msra.mxu0 %v253
    %770 = vmatpush.msra.mxu0 %v245
    %771 = vmatpush.msra.mxu0 %v237
    %772 = vmatpush.msra.mxu0 %v229
    %773 = vmatpush.msra.mxu0 %v221
    %774 = vmatpush.msra.mxu0 %v213
    %775 = vmatpush.msra.mxu0 %v205
    %776 = vmatpush.msra.mxu0 %v197
    %777 = vmatpush.msra.mxu0 %v189
    %778 = vmatpush.msra.mxu0 %v181
    %779 = vmatpush.msra.mxu0 %v173
    %780 = vmatpush.msra.mxu0 %v165
    %781 = vmatpush.msra.mxu0 %v157
    %782 = vmatpush.msra.mxu0 %v149
    %783 = vmatmul.f32.gmra.mxu0 %v135
    %v784 = vpop.f32.mrf.mxu0
    %v785 = vadd.f32 %v409, %v784
    %786 = vmatmul.f32.gmra.mxu0 %v137
    %v787 = vpop.f32.mrf.mxu0
    %v788 = vadd.f32 %v409, %v787
    %789 = vmatmul.f32.gmra.mxu0 %v139
    %v790 = vpop.f32.mrf.mxu0
    %v791 = vadd.f32 %v409, %v790
    %792 = vmatmul.f32.gmra.mxu0 %v141
    %v793 = vpop.f32.mrf.mxu0
    %v794 = vadd.f32 %v409, %v793
    %795 = vdwg.mxu0
    %796 = vmatpush.msra.mxu0 %v397
    %797 = vmatpush.msra.mxu0 %v389
    %798 = vmatpush.msra.mxu0 %v381
    %799 = vmatpush.msra.mxu0 %v373
    %800 = vmatpush.msra.mxu0 %v365
    %801 = vmatpush.msra.mxu0 %v357
    %802 = vmatpush.msra.mxu0 %v349
    %803 = vmatpush.msra.mxu0 %v341
    %804 = vmatpush.msra.mxu0 %v333
    %805 = vmatpush.msra.mxu0 %v325
    %806 = vmatpush.msra.mxu0 %v317
    %807 = vmatpush.msra.mxu0 %v309
    %808 = vmatpush.msra.mxu0 %v301
    %809 = vmatpush.msra.mxu0 %v293
    %810 = vmatpush.msra.mxu0 %v285
    %811 = vmatpush.msra.mxu0 %v277
    %812 = vmatmul.f32.gmra.mxu0 %v136
    %v813 = vpop.f32.mrf.mxu0
    %v814 = vadd.f32 %v785, %v813
    %815 = vmatmul.f32.gmra.mxu0 %v138
    %v816 = vpop.f32.mrf.mxu0
    %v817 = vadd.f32 %v788, %v816
    %818 = vmatmul.f32.gmra.mxu0 %v140
    %v819 = vpop.f32.mrf.mxu0
    %v820 = vadd.f32 %v791, %v819
    %821 = vmatmul.f32.gmra.mxu0 %v142
    %v822 = vpop.f32.mrf.mxu0
    %v823 = vadd.f32 %v794, %v822
    %824 = vdwg.mxu0
    %825 = vmatpush.msra.mxu0 %v270
    %826 = vmatpush.msra.mxu0 %v262
    %827 = vmatpush.msra.mxu0 %v254
    %828 = vmatpush.msra.mxu0 %v246
    %829 = vmatpush.msra.mxu0 %v238
    %830 = vmatpush.msra.mxu0 %v230
    %831 = vmatpush.msra.mxu0 %v222
    %832 = vmatpush.msra.mxu0 %v214
    %833 = vmatpush.msra.mxu0 %v206
    %834 = vmatpush.msra.mxu0 %v198
    %835 = vmatpush.msra.mxu0 %v190
    %836 = vmatpush.msra.mxu0 %v182
    %837 = vmatpush.msra.mxu0 %v174
    %838 = vmatpush.msra.mxu0 %v166
    %839 = vmatpush.msra.mxu0 %v158
    %840 = vmatpush.msra.mxu0 %v150
    %841 = vmatmul.f32.gmra.mxu0 %v135
    %v842 = vpop.f32.mrf.mxu0
    %v843 = vadd.f32 %v410, %v842
    %844 = vmatmul.f32.gmra.mxu0 %v137
    %v845 = vpop.f32.mrf.mxu0
    %v846 = vadd.f32 %v410, %v845
    %847 = vmatmul.f32.gmra.mxu0 %v139
    %v848 = vpop.f32.mrf.mxu0
    %v849 = vadd.f32 %v410, %v848
    %850 = vmatmul.f32.gmra.mxu0 %v141
    %v851 = vpop.f32.mrf.mxu0
    %v852 = vadd.f32 %v410, %v851
    %853 = vdwg.mxu0
    %854 = vmatpush.msra.mxu0 %v398
    %855 = vmatpush.msra.mxu0 %v390
    %856 = vmatpush.msra.mxu0 %v382
    %857 = vmatpush.msra.mxu0 %v374
    %858 = vmatpush.msra.mxu0 %v366
    %859 = vmatpush.msra.mxu0 %v358
    %860 = vmatpush.msra.mxu0 %v350
    %861 = vmatpush.msra.mxu0 %v342
    %862 = vmatpush.msra.mxu0 %v334
    %863 = vmatpush.msra.mxu0 %v326
    %864 = vmatpush.msra.mxu0 %v318
    %865 = vmatpush.msra.mxu0 %v310
    %866 = vmatpush.msra.mxu0 %v302
    %867 = vmatpush.msra.mxu0 %v294
    %868 = vmatpush.msra.mxu0 %v286
    %869 = vmatpush.msra.mxu0 %v278
    %870 = vmatmul.f32.gmra.mxu0 %v136
    %v871 = vpop.f32.mrf.mxu0
    %v872 = vadd.f32 %v843, %v871
    %873 = vmatmul.f32.gmra.mxu0 %v138
    %v874 = vpop.f32.mrf.mxu0
    %v875 = vadd.f32 %v846, %v874
    %876 = vmatmul.f32.gmra.mxu0 %v140
    %v877 = vpop.f32.mrf.mxu0
    %v878 = vadd.f32 %v849, %v877
    %879 = vmatmul.f32.gmra.mxu0 %v142
    %v880 = vpop.f32.mrf.mxu0
    %v881 = vadd.f32 %v852, %v880
    %882 = vdwg.mxu0
    %v883 = vmax.f32 %v466, 0.0
    %v884 = vmax.f32 %v524, 0.0
    %v885 = vmax.f32 %v582, 0.0
    %v886 = vmax.f32 %v640, 0.0
    %v887 = vmax.f32 %v698, 0.0
    %v888 = vmax.f32 %v756, 0.0
    %v889 = vmax.f32 %v814, 0.0
    %v890 = vmax.f32 %v872, 0.0
    %v891 = vmax.f32 %v469, 0.0
    %v892 = vmax.f32 %v527, 0.0
    %v893 = vmax.f32 %v585, 0.0
    %v894 = vmax.f32 %v643, 0.0
    %v895 = vmax.f32 %v701, 0.0
    %v896 = vmax.f32 %v759, 0.0
    %v897 = vmax.f32 %v817, 0.0
    %v898 = vmax.f32 %v875, 0.0
    %v899 = vmax.f32 %v472, 0.0
    %v900 = vmax.f32 %v530, 0.0
    %v901 = vmax.f32 %v588, 0.0
    %v902 = vmax.f32 %v646, 0.0
    %v903 = vmax.f32 %v704, 0.0
    %v904 = vmax.f32 %v762, 0.0
    %v905 = vmax.f32 %v820, 0.0
    %v906 = vmax.f32 %v878, 0.0
    %v907 = vmax.f32 %v475, 0.0
    %v908 = vmax.f32 %v533, 0.0
    %v909 = vmax.f32 %v591, 0.0
    %v910 = vmax.f32 %v649, 0.0
    %v911 = vmax.f32 %v707, 0.0
    %v912 = vmax.f32 %v765, 0.0
    %v913 = vmax.f32 %v823, 0.0
    %v914 = vmax.f32 %v881, 0.0
    %915 = vst [vmem:[#allocation2] sm:$0xff] %v883
    %916 = vst [vmem:[#allocation2 + $0x8] sm:$0xff] %v884
    %917 = vst [vmem:[#allocation2 + $0x10] sm:$0xff] %v885
    %918 = vst [vmem:[#allocation2 + $0x18] sm:$0xff] %v886
    %919 = vst [vmem:[#allocation2 + $0x20] sm:$0xff] %v887
    %920 = vst [vmem:[#allocation2 + $0x28] sm:$0xff] %v888
    %921 = vst [vmem:[#allocation2 + $0x30] sm:$0xff] %v889
    %922 = vst [vmem:[#allocation2 + $0x38] sm:$0xff] %v890
    %923 = vst [vmem:[#allocation2 + $0x40] sm:$0xff] %v891
    %924 = vst [vmem:[#allocation2 + $0x48] sm:$0xff] %v892
    %925 = vst [vmem:[#allocation2 + $0x50] sm:$0xff] %v893
    %926 = vst [vmem:[#allocation2 + $0x58] sm:$0xff] %v894
    %927 = vst [vmem:[#allocation2 + $0x60] sm:$0xff] %v895
    %928 = vst [vmem:[#allocation2 + $0x68] sm:$0xff] %v896
    %929 = vst [vmem:[#allocation2 + $0x70] sm:$0xff] %v897
    %930 = vst [vmem:[#allocation2 + $0x78] sm:$0xff] %v898
    %931 = vst [vmem:[#allocation2 + $0x80] sm:$0xff] %v899
    %932 = vst [vmem:[#allocation2 + $0x88] sm:$0xff] %v900
    %933 = vst [vmem:[#allocation2 + $0x90] sm:$0xff] %v901
    %934 = vst [vmem:[#allocation2 + $0x98] sm:$0xff] %v902
    %935 = vst [vmem:[#allocation2 + $0xa0] sm:$0xff] %v903
    %936 = vst [vmem:[#allocation2 + $0xa8] sm:$0xff] %v904
    %937 = vst [vmem:[#allocation2 + $0xb0] sm:$0xff] %v905
    %938 = vst [vmem:[#allocation2 + $0xb8] sm:$0xff] %v906
    %939 = vst [vmem:[#allocation2 + $0xc0] sm:$0xff] %v907
    %940 = vst [vmem:[#allocation2 + $0xc8] sm:$0xff] %v908
    %941 = vst [vmem:[#allocation2 + $0xd0] sm:$0xff] %v909
    %942 = vst [vmem:[#allocation2 + $0xd8] sm:$0xff] %v910
    %943 = vst [vmem:[#allocation2 + $0xe0] sm:$0xff] %v911
    %944 = vst [vmem:[#allocation2 + $0xe8] sm:$0xff] %v912
    %945 = vst [vmem:[#allocation2 + $0xf0] sm:$0xff] %v913
    %946 = vst [vmem:[#allocation2 + $0xf8] sm:$0xff] %v914
    %v947 = vld [vmem:[#allocation2] sm:$0xff]
    %v948 = vld [vmem:[#allocation2 + $0x8] sm:$0xff]
    %v949 = vld [vmem:[#allocation2 + $0x10] sm:$0xff]
    %v950 = vld [vmem:[#allocation2 + $0x18] sm:$0xff]
    %v951 = vld [vmem:[#allocation2 + $0x20] sm:$0xff]
    %v952 = vld [vmem:[#allocation2 + $0x28] sm:$0xff]
    %v953 = vld [vmem:[#allocation2 + $0x30] sm:$0xff]
    %v954 = vld [vmem:[#allocation2 + $0x38] sm:$0xff]
    %v955 = vld [vmem:[#allocation2 + $0x40] sm:$0xff]
    %v956 = vld [vmem:[#allocation2 + $0x48] sm:$0xff]
    %v957 = vld [vmem:[#allocation2 + $0x50] sm:$0xff]
    %v958 = vld [vmem:[#allocation2 + $0x58] sm:$0xff]
    %v959 = vld [vmem:[#allocation2 + $0x60] sm:$0xff]
    %v960 = vld [vmem:[#allocation2 + $0x68] sm:$0xff]
    %v961 = vld [vmem:[#allocation2 + $0x70] sm:$0xff]
    %v962 = vld [vmem:[#allocation2 + $0x78] sm:$0xff]
    %v963 = vld [vmem:[#allocation2 + $0x80] sm:$0xff]
    %v964 = vld [vmem:[#allocation2 + $0x88] sm:$0xff]
    %v965 = vld [vmem:[#allocation2 + $0x90] sm:$0xff]
    %v966 = vld [vmem:[#allocation2 + $0x98] sm:$0xff]
    %v967 = vld [vmem:[#allocation2 + $0xa0] sm:$0xff]
    %v968 = vld [vmem:[#allocation2 + $0xa8] sm:$0xff]
    %v969 = vld [vmem:[#allocation2 + $0xb0] sm:$0xff]
    %v970 = vld [vmem:[#allocation2 + $0xb8] sm:$0xff]
    %v971 = vld [vmem:[#allocation2 + $0xc0] sm:$0xff]
    %v972 = vld [vmem:[#allocation2 + $0xc8] sm:$0xff]
    %v973 = vld [vmem:[#allocation2 + $0xd0] sm:$0xff]
    %v974 = vld [vmem:[#allocation2 + $0xd8] sm:$0xff]
    %v975 = vld [vmem:[#allocation2 + $0xe0] sm:$0xff]
    %v976 = vld [vmem:[#allocation2 + $0xe8] sm:$0xff]
    %v977 = vld [vmem:[#allocation2 + $0xf0] sm:$0xff]
    %v978 = vld [vmem:[#allocation2 + $0xf8] sm:$0xff]
    %v979 = vld [vmem:[%s2] sm:$0xff]
    %v980 = vld [vmem:[%s2 + $0x8] sm:$0xff]
    %v981 = vld [vmem:[%s2 + $0x10] sm:$0xff]
    %v982 = vld [vmem:[%s2 + $0x18] sm:$0xff]
    %v983 = vld [vmem:[%s2 + $0x20] sm:$0xff]
    %v984 = vld [vmem:[%s2 + $0x28] sm:$0xff]
    %v985 = vld [vmem:[%s2 + $0x30] sm:$0xff]
    %v986 = vld [vmem:[%s2 + $0x38] sm:$0xff]
    %v987 = vld [vmem:[%s2 + $0x40] sm:$0xff]
    %v988 = vld [vmem:[%s2 + $0x48] sm:$0xff]
    %v989 = vld [vmem:[%s2 + $0x50] sm:$0xff]
    %v990 = vld [vmem:[%s2 + $0x58] sm:$0xff]
    %v991 = vld [vmem:[%s2 + $0x60] sm:$0xff]
    %v992 = vld [vmem:[%s2 + $0x68] sm:$0xff]
    %v993 = vld [vmem:[%s2 + $0x70] sm:$0xff]
    %v994 = vld [vmem:[%s2 + $0x78] sm:$0xff]
    %v995 = vld [vmem:[%s2 + $0x80] sm:$0xff]
    %v996 = vld [vmem:[%s2 + $0x88] sm:$0xff]
    %v997 = vld [vmem:[%s2 + $0x90] sm:$0xff]
    %v998 = vld [vmem:[%s2 + $0x98] sm:$0xff]
    %v999 = vld [vmem:[%s2 + $0xa0] sm:$0xff]
    %v1000 = vld [vmem:[%s2 + $0xa8] sm:$0xff]
    %v1001 = vld [vmem:[%s2 + $0xb0] sm:$0xff]
    %v1002 = vld [vmem:[%s2 + $0xb8] sm:$0xff]
    %v1003 = vld [vmem:[%s2 + $0xc0] sm:$0xff]
    %v1004 = vld [vmem:[%s2 + $0xc8] sm:$0xff]
    %v1005 = vld [vmem:[%s2 + $0xd0] sm:$0xff]
    %v1006 = vld [vmem:[%s2 + $0xd8] sm:$0xff]
    %v1007 = vld [vmem:[%s2 + $0xe0] sm:$0xff]
    %v1008 = vld [vmem:[%s2 + $0xe8] sm:$0xff]
    %v1009 = vld [vmem:[%s2 + $0xf0] sm:$0xff]
    %v1010 = vld [vmem:[%s2 + $0xf8] sm:$0xff]
    %v1011 = vld [vmem:[%s2 + $0x100] sm:$0xff]
    %v1012 = vld [vmem:[%s2 + $0x108] sm:$0xff]
    %v1013 = vld [vmem:[%s2 + $0x110] sm:$0xff]
    %v1014 = vld [vmem:[%s2 + $0x118] sm:$0xff]
    %v1015 = vld [vmem:[%s2 + $0x120] sm:$0xff]
    %v1016 = vld [vmem:[%s2 + $0x128] sm:$0xff]
    %v1017 = vld [vmem:[%s2 + $0x130] sm:$0xff]
    %v1018 = vld [vmem:[%s2 + $0x138] sm:$0xff]
    %v1019 = vld [vmem:[%s2 + $0x140] sm:$0xff]
    %v1020 = vld [vmem:[%s2 + $0x148] sm:$0xff]
    %v1021 = vld [vmem:[%s2 + $0x150] sm:$0xff]
    %v1022 = vld [vmem:[%s2 + $0x158] sm:$0xff]
    %v1023 = vld [vmem:[%s2 + $0x160] sm:$0xff]
    %v1024 = vld [vmem:[%s2 + $0x168] sm:$0xff]
    %v1025 = vld [vmem:[%s2 + $0x170] sm:$0xff]
    %v1026 = vld [vmem:[%s2 + $0x178] sm:$0xff]
    %v1027 = vld [vmem:[%s2 + $0x180] sm:$0xff]
    %v1028 = vld [vmem:[%s2 + $0x188] sm:$0xff]
    %v1029 = vld [vmem:[%s2 + $0x190] sm:$0xff]
    %v1030 = vld [vmem:[%s2 + $0x198] sm:$0xff]
    %v1031 = vld [vmem:[%s2 + $0x1a0] sm:$0xff]
    %v1032 = vld [vmem:[%s2 + $0x1a8] sm:$0xff]
    %v1033 = vld [vmem:[%s2 + $0x1b0] sm:$0xff]
    %v1034 = vld [vmem:[%s2 + $0x1b8] sm:$0xff]
    %v1035 = vld [vmem:[%s2 + $0x1c0] sm:$0xff]
    %v1036 = vld [vmem:[%s2 + $0x1c8] sm:$0xff]
    %v1037 = vld [vmem:[%s2 + $0x1d0] sm:$0xff]
    %v1038 = vld [vmem:[%s2 + $0x1d8] sm:$0xff]
    %v1039 = vld [vmem:[%s2 + $0x1e0] sm:$0xff]
    %v1040 = vld [vmem:[%s2 + $0x1e8] sm:$0xff]
    %v1041 = vld [vmem:[%s2 + $0x1f0] sm:$0xff]
    %v1042 = vld [vmem:[%s2 + $0x1f8] sm:$0xff]
    %v1043 = vld [vmem:[%s2 + $0x200] sm:$0xff]
    %v1044 = vld [vmem:[%s2 + $0x208] sm:$0xff]
    %v1045 = vld [vmem:[%s2 + $0x210] sm:$0xff]
    %v1046 = vld [vmem:[%s2 + $0x218] sm:$0xff]
    %v1047 = vld [vmem:[%s2 + $0x220] sm:$0xff]
    %v1048 = vld [vmem:[%s2 + $0x228] sm:$0xff]
    %v1049 = vld [vmem:[%s2 + $0x230] sm:$0xff]
    %v1050 = vld [vmem:[%s2 + $0x238] sm:$0xff]
    %v1051 = vld [vmem:[%s2 + $0x240] sm:$0xff]
    %v1052 = vld [vmem:[%s2 + $0x248] sm:$0xff]
    %v1053 = vld [vmem:[%s2 + $0x250] sm:$0xff]
    %v1054 = vld [vmem:[%s2 + $0x258] sm:$0xff]
    %v1055 = vld [vmem:[%s2 + $0x260] sm:$0xff]
    %v1056 = vld [vmem:[%s2 + $0x268] sm:$0xff]
    %v1057 = vld [vmem:[%s2 + $0x270] sm:$0xff]
    %v1058 = vld [vmem:[%s2 + $0x278] sm:$0xff]
    %v1059 = vld [vmem:[%s2 + $0x280] sm:$0xff]
    %v1060 = vld [vmem:[%s2 + $0x288] sm:$0xff]
    %v1061 = vld [vmem:[%s2 + $0x290] sm:$0xff]
    %v1062 = vld [vmem:[%s2 + $0x298] sm:$0xff]
    %v1063 = vld [vmem:[%s2 + $0x2a0] sm:$0xff]
    %v1064 = vld [vmem:[%s2 + $0x2a8] sm:$0xff]
    %v1065 = vld [vmem:[%s2 + $0x2b0] sm:$0xff]
    %v1066 = vld [vmem:[%s2 + $0x2b8] sm:$0xff]
    %v1067 = vld [vmem:[%s2 + $0x2c0] sm:$0xff]
    %v1068 = vld [vmem:[%s2 + $0x2c8] sm:$0xff]
    %v1069 = vld [vmem:[%s2 + $0x2d0] sm:$0xff]
    %v1070 = vld [vmem:[%s2 + $0x2d8] sm:$0xff]
    %v1071 = vld [vmem:[%s2 + $0x2e0] sm:$0xff]
    %v1072 = vld [vmem:[%s2 + $0x2e8] sm:$0xff]
    %v1073 = vld [vmem:[%s2 + $0x2f0] sm:$0xff]
    %v1074 = vld [vmem:[%s2 + $0x2f8] sm:$0xff]
    %v1075 = vld [vmem:[%s2 + $0x300] sm:$0xff]
    %v1076 = vld [vmem:[%s2 + $0x308] sm:$0xff]
    %v1077 = vld [vmem:[%s2 + $0x310] sm:$0xff]
    %v1078 = vld [vmem:[%s2 + $0x318] sm:$0xff]
    %v1079 = vld [vmem:[%s2 + $0x320] sm:$0xff]
    %v1080 = vld [vmem:[%s2 + $0x328] sm:$0xff]
    %v1081 = vld [vmem:[%s2 + $0x330] sm:$0xff]
    %v1082 = vld [vmem:[%s2 + $0x338] sm:$0xff]
    %v1083 = vld [vmem:[%s2 + $0x340] sm:$0xff]
    %v1084 = vld [vmem:[%s2 + $0x348] sm:$0xff]
    %v1085 = vld [vmem:[%s2 + $0x350] sm:$0xff]
    %v1086 = vld [vmem:[%s2 + $0x358] sm:$0xff]
    %v1087 = vld [vmem:[%s2 + $0x360] sm:$0xff]
    %v1088 = vld [vmem:[%s2 + $0x368] sm:$0xff]
    %v1089 = vld [vmem:[%s2 + $0x370] sm:$0xff]
    %v1090 = vld [vmem:[%s2 + $0x378] sm:$0xff]
    %v1091 = vld [vmem:[%s2 + $0x380] sm:$0xff]
    %v1092 = vld [vmem:[%s2 + $0x388] sm:$0xff]
    %v1093 = vld [vmem:[%s2 + $0x390] sm:$0xff]
    %v1094 = vld [vmem:[%s2 + $0x398] sm:$0xff]
    %v1095 = vld [vmem:[%s2 + $0x3a0] sm:$0xff]
    %v1096 = vld [vmem:[%s2 + $0x3a8] sm:$0xff]
    %v1097 = vld [vmem:[%s2 + $0x3b0] sm:$0xff]
    %v1098 = vld [vmem:[%s2 + $0x3b8] sm:$0xff]
    %v1099 = vld [vmem:[%s2 + $0x3c0] sm:$0xff]
    %v1100 = vld [vmem:[%s2 + $0x3c8] sm:$0xff]
    %v1101 = vld [vmem:[%s2 + $0x3d0] sm:$0xff]
    %v1102 = vld [vmem:[%s2 + $0x3d8] sm:$0xff]
    %v1103 = vld [vmem:[%s2 + $0x3e0] sm:$0xff]
    %v1104 = vld [vmem:[%s2 + $0x3e8] sm:$0xff]
    %v1105 = vld [vmem:[%s2 + $0x3f0] sm:$0xff]
    %v1106 = vld [vmem:[%s2 + $0x3f8] sm:$0xff]
    %v1107 = vld [vmem:[%s2 + $0x400] sm:$0xff]
    %v1108 = vld [vmem:[%s2 + $0x408] sm:$0xff]
    %v1109 = vld [vmem:[%s2 + $0x410] sm:$0xff]
    %v1110 = vld [vmem:[%s2 + $0x418] sm:$0xff]
    %v1111 = vld [vmem:[%s2 + $0x420] sm:$0xff]
    %v1112 = vld [vmem:[%s2 + $0x428] sm:$0xff]
    %v1113 = vld [vmem:[%s2 + $0x430] sm:$0xff]
    %v1114 = vld [vmem:[%s2 + $0x438] sm:$0xff]
    %v1115 = vld [vmem:[%s2 + $0x440] sm:$0xff]
    %v1116 = vld [vmem:[%s2 + $0x448] sm:$0xff]
    %v1117 = vld [vmem:[%s2 + $0x450] sm:$0xff]
    %v1118 = vld [vmem:[%s2 + $0x458] sm:$0xff]
    %v1119 = vld [vmem:[%s2 + $0x460] sm:$0xff]
    %v1120 = vld [vmem:[%s2 + $0x468] sm:$0xff]
    %v1121 = vld [vmem:[%s2 + $0x470] sm:$0xff]
    %v1122 = vld [vmem:[%s2 + $0x478] sm:$0xff]
    %v1123 = vld [vmem:[%s2 + $0x480] sm:$0xff]
    %v1124 = vld [vmem:[%s2 + $0x488] sm:$0xff]
    %v1125 = vld [vmem:[%s2 + $0x490] sm:$0xff]
    %v1126 = vld [vmem:[%s2 + $0x498] sm:$0xff]
    %v1127 = vld [vmem:[%s2 + $0x4a0] sm:$0xff]
    %v1128 = vld [vmem:[%s2 + $0x4a8] sm:$0xff]
    %v1129 = vld [vmem:[%s2 + $0x4b0] sm:$0xff]
    %v1130 = vld [vmem:[%s2 + $0x4b8] sm:$0xff]
    %v1131 = vld [vmem:[%s2 + $0x4c0] sm:$0xff]
    %v1132 = vld [vmem:[%s2 + $0x4c8] sm:$0xff]
    %v1133 = vld [vmem:[%s2 + $0x4d0] sm:$0xff]
    %v1134 = vld [vmem:[%s2 + $0x4d8] sm:$0xff]
    %v1135 = vld [vmem:[%s2 + $0x4e0] sm:$0xff]
    %v1136 = vld [vmem:[%s2 + $0x4e8] sm:$0xff]
    %v1137 = vld [vmem:[%s2 + $0x4f0] sm:$0xff]
    %v1138 = vld [vmem:[%s2 + $0x4f8] sm:$0xff]
    %v1139 = vld [vmem:[%s2 + $0x500] sm:$0xff]
    %v1140 = vld [vmem:[%s2 + $0x508] sm:$0xff]
    %v1141 = vld [vmem:[%s2 + $0x510] sm:$0xff]
    %v1142 = vld [vmem:[%s2 + $0x518] sm:$0xff]
    %v1143 = vld [vmem:[%s2 + $0x520] sm:$0xff]
    %v1144 = vld [vmem:[%s2 + $0x528] sm:$0xff]
    %v1145 = vld [vmem:[%s2 + $0x530] sm:$0xff]
    %v1146 = vld [vmem:[%s2 + $0x538] sm:$0xff]
    %v1147 = vld [vmem:[%s2 + $0x540] sm:$0xff]
    %v1148 = vld [vmem:[%s2 + $0x548] sm:$0xff]
    %v1149 = vld [vmem:[%s2 + $0x550] sm:$0xff]
    %v1150 = vld [vmem:[%s2 + $0x558] sm:$0xff]
    %v1151 = vld [vmem:[%s2 + $0x560] sm:$0xff]
    %v1152 = vld [vmem:[%s2 + $0x568] sm:$0xff]
    %v1153 = vld [vmem:[%s2 + $0x570] sm:$0xff]
    %v1154 = vld [vmem:[%s2 + $0x578] sm:$0xff]
    %v1155 = vld [vmem:[%s2 + $0x580] sm:$0xff]
    %v1156 = vld [vmem:[%s2 + $0x588] sm:$0xff]
    %v1157 = vld [vmem:[%s2 + $0x590] sm:$0xff]
    %v1158 = vld [vmem:[%s2 + $0x598] sm:$0xff]
    %v1159 = vld [vmem:[%s2 + $0x5a0] sm:$0xff]
    %v1160 = vld [vmem:[%s2 + $0x5a8] sm:$0xff]
    %v1161 = vld [vmem:[%s2 + $0x5b0] sm:$0xff]
    %v1162 = vld [vmem:[%s2 + $0x5b8] sm:$0xff]
    %v1163 = vld [vmem:[%s2 + $0x5c0] sm:$0xff]
    %v1164 = vld [vmem:[%s2 + $0x5c8] sm:$0xff]
    %v1165 = vld [vmem:[%s2 + $0x5d0] sm:$0xff]
    %v1166 = vld [vmem:[%s2 + $0x5d8] sm:$0xff]
    %v1167 = vld [vmem:[%s2 + $0x5e0] sm:$0xff]
    %v1168 = vld [vmem:[%s2 + $0x5e8] sm:$0xff]
    %v1169 = vld [vmem:[%s2 + $0x5f0] sm:$0xff]
    %v1170 = vld [vmem:[%s2 + $0x5f8] sm:$0xff]
    %v1171 = vld [vmem:[%s2 + $0x600] sm:$0xff]
    %v1172 = vld [vmem:[%s2 + $0x608] sm:$0xff]
    %v1173 = vld [vmem:[%s2 + $0x610] sm:$0xff]
    %v1174 = vld [vmem:[%s2 + $0x618] sm:$0xff]
    %v1175 = vld [vmem:[%s2 + $0x620] sm:$0xff]
    %v1176 = vld [vmem:[%s2 + $0x628] sm:$0xff]
    %v1177 = vld [vmem:[%s2 + $0x630] sm:$0xff]
    %v1178 = vld [vmem:[%s2 + $0x638] sm:$0xff]
    %v1179 = vld [vmem:[%s2 + $0x640] sm:$0xff]
    %v1180 = vld [vmem:[%s2 + $0x648] sm:$0xff]
    %v1181 = vld [vmem:[%s2 + $0x650] sm:$0xff]
    %v1182 = vld [vmem:[%s2 + $0x658] sm:$0xff]
    %v1183 = vld [vmem:[%s2 + $0x660] sm:$0xff]
    %v1184 = vld [vmem:[%s2 + $0x668] sm:$0xff]
    %v1185 = vld [vmem:[%s2 + $0x670] sm:$0xff]
    %v1186 = vld [vmem:[%s2 + $0x678] sm:$0xff]
    %v1187 = vld [vmem:[%s2 + $0x680] sm:$0xff]
    %v1188 = vld [vmem:[%s2 + $0x688] sm:$0xff]
    %v1189 = vld [vmem:[%s2 + $0x690] sm:$0xff]
    %v1190 = vld [vmem:[%s2 + $0x698] sm:$0xff]
    %v1191 = vld [vmem:[%s2 + $0x6a0] sm:$0xff]
    %v1192 = vld [vmem:[%s2 + $0x6a8] sm:$0xff]
    %v1193 = vld [vmem:[%s2 + $0x6b0] sm:$0xff]
    %v1194 = vld [vmem:[%s2 + $0x6b8] sm:$0xff]
    %v1195 = vld [vmem:[%s2 + $0x6c0] sm:$0xff]
    %v1196 = vld [vmem:[%s2 + $0x6c8] sm:$0xff]
    %v1197 = vld [vmem:[%s2 + $0x6d0] sm:$0xff]
    %v1198 = vld [vmem:[%s2 + $0x6d8] sm:$0xff]
    %v1199 = vld [vmem:[%s2 + $0x6e0] sm:$0xff]
    %v1200 = vld [vmem:[%s2 + $0x6e8] sm:$0xff]
    %v1201 = vld [vmem:[%s2 + $0x6f0] sm:$0xff]
    %v1202 = vld [vmem:[%s2 + $0x6f8] sm:$0xff]
    %v1203 = vld [vmem:[%s2 + $0x700] sm:$0xff]
    %v1204 = vld [vmem:[%s2 + $0x708] sm:$0xff]
    %v1205 = vld [vmem:[%s2 + $0x710] sm:$0xff]
    %v1206 = vld [vmem:[%s2 + $0x718] sm:$0xff]
    %v1207 = vld [vmem:[%s2 + $0x720] sm:$0xff]
    %v1208 = vld [vmem:[%s2 + $0x728] sm:$0xff]
    %v1209 = vld [vmem:[%s2 + $0x730] sm:$0xff]
    %v1210 = vld [vmem:[%s2 + $0x738] sm:$0xff]
    %v1211 = vld [vmem:[%s2 + $0x740] sm:$0xff]
    %v1212 = vld [vmem:[%s2 + $0x748] sm:$0xff]
    %v1213 = vld [vmem:[%s2 + $0x750] sm:$0xff]
    %v1214 = vld [vmem:[%s2 + $0x758] sm:$0xff]
    %v1215 = vld [vmem:[%s2 + $0x760] sm:$0xff]
    %v1216 = vld [vmem:[%s2 + $0x768] sm:$0xff]
    %v1217 = vld [vmem:[%s2 + $0x770] sm:$0xff]
    %v1218 = vld [vmem:[%s2 + $0x778] sm:$0xff]
    %v1219 = vld [vmem:[%s2 + $0x780] sm:$0xff]
    %v1220 = vld [vmem:[%s2 + $0x788] sm:$0xff]
    %v1221 = vld [vmem:[%s2 + $0x790] sm:$0xff]
    %v1222 = vld [vmem:[%s2 + $0x798] sm:$0xff]
    %v1223 = vld [vmem:[%s2 + $0x7a0] sm:$0xff]
    %v1224 = vld [vmem:[%s2 + $0x7a8] sm:$0xff]
    %v1225 = vld [vmem:[%s2 + $0x7b0] sm:$0xff]
    %v1226 = vld [vmem:[%s2 + $0x7b8] sm:$0xff]
    %v1227 = vld [vmem:[%s2 + $0x7c0] sm:$0xff]
    %v1228 = vld [vmem:[%s2 + $0x7c8] sm:$0xff]
    %v1229 = vld [vmem:[%s2 + $0x7d0] sm:$0xff]
    %v1230 = vld [vmem:[%s2 + $0x7d8] sm:$0xff]
    %v1231 = vld [vmem:[%s2 + $0x7e0] sm:$0xff]
    %v1232 = vld [vmem:[%s2 + $0x7e8] sm:$0xff]
    %v1233 = vld [vmem:[%s2 + $0x7f0] sm:$0xff]
    %v1234 = vld [vmem:[%s2 + $0x7f8] sm:$0xff]
    %v1235 = vld [vmem:[%s2 + $0x800] sm:$0xff]
    %v1236 = vld [vmem:[%s2 + $0x808] sm:$0xff]
    %v1237 = vld [vmem:[%s2 + $0x810] sm:$0xff]
    %v1238 = vld [vmem:[%s2 + $0x818] sm:$0xff]
    %v1239 = vld [vmem:[%s2 + $0x820] sm:$0xff]
    %v1240 = vld [vmem:[%s2 + $0x828] sm:$0xff]
    %v1241 = vld [vmem:[%s2 + $0x830] sm:$0xff]
    %v1242 = vld [vmem:[%s2 + $0x838] sm:$0xff]
    %v1243 = vld [vmem:[%s2 + $0x840] sm:$0xff]
    %v1244 = vld [vmem:[%s2 + $0x848] sm:$0xff]
    %v1245 = vld [vmem:[%s2 + $0x850] sm:$0xff]
    %v1246 = vld [vmem:[%s2 + $0x858] sm:$0xff]
    %v1247 = vld [vmem:[%s2 + $0x860] sm:$0xff]
    %v1248 = vld [vmem:[%s2 + $0x868] sm:$0xff]
    %v1249 = vld [vmem:[%s2 + $0x870] sm:$0xff]
    %v1250 = vld [vmem:[%s2 + $0x878] sm:$0xff]
    %v1251 = vld [vmem:[%s2 + $0x880] sm:$0xff]
    %v1252 = vld [vmem:[%s2 + $0x888] sm:$0xff]
    %v1253 = vld [vmem:[%s2 + $0x890] sm:$0xff]
    %v1254 = vld [vmem:[%s2 + $0x898] sm:$0xff]
    %v1255 = vld [vmem:[%s2 + $0x8a0] sm:$0xff]
    %v1256 = vld [vmem:[%s2 + $0x8a8] sm:$0xff]
    %v1257 = vld [vmem:[%s2 + $0x8b0] sm:$0xff]
    %v1258 = vld [vmem:[%s2 + $0x8b8] sm:$0xff]
    %v1259 = vld [vmem:[%s2 + $0x8c0] sm:$0xff]
    %v1260 = vld [vmem:[%s2 + $0x8c8] sm:$0xff]
    %v1261 = vld [vmem:[%s2 + $0x8d0] sm:$0xff]
    %v1262 = vld [vmem:[%s2 + $0x8d8] sm:$0xff]
    %v1263 = vld [vmem:[%s2 + $0x8e0] sm:$0xff]
    %v1264 = vld [vmem:[%s2 + $0x8e8] sm:$0xff]
    %v1265 = vld [vmem:[%s2 + $0x8f0] sm:$0xff]
    %v1266 = vld [vmem:[%s2 + $0x8f8] sm:$0xff]
    %v1267 = vld [vmem:[%s2 + $0x900] sm:$0xff]
    %v1268 = vld [vmem:[%s2 + $0x908] sm:$0xff]
    %v1269 = vld [vmem:[%s2 + $0x910] sm:$0xff]
    %v1270 = vld [vmem:[%s2 + $0x918] sm:$0xff]
    %v1271 = vld [vmem:[%s2 + $0x920] sm:$0xff]
    %v1272 = vld [vmem:[%s2 + $0x928] sm:$0xff]
    %v1273 = vld [vmem:[%s2 + $0x930] sm:$0xff]
    %v1274 = vld [vmem:[%s2 + $0x938] sm:$0xff]
    %v1275 = vld [vmem:[%s2 + $0x940] sm:$0xff]
    %v1276 = vld [vmem:[%s2 + $0x948] sm:$0xff]
    %v1277 = vld [vmem:[%s2 + $0x950] sm:$0xff]
    %v1278 = vld [vmem:[%s2 + $0x958] sm:$0xff]
    %v1279 = vld [vmem:[%s2 + $0x960] sm:$0xff]
    %v1280 = vld [vmem:[%s2 + $0x968] sm:$0xff]
    %v1281 = vld [vmem:[%s2 + $0x970] sm:$0xff]
    %v1282 = vld [vmem:[%s2 + $0x978] sm:$0xff]
    %v1283 = vld [vmem:[%s2 + $0x980] sm:$0xff]
    %v1284 = vld [vmem:[%s2 + $0x988] sm:$0xff]
    %v1285 = vld [vmem:[%s2 + $0x990] sm:$0xff]
    %v1286 = vld [vmem:[%s2 + $0x998] sm:$0xff]
    %v1287 = vld [vmem:[%s2 + $0x9a0] sm:$0xff]
    %v1288 = vld [vmem:[%s2 + $0x9a8] sm:$0xff]
    %v1289 = vld [vmem:[%s2 + $0x9b0] sm:$0xff]
    %v1290 = vld [vmem:[%s2 + $0x9b8] sm:$0xff]
    %v1291 = vld [vmem:[%s2 + $0x9c0] sm:$0xff]
    %v1292 = vld [vmem:[%s2 + $0x9c8] sm:$0xff]
    %v1293 = vld [vmem:[%s2 + $0x9d0] sm:$0xff]
    %v1294 = vld [vmem:[%s2 + $0x9d8] sm:$0xff]
    %v1295 = vld [vmem:[%s2 + $0x9e0] sm:$0xff]
    %v1296 = vld [vmem:[%s2 + $0x9e8] sm:$0xff]
    %v1297 = vld [vmem:[%s2 + $0x9f0] sm:$0xff]
    %v1298 = vld [vmem:[%s2 + $0x9f8] sm:$0xff]
    %v1299 = vld [vmem:[%s2 + $0xa00] sm:$0xff]
    %v1300 = vld [vmem:[%s2 + $0xa08] sm:$0xff]
    %v1301 = vld [vmem:[%s2 + $0xa10] sm:$0xff]
    %v1302 = vld [vmem:[%s2 + $0xa18] sm:$0xff]
    %v1303 = vld [vmem:[%s2 + $0xa20] sm:$0xff]
    %v1304 = vld [vmem:[%s2 + $0xa28] sm:$0xff]
    %v1305 = vld [vmem:[%s2 + $0xa30] sm:$0xff]
    %v1306 = vld [vmem:[%s2 + $0xa38] sm:$0xff]
    %v1307 = vld [vmem:[%s2 + $0xa40] sm:$0xff]
    %v1308 = vld [vmem:[%s2 + $0xa48] sm:$0xff]
    %v1309 = vld [vmem:[%s2 + $0xa50] sm:$0xff]
    %v1310 = vld [vmem:[%s2 + $0xa58] sm:$0xff]
    %v1311 = vld [vmem:[%s2 + $0xa60] sm:$0xff]
    %v1312 = vld [vmem:[%s2 + $0xa68] sm:$0xff]
    %v1313 = vld [vmem:[%s2 + $0xa70] sm:$0xff]
    %v1314 = vld [vmem:[%s2 + $0xa78] sm:$0xff]
    %v1315 = vld [vmem:[%s2 + $0xa80] sm:$0xff]
    %v1316 = vld [vmem:[%s2 + $0xa88] sm:$0xff]
    %v1317 = vld [vmem:[%s2 + $0xa90] sm:$0xff]
    %v1318 = vld [vmem:[%s2 + $0xa98] sm:$0xff]
    %v1319 = vld [vmem:[%s2 + $0xaa0] sm:$0xff]
    %v1320 = vld [vmem:[%s2 + $0xaa8] sm:$0xff]
    %v1321 = vld [vmem:[%s2 + $0xab0] sm:$0xff]
    %v1322 = vld [vmem:[%s2 + $0xab8] sm:$0xff]
    %v1323 = vld [vmem:[%s2 + $0xac0] sm:$0xff]
    %v1324 = vld [vmem:[%s2 + $0xac8] sm:$0xff]
    %v1325 = vld [vmem:[%s2 + $0xad0] sm:$0xff]
    %v1326 = vld [vmem:[%s2 + $0xad8] sm:$0xff]
    %v1327 = vld [vmem:[%s2 + $0xae0] sm:$0xff]
    %v1328 = vld [vmem:[%s2 + $0xae8] sm:$0xff]
    %v1329 = vld [vmem:[%s2 + $0xaf0] sm:$0xff]
    %v1330 = vld [vmem:[%s2 + $0xaf8] sm:$0xff]
    %v1331 = vld [vmem:[%s2 + $0xb00] sm:$0xff]
    %v1332 = vld [vmem:[%s2 + $0xb08] sm:$0xff]
    %v1333 = vld [vmem:[%s2 + $0xb10] sm:$0xff]
    %v1334 = vld [vmem:[%s2 + $0xb18] sm:$0xff]
    %v1335 = vld [vmem:[%s2 + $0xb20] sm:$0xff]
    %v1336 = vld [vmem:[%s2 + $0xb28] sm:$0xff]
    %v1337 = vld [vmem:[%s2 + $0xb30] sm:$0xff]
    %v1338 = vld [vmem:[%s2 + $0xb38] sm:$0xff]
    %v1339 = vld [vmem:[%s2 + $0xb40] sm:$0xff]
    %v1340 = vld [vmem:[%s2 + $0xb48] sm:$0xff]
    %v1341 = vld [vmem:[%s2 + $0xb50] sm:$0xff]
    %v1342 = vld [vmem:[%s2 + $0xb58] sm:$0xff]
    %v1343 = vld [vmem:[%s2 + $0xb60] sm:$0xff]
    %v1344 = vld [vmem:[%s2 + $0xb68] sm:$0xff]
    %v1345 = vld [vmem:[%s2 + $0xb70] sm:$0xff]
    %v1346 = vld [vmem:[%s2 + $0xb78] sm:$0xff]
    %v1347 = vld [vmem:[%s2 + $0xb80] sm:$0xff]
    %v1348 = vld [vmem:[%s2 + $0xb88] sm:$0xff]
    %v1349 = vld [vmem:[%s2 + $0xb90] sm:$0xff]
    %v1350 = vld [vmem:[%s2 + $0xb98] sm:$0xff]
    %v1351 = vld [vmem:[%s2 + $0xba0] sm:$0xff]
    %v1352 = vld [vmem:[%s2 + $0xba8] sm:$0xff]
    %v1353 = vld [vmem:[%s2 + $0xbb0] sm:$0xff]
    %v1354 = vld [vmem:[%s2 + $0xbb8] sm:$0xff]
    %v1355 = vld [vmem:[%s2 + $0xbc0] sm:$0xff]
    %v1356 = vld [vmem:[%s2 + $0xbc8] sm:$0xff]
    %v1357 = vld [vmem:[%s2 + $0xbd0] sm:$0xff]
    %v1358 = vld [vmem:[%s2 + $0xbd8] sm:$0xff]
    %v1359 = vld [vmem:[%s2 + $0xbe0] sm:$0xff]
    %v1360 = vld [vmem:[%s2 + $0xbe8] sm:$0xff]
    %v1361 = vld [vmem:[%s2 + $0xbf0] sm:$0xff]
    %v1362 = vld [vmem:[%s2 + $0xbf8] sm:$0xff]
    %v1363 = vld [vmem:[%s2 + $0xc00] sm:$0xff]
    %v1364 = vld [vmem:[%s2 + $0xc08] sm:$0xff]
    %v1365 = vld [vmem:[%s2 + $0xc10] sm:$0xff]
    %v1366 = vld [vmem:[%s2 + $0xc18] sm:$0xff]
    %v1367 = vld [vmem:[%s2 + $0xc20] sm:$0xff]
    %v1368 = vld [vmem:[%s2 + $0xc28] sm:$0xff]
    %v1369 = vld [vmem:[%s2 + $0xc30] sm:$0xff]
    %v1370 = vld [vmem:[%s2 + $0xc38] sm:$0xff]
    %v1371 = vld [vmem:[%s2 + $0xc40] sm:$0xff]
    %v1372 = vld [vmem:[%s2 + $0xc48] sm:$0xff]
    %v1373 = vld [vmem:[%s2 + $0xc50] sm:$0xff]
    %v1374 = vld [vmem:[%s2 + $0xc58] sm:$0xff]
    %v1375 = vld [vmem:[%s2 + $0xc60] sm:$0xff]
    %v1376 = vld [vmem:[%s2 + $0xc68] sm:$0xff]
    %v1377 = vld [vmem:[%s2 + $0xc70] sm:$0xff]
    %v1378 = vld [vmem:[%s2 + $0xc78] sm:$0xff]
    %v1379 = vld [vmem:[%s2 + $0xc80] sm:$0xff]
    %v1380 = vld [vmem:[%s2 + $0xc88] sm:$0xff]
    %v1381 = vld [vmem:[%s2 + $0xc90] sm:$0xff]
    %v1382 = vld [vmem:[%s2 + $0xc98] sm:$0xff]
    %v1383 = vld [vmem:[%s2 + $0xca0] sm:$0xff]
    %v1384 = vld [vmem:[%s2 + $0xca8] sm:$0xff]
    %v1385 = vld [vmem:[%s2 + $0xcb0] sm:$0xff]
    %v1386 = vld [vmem:[%s2 + $0xcb8] sm:$0xff]
    %v1387 = vld [vmem:[%s2 + $0xcc0] sm:$0xff]
    %v1388 = vld [vmem:[%s2 + $0xcc8] sm:$0xff]
    %v1389 = vld [vmem:[%s2 + $0xcd0] sm:$0xff]
    %v1390 = vld [vmem:[%s2 + $0xcd8] sm:$0xff]
    %v1391 = vld [vmem:[%s2 + $0xce0] sm:$0xff]
    %v1392 = vld [vmem:[%s2 + $0xce8] sm:$0xff]
    %v1393 = vld [vmem:[%s2 + $0xcf0] sm:$0xff]
    %v1394 = vld [vmem:[%s2 + $0xcf8] sm:$0xff]
    %v1395 = vld [vmem:[%s2 + $0xd00] sm:$0xff]
    %v1396 = vld [vmem:[%s2 + $0xd08] sm:$0xff]
    %v1397 = vld [vmem:[%s2 + $0xd10] sm:$0xff]
    %v1398 = vld [vmem:[%s2 + $0xd18] sm:$0xff]
    %v1399 = vld [vmem:[%s2 + $0xd20] sm:$0xff]
    %v1400 = vld [vmem:[%s2 + $0xd28] sm:$0xff]
    %v1401 = vld [vmem:[%s2 + $0xd30] sm:$0xff]
    %v1402 = vld [vmem:[%s2 + $0xd38] sm:$0xff]
    %v1403 = vld [vmem:[%s2 + $0xd40] sm:$0xff]
    %v1404 = vld [vmem:[%s2 + $0xd48] sm:$0xff]
    %v1405 = vld [vmem:[%s2 + $0xd50] sm:$0xff]
    %v1406 = vld [vmem:[%s2 + $0xd58] sm:$0xff]
    %v1407 = vld [vmem:[%s2 + $0xd60] sm:$0xff]
    %v1408 = vld [vmem:[%s2 + $0xd68] sm:$0xff]
    %v1409 = vld [vmem:[%s2 + $0xd70] sm:$0xff]
    %v1410 = vld [vmem:[%s2 + $0xd78] sm:$0xff]
    %v1411 = vld [vmem:[%s2 + $0xd80] sm:$0xff]
    %v1412 = vld [vmem:[%s2 + $0xd88] sm:$0xff]
    %v1413 = vld [vmem:[%s2 + $0xd90] sm:$0xff]
    %v1414 = vld [vmem:[%s2 + $0xd98] sm:$0xff]
    %v1415 = vld [vmem:[%s2 + $0xda0] sm:$0xff]
    %v1416 = vld [vmem:[%s2 + $0xda8] sm:$0xff]
    %v1417 = vld [vmem:[%s2 + $0xdb0] sm:$0xff]
    %v1418 = vld [vmem:[%s2 + $0xdb8] sm:$0xff]
    %v1419 = vld [vmem:[%s2 + $0xdc0] sm:$0xff]
    %v1420 = vld [vmem:[%s2 + $0xdc8] sm:$0xff]
    %v1421 = vld [vmem:[%s2 + $0xdd0] sm:$0xff]
    %v1422 = vld [vmem:[%s2 + $0xdd8] sm:$0xff]
    %v1423 = vld [vmem:[%s2 + $0xde0] sm:$0xff]
    %v1424 = vld [vmem:[%s2 + $0xde8] sm:$0xff]
    %v1425 = vld [vmem:[%s2 + $0xdf0] sm:$0xff]
    %v1426 = vld [vmem:[%s2 + $0xdf8] sm:$0xff]
    %v1427 = vld [vmem:[%s2 + $0xe00] sm:$0xff]
    %v1428 = vld [vmem:[%s2 + $0xe08] sm:$0xff]
    %v1429 = vld [vmem:[%s2 + $0xe10] sm:$0xff]
    %v1430 = vld [vmem:[%s2 + $0xe18] sm:$0xff]
    %v1431 = vld [vmem:[%s2 + $0xe20] sm:$0xff]
    %v1432 = vld [vmem:[%s2 + $0xe28] sm:$0xff]
    %v1433 = vld [vmem:[%s2 + $0xe30] sm:$0xff]
    %v1434 = vld [vmem:[%s2 + $0xe38] sm:$0xff]
    %v1435 = vld [vmem:[%s2 + $0xe40] sm:$0xff]
    %v1436 = vld [vmem:[%s2 + $0xe48] sm:$0xff]
    %v1437 = vld [vmem:[%s2 + $0xe50] sm:$0xff]
    %v1438 = vld [vmem:[%s2 + $0xe58] sm:$0xff]
    %v1439 = vld [vmem:[%s2 + $0xe60] sm:$0xff]
    %v1440 = vld [vmem:[%s2 + $0xe68] sm:$0xff]
    %v1441 = vld [vmem:[%s2 + $0xe70] sm:$0xff]
    %v1442 = vld [vmem:[%s2 + $0xe78] sm:$0xff]
    %v1443 = vld [vmem:[%s2 + $0xe80] sm:$0xff]
    %v1444 = vld [vmem:[%s2 + $0xe88] sm:$0xff]
    %v1445 = vld [vmem:[%s2 + $0xe90] sm:$0xff]
    %v1446 = vld [vmem:[%s2 + $0xe98] sm:$0xff]
    %v1447 = vld [vmem:[%s2 + $0xea0] sm:$0xff]
    %v1448 = vld [vmem:[%s2 + $0xea8] sm:$0xff]
    %v1449 = vld [vmem:[%s2 + $0xeb0] sm:$0xff]
    %v1450 = vld [vmem:[%s2 + $0xeb8] sm:$0xff]
    %v1451 = vld [vmem:[%s2 + $0xec0] sm:$0xff]
    %v1452 = vld [vmem:[%s2 + $0xec8] sm:$0xff]
    %v1453 = vld [vmem:[%s2 + $0xed0] sm:$0xff]
    %v1454 = vld [vmem:[%s2 + $0xed8] sm:$0xff]
    %v1455 = vld [vmem:[%s2 + $0xee0] sm:$0xff]
    %v1456 = vld [vmem:[%s2 + $0xee8] sm:$0xff]
    %v1457 = vld [vmem:[%s2 + $0xef0] sm:$0xff]
    %v1458 = vld [vmem:[%s2 + $0xef8] sm:$0xff]
    %v1459 = vld [vmem:[%s2 + $0xf00] sm:$0xff]
    %v1460 = vld [vmem:[%s2 + $0xf08] sm:$0xff]
    %v1461 = vld [vmem:[%s2 + $0xf10] sm:$0xff]
    %v1462 = vld [vmem:[%s2 + $0xf18] sm:$0xff]
    %v1463 = vld [vmem:[%s2 + $0xf20] sm:$0xff]
    %v1464 = vld [vmem:[%s2 + $0xf28] sm:$0xff]
    %v1465 = vld [vmem:[%s2 + $0xf30] sm:$0xff]
    %v1466 = vld [vmem:[%s2 + $0xf38] sm:$0xff]
    %v1467 = vld [vmem:[%s2 + $0xf40] sm:$0xff]
    %v1468 = vld [vmem:[%s2 + $0xf48] sm:$0xff]
    %v1469 = vld [vmem:[%s2 + $0xf50] sm:$0xff]
    %v1470 = vld [vmem:[%s2 + $0xf58] sm:$0xff]
    %v1471 = vld [vmem:[%s2 + $0xf60] sm:$0xff]
    %v1472 = vld [vmem:[%s2 + $0xf68] sm:$0xff]
    %v1473 = vld [vmem:[%s2 + $0xf70] sm:$0xff]
    %v1474 = vld [vmem:[%s2 + $0xf78] sm:$0xff]
    %v1475 = vld [vmem:[%s2 + $0xf80] sm:$0xff]
    %v1476 = vld [vmem:[%s2 + $0xf88] sm:$0xff]
    %v1477 = vld [vmem:[%s2 + $0xf90] sm:$0xff]
    %v1478 = vld [vmem:[%s2 + $0xf98] sm:$0xff]
    %v1479 = vld [vmem:[%s2 + $0xfa0] sm:$0xff]
    %v1480 = vld [vmem:[%s2 + $0xfa8] sm:$0xff]
    %v1481 = vld [vmem:[%s2 + $0xfb0] sm:$0xff]
    %v1482 = vld [vmem:[%s2 + $0xfb8] sm:$0xff]
    %v1483 = vld [vmem:[%s2 + $0xfc0] sm:$0xff]
    %v1484 = vld [vmem:[%s2 + $0xfc8] sm:$0xff]
    %v1485 = vld [vmem:[%s2 + $0xfd0] sm:$0xff]
    %v1486 = vld [vmem:[%s2 + $0xfd8] sm:$0xff]
    %v1487 = vld [vmem:[%s2 + $0xfe0] sm:$0xff]
    %v1488 = vld [vmem:[%s2 + $0xfe8] sm:$0xff]
    %v1489 = vld [vmem:[%s2 + $0xff0] sm:$0xff]
    %v1490 = vld [vmem:[%s2 + $0xff8] sm:$0xff]
    %s1491 = scalar_lea.vmem %s11, 1
    %v1492 = vld [vmem:[%s1491] ss:$8 sm:$0xf]
    %v1494 = vperm.slane %v1492, 0
    %v1495 = vperm.slane %v1492, 1
    %v1496 = vperm.slane %v1492, 2
    %v1497 = vperm.slane %v1492, 3
    %1502 = vmatpush.msra.mxu0 %v1039
    %1503 = vmatpush.msra.mxu0 %v1035
    %1504 = vmatpush.msra.mxu0 %v1031
    %1505 = vmatpush.msra.mxu0 %v1027
    %1506 = vmatpush.msra.mxu0 %v1023
    %1507 = vmatpush.msra.mxu0 %v1019
    %1508 = vmatpush.msra.mxu0 %v1015
    %1509 = vmatpush.msra.mxu0 %v1011
    %1510 = vmatpush.msra.mxu0 %v1007
    %1511 = vmatpush.msra.mxu0 %v1003
    %1512 = vmatpush.msra.mxu0 %v999
    %1513 = vmatpush.msra.mxu0 %v995
    %1514 = vmatpush.msra.mxu0 %v991
    %1515 = vmatpush.msra.mxu0 %v987
    %1516 = vmatpush.msra.mxu0 %v983
    %1517 = vmatpush.msra.mxu0 %v979
    %1518 = vmatmul.f32.gmra.mxu0 %v947
    %v1519 = vpop.f32.mrf.mxu0
    %v1520 = vadd.f32 %v1494, %v1519
    %1521 = vmatmul.f32.gmra.mxu0 %v955
    %v1522 = vpop.f32.mrf.mxu0
    %v1523 = vadd.f32 %v1494, %v1522
    %1524 = vmatmul.f32.gmra.mxu0 %v963
    %v1525 = vpop.f32.mrf.mxu0
    %v1526 = vadd.f32 %v1494, %v1525
    %1527 = vmatmul.f32.gmra.mxu0 %v971
    %v1528 = vpop.f32.mrf.mxu0
    %v1529 = vadd.f32 %v1494, %v1528
    %1530 = vdwg.mxu0
    %1531 = vmatpush.msra.mxu0 %v1103
    %1532 = vmatpush.msra.mxu0 %v1099
    %1533 = vmatpush.msra.mxu0 %v1095
    %1534 = vmatpush.msra.mxu0 %v1091
    %1535 = vmatpush.msra.mxu0 %v1087
    %1536 = vmatpush.msra.mxu0 %v1083
    %1537 = vmatpush.msra.mxu0 %v1079
    %1538 = vmatpush.msra.mxu0 %v1075
    %1539 = vmatpush.msra.mxu0 %v1071
    %1540 = vmatpush.msra.mxu0 %v1067
    %1541 = vmatpush.msra.mxu0 %v1063
    %1542 = vmatpush.msra.mxu0 %v1059
    %1543 = vmatpush.msra.mxu0 %v1055
    %1544 = vmatpush.msra.mxu0 %v1051
    %1545 = vmatpush.msra.mxu0 %v1047
    %1546 = vmatpush.msra.mxu0 %v1043
    %1547 = vmatmul.f32.gmra.mxu0 %v948
    %v1548 = vpop.f32.mrf.mxu0
    %v1549 = vadd.f32 %v1520, %v1548
    %1550 = vmatmul.f32.gmra.mxu0 %v956
    %v1551 = vpop.f32.mrf.mxu0
    %v1552 = vadd.f32 %v1523, %v1551
    %1553 = vmatmul.f32.gmra.mxu0 %v964
    %v1554 = vpop.f32.mrf.mxu0
    %v1555 = vadd.f32 %v1526, %v1554
    %1556 = vmatmul.f32.gmra.mxu0 %v972
    %v1557 = vpop.f32.mrf.mxu0
    %v1558 = vadd.f32 %v1529, %v1557
    %1559 = vdwg.mxu0
    %1560 = vmatpush.msra.mxu0 %v1167
    %1561 = vmatpush.msra.mxu0 %v1163
    %1562 = vmatpush.msra.mxu0 %v1159
    %1563 = vmatpush.msra.mxu0 %v1155
    %1564 = vmatpush.msra.mxu0 %v1151
    %1565 = vmatpush.msra.mxu0 %v1147
    %1566 = vmatpush.msra.mxu0 %v1143
    %1567 = vmatpush.msra.mxu0 %v1139
    %1568 = vmatpush.msra.mxu0 %v1135
    %1569 = vmatpush.msra.mxu0 %v1131
    %1570 = vmatpush.msra.mxu0 %v1127
    %1571 = vmatpush.msra.mxu0 %v1123
    %1572 = vmatpush.msra.mxu0 %v1119
    %1573 = vmatpush.msra.mxu0 %v1115
    %1574 = vmatpush.msra.mxu0 %v1111
    %1575 = vmatpush.msra.mxu0 %v1107
    %1576 = vmatmul.f32.gmra.mxu0 %v949
    %v1577 = vpop.f32.mrf.mxu0
    %v1578 = vadd.f32 %v1549, %v1577
    %1579 = vmatmul.f32.gmra.mxu0 %v957
    %v1580 = vpop.f32.mrf.mxu0
    %v1581 = vadd.f32 %v1552, %v1580
    %1582 = vmatmul.f32.gmra.mxu0 %v965
    %v1583 = vpop.f32.mrf.mxu0
    %v1584 = vadd.f32 %v1555, %v1583
    %1585 = vmatmul.f32.gmra.mxu0 %v973
    %v1586 = vpop.f32.mrf.mxu0
    %v1587 = vadd.f32 %v1558, %v1586
    %1588 = vdwg.mxu0
    %1589 = vmatpush.msra.mxu0 %v1231
    %1590 = vmatpush.msra.mxu0 %v1227
    %1591 = vmatpush.msra.mxu0 %v1223
    %1592 = vmatpush.msra.mxu0 %v1219
    %1593 = vmatpush.msra.mxu0 %v1215
    %1594 = vmatpush.msra.mxu0 %v1211
    %1595 = vmatpush.msra.mxu0 %v1207
    %1596 = vmatpush.msra.mxu0 %v1203
    %1597 = vmatpush.msra.mxu0 %v1199
    %1598 = vmatpush.msra.mxu0 %v1195
    %1599 = vmatpush.msra.mxu0 %v1191
    %1600 = vmatpush.msra.mxu0 %v1187
    %1601 = vmatpush.msra.mxu0 %v1183
    %1602 = vmatpush.msra.mxu0 %v1179
    %1603 = vmatpush.msra.mxu0 %v1175
    %1604 = vmatpush.msra.mxu0 %v1171
    %1605 = vmatmul.f32.gmra.mxu0 %v950
    %v1606 = vpop.f32.mrf.mxu0
    %v1607 = vadd.f32 %v1578, %v1606
    %1608 = vmatmul.f32.gmra.mxu0 %v958
    %v1609 = vpop.f32.mrf.mxu0
    %v1610 = vadd.f32 %v1581, %v1609
    %1611 = vmatmul.f32.gmra.mxu0 %v966
    %v1612 = vpop.f32.mrf.mxu0
    %v1613 = vadd.f32 %v1584, %v1612
    %1614 = vmatmul.f32.gmra.mxu0 %v974
    %v1615 = vpop.f32.mrf.mxu0
    %v1616 = vadd.f32 %v1587, %v1615
    %1617 = vdwg.mxu0
    %1618 = vmatpush.msra.mxu0 %v1295
    %1619 = vmatpush.msra.mxu0 %v1291
    %1620 = vmatpush.msra.mxu0 %v1287
    %1621 = vmatpush.msra.mxu0 %v1283
    %1622 = vmatpush.msra.mxu0 %v1279
    %1623 = vmatpush.msra.mxu0 %v1275
    %1624 = vmatpush.msra.mxu0 %v1271
    %1625 = vmatpush.msra.mxu0 %v1267
    %1626 = vmatpush.msra.mxu0 %v1263
    %1627 = vmatpush.msra.mxu0 %v1259
    %1628 = vmatpush.msra.mxu0 %v1255
    %1629 = vmatpush.msra.mxu0 %v1251
    %1630 = vmatpush.msra.mxu0 %v1247
    %1631 = vmatpush.msra.mxu0 %v1243
    %1632 = vmatpush.msra.mxu0 %v1239
    %1633 = vmatpush.msra.mxu0 %v1235
    %1634 = vmatmul.f32.gmra.mxu0 %v951
    %v1635 = vpop.f32.mrf.mxu0
    %v1636 = vadd.f32 %v1607, %v1635
    %1637 = vmatmul.f32.gmra.mxu0 %v959
    %v1638 = vpop.f32.mrf.mxu0
    %v1639 = vadd.f32 %v1610, %v1638
    %1640 = vmatmul.f32.gmra.mxu0 %v967
    %v1641 = vpop.f32.mrf.mxu0
    %v1642 = vadd.f32 %v1613, %v1641
    %1643 = vmatmul.f32.gmra.mxu0 %v975
    %v1644 = vpop.f32.mrf.mxu0
    %v1645 = vadd.f32 %v1616, %v1644
    %1646 = vdwg.mxu0
    %1647 = vmatpush.msra.mxu0 %v1359
    %1648 = vmatpush.msra.mxu0 %v1355
    %1649 = vmatpush.msra.mxu0 %v1351
    %1650 = vmatpush.msra.mxu0 %v1347
    %1651 = vmatpush.msra.mxu0 %v1343
    %1652 = vmatpush.msra.mxu0 %v1339
    %1653 = vmatpush.msra.mxu0 %v1335
    %1654 = vmatpush.msra.mxu0 %v1331
    %1655 = vmatpush.msra.mxu0 %v1327
    %1656 = vmatpush.msra.mxu0 %v1323
    %1657 = vmatpush.msra.mxu0 %v1319
    %1658 = vmatpush.msra.mxu0 %v1315
    %1659 = vmatpush.msra.mxu0 %v1311
    %1660 = vmatpush.msra.mxu0 %v1307
    %1661 = vmatpush.msra.mxu0 %v1303
    %1662 = vmatpush.msra.mxu0 %v1299
    %1663 = vmatmul.f32.gmra.mxu0 %v952
    %v1664 = vpop.f32.mrf.mxu0
    %v1665 = vadd.f32 %v1636, %v1664
    %1666 = vmatmul.f32.gmra.mxu0 %v960
    %v1667 = vpop.f32.mrf.mxu0
    %v1668 = vadd.f32 %v1639, %v1667
    %1669 = vmatmul.f32.gmra.mxu0 %v968
    %v1670 = vpop.f32.mrf.mxu0
    %v1671 = vadd.f32 %v1642, %v1670
    %1672 = vmatmul.f32.gmra.mxu0 %v976
    %v1673 = vpop.f32.mrf.mxu0
    %v1674 = vadd.f32 %v1645, %v1673
    %1675 = vdwg.mxu0
    %1676 = vmatpush.msra.mxu0 %v1423
    %1677 = vmatpush.msra.mxu0 %v1419
    %1678 = vmatpush.msra.mxu0 %v1415
    %1679 = vmatpush.msra.mxu0 %v1411
    %1680 = vmatpush.msra.mxu0 %v1407
    %1681 = vmatpush.msra.mxu0 %v1403
    %1682 = vmatpush.msra.mxu0 %v1399
    %1683 = vmatpush.msra.mxu0 %v1395
    %1684 = vmatpush.msra.mxu0 %v1391
    %1685 = vmatpush.msra.mxu0 %v1387
    %1686 = vmatpush.msra.mxu0 %v1383
    %1687 = vmatpush.msra.mxu0 %v1379
    %1688 = vmatpush.msra.mxu0 %v1375
    %1689 = vmatpush.msra.mxu0 %v1371
    %1690 = vmatpush.msra.mxu0 %v1367
    %1691 = vmatpush.msra.mxu0 %v1363
    %1692 = vmatmul.f32.gmra.mxu0 %v953
    %v1693 = vpop.f32.mrf.mxu0
    %v1694 = vadd.f32 %v1665, %v1693
    %1695 = vmatmul.f32.gmra.mxu0 %v961
    %v1696 = vpop.f32.mrf.mxu0
    %v1697 = vadd.f32 %v1668, %v1696
    %1698 = vmatmul.f32.gmra.mxu0 %v969
    %v1699 = vpop.f32.mrf.mxu0
    %v1700 = vadd.f32 %v1671, %v1699
    %1701 = vmatmul.f32.gmra.mxu0 %v977
    %v1702 = vpop.f32.mrf.mxu0
    %v1703 = vadd.f32 %v1674, %v1702
    %1704 = vdwg.mxu0
    %1705 = vmatpush.msra.mxu0 %v1487
    %1706 = vmatpush.msra.mxu0 %v1483
    %1707 = vmatpush.msra.mxu0 %v1479
    %1708 = vmatpush.msra.mxu0 %v1475
    %1709 = vmatpush.msra.mxu0 %v1471
    %1710 = vmatpush.msra.mxu0 %v1467
    %1711 = vmatpush.msra.mxu0 %v1463
    %1712 = vmatpush.msra.mxu0 %v1459
    %1713 = vmatpush.msra.mxu0 %v1455
    %1714 = vmatpush.msra.mxu0 %v1451
    %1715 = vmatpush.msra.mxu0 %v1447
    %1716 = vmatpush.msra.mxu0 %v1443
    %1717 = vmatpush.msra.mxu0 %v1439
    %1718 = vmatpush.msra.mxu0 %v1435
    %1719 = vmatpush.msra.mxu0 %v1431
    %1720 = vmatpush.msra.mxu0 %v1427
    %1721 = vmatmul.f32.gmra.mxu0 %v954
    %v1722 = vpop.f32.mrf.mxu0
    %v1723 = vadd.f32 %v1694, %v1722
    %1724 = vmatmul.f32.gmra.mxu0 %v962
    %v1725 = vpop.f32.mrf.mxu0
    %v1726 = vadd.f32 %v1697, %v1725
    %1727 = vmatmul.f32.gmra.mxu0 %v970
    %v1728 = vpop.f32.mrf.mxu0
    %v1729 = vadd.f32 %v1700, %v1728
    %1730 = vmatmul.f32.gmra.mxu0 %v978
    %v1731 = vpop.f32.mrf.mxu0
    %v1732 = vadd.f32 %v1703, %v1731
    %1733 = vdwg.mxu0
    %1734 = vmatpush.msra.mxu0 %v1040
    %1735 = vmatpush.msra.mxu0 %v1036
    %1736 = vmatpush.msra.mxu0 %v1032
    %1737 = vmatpush.msra.mxu0 %v1028
    %1738 = vmatpush.msra.mxu0 %v1024
    %1739 = vmatpush.msra.mxu0 %v1020
    %1740 = vmatpush.msra.mxu0 %v1016
    %1741 = vmatpush.msra.mxu0 %v1012
    %1742 = vmatpush.msra.mxu0 %v1008
    %1743 = vmatpush.msra.mxu0 %v1004
    %1744 = vmatpush.msra.mxu0 %v1000
    %1745 = vmatpush.msra.mxu0 %v996
    %1746 = vmatpush.msra.mxu0 %v992
    %1747 = vmatpush.msra.mxu0 %v988
    %1748 = vmatpush.msra.mxu0 %v984
    %1749 = vmatpush.msra.mxu0 %v980
    %1750 = vmatmul.f32.gmra.mxu0 %v947
    %v1751 = vpop.f32.mrf.mxu0
    %v1752 = vadd.f32 %v1495, %v1751
    %1753 = vmatmul.f32.gmra.mxu0 %v955
    %v1754 = vpop.f32.mrf.mxu0
    %v1755 = vadd.f32 %v1495, %v1754
    %1756 = vmatmul.f32.gmra.mxu0 %v963
    %v1757 = vpop.f32.mrf.mxu0
    %v1758 = vadd.f32 %v1495, %v1757
    %1759 = vmatmul.f32.gmra.mxu0 %v971
    %v1760 = vpop.f32.mrf.mxu0
    %v1761 = vadd.f32 %v1495, %v1760
    %1762 = vdwg.mxu0
    %1763 = vmatpush.msra.mxu0 %v1104
    %1764 = vmatpush.msra.mxu0 %v1100
    %1765 = vmatpush.msra.mxu0 %v1096
    %1766 = vmatpush.msra.mxu0 %v1092
    %1767 = vmatpush.msra.mxu0 %v1088
    %1768 = vmatpush.msra.mxu0 %v1084
    %1769 = vmatpush.msra.mxu0 %v1080
    %1770 = vmatpush.msra.mxu0 %v1076
    %1771 = vmatpush.msra.mxu0 %v1072
    %1772 = vmatpush.msra.mxu0 %v1068
    %1773 = vmatpush.msra.mxu0 %v1064
    %1774 = vmatpush.msra.mxu0 %v1060
    %1775 = vmatpush.msra.mxu0 %v1056
    %1776 = vmatpush.msra.mxu0 %v1052
    %1777 = vmatpush.msra.mxu0 %v1048
    %1778 = vmatpush.msra.mxu0 %v1044
    %1779 = vmatmul.f32.gmra.mxu0 %v948
    %v1780 = vpop.f32.mrf.mxu0
    %v1781 = vadd.f32 %v1752, %v1780
    %1782 = vmatmul.f32.gmra.mxu0 %v956
    %v1783 = vpop.f32.mrf.mxu0
    %v1784 = vadd.f32 %v1755, %v1783
    %1785 = vmatmul.f32.gmra.mxu0 %v964
    %v1786 = vpop.f32.mrf.mxu0
    %v1787 = vadd.f32 %v1758, %v1786
    %1788 = vmatmul.f32.gmra.mxu0 %v972
    %v1789 = vpop.f32.mrf.mxu0
    %v1790 = vadd.f32 %v1761, %v1789
    %1791 = vdwg.mxu0
    %1792 = vmatpush.msra.mxu0 %v1168
    %1793 = vmatpush.msra.mxu0 %v1164
    %1794 = vmatpush.msra.mxu0 %v1160
    %1795 = vmatpush.msra.mxu0 %v1156
    %1796 = vmatpush.msra.mxu0 %v1152
    %1797 = vmatpush.msra.mxu0 %v1148
    %1798 = vmatpush.msra.mxu0 %v1144
    %1799 = vmatpush.msra.mxu0 %v1140
    %1800 = vmatpush.msra.mxu0 %v1136
    %1801 = vmatpush.msra.mxu0 %v1132
    %1802 = vmatpush.msra.mxu0 %v1128
    %1803 = vmatpush.msra.mxu0 %v1124
    %1804 = vmatpush.msra.mxu0 %v1120
    %1805 = vmatpush.msra.mxu0 %v1116
    %1806 = vmatpush.msra.mxu0 %v1112
    %1807 = vmatpush.msra.mxu0 %v1108
    %1808 = vmatmul.f32.gmra.mxu0 %v949
    %v1809 = vpop.f32.mrf.mxu0
    %v1810 = vadd.f32 %v1781, %v1809
    %1811 = vmatmul.f32.gmra.mxu0 %v957
    %v1812 = vpop.f32.mrf.mxu0
    %v1813 = vadd.f32 %v1784, %v1812
    %1814 = vmatmul.f32.gmra.mxu0 %v965
    %v1815 = vpop.f32.mrf.mxu0
    %v1816 = vadd.f32 %v1787, %v1815
    %1817 = vmatmul.f32.gmra.mxu0 %v973
    %v1818 = vpop.f32.mrf.mxu0
    %v1819 = vadd.f32 %v1790, %v1818
    %1820 = vdwg.mxu0
    %1821 = vmatpush.msra.mxu0 %v1232
    %1822 = vmatpush.msra.mxu0 %v1228
    %1823 = vmatpush.msra.mxu0 %v1224
    %1824 = vmatpush.msra.mxu0 %v1220
    %1825 = vmatpush.msra.mxu0 %v1216
    %1826 = vmatpush.msra.mxu0 %v1212
    %1827 = vmatpush.msra.mxu0 %v1208
    %1828 = vmatpush.msra.mxu0 %v1204
    %1829 = vmatpush.msra.mxu0 %v1200
    %1830 = vmatpush.msra.mxu0 %v1196
    %1831 = vmatpush.msra.mxu0 %v1192
    %1832 = vmatpush.msra.mxu0 %v1188
    %1833 = vmatpush.msra.mxu0 %v1184
    %1834 = vmatpush.msra.mxu0 %v1180
    %1835 = vmatpush.msra.mxu0 %v1176
    %1836 = vmatpush.msra.mxu0 %v1172
    %1837 = vmatmul.f32.gmra.mxu0 %v950
    %v1838 = vpop.f32.mrf.mxu0
    %v1839 = vadd.f32 %v1810, %v1838
    %1840 = vmatmul.f32.gmra.mxu0 %v958
    %v1841 = vpop.f32.mrf.mxu0
    %v1842 = vadd.f32 %v1813, %v1841
    %1843 = vmatmul.f32.gmra.mxu0 %v966
    %v1844 = vpop.f32.mrf.mxu0
    %v1845 = vadd.f32 %v1816, %v1844
    %1846 = vmatmul.f32.gmra.mxu0 %v974
    %v1847 = vpop.f32.mrf.mxu0
    %v1848 = vadd.f32 %v1819, %v1847
    %1849 = vdwg.mxu0
    %1850 = vmatpush.msra.mxu0 %v1296
    %1851 = vmatpush.msra.mxu0 %v1292
    %1852 = vmatpush.msra.mxu0 %v1288
    %1853 = vmatpush.msra.mxu0 %v1284
    %1854 = vmatpush.msra.mxu0 %v1280
    %1855 = vmatpush.msra.mxu0 %v1276
    %1856 = vmatpush.msra.mxu0 %v1272
    %1857 = vmatpush.msra.mxu0 %v1268
    %1858 = vmatpush.msra.mxu0 %v1264
    %1859 = vmatpush.msra.mxu0 %v1260
    %1860 = vmatpush.msra.mxu0 %v1256
    %1861 = vmatpush.msra.mxu0 %v1252
    %1862 = vmatpush.msra.mxu0 %v1248
    %1863 = vmatpush.msra.mxu0 %v1244
    %1864 = vmatpush.msra.mxu0 %v1240
    %1865 = vmatpush.msra.mxu0 %v1236
    %1866 = vmatmul.f32.gmra.mxu0 %v951
    %v1867 = vpop.f32.mrf.mxu0
    %v1868 = vadd.f32 %v1839, %v1867
    %1869 = vmatmul.f32.gmra.mxu0 %v959
    %v1870 = vpop.f32.mrf.mxu0
    %v1871 = vadd.f32 %v1842, %v1870
    %1872 = vmatmul.f32.gmra.mxu0 %v967
    %v1873 = vpop.f32.mrf.mxu0
    %v1874 = vadd.f32 %v1845, %v1873
    %1875 = vmatmul.f32.gmra.mxu0 %v975
    %v1876 = vpop.f32.mrf.mxu0
    %v1877 = vadd.f32 %v1848, %v1876
    %1878 = vdwg.mxu0
    %1879 = vmatpush.msra.mxu0 %v1360
    %1880 = vmatpush.msra.mxu0 %v1356
    %1881 = vmatpush.msra.mxu0 %v1352
    %1882 = vmatpush.msra.mxu0 %v1348
    %1883 = vmatpush.msra.mxu0 %v1344
    %1884 = vmatpush.msra.mxu0 %v1340
    %1885 = vmatpush.msra.mxu0 %v1336
    %1886 = vmatpush.msra.mxu0 %v1332
    %1887 = vmatpush.msra.mxu0 %v1328
    %1888 = vmatpush.msra.mxu0 %v1324
    %1889 = vmatpush.msra.mxu0 %v1320
    %1890 = vmatpush.msra.mxu0 %v1316
    %1891 = vmatpush.msra.mxu0 %v1312
    %1892 = vmatpush.msra.mxu0 %v1308
    %1893 = vmatpush.msra.mxu0 %v1304
    %1894 = vmatpush.msra.mxu0 %v1300
    %1895 = vmatmul.f32.gmra.mxu0 %v952
    %v1896 = vpop.f32.mrf.mxu0
    %v1897 = vadd.f32 %v1868, %v1896
    %1898 = vmatmul.f32.gmra.mxu0 %v960
    %v1899 = vpop.f32.mrf.mxu0
    %v1900 = vadd.f32 %v1871, %v1899
    %1901 = vmatmul.f32.gmra.mxu0 %v968
    %v1902 = vpop.f32.mrf.mxu0
    %v1903 = vadd.f32 %v1874, %v1902
    %1904 = vmatmul.f32.gmra.mxu0 %v976
    %v1905 = vpop.f32.mrf.mxu0
    %v1906 = vadd.f32 %v1877, %v1905
    %1907 = vdwg.mxu0
    %1908 = vmatpush.msra.mxu0 %v1424
    %1909 = vmatpush.msra.mxu0 %v1420
    %1910 = vmatpush.msra.mxu0 %v1416
    %1911 = vmatpush.msra.mxu0 %v1412
    %1912 = vmatpush.msra.mxu0 %v1408
    %1913 = vmatpush.msra.mxu0 %v1404
    %1914 = vmatpush.msra.mxu0 %v1400
    %1915 = vmatpush.msra.mxu0 %v1396
    %1916 = vmatpush.msra.mxu0 %v1392
    %1917 = vmatpush.msra.mxu0 %v1388
    %1918 = vmatpush.msra.mxu0 %v1384
    %1919 = vmatpush.msra.mxu0 %v1380
    %1920 = vmatpush.msra.mxu0 %v1376
    %1921 = vmatpush.msra.mxu0 %v1372
    %1922 = vmatpush.msra.mxu0 %v1368
    %1923 = vmatpush.msra.mxu0 %v1364
    %1924 = vmatmul.f32.gmra.mxu0 %v953
    %v1925 = vpop.f32.mrf.mxu0
    %v1926 = vadd.f32 %v1897, %v1925
    %1927 = vmatmul.f32.gmra.mxu0 %v961
    %v1928 = vpop.f32.mrf.mxu0
    %v1929 = vadd.f32 %v1900, %v1928
    %1930 = vmatmul.f32.gmra.mxu0 %v969
    %v1931 = vpop.f32.mrf.mxu0
    %v1932 = vadd.f32 %v1903, %v1931
    %1933 = vmatmul.f32.gmra.mxu0 %v977
    %v1934 = vpop.f32.mrf.mxu0
    %v1935 = vadd.f32 %v1906, %v1934
    %1936 = vdwg.mxu0
    %1937 = vmatpush.msra.mxu0 %v1488
    %1938 = vmatpush.msra.mxu0 %v1484
    %1939 = vmatpush.msra.mxu0 %v1480
    %1940 = vmatpush.msra.mxu0 %v1476
    %1941 = vmatpush.msra.mxu0 %v1472
    %1942 = vmatpush.msra.mxu0 %v1468
    %1943 = vmatpush.msra.mxu0 %v1464
    %1944 = vmatpush.msra.mxu0 %v1460
    %1945 = vmatpush.msra.mxu0 %v1456
    %1946 = vmatpush.msra.mxu0 %v1452
    %1947 = vmatpush.msra.mxu0 %v1448
    %1948 = vmatpush.msra.mxu0 %v1444
    %1949 = vmatpush.msra.mxu0 %v1440
    %1950 = vmatpush.msra.mxu0 %v1436
    %1951 = vmatpush.msra.mxu0 %v1432
    %1952 = vmatpush.msra.mxu0 %v1428
    %1953 = vmatmul.f32.gmra.mxu0 %v954
    %v1954 = vpop.f32.mrf.mxu0
    %v1955 = vadd.f32 %v1926, %v1954
    %1956 = vmatmul.f32.gmra.mxu0 %v962
    %v1957 = vpop.f32.mrf.mxu0
    %v1958 = vadd.f32 %v1929, %v1957
    %1959 = vmatmul.f32.gmra.mxu0 %v970
    %v1960 = vpop.f32.mrf.mxu0
    %v1961 = vadd.f32 %v1932, %v1960
    %1962 = vmatmul.f32.gmra.mxu0 %v978
    %v1963 = vpop.f32.mrf.mxu0
    %v1964 = vadd.f32 %v1935, %v1963
    %1965 = vdwg.mxu0
    %1966 = vmatpush.msra.mxu0 %v1041
    %1967 = vmatpush.msra.mxu0 %v1037
    %1968 = vmatpush.msra.mxu0 %v1033
    %1969 = vmatpush.msra.mxu0 %v1029
    %1970 = vmatpush.msra.mxu0 %v1025
    %1971 = vmatpush.msra.mxu0 %v1021
    %1972 = vmatpush.msra.mxu0 %v1017
    %1973 = vmatpush.msra.mxu0 %v1013
    %1974 = vmatpush.msra.mxu0 %v1009
    %1975 = vmatpush.msra.mxu0 %v1005
    %1976 = vmatpush.msra.mxu0 %v1001
    %1977 = vmatpush.msra.mxu0 %v997
    %1978 = vmatpush.msra.mxu0 %v993
    %1979 = vmatpush.msra.mxu0 %v989
    %1980 = vmatpush.msra.mxu0 %v985
    %1981 = vmatpush.msra.mxu0 %v981
    %1982 = vmatmul.f32.gmra.mxu0 %v947
    %v1983 = vpop.f32.mrf.mxu0
    %v1984 = vadd.f32 %v1496, %v1983
    %1985 = vmatmul.f32.gmra.mxu0 %v955
    %v1986 = vpop.f32.mrf.mxu0
    %v1987 = vadd.f32 %v1496, %v1986
    %1988 = vmatmul.f32.gmra.mxu0 %v963
    %v1989 = vpop.f32.mrf.mxu0
    %v1990 = vadd.f32 %v1496, %v1989
    %1991 = vmatmul.f32.gmra.mxu0 %v971
    %v1992 = vpop.f32.mrf.mxu0
    %v1993 = vadd.f32 %v1496, %v1992
    %1994 = vdwg.mxu0
    %1995 = vmatpush.msra.mxu0 %v1105
    %1996 = vmatpush.msra.mxu0 %v1101
    %1997 = vmatpush.msra.mxu0 %v1097
    %1998 = vmatpush.msra.mxu0 %v1093
    %1999 = vmatpush.msra.mxu0 %v1089
    %2000 = vmatpush.msra.mxu0 %v1085
    %2001 = vmatpush.msra.mxu0 %v1081
    %2002 = vmatpush.msra.mxu0 %v1077
    %2003 = vmatpush.msra.mxu0 %v1073
    %2004 = vmatpush.msra.mxu0 %v1069
    %2005 = vmatpush.msra.mxu0 %v1065
    %2006 = vmatpush.msra.mxu0 %v1061
    %2007 = vmatpush.msra.mxu0 %v1057
    %2008 = vmatpush.msra.mxu0 %v1053
    %2009 = vmatpush.msra.mxu0 %v1049
    %2010 = vmatpush.msra.mxu0 %v1045
    %2011 = vmatmul.f32.gmra.mxu0 %v948
    %v2012 = vpop.f32.mrf.mxu0
    %v2013 = vadd.f32 %v1984, %v2012
    %2014 = vmatmul.f32.gmra.mxu0 %v956
    %v2015 = vpop.f32.mrf.mxu0
    %v2016 = vadd.f32 %v1987, %v2015
    %2017 = vmatmul.f32.gmra.mxu0 %v964
    %v2018 = vpop.f32.mrf.mxu0
    %v2019 = vadd.f32 %v1990, %v2018
    %2020 = vmatmul.f32.gmra.mxu0 %v972
    %v2021 = vpop.f32.mrf.mxu0
    %v2022 = vadd.f32 %v1993, %v2021
    %2023 = vdwg.mxu0
    %2024 = vmatpush.msra.mxu0 %v1169
    %2025 = vmatpush.msra.mxu0 %v1165
    %2026 = vmatpush.msra.mxu0 %v1161
    %2027 = vmatpush.msra.mxu0 %v1157
    %2028 = vmatpush.msra.mxu0 %v1153
    %2029 = vmatpush.msra.mxu0 %v1149
    %2030 = vmatpush.msra.mxu0 %v1145
    %2031 = vmatpush.msra.mxu0 %v1141
    %2032 = vmatpush.msra.mxu0 %v1137
    %2033 = vmatpush.msra.mxu0 %v1133
    %2034 = vmatpush.msra.mxu0 %v1129
    %2035 = vmatpush.msra.mxu0 %v1125
    %2036 = vmatpush.msra.mxu0 %v1121
    %2037 = vmatpush.msra.mxu0 %v1117
    %2038 = vmatpush.msra.mxu0 %v1113
    %2039 = vmatpush.msra.mxu0 %v1109
    %2040 = vmatmul.f32.gmra.mxu0 %v949
    %v2041 = vpop.f32.mrf.mxu0
    %v2042 = vadd.f32 %v2013, %v2041
    %2043 = vmatmul.f32.gmra.mxu0 %v957
    %v2044 = vpop.f32.mrf.mxu0
    %v2045 = vadd.f32 %v2016, %v2044
    %2046 = vmatmul.f32.gmra.mxu0 %v965
    %v2047 = vpop.f32.mrf.mxu0
    %v2048 = vadd.f32 %v2019, %v2047
    %2049 = vmatmul.f32.gmra.mxu0 %v973
    %v2050 = vpop.f32.mrf.mxu0
    %v2051 = vadd.f32 %v2022, %v2050
    %2052 = vdwg.mxu0
    %2053 = vmatpush.msra.mxu0 %v1233
    %2054 = vmatpush.msra.mxu0 %v1229
    %2055 = vmatpush.msra.mxu0 %v1225
    %2056 = vmatpush.msra.mxu0 %v1221
    %2057 = vmatpush.msra.mxu0 %v1217
    %2058 = vmatpush.msra.mxu0 %v1213
    %2059 = vmatpush.msra.mxu0 %v1209
    %2060 = vmatpush.msra.mxu0 %v1205
    %2061 = vmatpush.msra.mxu0 %v1201
    %2062 = vmatpush.msra.mxu0 %v1197
    %2063 = vmatpush.msra.mxu0 %v1193
    %2064 = vmatpush.msra.mxu0 %v1189
    %2065 = vmatpush.msra.mxu0 %v1185
    %2066 = vmatpush.msra.mxu0 %v1181
    %2067 = vmatpush.msra.mxu0 %v1177
    %2068 = vmatpush.msra.mxu0 %v1173
    %2069 = vmatmul.f32.gmra.mxu0 %v950
    %v2070 = vpop.f32.mrf.mxu0
    %v2071 = vadd.f32 %v2042, %v2070
    %2072 = vmatmul.f32.gmra.mxu0 %v958
    %v2073 = vpop.f32.mrf.mxu0
    %v2074 = vadd.f32 %v2045, %v2073
    %2075 = vmatmul.f32.gmra.mxu0 %v966
    %v2076 = vpop.f32.mrf.mxu0
    %v2077 = vadd.f32 %v2048, %v2076
    %2078 = vmatmul.f32.gmra.mxu0 %v974
    %v2079 = vpop.f32.mrf.mxu0
    %v2080 = vadd.f32 %v2051, %v2079
    %2081 = vdwg.mxu0
    %2082 = vmatpush.msra.mxu0 %v1297
    %2083 = vmatpush.msra.mxu0 %v1293
    %2084 = vmatpush.msra.mxu0 %v1289
    %2085 = vmatpush.msra.mxu0 %v1285
    %2086 = vmatpush.msra.mxu0 %v1281
    %2087 = vmatpush.msra.mxu0 %v1277
    %2088 = vmatpush.msra.mxu0 %v1273
    %2089 = vmatpush.msra.mxu0 %v1269
    %2090 = vmatpush.msra.mxu0 %v1265
    %2091 = vmatpush.msra.mxu0 %v1261
    %2092 = vmatpush.msra.mxu0 %v1257
    %2093 = vmatpush.msra.mxu0 %v1253
    %2094 = vmatpush.msra.mxu0 %v1249
    %2095 = vmatpush.msra.mxu0 %v1245
    %2096 = vmatpush.msra.mxu0 %v1241
    %2097 = vmatpush.msra.mxu0 %v1237
    %2098 = vmatmul.f32.gmra.mxu0 %v951
    %v2099 = vpop.f32.mrf.mxu0
    %v2100 = vadd.f32 %v2071, %v2099
    %2101 = vmatmul.f32.gmra.mxu0 %v959
    %v2102 = vpop.f32.mrf.mxu0
    %v2103 = vadd.f32 %v2074, %v2102
    %2104 = vmatmul.f32.gmra.mxu0 %v967
    %v2105 = vpop.f32.mrf.mxu0
    %v2106 = vadd.f32 %v2077, %v2105
    %2107 = vmatmul.f32.gmra.mxu0 %v975
    %v2108 = vpop.f32.mrf.mxu0
    %v2109 = vadd.f32 %v2080, %v2108
    %2110 = vdwg.mxu0
    %2111 = vmatpush.msra.mxu0 %v1361
    %2112 = vmatpush.msra.mxu0 %v1357
    %2113 = vmatpush.msra.mxu0 %v1353
    %2114 = vmatpush.msra.mxu0 %v1349
    %2115 = vmatpush.msra.mxu0 %v1345
    %2116 = vmatpush.msra.mxu0 %v1341
    %2117 = vmatpush.msra.mxu0 %v1337
    %2118 = vmatpush.msra.mxu0 %v1333
    %2119 = vmatpush.msra.mxu0 %v1329
    %2120 = vmatpush.msra.mxu0 %v1325
    %2121 = vmatpush.msra.mxu0 %v1321
    %2122 = vmatpush.msra.mxu0 %v1317
    %2123 = vmatpush.msra.mxu0 %v1313
    %2124 = vmatpush.msra.mxu0 %v1309
    %2125 = vmatpush.msra.mxu0 %v1305
    %2126 = vmatpush.msra.mxu0 %v1301
    %2127 = vmatmul.f32.gmra.mxu0 %v952
    %v2128 = vpop.f32.mrf.mxu0
    %v2129 = vadd.f32 %v2100, %v2128
    %2130 = vmatmul.f32.gmra.mxu0 %v960
    %v2131 = vpop.f32.mrf.mxu0
    %v2132 = vadd.f32 %v2103, %v2131
    %2133 = vmatmul.f32.gmra.mxu0 %v968
    %v2134 = vpop.f32.mrf.mxu0
    %v2135 = vadd.f32 %v2106, %v2134
    %2136 = vmatmul.f32.gmra.mxu0 %v976
    %v2137 = vpop.f32.mrf.mxu0
    %v2138 = vadd.f32 %v2109, %v2137
    %2139 = vdwg.mxu0
    %2140 = vmatpush.msra.mxu0 %v1425
    %2141 = vmatpush.msra.mxu0 %v1421
    %2142 = vmatpush.msra.mxu0 %v1417
    %2143 = vmatpush.msra.mxu0 %v1413
    %2144 = vmatpush.msra.mxu0 %v1409
    %2145 = vmatpush.msra.mxu0 %v1405
    %2146 = vmatpush.msra.mxu0 %v1401
    %2147 = vmatpush.msra.mxu0 %v1397
    %2148 = vmatpush.msra.mxu0 %v1393
    %2149 = vmatpush.msra.mxu0 %v1389
    %2150 = vmatpush.msra.mxu0 %v1385
    %2151 = vmatpush.msra.mxu0 %v1381
    %2152 = vmatpush.msra.mxu0 %v1377
    %2153 = vmatpush.msra.mxu0 %v1373
    %2154 = vmatpush.msra.mxu0 %v1369
    %2155 = vmatpush.msra.mxu0 %v1365
    %2156 = vmatmul.f32.gmra.mxu0 %v953
    %v2157 = vpop.f32.mrf.mxu0
    %v2158 = vadd.f32 %v2129, %v2157
    %2159 = vmatmul.f32.gmra.mxu0 %v961
    %v2160 = vpop.f32.mrf.mxu0
    %v2161 = vadd.f32 %v2132, %v2160
    %2162 = vmatmul.f32.gmra.mxu0 %v969
    %v2163 = vpop.f32.mrf.mxu0
    %v2164 = vadd.f32 %v2135, %v2163
    %2165 = vmatmul.f32.gmra.mxu0 %v977
    %v2166 = vpop.f32.mrf.mxu0
    %v2167 = vadd.f32 %v2138, %v2166
    %2168 = vdwg.mxu0
    %2169 = vmatpush.msra.mxu0 %v1489
    %2170 = vmatpush.msra.mxu0 %v1485
    %2171 = vmatpush.msra.mxu0 %v1481
    %2172 = vmatpush.msra.mxu0 %v1477
    %2173 = vmatpush.msra.mxu0 %v1473
    %2174 = vmatpush.msra.mxu0 %v1469
    %2175 = vmatpush.msra.mxu0 %v1465
    %2176 = vmatpush.msra.mxu0 %v1461
    %2177 = vmatpush.msra.mxu0 %v1457
    %2178 = vmatpush.msra.mxu0 %v1453
    %2179 = vmatpush.msra.mxu0 %v1449
    %2180 = vmatpush.msra.mxu0 %v1445
    %2181 = vmatpush.msra.mxu0 %v1441
    %2182 = vmatpush.msra.mxu0 %v1437
    %2183 = vmatpush.msra.mxu0 %v1433
    %2184 = vmatpush.msra.mxu0 %v1429
    %2185 = vmatmul.f32.gmra.mxu0 %v954
    %v2186 = vpop.f32.mrf.mxu0
    %v2187 = vadd.f32 %v2158, %v2186
    %2188 = vmatmul.f32.gmra.mxu0 %v962
    %v2189 = vpop.f32.mrf.mxu0
    %v2190 = vadd.f32 %v2161, %v2189
    %2191 = vmatmul.f32.gmra.mxu0 %v970
    %v2192 = vpop.f32.mrf.mxu0
    %v2193 = vadd.f32 %v2164, %v2192
    %2194 = vmatmul.f32.gmra.mxu0 %v978
    %v2195 = vpop.f32.mrf.mxu0
    %v2196 = vadd.f32 %v2167, %v2195
    %2197 = vdwg.mxu0
    %2198 = vmatpush.msra.mxu0 %v1042
    %2199 = vmatpush.msra.mxu0 %v1038
    %2200 = vmatpush.msra.mxu0 %v1034
    %2201 = vmatpush.msra.mxu0 %v1030
    %2202 = vmatpush.msra.mxu0 %v1026
    %2203 = vmatpush.msra.mxu0 %v1022
    %2204 = vmatpush.msra.mxu0 %v1018
    %2205 = vmatpush.msra.mxu0 %v1014
    %2206 = vmatpush.msra.mxu0 %v1010
    %2207 = vmatpush.msra.mxu0 %v1006
    %2208 = vmatpush.msra.mxu0 %v1002
    %2209 = vmatpush.msra.mxu0 %v998
    %2210 = vmatpush.msra.mxu0 %v994
    %2211 = vmatpush.msra.mxu0 %v990
    %2212 = vmatpush.msra.mxu0 %v986
    %2213 = vmatpush.msra.mxu0 %v982
    %2214 = vmatmul.f32.gmra.mxu0 %v947
    %v2215 = vpop.f32.mrf.mxu0
    %v2216 = vadd.f32 %v1497, %v2215
    %2217 = vmatmul.f32.gmra.mxu0 %v955
    %v2218 = vpop.f32.mrf.mxu0
    %v2219 = vadd.f32 %v1497, %v2218
    %2220 = vmatmul.f32.gmra.mxu0 %v963
    %v2221 = vpop.f32.mrf.mxu0
    %v2222 = vadd.f32 %v1497, %v2221
    %2223 = vmatmul.f32.gmra.mxu0 %v971
    %v2224 = vpop.f32.mrf.mxu0
    %v2225 = vadd.f32 %v1497, %v2224
    %2226 = vdwg.mxu0
    %2227 = vmatpush.msra.mxu0 %v1106
    %2228 = vmatpush.msra.mxu0 %v1102
    %2229 = vmatpush.msra.mxu0 %v1098
    %2230 = vmatpush.msra.mxu0 %v1094
    %2231 = vmatpush.msra.mxu0 %v1090
    %2232 = vmatpush.msra.mxu0 %v1086
    %2233 = vmatpush.msra.mxu0 %v1082
    %2234 = vmatpush.msra.mxu0 %v1078
    %2235 = vmatpush.msra.mxu0 %v1074
    %2236 = vmatpush.msra.mxu0 %v1070
    %2237 = vmatpush.msra.mxu0 %v1066
    %2238 = vmatpush.msra.mxu0 %v1062
    %2239 = vmatpush.msra.mxu0 %v1058
    %2240 = vmatpush.msra.mxu0 %v1054
    %2241 = vmatpush.msra.mxu0 %v1050
    %2242 = vmatpush.msra.mxu0 %v1046
    %2243 = vmatmul.f32.gmra.mxu0 %v948
    %v2244 = vpop.f32.mrf.mxu0
    %v2245 = vadd.f32 %v2216, %v2244
    %2246 = vmatmul.f32.gmra.mxu0 %v956
    %v2247 = vpop.f32.mrf.mxu0
    %v2248 = vadd.f32 %v2219, %v2247
    %2249 = vmatmul.f32.gmra.mxu0 %v964
    %v2250 = vpop.f32.mrf.mxu0
    %v2251 = vadd.f32 %v2222, %v2250
    %2252 = vmatmul.f32.gmra.mxu0 %v972
    %v2253 = vpop.f32.mrf.mxu0
    %v2254 = vadd.f32 %v2225, %v2253
    %2255 = vdwg.mxu0
    %2256 = vmatpush.msra.mxu0 %v1170
    %2257 = vmatpush.msra.mxu0 %v1166
    %2258 = vmatpush.msra.mxu0 %v1162
    %2259 = vmatpush.msra.mxu0 %v1158
    %2260 = vmatpush.msra.mxu0 %v1154
    %2261 = vmatpush.msra.mxu0 %v1150
    %2262 = vmatpush.msra.mxu0 %v1146
    %2263 = vmatpush.msra.mxu0 %v1142
    %2264 = vmatpush.msra.mxu0 %v1138
    %2265 = vmatpush.msra.mxu0 %v1134
    %2266 = vmatpush.msra.mxu0 %v1130
    %2267 = vmatpush.msra.mxu0 %v1126
    %2268 = vmatpush.msra.mxu0 %v1122
    %2269 = vmatpush.msra.mxu0 %v1118
    %2270 = vmatpush.msra.mxu0 %v1114
    %2271 = vmatpush.msra.mxu0 %v1110
    %2272 = vmatmul.f32.gmra.mxu0 %v949
    %v2273 = vpop.f32.mrf.mxu0
    %v2274 = vadd.f32 %v2245, %v2273
    %2275 = vmatmul.f32.gmra.mxu0 %v957
    %v2276 = vpop.f32.mrf.mxu0
    %v2277 = vadd.f32 %v2248, %v2276
    %2278 = vmatmul.f32.gmra.mxu0 %v965
    %v2279 = vpop.f32.mrf.mxu0
    %v2280 = vadd.f32 %v2251, %v2279
    %2281 = vmatmul.f32.gmra.mxu0 %v973
    %v2282 = vpop.f32.mrf.mxu0
    %v2283 = vadd.f32 %v2254, %v2282
    %2284 = vdwg.mxu0
    %2285 = vmatpush.msra.mxu0 %v1234
    %2286 = vmatpush.msra.mxu0 %v1230
    %2287 = vmatpush.msra.mxu0 %v1226
    %2288 = vmatpush.msra.mxu0 %v1222
    %2289 = vmatpush.msra.mxu0 %v1218
    %2290 = vmatpush.msra.mxu0 %v1214
    %2291 = vmatpush.msra.mxu0 %v1210
    %2292 = vmatpush.msra.mxu0 %v1206
    %2293 = vmatpush.msra.mxu0 %v1202
    %2294 = vmatpush.msra.mxu0 %v1198
    %2295 = vmatpush.msra.mxu0 %v1194
    %2296 = vmatpush.msra.mxu0 %v1190
    %2297 = vmatpush.msra.mxu0 %v1186
    %2298 = vmatpush.msra.mxu0 %v1182
    %2299 = vmatpush.msra.mxu0 %v1178
    %2300 = vmatpush.msra.mxu0 %v1174
    %2301 = vmatmul.f32.gmra.mxu0 %v950
    %v2302 = vpop.f32.mrf.mxu0
    %v2303 = vadd.f32 %v2274, %v2302
    %2304 = vmatmul.f32.gmra.mxu0 %v958
    %v2305 = vpop.f32.mrf.mxu0
    %v2306 = vadd.f32 %v2277, %v2305
    %2307 = vmatmul.f32.gmra.mxu0 %v966
    %v2308 = vpop.f32.mrf.mxu0
    %v2309 = vadd.f32 %v2280, %v2308
    %2310 = vmatmul.f32.gmra.mxu0 %v974
    %v2311 = vpop.f32.mrf.mxu0
    %v2312 = vadd.f32 %v2283, %v2311
    %2313 = vdwg.mxu0
    %2314 = vmatpush.msra.mxu0 %v1298
    %2315 = vmatpush.msra.mxu0 %v1294
    %2316 = vmatpush.msra.mxu0 %v1290
    %2317 = vmatpush.msra.mxu0 %v1286
    %2318 = vmatpush.msra.mxu0 %v1282
    %2319 = vmatpush.msra.mxu0 %v1278
    %2320 = vmatpush.msra.mxu0 %v1274
    %2321 = vmatpush.msra.mxu0 %v1270
    %2322 = vmatpush.msra.mxu0 %v1266
    %2323 = vmatpush.msra.mxu0 %v1262
    %2324 = vmatpush.msra.mxu0 %v1258
    %2325 = vmatpush.msra.mxu0 %v1254
    %2326 = vmatpush.msra.mxu0 %v1250
    %2327 = vmatpush.msra.mxu0 %v1246
    %2328 = vmatpush.msra.mxu0 %v1242
    %2329 = vmatpush.msra.mxu0 %v1238
    %2330 = vmatmul.f32.gmra.mxu0 %v951
    %v2331 = vpop.f32.mrf.mxu0
    %v2332 = vadd.f32 %v2303, %v2331
    %2333 = vmatmul.f32.gmra.mxu0 %v959
    %v2334 = vpop.f32.mrf.mxu0
    %v2335 = vadd.f32 %v2306, %v2334
    %2336 = vmatmul.f32.gmra.mxu0 %v967
    %v2337 = vpop.f32.mrf.mxu0
    %v2338 = vadd.f32 %v2309, %v2337
    %2339 = vmatmul.f32.gmra.mxu0 %v975
    %v2340 = vpop.f32.mrf.mxu0
    %v2341 = vadd.f32 %v2312, %v2340
    %2342 = vdwg.mxu0
    %2343 = vmatpush.msra.mxu0 %v1362
    %2344 = vmatpush.msra.mxu0 %v1358
    %2345 = vmatpush.msra.mxu0 %v1354
    %2346 = vmatpush.msra.mxu0 %v1350
    %2347 = vmatpush.msra.mxu0 %v1346
    %2348 = vmatpush.msra.mxu0 %v1342
    %2349 = vmatpush.msra.mxu0 %v1338
    %2350 = vmatpush.msra.mxu0 %v1334
    %2351 = vmatpush.msra.mxu0 %v1330
    %2352 = vmatpush.msra.mxu0 %v1326
    %2353 = vmatpush.msra.mxu0 %v1322
    %2354 = vmatpush.msra.mxu0 %v1318
    %2355 = vmatpush.msra.mxu0 %v1314
    %2356 = vmatpush.msra.mxu0 %v1310
    %2357 = vmatpush.msra.mxu0 %v1306
    %2358 = vmatpush.msra.mxu0 %v1302
    %2359 = vmatmul.f32.gmra.mxu0 %v952
    %v2360 = vpop.f32.mrf.mxu0
    %v2361 = vadd.f32 %v2332, %v2360
    %2362 = vmatmul.f32.gmra.mxu0 %v960
    %v2363 = vpop.f32.mrf.mxu0
    %v2364 = vadd.f32 %v2335, %v2363
    %2365 = vmatmul.f32.gmra.mxu0 %v968
    %v2366 = vpop.f32.mrf.mxu0
    %v2367 = vadd.f32 %v2338, %v2366
    %2368 = vmatmul.f32.gmra.mxu0 %v976
    %v2369 = vpop.f32.mrf.mxu0
    %v2370 = vadd.f32 %v2341, %v2369
    %2371 = vdwg.mxu0
    %2372 = vmatpush.msra.mxu0 %v1426
    %2373 = vmatpush.msra.mxu0 %v1422
    %2374 = vmatpush.msra.mxu0 %v1418
    %2375 = vmatpush.msra.mxu0 %v1414
    %2376 = vmatpush.msra.mxu0 %v1410
    %2377 = vmatpush.msra.mxu0 %v1406
    %2378 = vmatpush.msra.mxu0 %v1402
    %2379 = vmatpush.msra.mxu0 %v1398
    %2380 = vmatpush.msra.mxu0 %v1394
    %2381 = vmatpush.msra.mxu0 %v1390
    %2382 = vmatpush.msra.mxu0 %v1386
    %2383 = vmatpush.msra.mxu0 %v1382
    %2384 = vmatpush.msra.mxu0 %v1378
    %2385 = vmatpush.msra.mxu0 %v1374
    %2386 = vmatpush.msra.mxu0 %v1370
    %2387 = vmatpush.msra.mxu0 %v1366
    %2388 = vmatmul.f32.gmra.mxu0 %v953
    %v2389 = vpop.f32.mrf.mxu0
    %v2390 = vadd.f32 %v2361, %v2389
    %2391 = vmatmul.f32.gmra.mxu0 %v961
    %v2392 = vpop.f32.mrf.mxu0
    %v2393 = vadd.f32 %v2364, %v2392
    %2394 = vmatmul.f32.gmra.mxu0 %v969
    %v2395 = vpop.f32.mrf.mxu0
    %v2396 = vadd.f32 %v2367, %v2395
    %2397 = vmatmul.f32.gmra.mxu0 %v977
    %v2398 = vpop.f32.mrf.mxu0
    %v2399 = vadd.f32 %v2370, %v2398
    %2400 = vdwg.mxu0
    %2401 = vmatpush.msra.mxu0 %v1490
    %2402 = vmatpush.msra.mxu0 %v1486
    %2403 = vmatpush.msra.mxu0 %v1482
    %2404 = vmatpush.msra.mxu0 %v1478
    %2405 = vmatpush.msra.mxu0 %v1474
    %2406 = vmatpush.msra.mxu0 %v1470
    %2407 = vmatpush.msra.mxu0 %v1466
    %2408 = vmatpush.msra.mxu0 %v1462
    %2409 = vmatpush.msra.mxu0 %v1458
    %2410 = vmatpush.msra.mxu0 %v1454
    %2411 = vmatpush.msra.mxu0 %v1450
    %2412 = vmatpush.msra.mxu0 %v1446
    %2413 = vmatpush.msra.mxu0 %v1442
    %2414 = vmatpush.msra.mxu0 %v1438
    %2415 = vmatpush.msra.mxu0 %v1434
    %2416 = vmatpush.msra.mxu0 %v1430
    %2417 = vmatmul.f32.gmra.mxu0 %v954
    %v2418 = vpop.f32.mrf.mxu0
    %v2419 = vadd.f32 %v2390, %v2418
    %2420 = vmatmul.f32.gmra.mxu0 %v962
    %v2421 = vpop.f32.mrf.mxu0
    %v2422 = vadd.f32 %v2393, %v2421
    %2423 = vmatmul.f32.gmra.mxu0 %v970
    %v2424 = vpop.f32.mrf.mxu0
    %v2425 = vadd.f32 %v2396, %v2424
    %2426 = vmatmul.f32.gmra.mxu0 %v978
    %v2427 = vpop.f32.mrf.mxu0
    %v2428 = vadd.f32 %v2399, %v2427
    %2429 = vdwg.mxu0
    %v2430 = vmax.f32 %v1723, 0.0
    %v2431 = vmax.f32 %v1955, 0.0
    %v2432 = vmax.f32 %v2187, 0.0
    %v2433 = vmax.f32 %v2419, 0.0
    %v2434 = vmax.f32 %v1726, 0.0
    %v2435 = vmax.f32 %v1958, 0.0
    %v2436 = vmax.f32 %v2190, 0.0
    %v2437 = vmax.f32 %v2422, 0.0
    %v2438 = vmax.f32 %v1729, 0.0
    %v2439 = vmax.f32 %v1961, 0.0
    %v2440 = vmax.f32 %v2193, 0.0
    %v2441 = vmax.f32 %v2425, 0.0
    %v2442 = vmax.f32 %v1732, 0.0
    %v2443 = vmax.f32 %v1964, 0.0
    %v2444 = vmax.f32 %v2196, 0.0
    %v2445 = vmax.f32 %v2428, 0.0
    %2446 = vst [vmem:[#allocation3] sm:$0xff] %v2430
    %2447 = vst [vmem:[#allocation3 + $0x8] sm:$0xff] %v2431
    %2448 = vst [vmem:[#allocation3 + $0x10] sm:$0xff] %v2432
    %2449 = vst [vmem:[#allocation3 + $0x18] sm:$0xff] %v2433
    %2450 = vst [vmem:[#allocation3 + $0x20] sm:$0xff] %v2434
    %2451 = vst [vmem:[#allocation3 + $0x28] sm:$0xff] %v2435
    %2452 = vst [vmem:[#allocation3 + $0x30] sm:$0xff] %v2436
    %2453 = vst [vmem:[#allocation3 + $0x38] sm:$0xff] %v2437
    %2454 = vst [vmem:[#allocation3 + $0x40] sm:$0xff] %v2438
    %2455 = vst [vmem:[#allocation3 + $0x48] sm:$0xff] %v2439
    %2456 = vst [vmem:[#allocation3 + $0x50] sm:$0xff] %v2440
    %2457 = vst [vmem:[#allocation3 + $0x58] sm:$0xff] %v2441
    %2458 = vst [vmem:[#allocation3 + $0x60] sm:$0xff] %v2442
    %2459 = vst [vmem:[#allocation3 + $0x68] sm:$0xff] %v2443
    %2460 = vst [vmem:[#allocation3 + $0x70] sm:$0xff] %v2444
    %2461 = vst [vmem:[#allocation3 + $0x78] sm:$0xff] %v2445
    %v2462 = vld [vmem:[#allocation3] sm:$0xff]
    %v2463 = vld [vmem:[#allocation3 + $0x8] sm:$0xff]
    %v2464 = vld [vmem:[#allocation3 + $0x10] sm:$0xff]
    %v2465 = vld [vmem:[#allocation3 + $0x18] sm:$0xff]
    %v2466 = vld [vmem:[#allocation3 + $0x20] sm:$0xff]
    %v2467 = vld [vmem:[#allocation3 + $0x28] sm:$0xff]
    %v2468 = vld [vmem:[#allocation3 + $0x30] sm:$0xff]
    %v2469 = vld [vmem:[#allocation3 + $0x38] sm:$0xff]
    %v2470 = vld [vmem:[#allocation3 + $0x40] sm:$0xff]
    %v2471 = vld [vmem:[#allocation3 + $0x48] sm:$0xff]
    %v2472 = vld [vmem:[#allocation3 + $0x50] sm:$0xff]
    %v2473 = vld [vmem:[#allocation3 + $0x58] sm:$0xff]
    %v2474 = vld [vmem:[#allocation3 + $0x60] sm:$0xff]
    %v2475 = vld [vmem:[#allocation3 + $0x68] sm:$0xff]
    %v2476 = vld [vmem:[#allocation3 + $0x70] sm:$0xff]
    %v2477 = vld [vmem:[#allocation3 + $0x78] sm:$0xff]
    %v2478 = vld [vmem:[#allocation6] sm:$0xff]
    %v2479 = vld [vmem:[#allocation6 + $0x8] sm:$0xff]
    %v2480 = vld [vmem:[#allocation6 + $0x10] sm:$0xff]
    %v2481 = vld [vmem:[#allocation6 + $0x18] sm:$0xff]
    %v2482 = vld [vmem:[#allocation6 + $0x20] sm:$0xff]
    %v2483 = vld [vmem:[#allocation6 + $0x28] sm:$0xff]
    %v2484 = vld [vmem:[#allocation6 + $0x30] sm:$0xff]
    %v2485 = vld [vmem:[#allocation6 + $0x38] sm:$0xff]
    %v2486 = vld [vmem:[#allocation6 + $0x40] sm:$0xff]
    %v2487 = vld [vmem:[#allocation6 + $0x48] sm:$0xff]
    %v2488 = vld [vmem:[#allocation6 + $0x50] sm:$0xff]
    %v2489 = vld [vmem:[#allocation6 + $0x58] sm:$0xff]
    %v2490 = vld [vmem:[#allocation6 + $0x60] sm:$0xff]
    %v2491 = vld [vmem:[#allocation6 + $0x68] sm:$0xff]
    %v2492 = vld [vmem:[#allocation6 + $0x70] sm:$0xff]
    %v2493 = vld [vmem:[#allocation6 + $0x78] sm:$0xff]
    %v2494 = vld [vmem:[#allocation6 + $0x80] sm:$0xff]
    %v2495 = vld [vmem:[#allocation6 + $0x88] sm:$0xff]
    %v2496 = vld [vmem:[#allocation6 + $0x90] sm:$0xff]
    %v2497 = vld [vmem:[#allocation6 + $0x98] sm:$0xff]
    %v2498 = vld [vmem:[#allocation6 + $0xa0] sm:$0xff]
    %v2499 = vld [vmem:[#allocation6 + $0xa8] sm:$0xff]
    %v2500 = vld [vmem:[#allocation6 + $0xb0] sm:$0xff]
    %v2501 = vld [vmem:[#allocation6 + $0xb8] sm:$0xff]
    %v2502 = vld [vmem:[#allocation6 + $0xc0] sm:$0xff]
    %v2503 = vld [vmem:[#allocation6 + $0xc8] sm:$0xff]
    %v2504 = vld [vmem:[#allocation6 + $0xd0] sm:$0xff]
    %v2505 = vld [vmem:[#allocation6 + $0xd8] sm:$0xff]
    %v2506 = vld [vmem:[#allocation6 + $0xe0] sm:$0xff]
    %v2507 = vld [vmem:[#allocation6 + $0xe8] sm:$0xff]
    %v2508 = vld [vmem:[#allocation6 + $0xf0] sm:$0xff]
    %v2509 = vld [vmem:[#allocation6 + $0xf8] sm:$0xff]
    %v2510 = vld [vmem:[#allocation6 + $0x100] sm:$0xff]
    %v2511 = vld [vmem:[#allocation6 + $0x108] sm:$0xff]
    %v2512 = vld [vmem:[#allocation6 + $0x110] sm:$0xff]
    %v2513 = vld [vmem:[#allocation6 + $0x118] sm:$0xff]
    %v2514 = vld [vmem:[#allocation6 + $0x120] sm:$0xff]
    %v2515 = vld [vmem:[#allocation6 + $0x128] sm:$0xff]
    %v2516 = vld [vmem:[#allocation6 + $0x130] sm:$0xff]
    %v2517 = vld [vmem:[#allocation6 + $0x138] sm:$0xff]
    %v2518 = vld [vmem:[#allocation6 + $0x140] sm:$0xff]
    %v2519 = vld [vmem:[#allocation6 + $0x148] sm:$0xff]
    %v2520 = vld [vmem:[#allocation6 + $0x150] sm:$0xff]
    %v2521 = vld [vmem:[#allocation6 + $0x158] sm:$0xff]
    %v2522 = vld [vmem:[#allocation6 + $0x160] sm:$0xff]
    %v2523 = vld [vmem:[#allocation6 + $0x168] sm:$0xff]
    %v2524 = vld [vmem:[#allocation6 + $0x170] sm:$0xff]
    %v2525 = vld [vmem:[#allocation6 + $0x178] sm:$0xff]
    %v2526 = vld [vmem:[#allocation6 + $0x180] sm:$0xff]
    %v2527 = vld [vmem:[#allocation6 + $0x188] sm:$0xff]
    %v2528 = vld [vmem:[#allocation6 + $0x190] sm:$0xff]
    %v2529 = vld [vmem:[#allocation6 + $0x198] sm:$0xff]
    %v2530 = vld [vmem:[#allocation6 + $0x1a0] sm:$0xff]
    %v2531 = vld [vmem:[#allocation6 + $0x1a8] sm:$0xff]
    %v2532 = vld [vmem:[#allocation6 + $0x1b0] sm:$0xff]
    %v2533 = vld [vmem:[#allocation6 + $0x1b8] sm:$0xff]
    %v2534 = vld [vmem:[#allocation6 + $0x1c0] sm:$0xff]
    %v2535 = vld [vmem:[#allocation6 + $0x1c8] sm:$0xff]
    %v2536 = vld [vmem:[#allocation6 + $0x1d0] sm:$0xff]
    %v2537 = vld [vmem:[#allocation6 + $0x1d8] sm:$0xff]
    %v2538 = vld [vmem:[#allocation6 + $0x1e0] sm:$0xff]
    %v2539 = vld [vmem:[#allocation6 + $0x1e8] sm:$0xff]
    %v2540 = vld [vmem:[#allocation6 + $0x1f0] sm:$0xff]
    %v2541 = vld [vmem:[#allocation6 + $0x1f8] sm:$0xff]
    %v2542 = vld [vmem:[#allocation6 + $0x200] sm:$0xff]
    %v2543 = vld [vmem:[#allocation6 + $0x208] sm:$0xff]
    %v2544 = vld [vmem:[#allocation6 + $0x210] sm:$0xff]
    %v2545 = vld [vmem:[#allocation6 + $0x218] sm:$0xff]
    %v2546 = vld [vmem:[#allocation6 + $0x220] sm:$0xff]
    %v2547 = vld [vmem:[#allocation6 + $0x228] sm:$0xff]
    %v2548 = vld [vmem:[#allocation6 + $0x230] sm:$0xff]
    %v2549 = vld [vmem:[#allocation6 + $0x238] sm:$0xff]
    %v2550 = vld [vmem:[#allocation6 + $0x240] sm:$0xff]
    %v2551 = vld [vmem:[#allocation6 + $0x248] sm:$0xff]
    %v2552 = vld [vmem:[#allocation6 + $0x250] sm:$0xff]
    %v2553 = vld [vmem:[#allocation6 + $0x258] sm:$0xff]
    %v2554 = vld [vmem:[#allocation6 + $0x260] sm:$0xff]
    %v2555 = vld [vmem:[#allocation6 + $0x268] sm:$0xff]
    %v2556 = vld [vmem:[#allocation6 + $0x270] sm:$0xff]
    %v2557 = vld [vmem:[#allocation6 + $0x278] sm:$0xff]
    %v2558 = vld [vmem:[#allocation6 + $0x280] sm:$0xff]
    %v2559 = vld [vmem:[#allocation6 + $0x288] sm:$0xff]
    %v2560 = vld [vmem:[#allocation6 + $0x290] sm:$0xff]
    %v2561 = vld [vmem:[#allocation6 + $0x298] sm:$0xff]
    %v2562 = vld [vmem:[#allocation6 + $0x2a0] sm:$0xff]
    %v2563 = vld [vmem:[#allocation6 + $0x2a8] sm:$0xff]
    %v2564 = vld [vmem:[#allocation6 + $0x2b0] sm:$0xff]
    %v2565 = vld [vmem:[#allocation6 + $0x2b8] sm:$0xff]
    %v2566 = vld [vmem:[#allocation6 + $0x2c0] sm:$0xff]
    %v2567 = vld [vmem:[#allocation6 + $0x2c8] sm:$0xff]
    %v2568 = vld [vmem:[#allocation6 + $0x2d0] sm:$0xff]
    %v2569 = vld [vmem:[#allocation6 + $0x2d8] sm:$0xff]
    %v2570 = vld [vmem:[#allocation6 + $0x2e0] sm:$0xff]
    %v2571 = vld [vmem:[#allocation6 + $0x2e8] sm:$0xff]
    %v2572 = vld [vmem:[#allocation6 + $0x2f0] sm:$0xff]
    %v2573 = vld [vmem:[#allocation6 + $0x2f8] sm:$0xff]
    %v2574 = vld [vmem:[#allocation6 + $0x300] sm:$0xff]
    %v2575 = vld [vmem:[#allocation6 + $0x308] sm:$0xff]
    %v2576 = vld [vmem:[#allocation6 + $0x310] sm:$0xff]
    %v2577 = vld [vmem:[#allocation6 + $0x318] sm:$0xff]
    %v2578 = vld [vmem:[#allocation6 + $0x320] sm:$0xff]
    %v2579 = vld [vmem:[#allocation6 + $0x328] sm:$0xff]
    %v2580 = vld [vmem:[#allocation6 + $0x330] sm:$0xff]
    %v2581 = vld [vmem:[#allocation6 + $0x338] sm:$0xff]
    %v2582 = vld [vmem:[#allocation6 + $0x340] sm:$0xff]
    %v2583 = vld [vmem:[#allocation6 + $0x348] sm:$0xff]
    %v2584 = vld [vmem:[#allocation6 + $0x350] sm:$0xff]
    %v2585 = vld [vmem:[#allocation6 + $0x358] sm:$0xff]
    %v2586 = vld [vmem:[#allocation6 + $0x360] sm:$0xff]
    %v2587 = vld [vmem:[#allocation6 + $0x368] sm:$0xff]
    %v2588 = vld [vmem:[#allocation6 + $0x370] sm:$0xff]
    %v2589 = vld [vmem:[#allocation6 + $0x378] sm:$0xff]
    %v2590 = vld [vmem:[#allocation6 + $0x380] sm:$0xff]
    %v2591 = vld [vmem:[#allocation6 + $0x388] sm:$0xff]
    %v2592 = vld [vmem:[#allocation6 + $0x390] sm:$0xff]
    %v2593 = vld [vmem:[#allocation6 + $0x398] sm:$0xff]
    %v2594 = vld [vmem:[#allocation6 + $0x3a0] sm:$0xff]
    %v2595 = vld [vmem:[#allocation6 + $0x3a8] sm:$0xff]
    %v2596 = vld [vmem:[#allocation6 + $0x3b0] sm:$0xff]
    %v2597 = vld [vmem:[#allocation6 + $0x3b8] sm:$0xff]
    %v2598 = vld [vmem:[#allocation6 + $0x3c0] sm:$0xff]
    %v2599 = vld [vmem:[#allocation6 + $0x3c8] sm:$0xff]
    %v2600 = vld [vmem:[#allocation6 + $0x3d0] sm:$0xff]
    %v2601 = vld [vmem:[#allocation6 + $0x3d8] sm:$0xff]
    %v2602 = vld [vmem:[#allocation6 + $0x3e0] sm:$0xff]
    %v2603 = vld [vmem:[#allocation6 + $0x3e8] sm:$0xff]
    %v2604 = vld [vmem:[#allocation6 + $0x3f0] sm:$0xff]
    %v2605 = vld [vmem:[#allocation6 + $0x3f8] sm:$0xff]
    %s2606 = scalar_lea.vmem %s11, 2
    %v2607 = vld [vmem:[%s2606] ss:$8 sm:$0x3]
    %v2609 = vperm.slane %v2607, 0
    %v2610 = vperm.slane %v2607, 1
    %2613 = vmatpush.msra.mxu0 %v2508
    %2614 = vmatpush.msra.mxu0 %v2506
    %2615 = vmatpush.msra.mxu0 %v2504
    %2616 = vmatpush.msra.mxu0 %v2502
    %2617 = vmatpush.msra.mxu0 %v2500
    %2618 = vmatpush.msra.mxu0 %v2498
    %2619 = vmatpush.msra.mxu0 %v2496
    %2620 = vmatpush.msra.mxu0 %v2494
    %2621 = vmatpush.msra.mxu0 %v2492
    %2622 = vmatpush.msra.mxu0 %v2490
    %2623 = vmatpush.msra.mxu0 %v2488
    %2624 = vmatpush.msra.mxu0 %v2486
    %2625 = vmatpush.msra.mxu0 %v2484
    %2626 = vmatpush.msra.mxu0 %v2482
    %2627 = vmatpush.msra.mxu0 %v2480
    %2628 = vmatpush.msra.mxu0 %v2478
    %2629 = vmatmul.f32.gmra.mxu0 %v2462
    %v2630 = vpop.f32.mrf.mxu0
    %v2631 = vadd.f32 %v2609, %v2630
    %2632 = vmatmul.f32.gmra.mxu0 %v2466
    %v2633 = vpop.f32.mrf.mxu0
    %v2634 = vadd.f32 %v2609, %v2633
    %2635 = vmatmul.f32.gmra.mxu0 %v2470
    %v2636 = vpop.f32.mrf.mxu0
    %v2637 = vadd.f32 %v2609, %v2636
    %2638 = vmatmul.f32.gmra.mxu0 %v2474
    %v2639 = vpop.f32.mrf.mxu0
    %v2640 = vadd.f32 %v2609, %v2639
    %2641 = vdwg.mxu0
    %2642 = vmatpush.msra.mxu0 %v2540
    %2643 = vmatpush.msra.mxu0 %v2538
    %2644 = vmatpush.msra.mxu0 %v2536
    %2645 = vmatpush.msra.mxu0 %v2534
    %2646 = vmatpush.msra.mxu0 %v2532
    %2647 = vmatpush.msra.mxu0 %v2530
    %2648 = vmatpush.msra.mxu0 %v2528
    %2649 = vmatpush.msra.mxu0 %v2526
    %2650 = vmatpush.msra.mxu0 %v2524
    %2651 = vmatpush.msra.mxu0 %v2522
    %2652 = vmatpush.msra.mxu0 %v2520
    %2653 = vmatpush.msra.mxu0 %v2518
    %2654 = vmatpush.msra.mxu0 %v2516
    %2655 = vmatpush.msra.mxu0 %v2514
    %2656 = vmatpush.msra.mxu0 %v2512
    %2657 = vmatpush.msra.mxu0 %v2510
    %2658 = vmatmul.f32.gmra.mxu0 %v2463
    %v2659 = vpop.f32.mrf.mxu0
    %v2660 = vadd.f32 %v2631, %v2659
    %2661 = vmatmul.f32.gmra.mxu0 %v2467
    %v2662 = vpop.f32.mrf.mxu0
    %v2663 = vadd.f32 %v2634, %v2662
    %2664 = vmatmul.f32.gmra.mxu0 %v2471
    %v2665 = vpop.f32.mrf.mxu0
    %v2666 = vadd.f32 %v2637, %v2665
    %2667 = vmatmul.f32.gmra.mxu0 %v2475
    %v2668 = vpop.f32.mrf.mxu0
    %v2669 = vadd.f32 %v2640, %v2668
    %2670 = vdwg.mxu0
    %2671 = vmatpush.msra.mxu0 %v2572
    %2672 = vmatpush.msra.mxu0 %v2570
    %2673 = vmatpush.msra.mxu0 %v2568
    %2674 = vmatpush.msra.mxu0 %v2566
    %2675 = vmatpush.msra.mxu0 %v2564
    %2676 = vmatpush.msra.mxu0 %v2562
    %2677 = vmatpush.msra.mxu0 %v2560
    %2678 = vmatpush.msra.mxu0 %v2558
    %2679 = vmatpush.msra.mxu0 %v2556
    %2680 = vmatpush.msra.mxu0 %v2554
    %2681 = vmatpush.msra.mxu0 %v2552
    %2682 = vmatpush.msra.mxu0 %v2550
    %2683 = vmatpush.msra.mxu0 %v2548
    %2684 = vmatpush.msra.mxu0 %v2546
    %2685 = vmatpush.msra.mxu0 %v2544
    %2686 = vmatpush.msra.mxu0 %v2542
    %2687 = vmatmul.f32.gmra.mxu0 %v2464
    %v2688 = vpop.f32.mrf.mxu0
    %v2689 = vadd.f32 %v2660, %v2688
    %2690 = vmatmul.f32.gmra.mxu0 %v2468
    %v2691 = vpop.f32.mrf.mxu0
    %v2692 = vadd.f32 %v2663, %v2691
    %2693 = vmatmul.f32.gmra.mxu0 %v2472
    %v2694 = vpop.f32.mrf.mxu0
    %v2695 = vadd.f32 %v2666, %v2694
    %2696 = vmatmul.f32.gmra.mxu0 %v2476
    %v2697 = vpop.f32.mrf.mxu0
    %v2698 = vadd.f32 %v2669, %v2697
    %2699 = vdwg.mxu0
    %2700 = vmatpush.msra.mxu0 %v2604
    %2701 = vmatpush.msra.mxu0 %v2602
    %2702 = vmatpush.msra.mxu0 %v2600
    %2703 = vmatpush.msra.mxu0 %v2598
    %2704 = vmatpush.msra.mxu0 %v2596
    %2705 = vmatpush.msra.mxu0 %v2594
    %2706 = vmatpush.msra.mxu0 %v2592
    %2707 = vmatpush.msra.mxu0 %v2590
    %2708 = vmatpush.msra.mxu0 %v2588
    %2709 = vmatpush.msra.mxu0 %v2586
    %2710 = vmatpush.msra.mxu0 %v2584
    %2711 = vmatpush.msra.mxu0 %v2582
    %2712 = vmatpush.msra.mxu0 %v2580
    %2713 = vmatpush.msra.mxu0 %v2578
    %2714 = vmatpush.msra.mxu0 %v2576
    %2715 = vmatpush.msra.mxu0 %v2574
    %2716 = vmatmul.f32.gmra.mxu0 %v2465
    %v2717 = vpop.f32.mrf.mxu0
    %v2718 = vadd.f32 %v2689, %v2717
    %2719 = vmatmul.f32.gmra.mxu0 %v2469
    %v2720 = vpop.f32.mrf.mxu0
    %v2721 = vadd.f32 %v2692, %v2720
    %2722 = vmatmul.f32.gmra.mxu0 %v2473
    %v2723 = vpop.f32.mrf.mxu0
    %v2724 = vadd.f32 %v2695, %v2723
    %2725 = vmatmul.f32.gmra.mxu0 %v2477
    %v2726 = vpop.f32.mrf.mxu0
    %v2727 = vadd.f32 %v2698, %v2726
    %2728 = vdwg.mxu0
    %2729 = vmatpush.msra.mxu0 %v2509
    %2730 = vmatpush.msra.mxu0 %v2507
    %2731 = vmatpush.msra.mxu0 %v2505
    %2732 = vmatpush.msra.mxu0 %v2503
    %2733 = vmatpush.msra.mxu0 %v2501
    %2734 = vmatpush.msra.mxu0 %v2499
    %2735 = vmatpush.msra.mxu0 %v2497
    %2736 = vmatpush.msra.mxu0 %v2495
    %2737 = vmatpush.msra.mxu0 %v2493
    %2738 = vmatpush.msra.mxu0 %v2491
    %2739 = vmatpush.msra.mxu0 %v2489
    %2740 = vmatpush.msra.mxu0 %v2487
    %2741 = vmatpush.msra.mxu0 %v2485
    %2742 = vmatpush.msra.mxu0 %v2483
    %2743 = vmatpush.msra.mxu0 %v2481
    %2744 = vmatpush.msra.mxu0 %v2479
    %2745 = vmatmul.f32.gmra.mxu0 %v2462
    %v2746 = vpop.f32.mrf.mxu0
    %v2747 = vadd.f32 %v2610, %v2746
    %2748 = vmatmul.f32.gmra.mxu0 %v2466
    %v2749 = vpop.f32.mrf.mxu0
    %v2750 = vadd.f32 %v2610, %v2749
    %2751 = vmatmul.f32.gmra.mxu0 %v2470
    %v2752 = vpop.f32.mrf.mxu0
    %v2753 = vadd.f32 %v2610, %v2752
    %2754 = vmatmul.f32.gmra.mxu0 %v2474
    %v2755 = vpop.f32.mrf.mxu0
    %v2756 = vadd.f32 %v2610, %v2755
    %2757 = vdwg.mxu0
    %2758 = vmatpush.msra.mxu0 %v2541
    %2759 = vmatpush.msra.mxu0 %v2539
    %2760 = vmatpush.msra.mxu0 %v2537
    %2761 = vmatpush.msra.mxu0 %v2535
    %2762 = vmatpush.msra.mxu0 %v2533
    %2763 = vmatpush.msra.mxu0 %v2531
    %2764 = vmatpush.msra.mxu0 %v2529
    %2765 = vmatpush.msra.mxu0 %v2527
    %2766 = vmatpush.msra.mxu0 %v2525
    %2767 = vmatpush.msra.mxu0 %v2523
    %2768 = vmatpush.msra.mxu0 %v2521
    %2769 = vmatpush.msra.mxu0 %v2519
    %2770 = vmatpush.msra.mxu0 %v2517
    %2771 = vmatpush.msra.mxu0 %v2515
    %2772 = vmatpush.msra.mxu0 %v2513
    %2773 = vmatpush.msra.mxu0 %v2511
    %2774 = vmatmul.f32.gmra.mxu0 %v2463
    %v2775 = vpop.f32.mrf.mxu0
    %v2776 = vadd.f32 %v2747, %v2775
    %2777 = vmatmul.f32.gmra.mxu0 %v2467
    %v2778 = vpop.f32.mrf.mxu0
    %v2779 = vadd.f32 %v2750, %v2778
    %2780 = vmatmul.f32.gmra.mxu0 %v2471
    %v2781 = vpop.f32.mrf.mxu0
    %v2782 = vadd.f32 %v2753, %v2781
    %2783 = vmatmul.f32.gmra.mxu0 %v2475
    %v2784 = vpop.f32.mrf.mxu0
    %v2785 = vadd.f32 %v2756, %v2784
    %2786 = vdwg.mxu0
    %2787 = vmatpush.msra.mxu0 %v2573
    %2788 = vmatpush.msra.mxu0 %v2571
    %2789 = vmatpush.msra.mxu0 %v2569
    %2790 = vmatpush.msra.mxu0 %v2567
    %2791 = vmatpush.msra.mxu0 %v2565
    %2792 = vmatpush.msra.mxu0 %v2563
    %2793 = vmatpush.msra.mxu0 %v2561
    %2794 = vmatpush.msra.mxu0 %v2559
    %2795 = vmatpush.msra.mxu0 %v2557
    %2796 = vmatpush.msra.mxu0 %v2555
    %2797 = vmatpush.msra.mxu0 %v2553
    %2798 = vmatpush.msra.mxu0 %v2551
    %2799 = vmatpush.msra.mxu0 %v2549
    %2800 = vmatpush.msra.mxu0 %v2547
    %2801 = vmatpush.msra.mxu0 %v2545
    %2802 = vmatpush.msra.mxu0 %v2543
    %2803 = vmatmul.f32.gmra.mxu0 %v2464
    %v2804 = vpop.f32.mrf.mxu0
    %v2805 = vadd.f32 %v2776, %v2804
    %2806 = vmatmul.f32.gmra.mxu0 %v2468
    %v2807 = vpop.f32.mrf.mxu0
    %v2808 = vadd.f32 %v2779, %v2807
    %2809 = vmatmul.f32.gmra.mxu0 %v2472
    %v2810 = vpop.f32.mrf.mxu0
    %v2811 = vadd.f32 %v2782, %v2810
    %2812 = vmatmul.f32.gmra.mxu0 %v2476
    %v2813 = vpop.f32.mrf.mxu0
    %v2814 = vadd.f32 %v2785, %v2813
    %2815 = vdwg.mxu0
    %2816 = vmatpush.msra.mxu0 %v2605
    %2817 = vmatpush.msra.mxu0 %v2603
    %2818 = vmatpush.msra.mxu0 %v2601
    %2819 = vmatpush.msra.mxu0 %v2599
    %2820 = vmatpush.msra.mxu0 %v2597
    %2821 = vmatpush.msra.mxu0 %v2595
    %2822 = vmatpush.msra.mxu0 %v2593
    %2823 = vmatpush.msra.mxu0 %v2591
    %2824 = vmatpush.msra.mxu0 %v2589
    %2825 = vmatpush.msra.mxu0 %v2587
    %2826 = vmatpush.msra.mxu0 %v2585
    %2827 = vmatpush.msra.mxu0 %v2583
    %2828 = vmatpush.msra.mxu0 %v2581
    %2829 = vmatpush.msra.mxu0 %v2579
    %2830 = vmatpush.msra.mxu0 %v2577
    %2831 = vmatpush.msra.mxu0 %v2575
    %2832 = vmatmul.f32.gmra.mxu0 %v2465
    %v2833 = vpop.f32.mrf.mxu0
    %v2834 = vadd.f32 %v2805, %v2833
    %2835 = vmatmul.f32.gmra.mxu0 %v2469
    %v2836 = vpop.f32.mrf.mxu0
    %v2837 = vadd.f32 %v2808, %v2836
    %2838 = vmatmul.f32.gmra.mxu0 %v2473
    %v2839 = vpop.f32.mrf.mxu0
    %v2840 = vadd.f32 %v2811, %v2839
    %2841 = vmatmul.f32.gmra.mxu0 %v2477
    %v2842 = vpop.f32.mrf.mxu0
    %v2843 = vadd.f32 %v2814, %v2842
    %2844 = vdwg.mxu0
    %v2845 = vmax.f32 %v2718, 0.0
    %v2846 = vmax.f32 %v2834, 0.0
    %v2847 = vmax.f32 %v2721, 0.0
    %v2848 = vmax.f32 %v2837, 0.0
    %v2849 = vmax.f32 %v2724, 0.0
    %v2850 = vmax.f32 %v2840, 0.0
    %v2851 = vmax.f32 %v2727, 0.0
    %v2852 = vmax.f32 %v2843, 0.0
    %2853 = vst [vmem:[#allocation4] sm:$0xff] %v2845
    %2854 = vst [vmem:[#allocation4 + $0x8] sm:$0xff] %v2846
    %2855 = vst [vmem:[#allocation4 + $0x10] sm:$0xff] %v2847
    %2856 = vst [vmem:[#allocation4 + $0x18] sm:$0xff] %v2848
    %2857 = vst [vmem:[#allocation4 + $0x20] sm:$0xff] %v2849
    %2858 = vst [vmem:[#allocation4 + $0x28] sm:$0xff] %v2850
    %2859 = vst [vmem:[#allocation4 + $0x30] sm:$0xff] %v2851
    %2860 = vst [vmem:[#allocation4 + $0x38] sm:$0xff] %v2852
    %v2861 = vld [vmem:[#allocation4] sm:$0xff]
    %v2862 = vld [vmem:[#allocation4 + $0x8] sm:$0xff]
    %v2863 = vld [vmem:[#allocation4 + $0x10] sm:$0xff]
    %v2864 = vld [vmem:[#allocation4 + $0x18] sm:$0xff]
    %v2865 = vld [vmem:[#allocation4 + $0x20] sm:$0xff]
    %v2866 = vld [vmem:[#allocation4 + $0x28] sm:$0xff]
    %v2867 = vld [vmem:[#allocation4 + $0x30] sm:$0xff]
    %v2868 = vld [vmem:[#allocation4 + $0x38] sm:$0xff]
    %v2869 = vld [vmem:[%s4] sm:$0xff]
    %v2870 = vld [vmem:[%s4 + $0x8] sm:$0xff]
    %v2871 = vld [vmem:[%s4 + $0x10] sm:$0xff]
    %v2872 = vld [vmem:[%s4 + $0x18] sm:$0xff]
    %v2873 = vld [vmem:[%s4 + $0x20] sm:$0xff]
    %v2874 = vld [vmem:[%s4 + $0x28] sm:$0xff]
    %v2875 = vld [vmem:[%s4 + $0x30] sm:$0xff]
    %v2876 = vld [vmem:[%s4 + $0x38] sm:$0xff]
    %v2877 = vld [vmem:[%s4 + $0x40] sm:$0xff]
    %v2878 = vld [vmem:[%s4 + $0x48] sm:$0xff]
    %v2879 = vld [vmem:[%s4 + $0x50] sm:$0xff]
    %v2880 = vld [vmem:[%s4 + $0x58] sm:$0xff]
    %v2881 = vld [vmem:[%s4 + $0x60] sm:$0xff]
    %v2882 = vld [vmem:[%s4 + $0x68] sm:$0xff]
    %v2883 = vld [vmem:[%s4 + $0x70] sm:$0xff]
    %v2884 = vld [vmem:[%s4 + $0x78] sm:$0xff]
    %v2885 = vld [vmem:[%s4 + $0x80] sm:$0xff]
    %v2886 = vld [vmem:[%s4 + $0x88] sm:$0xff]
    %v2887 = vld [vmem:[%s4 + $0x90] sm:$0xff]
    %v2888 = vld [vmem:[%s4 + $0x98] sm:$0xff]
    %v2889 = vld [vmem:[%s4 + $0xa0] sm:$0xff]
    %v2890 = vld [vmem:[%s4 + $0xa8] sm:$0xff]
    %v2891 = vld [vmem:[%s4 + $0xb0] sm:$0xff]
    %v2892 = vld [vmem:[%s4 + $0xb8] sm:$0xff]
    %v2893 = vld [vmem:[%s4 + $0xc0] sm:$0xff]
    %v2894 = vld [vmem:[%s4 + $0xc8] sm:$0xff]
    %v2895 = vld [vmem:[%s4 + $0xd0] sm:$0xff]
    %v2896 = vld [vmem:[%s4 + $0xd8] sm:$0xff]
    %v2897 = vld [vmem:[%s4 + $0xe0] sm:$0xff]
    %v2898 = vld [vmem:[%s4 + $0xe8] sm:$0xff]
    %v2899 = vld [vmem:[%s4 + $0xf0] sm:$0xff]
    %v2900 = vld [vmem:[%s4 + $0xf8] sm:$0xff]
    %v2901 = vld [vmem:[%s11 + $0x3] ss:$0 sm:$0xff]
    %2902 = vmatpush.msra.mxu0 %v2884
    %2903 = vmatpush.msra.mxu0 %v2883
    %2904 = vmatpush.msra.mxu0 %v2882
    %2905 = vmatpush.msra.mxu0 %v2881
    %2906 = vmatpush.msra.mxu0 %v2880
    %2907 = vmatpush.msra.mxu0 %v2879
    %2908 = vmatpush.msra.mxu0 %v2878
    %2909 = vmatpush.msra.mxu0 %v2877
    %2910 = vmatpush.msra.mxu0 %v2876
    %2911 = vmatpush.msra.mxu0 %v2875
    %2912 = vmatpush.msra.mxu0 %v2874
    %2913 = vmatpush.msra.mxu0 %v2873
    %2914 = vmatpush.msra.mxu0 %v2872
    %2915 = vmatpush.msra.mxu0 %v2871
    %2916 = vmatpush.msra.mxu0 %v2870
    %2917 = vmatpush.msra.mxu0 %v2869
    %2918 = vmatmul.f32.gmra.mxu0 %v2861
    %v2919 = vpop.f32.mrf.mxu0
    %v2920 = vadd.f32 %v2901, %v2919
    %2921 = vmatmul.f32.gmra.mxu0 %v2863
    %v2922 = vpop.f32.mrf.mxu0
    %v2923 = vadd.f32 %v2901, %v2922
    %2924 = vmatmul.f32.gmra.mxu0 %v2865
    %v2925 = vpop.f32.mrf.mxu0
    %v2926 = vadd.f32 %v2901, %v2925
    %2927 = vmatmul.f32.gmra.mxu0 %v2867
    %v2928 = vpop.f32.mrf.mxu0
    %v2929 = vadd.f32 %v2901, %v2928
    %2930 = vdwg.mxu0
    %2931 = vmatpush.msra.mxu0 %v2900
    %2932 = vmatpush.msra.mxu0 %v2899
    %2933 = vmatpush.msra.mxu0 %v2898
    %2934 = vmatpush.msra.mxu0 %v2897
    %2935 = vmatpush.msra.mxu0 %v2896
    %2936 = vmatpush.msra.mxu0 %v2895
    %2937 = vmatpush.msra.mxu0 %v2894
    %2938 = vmatpush.msra.mxu0 %v2893
    %2939 = vmatpush.msra.mxu0 %v2892
    %2940 = vmatpush.msra.mxu0 %v2891
    %2941 = vmatpush.msra.mxu0 %v2890
    %2942 = vmatpush.msra.mxu0 %v2889
    %2943 = vmatpush.msra.mxu0 %v2888
    %2944 = vmatpush.msra.mxu0 %v2887
    %2945 = vmatpush.msra.mxu0 %v2886
    %2946 = vmatpush.msra.mxu0 %v2885
    %2947 = vmatmul.f32.gmra.mxu0 %v2862
    %v2948 = vpop.f32.mrf.mxu0
    %v2949 = vadd.f32 %v2920, %v2948
    %2950 = vmatmul.f32.gmra.mxu0 %v2864
    %v2951 = vpop.f32.mrf.mxu0
    %v2952 = vadd.f32 %v2923, %v2951
    %2953 = vmatmul.f32.gmra.mxu0 %v2866
    %v2954 = vpop.f32.mrf.mxu0
    %v2955 = vadd.f32 %v2926, %v2954
    %2956 = vmatmul.f32.gmra.mxu0 %v2868
    %v2957 = vpop.f32.mrf.mxu0
    %v2958 = vadd.f32 %v2929, %v2957
    %2959 = vdwg.mxu0
    %v2960 = vmax.f32 %v2949, 0.0
    %v2961 = vmax.f32 %v2952, 0.0
    %v2962 = vmax.f32 %v2955, 0.0
    %v2963 = vmax.f32 %v2958, 0.0
    %2964 = vst [vmem:[#allocation5] sm:$0xff] %v2960
    %2965 = vst [vmem:[#allocation5 + $0x8] sm:$0xff] %v2961
    %2966 = vst [vmem:[#allocation5 + $0x10] sm:$0xff] %v2962
    %2967 = vst [vmem:[#allocation5 + $0x18] sm:$0xff] %v2963
    %s2968 = scalar_lea.vmem %s11, 4
    %v2969 = vld [vmem:[%s2968] ss:$8 sm:$0x3]
    %v2970 = vld [vmem:[#allocation5] sm:$0xff]
    %v2971 = vld [vmem:[#allocation8] sm:$0xff]
    %v2972 = vld [vmem:[#allocation8 + $0x8] sm:$0xff]
    %v2973 = vld [vmem:[#allocation8 + $0x10] sm:$0xff]
    %v2974 = vld [vmem:[#allocation8 + $0x18] sm:$0xff]
    %v2975 = vld [vmem:[#allocation8 + $0x20] sm:$0xff]
    %v2976 = vld [vmem:[#allocation8 + $0x28] sm:$0xff]
    %v2977 = vld [vmem:[#allocation8 + $0x30] sm:$0xff]
    %v2978 = vld [vmem:[#allocation8 + $0x38] sm:$0xff]
    %v2979 = vld [vmem:[#allocation8 + $0x40] sm:$0xff]
    %v2980 = vld [vmem:[#allocation8 + $0x48] sm:$0xff]
    %v2981 = vld [vmem:[#allocation8 + $0x50] sm:$0xff]
    %v2982 = vld [vmem:[#allocation8 + $0x58] sm:$0xff]
    %v2983 = vld [vmem:[#allocation8 + $0x60] sm:$0xff]
    %v2984 = vld [vmem:[#allocation8 + $0x68] sm:$0xff]
    %v2985 = vld [vmem:[#allocation8 + $0x70] sm:$0xff]
    %v2986 = vld [vmem:[#allocation8 + $0x78] sm:$0xff]
    %v2987 = vld [vmem:[#allocation8 + $0x80] sm:$0xff]
    %v2988 = vld [vmem:[#allocation8 + $0x88] sm:$0xff]
    %v2989 = vld [vmem:[#allocation8 + $0x90] sm:$0xff]
    %v2990 = vld [vmem:[#allocation8 + $0x98] sm:$0xff]
    %v2991 = vld [vmem:[#allocation8 + $0xa0] sm:$0xff]
    %v2992 = vld [vmem:[#allocation8 + $0xa8] sm:$0xff]
    %v2993 = vld [vmem:[#allocation8 + $0xb0] sm:$0xff]
    %v2994 = vld [vmem:[#allocation8 + $0xb8] sm:$0xff]
    %v2995 = vld [vmem:[#allocation8 + $0xc0] sm:$0xff]
    %v2996 = vld [vmem:[#allocation8 + $0xc8] sm:$0xff]
    %v2997 = vld [vmem:[#allocation8 + $0xd0] sm:$0xff]
    %v2998 = vld [vmem:[#allocation8 + $0xd8] sm:$0xff]
    %v2999 = vld [vmem:[#allocation8 + $0xe0] sm:$0xff]
    %v3000 = vld [vmem:[#allocation8 + $0xe8] sm:$0xff]
    %v3001 = vld [vmem:[#allocation8 + $0xf0] sm:$0xff]
    %v3002 = vld [vmem:[#allocation8 + $0xf8] sm:$0xff]
    %3003 = vmatpush.msra.mxu0 %v3001
    %3004 = vmatpush.msra.mxu0 %v2999
    %3005 = vmatpush.msra.mxu0 %v2997
    %3006 = vmatpush.msra.mxu0 %v2995
    %3007 = vmatpush.msra.mxu0 %v2993
    %3008 = vmatpush.msra.mxu0 %v2991
    %3009 = vmatpush.msra.mxu0 %v2989
    %3010 = vmatpush.msra.mxu0 %v2987
    %3011 = vmatpush.msra.mxu0 %v2985
    %3012 = vmatpush.msra.mxu0 %v2983
    %3013 = vmatpush.msra.mxu0 %v2981
    %3014 = vmatpush.msra.mxu0 %v2979
    %3015 = vmatpush.msra.mxu0 %v2977
    %3016 = vmatpush.msra.mxu0 %v2975
    %3017 = vmatpush.msra.mxu0 %v2973
    %3018 = vmatpush.msra.mxu0 %v2971
    %3019 = vmatmul.f32.gmra.mxu0 %v2970
    %v3020 = vpop.f32.mrf.mxu0
    %v3021 = vadd.f32 0.0, %v3020
    %3022 = vdwg.mxu0
    %3023 = vmatpush.msra.mxu0 %v3002
    %3024 = vmatpush.msra.mxu0 %v3000
    %3025 = vmatpush.msra.mxu0 %v2998
    %3026 = vmatpush.msra.mxu0 %v2996
    %3027 = vmatpush.msra.mxu0 %v2994
    %3028 = vmatpush.msra.mxu0 %v2992
    %3029 = vmatpush.msra.mxu0 %v2990
    %3030 = vmatpush.msra.mxu0 %v2988
    %3031 = vmatpush.msra.mxu0 %v2986
    %3032 = vmatpush.msra.mxu0 %v2984
    %3033 = vmatpush.msra.mxu0 %v2982
    %3034 = vmatpush.msra.mxu0 %v2980
    %3035 = vmatpush.msra.mxu0 %v2978
    %3036 = vmatpush.msra.mxu0 %v2976
    %3037 = vmatpush.msra.mxu0 %v2974
    %3038 = vmatpush.msra.mxu0 %v2972
    %3039 = vmatmul.f32.gmra.mxu0 %v2970
    %v3040 = vpop.f32.mrf.mxu0
    %v3041 = vadd.f32 0.0, %v3040
    %3042 = vdwg.mxu0
    %v3044 = vperm.slane %v2969, 0
    %v3045 = vperm.slane %v2969, 1
    %v3048 = vadd.f32 %v3044, %v3021
    %v3049 = vadd.f32 %v3045, %v3041
    %v3050 = vld [vmem:[#allocation5 + $0x8] sm:$0xff]
    %v3051 = vld [vmem:[#allocation8 + $0x100] sm:$0xff]
    %v3052 = vld [vmem:[#allocation8 + $0x108] sm:$0xff]
    %v3053 = vld [vmem:[#allocation8 + $0x110] sm:$0xff]
    %v3054 = vld [vmem:[#allocation8 + $0x118] sm:$0xff]
    %v3055 = vld [vmem:[#allocation8 + $0x120] sm:$0xff]
    %v3056 = vld [vmem:[#allocation8 + $0x128] sm:$0xff]
    %v3057 = vld [vmem:[#allocation8 + $0x130] sm:$0xff]
    %v3058 = vld [vmem:[#allocation8 + $0x138] sm:$0xff]
    %v3059 = vld [vmem:[#allocation8 + $0x140] sm:$0xff]
    %v3060 = vld [vmem:[#allocation8 + $0x148] sm:$0xff]
    %v3061 = vld [vmem:[#allocation8 + $0x150] sm:$0xff]
    %v3062 = vld [vmem:[#allocation8 + $0x158] sm:$0xff]
    %v3063 = vld [vmem:[#allocation8 + $0x160] sm:$0xff]
    %v3064 = vld [vmem:[#allocation8 + $0x168] sm:$0xff]
    %v3065 = vld [vmem:[#allocation8 + $0x170] sm:$0xff]
    %v3066 = vld [vmem:[#allocation8 + $0x178] sm:$0xff]
    %v3067 = vld [vmem:[#allocation8 + $0x180] sm:$0xff]
    %v3068 = vld [vmem:[#allocation8 + $0x188] sm:$0xff]
    %v3069 = vld [vmem:[#allocation8 + $0x190] sm:$0xff]
    %v3070 = vld [vmem:[#allocation8 + $0x198] sm:$0xff]
    %v3071 = vld [vmem:[#allocation8 + $0x1a0] sm:$0xff]
    %v3072 = vld [vmem:[#allocation8 + $0x1a8] sm:$0xff]
    %v3073 = vld [vmem:[#allocation8 + $0x1b0] sm:$0xff]
    %v3074 = vld [vmem:[#allocation8 + $0x1b8] sm:$0xff]
    %v3075 = vld [vmem:[#allocation8 + $0x1c0] sm:$0xff]
    %v3076 = vld [vmem:[#allocation8 + $0x1c8] sm:$0xff]
    %v3077 = vld [vmem:[#allocation8 + $0x1d0] sm:$0xff]
    %v3078 = vld [vmem:[#allocation8 + $0x1d8] sm:$0xff]
    %v3079 = vld [vmem:[#allocation8 + $0x1e0] sm:$0xff]
    %v3080 = vld [vmem:[#allocation8 + $0x1e8] sm:$0xff]
    %v3081 = vld [vmem:[#allocation8 + $0x1f0] sm:$0xff]
    %v3082 = vld [vmem:[#allocation8 + $0x1f8] sm:$0xff]
    %3083 = vmatpush.msra.mxu0 %v3081
    %3084 = vmatpush.msra.mxu0 %v3079
    %3085 = vmatpush.msra.mxu0 %v3077
    %3086 = vmatpush.msra.mxu0 %v3075
    %3087 = vmatpush.msra.mxu0 %v3073
    %3088 = vmatpush.msra.mxu0 %v3071
    %3089 = vmatpush.msra.mxu0 %v3069
    %3090 = vmatpush.msra.mxu0 %v3067
    %3091 = vmatpush.msra.mxu0 %v3065
    %3092 = vmatpush.msra.mxu0 %v3063
    %3093 = vmatpush.msra.mxu0 %v3061
    %3094 = vmatpush.msra.mxu0 %v3059
    %3095 = vmatpush.msra.mxu0 %v3057
    %3096 = vmatpush.msra.mxu0 %v3055
    %3097 = vmatpush.msra.mxu0 %v3053
    %3098 = vmatpush.msra.mxu0 %v3051
    %3099 = vmatmul.f32.gmra.mxu0 %v3050
    %v3100 = vpop.f32.mrf.mxu0
    %v3101 = vadd.f32 0.0, %v3100
    %3102 = vdwg.mxu0
    %3103 = vmatpush.msra.mxu0 %v3082
    %3104 = vmatpush.msra.mxu0 %v3080
    %3105 = vmatpush.msra.mxu0 %v3078
    %3106 = vmatpush.msra.mxu0 %v3076
    %3107 = vmatpush.msra.mxu0 %v3074
    %3108 = vmatpush.msra.mxu0 %v3072
    %3109 = vmatpush.msra.mxu0 %v3070
    %3110 = vmatpush.msra.mxu0 %v3068
    %3111 = vmatpush.msra.mxu0 %v3066
    %3112 = vmatpush.msra.mxu0 %v3064
    %3113 = vmatpush.msra.mxu0 %v3062
    %3114 = vmatpush.msra.mxu0 %v3060
    %3115 = vmatpush.msra.mxu0 %v3058
    %3116 = vmatpush.msra.mxu0 %v3056
    %3117 = vmatpush.msra.mxu0 %v3054
    %3118 = vmatpush.msra.mxu0 %v3052
    %3119 = vmatmul.f32.gmra.mxu0 %v3050
    %v3120 = vpop.f32.mrf.mxu0
    %v3121 = vadd.f32 0.0, %v3120
    %3122 = vdwg.mxu0
    %v3123 = vadd.f32 %v3048, %v3101
    %v3124 = vadd.f32 %v3049, %v3121
    %v3125 = vld [vmem:[#allocation5 + $0x10] sm:$0xff]
    %v3126 = vld [vmem:[#allocation8 + $0x200] sm:$0xff]
    %v3127 = vld [vmem:[#allocation8 + $0x208] sm:$0xff]
    %v3128 = vld [vmem:[#allocation8 + $0x210] sm:$0xff]
    %v3129 = vld [vmem:[#allocation8 + $0x218] sm:$0xff]
    %v3130 = vld [vmem:[#allocation8 + $0x220] sm:$0xff]
    %v3131 = vld [vmem:[#allocation8 + $0x228] sm:$0xff]
    %v3132 = vld [vmem:[#allocation8 + $0x230] sm:$0xff]
    %v3133 = vld [vmem:[#allocation8 + $0x238] sm:$0xff]
    %v3134 = vld [vmem:[#allocation8 + $0x240] sm:$0xff]
    %v3135 = vld [vmem:[#allocation8 + $0x248] sm:$0xff]
    %v3136 = vld [vmem:[#allocation8 + $0x250] sm:$0xff]
    %v3137 = vld [vmem:[#allocation8 + $0x258] sm:$0xff]
    %v3138 = vld [vmem:[#allocation8 + $0x260] sm:$0xff]
    %v3139 = vld [vmem:[#allocation8 + $0x268] sm:$0xff]
    %v3140 = vld [vmem:[#allocation8 + $0x270] sm:$0xff]
    %v3141 = vld [vmem:[#allocation8 + $0x278] sm:$0xff]
    %v3142 = vld [vmem:[#allocation8 + $0x280] sm:$0xff]
    %v3143 = vld [vmem:[#allocation8 + $0x288] sm:$0xff]
    %v3144 = vld [vmem:[#allocation8 + $0x290] sm:$0xff]
    %v3145 = vld [vmem:[#allocation8 + $0x298] sm:$0xff]
    %v3146 = vld [vmem:[#allocation8 + $0x2a0] sm:$0xff]
    %v3147 = vld [vmem:[#allocation8 + $0x2a8] sm:$0xff]
    %v3148 = vld [vmem:[#allocation8 + $0x2b0] sm:$0xff]
    %v3149 = vld [vmem:[#allocation8 + $0x2b8] sm:$0xff]
    %v3150 = vld [vmem:[#allocation8 + $0x2c0] sm:$0xff]
    %v3151 = vld [vmem:[#allocation8 + $0x2c8] sm:$0xff]
    %v3152 = vld [vmem:[#allocation8 + $0x2d0] sm:$0xff]
    %v3153 = vld [vmem:[#allocation8 + $0x2d8] sm:$0xff]
    %v3154 = vld [vmem:[#allocation8 + $0x2e0] sm:$0xff]
    %v3155 = vld [vmem:[#allocation8 + $0x2e8] sm:$0xff]
    %v3156 = vld [vmem:[#allocation8 + $0x2f0] sm:$0xff]
    %v3157 = vld [vmem:[#allocation8 + $0x2f8] sm:$0xff]
    %3158 = vmatpush.msra.mxu0 %v3156
    %3159 = vmatpush.msra.mxu0 %v3154
    %3160 = vmatpush.msra.mxu0 %v3152
    %3161 = vmatpush.msra.mxu0 %v3150
    %3162 = vmatpush.msra.mxu0 %v3148
    %3163 = vmatpush.msra.mxu0 %v3146
    %3164 = vmatpush.msra.mxu0 %v3144
    %3165 = vmatpush.msra.mxu0 %v3142
    %3166 = vmatpush.msra.mxu0 %v3140
    %3167 = vmatpush.msra.mxu0 %v3138
    %3168 = vmatpush.msra.mxu0 %v3136
    %3169 = vmatpush.msra.mxu0 %v3134
    %3170 = vmatpush.msra.mxu0 %v3132
    %3171 = vmatpush.msra.mxu0 %v3130
    %3172 = vmatpush.msra.mxu0 %v3128
    %3173 = vmatpush.msra.mxu0 %v3126
    %3174 = vmatmul.f32.gmra.mxu0 %v3125
    %v3175 = vpop.f32.mrf.mxu0
    %v3176 = vadd.f32 0.0, %v3175
    %3177 = vdwg.mxu0
    %3178 = vmatpush.msra.mxu0 %v3157
    %3179 = vmatpush.msra.mxu0 %v3155
    %3180 = vmatpush.msra.mxu0 %v3153
    %3181 = vmatpush.msra.mxu0 %v3151
    %3182 = vmatpush.msra.mxu0 %v3149
    %3183 = vmatpush.msra.mxu0 %v3147
    %3184 = vmatpush.msra.mxu0 %v3145
    %3185 = vmatpush.msra.mxu0 %v3143
    %3186 = vmatpush.msra.mxu0 %v3141
    %3187 = vmatpush.msra.mxu0 %v3139
    %3188 = vmatpush.msra.mxu0 %v3137
    %3189 = vmatpush.msra.mxu0 %v3135
    %3190 = vmatpush.msra.mxu0 %v3133
    %3191 = vmatpush.msra.mxu0 %v3131
    %3192 = vmatpush.msra.mxu0 %v3129
    %3193 = vmatpush.msra.mxu0 %v3127
    %3194 = vmatmul.f32.gmra.mxu0 %v3125
    %v3195 = vpop.f32.mrf.mxu0
    %v3196 = vadd.f32 0.0, %v3195
    %3197 = vdwg.mxu0
    %v3198 = vadd.f32 %v3123, %v3176
    %v3199 = vadd.f32 %v3124, %v3196
    %v3200 = vld [vmem:[#allocation5 + $0x18] sm:$0xff]
    %v3201 = vld [vmem:[#allocation8 + $0x300] sm:$0xff]
    %v3202 = vld [vmem:[#allocation8 + $0x308] sm:$0xff]
    %v3203 = vld [vmem:[#allocation8 + $0x310] sm:$0xff]
    %v3204 = vld [vmem:[#allocation8 + $0x318] sm:$0xff]
    %v3205 = vld [vmem:[#allocation8 + $0x320] sm:$0xff]
    %v3206 = vld [vmem:[#allocation8 + $0x328] sm:$0xff]
    %v3207 = vld [vmem:[#allocation8 + $0x330] sm:$0xff]
    %v3208 = vld [vmem:[#allocation8 + $0x338] sm:$0xff]
    %v3209 = vld [vmem:[#allocation8 + $0x340] sm:$0xff]
    %v3210 = vld [vmem:[#allocation8 + $0x348] sm:$0xff]
    %v3211 = vld [vmem:[#allocation8 + $0x350] sm:$0xff]
    %v3212 = vld [vmem:[#allocation8 + $0x358] sm:$0xff]
    %v3213 = vld [vmem:[#allocation8 + $0x360] sm:$0xff]
    %v3214 = vld [vmem:[#allocation8 + $0x368] sm:$0xff]
    %v3215 = vld [vmem:[#allocation8 + $0x370] sm:$0xff]
    %v3216 = vld [vmem:[#allocation8 + $0x378] sm:$0xff]
    %v3217 = vld [vmem:[#allocation8 + $0x380] sm:$0xff]
    %v3218 = vld [vmem:[#allocation8 + $0x388] sm:$0xff]
    %v3219 = vld [vmem:[#allocation8 + $0x390] sm:$0xff]
    %v3220 = vld [vmem:[#allocation8 + $0x398] sm:$0xff]
    %v3221 = vld [vmem:[#allocation8 + $0x3a0] sm:$0xff]
    %v3222 = vld [vmem:[#allocation8 + $0x3a8] sm:$0xff]
    %v3223 = vld [vmem:[#allocation8 + $0x3b0] sm:$0xff]
    %v3224 = vld [vmem:[#allocation8 + $0x3b8] sm:$0xff]
    %v3225 = vld [vmem:[#allocation8 + $0x3c0] sm:$0xff]
    %v3226 = vld [vmem:[#allocation8 + $0x3c8] sm:$0xff]
    %v3227 = vld [vmem:[#allocation8 + $0x3d0] sm:$0xff]
    %v3228 = vld [vmem:[#allocation8 + $0x3d8] sm:$0xff]
    %v3229 = vld [vmem:[#allocation8 + $0x3e0] sm:$0xff]
    %v3230 = vld [vmem:[#allocation8 + $0x3e8] sm:$0xff]
    %v3231 = vld [vmem:[#allocation8 + $0x3f0] sm:$0xff]
    %v3232 = vld [vmem:[#allocation8 + $0x3f8] sm:$0xff]
    %3233 = vmatpush.msra.mxu0 %v3231
    %3234 = vmatpush.msra.mxu0 %v3229
    %3235 = vmatpush.msra.mxu0 %v3227
    %3236 = vmatpush.msra.mxu0 %v3225
    %3237 = vmatpush.msra.mxu0 %v3223
    %3238 = vmatpush.msra.mxu0 %v3221
    %3239 = vmatpush.msra.mxu0 %v3219
    %3240 = vmatpush.msra.mxu0 %v3217
    %3241 = vmatpush.msra.mxu0 %v3215
    %3242 = vmatpush.msra.mxu0 %v3213
    %3243 = vmatpush.msra.mxu0 %v3211
    %3244 = vmatpush.msra.mxu0 %v3209
    %3245 = vmatpush.msra.mxu0 %v3207
    %3246 = vmatpush.msra.mxu0 %v3205
    %3247 = vmatpush.msra.mxu0 %v3203
    %3248 = vmatpush.msra.mxu0 %v3201
    %3249 = vmatmul.f32.gmra.mxu0 %v3200
    %v3250 = vpop.f32.mrf.mxu0
    %v3251 = vadd.f32 0.0, %v3250
    %3252 = vdwg.mxu0
    %3253 = vmatpush.msra.mxu0 %v3232
    %3254 = vmatpush.msra.mxu0 %v3230
    %3255 = vmatpush.msra.mxu0 %v3228
    %3256 = vmatpush.msra.mxu0 %v3226
    %3257 = vmatpush.msra.mxu0 %v3224
    %3258 = vmatpush.msra.mxu0 %v3222
    %3259 = vmatpush.msra.mxu0 %v3220
    %3260 = vmatpush.msra.mxu0 %v3218
    %3261 = vmatpush.msra.mxu0 %v3216
    %3262 = vmatpush.msra.mxu0 %v3214
    %3263 = vmatpush.msra.mxu0 %v3212
    %3264 = vmatpush.msra.mxu0 %v3210
    %3265 = vmatpush.msra.mxu0 %v3208
    %3266 = vmatpush.msra.mxu0 %v3206
    %3267 = vmatpush.msra.mxu0 %v3204
    %3268 = vmatpush.msra.mxu0 %v3202
    %3269 = vmatmul.f32.gmra.mxu0 %v3200
    %v3270 = vpop.f32.mrf.mxu0
    %v3271 = vadd.f32 0.0, %v3270
    %3272 = vdwg.mxu0
    %v3273 = vadd.f32 %v3198, %v3251
    %v3274 = vadd.f32 %v3199, %v3271
    %v3275 = vmax.f32 %v3273, 0.0
    %v3276 = vmax.f32 %v3274, 0.0
    %v3277 = vld [vmem:[#allocation10] sm:$0xff]
    %v3278 = vld [vmem:[#allocation10 + $0x20] sm:$0xff]
    %v3279 = vld [vmem:[#allocation10 + $0x40] sm:$0xff]
    %v3280 = vld [vmem:[#allocation10 + $0x60] sm:$0xff]
    %v3281 = vld [vmem:[#allocation10 + $0x80] sm:$0xff]
    %v3282 = vld [vmem:[#allocation10 + $0xa0] sm:$0xff]
    %v3283 = vld [vmem:[#allocation10 + $0xc0] sm:$0xff]
    %v3284 = vld [vmem:[#allocation10 + $0xe0] sm:$0xff]
    %v3285 = vld [vmem:[#allocation10 + $0x100] sm:$0xff]
    %v3286 = vld [vmem:[#allocation10 + $0x120] sm:$0xff]
    %v3287 = vld [vmem:[#allocation10 + $0x140] sm:$0xff]
    %v3288 = vld [vmem:[#allocation10 + $0x160] sm:$0xff]
    %v3289 = vld [vmem:[#allocation10 + $0x180] sm:$0xff]
    %v3290 = vld [vmem:[#allocation10 + $0x1a0] sm:$0xff]
    %v3291 = vld [vmem:[#allocation10 + $0x1c0] sm:$0xff]
    %v3292 = vld [vmem:[#allocation10 + $0x1e0] sm:$0xff]
    %v3293 = vld [vmem:[#allocation10 + $0x200] sm:$0xff]
    %v3294 = vld [vmem:[#allocation10 + $0x220] sm:$0xff]
    %v3295 = vld [vmem:[#allocation10 + $0x240] sm:$0xff]
    %v3296 = vld [vmem:[#allocation10 + $0x260] sm:$0xff]
    %v3297 = vld [vmem:[#allocation10 + $0x280] sm:$0xff]
    %v3298 = vld [vmem:[#allocation10 + $0x2a0] sm:$0xff]
    %v3299 = vld [vmem:[#allocation10 + $0x2c0] sm:$0xff]
    %v3300 = vld [vmem:[#allocation10 + $0x2e0] sm:$0xff]
    %v3301 = vld [vmem:[#allocation10 + $0x300] sm:$0xff]
    %v3302 = vld [vmem:[#allocation10 + $0x320] sm:$0xff]
    %v3303 = vld [vmem:[#allocation10 + $0x340] sm:$0xff]
    %v3304 = vld [vmem:[#allocation10 + $0x360] sm:$0xff]
    %v3305 = vld [vmem:[#allocation10 + $0x380] sm:$0xff]
    %v3306 = vld [vmem:[#allocation10 + $0x3a0] sm:$0xff]
    %v3307 = vld [vmem:[#allocation10 + $0x3c0] sm:$0xff]
    %v3308 = vld [vmem:[#allocation10 + $0x3e0] sm:$0xff]
    %v3309 = vld [vmem:[%s11 + $0x5] ss:$0 sm:$0xff]
    %3310 = vmatpush.msra.mxu0 %v3292
    %3311 = vmatpush.msra.mxu0 %v3291
    %3312 = vmatpush.msra.mxu0 %v3290
    %3313 = vmatpush.msra.mxu0 %v3289
    %3314 = vmatpush.msra.mxu0 %v3288
    %3315 = vmatpush.msra.mxu0 %v3287
    %3316 = vmatpush.msra.mxu0 %v3286
    %3317 = vmatpush.msra.mxu0 %v3285
    %3318 = vmatpush.msra.mxu0 %v3284
    %3319 = vmatpush.msra.mxu0 %v3283
    %3320 = vmatpush.msra.mxu0 %v3282
    %3321 = vmatpush.msra.mxu0 %v3281
    %3322 = vmatpush.msra.mxu0 %v3280
    %3323 = vmatpush.msra.mxu0 %v3279
    %3324 = vmatpush.msra.mxu0 %v3278
    %3325 = vmatpush.msra.mxu0 %v3277
    %3326 = vmatmul.f32.gmra.mxu0 %v3275
    %v3327 = vpop.f32.mrf.mxu0
    %v3328 = vadd.f32 %v3309, %v3327
    %3329 = vdwg.mxu0
    %3330 = vmatpush.msra.mxu0 %v3308
    %3331 = vmatpush.msra.mxu0 %v3307
    %3332 = vmatpush.msra.mxu0 %v3306
    %3333 = vmatpush.msra.mxu0 %v3305
    %3334 = vmatpush.msra.mxu0 %v3304
    %3335 = vmatpush.msra.mxu0 %v3303
    %3336 = vmatpush.msra.mxu0 %v3302
    %3337 = vmatpush.msra.mxu0 %v3301
    %3338 = vmatpush.msra.mxu0 %v3300
    %3339 = vmatpush.msra.mxu0 %v3299
    %3340 = vmatpush.msra.mxu0 %v3298
    %3341 = vmatpush.msra.mxu0 %v3297
    %3342 = vmatpush.msra.mxu0 %v3296
    %3343 = vmatpush.msra.mxu0 %v3295
    %3344 = vmatpush.msra.mxu0 %v3294
    %3345 = vmatpush.msra.mxu0 %v3293
    %3346 = vmatmul.f32.gmra.mxu0 %v3276
    %v3347 = vpop.f32.mrf.mxu0
    %v3348 = vadd.f32 %v3328, %v3347
    %3349 = vdwg.mxu0
    %v3350 = vmax.f32 %v3348, 0.0
    %3351 = vst [vmem:[#allocation5] sm:$0xff] %v3350
    %v3352 = vld [vmem:[#allocation10 + $0x8] sm:$0xff]
    %v3353 = vld [vmem:[#allocation10 + $0x28] sm:$0xff]
    %v3354 = vld [vmem:[#allocation10 + $0x48] sm:$0xff]
    %v3355 = vld [vmem:[#allocation10 + $0x68] sm:$0xff]
    %v3356 = vld [vmem:[#allocation10 + $0x88] sm:$0xff]
    %v3357 = vld [vmem:[#allocation10 + $0xa8] sm:$0xff]
    %v3358 = vld [vmem:[#allocation10 + $0xc8] sm:$0xff]
    %v3359 = vld [vmem:[#allocation10 + $0xe8] sm:$0xff]
    %v3360 = vld [vmem:[#allocation10 + $0x108] sm:$0xff]
    %v3361 = vld [vmem:[#allocation10 + $0x128] sm:$0xff]
    %v3362 = vld [vmem:[#allocation10 + $0x148] sm:$0xff]
    %v3363 = vld [vmem:[#allocation10 + $0x168] sm:$0xff]
    %v3364 = vld [vmem:[#allocation10 + $0x188] sm:$0xff]
    %v3365 = vld [vmem:[#allocation10 + $0x1a8] sm:$0xff]
    %v3366 = vld [vmem:[#allocation10 + $0x1c8] sm:$0xff]
    %v3367 = vld [vmem:[#allocation10 + $0x1e8] sm:$0xff]
    %v3368 = vld [vmem:[#allocation10 + $0x208] sm:$0xff]
    %v3369 = vld [vmem:[#allocation10 + $0x228] sm:$0xff]
    %v3370 = vld [vmem:[#allocation10 + $0x248] sm:$0xff]
    %v3371 = vld [vmem:[#allocation10 + $0x268] sm:$0xff]
    %v3372 = vld [vmem:[#allocation10 + $0x288] sm:$0xff]
    %v3373 = vld [vmem:[#allocation10 + $0x2a8] sm:$0xff]
    %v3374 = vld [vmem:[#allocation10 + $0x2c8] sm:$0xff]
    %v3375 = vld [vmem:[#allocation10 + $0x2e8] sm:$0xff]
    %v3376 = vld [vmem:[#allocation10 + $0x308] sm:$0xff]
    %v3377 = vld [vmem:[#allocation10 + $0x328] sm:$0xff]
    %v3378 = vld [vmem:[#allocation10 + $0x348] sm:$0xff]
    %v3379 = vld [vmem:[#allocation10 + $0x368] sm:$0xff]
    %v3380 = vld [vmem:[#allocation10 + $0x388] sm:$0xff]
    %v3381 = vld [vmem:[#allocation10 + $0x3a8] sm:$0xff]
    %v3382 = vld [vmem:[#allocation10 + $0x3c8] sm:$0xff]
    %v3383 = vld [vmem:[#allocation10 + $0x3e8] sm:$0xff]
    %v3384 = vld [vmem:[%s11 + $0xd] ss:$0 sm:$0xff]
    %3385 = vmatpush.msra.mxu0 %v3367
    %3386 = vmatpush.msra.mxu0 %v3366
    %3387 = vmatpush.msra.mxu0 %v3365
    %3388 = vmatpush.msra.mxu0 %v3364
    %3389 = vmatpush.msra.mxu0 %v3363
    %3390 = vmatpush.msra.mxu0 %v3362
    %3391 = vmatpush.msra.mxu0 %v3361
    %3392 = vmatpush.msra.mxu0 %v3360
    %3393 = vmatpush.msra.mxu0 %v3359
    %3394 = vmatpush.msra.mxu0 %v3358
    %3395 = vmatpush.msra.mxu0 %v3357
    %3396 = vmatpush.msra.mxu0 %v3356
    %3397 = vmatpush.msra.mxu0 %v3355
    %3398 = vmatpush.msra.mxu0 %v3354
    %3399 = vmatpush.msra.mxu0 %v3353
    %3400 = vmatpush.msra.mxu0 %v3352
    %3401 = vmatmul.f32.gmra.mxu0 %v3275
    %v3402 = vpop.f32.mrf.mxu0
    %v3403 = vadd.f32 %v3384, %v3402
    %3404 = vdwg.mxu0
    %3405 = vmatpush.msra.mxu0 %v3383
    %3406 = vmatpush.msra.mxu0 %v3382
    %3407 = vmatpush.msra.mxu0 %v3381
    %3408 = vmatpush.msra.mxu0 %v3380
    %3409 = vmatpush.msra.mxu0 %v3379
    %3410 = vmatpush.msra.mxu0 %v3378
    %3411 = vmatpush.msra.mxu0 %v3377
    %3412 = vmatpush.msra.mxu0 %v3376
    %3413 = vmatpush.msra.mxu0 %v3375
    %3414 = vmatpush.msra.mxu0 %v3374
    %3415 = vmatpush.msra.mxu0 %v3373
    %3416 = vmatpush.msra.mxu0 %v3372
    %3417 = vmatpush.msra.mxu0 %v3371
    %3418 = vmatpush.msra.mxu0 %v3370
    %3419 = vmatpush.msra.mxu0 %v3369
    %3420 = vmatpush.msra.mxu0 %v3368
    %3421 = vmatmul.f32.gmra.mxu0 %v3276
    %v3422 = vpop.f32.mrf.mxu0
    %v3423 = vadd.f32 %v3403, %v3422
    %3424 = vdwg.mxu0
    %v3425 = vmax.f32 %v3423, 0.0
    %3426 = vst [vmem:[#allocation5 + $0x8] sm:$0xff] %v3425
    %v3427 = vld [vmem:[#allocation10 + $0x10] sm:$0xff]
    %v3428 = vld [vmem:[#allocation10 + $0x30] sm:$0xff]
    %v3429 = vld [vmem:[#allocation10 + $0x50] sm:$0xff]
    %v3430 = vld [vmem:[#allocation10 + $0x70] sm:$0xff]
    %v3431 = vld [vmem:[#allocation10 + $0x90] sm:$0xff]
    %v3432 = vld [vmem:[#allocation10 + $0xb0] sm:$0xff]
    %v3433 = vld [vmem:[#allocation10 + $0xd0] sm:$0xff]
    %v3434 = vld [vmem:[#allocation10 + $0xf0] sm:$0xff]
    %v3435 = vld [vmem:[#allocation10 + $0x110] sm:$0xff]
    %v3436 = vld [vmem:[#allocation10 + $0x130] sm:$0xff]
    %v3437 = vld [vmem:[#allocation10 + $0x150] sm:$0xff]
    %v3438 = vld [vmem:[#allocation10 + $0x170] sm:$0xff]
    %v3439 = vld [vmem:[#allocation10 + $0x190] sm:$0xff]
    %v3440 = vld [vmem:[#allocation10 + $0x1b0] sm:$0xff]
    %v3441 = vld [vmem:[#allocation10 + $0x1d0] sm:$0xff]
    %v3442 = vld [vmem:[#allocation10 + $0x1f0] sm:$0xff]
    %v3443 = vld [vmem:[#allocation10 + $0x210] sm:$0xff]
    %v3444 = vld [vmem:[#allocation10 + $0x230] sm:$0xff]
    %v3445 = vld [vmem:[#allocation10 + $0x250] sm:$0xff]
    %v3446 = vld [vmem:[#allocation10 + $0x270] sm:$0xff]
    %v3447 = vld [vmem:[#allocation10 + $0x290] sm:$0xff]
    %v3448 = vld [vmem:[#allocation10 + $0x2b0] sm:$0xff]
    %v3449 = vld [vmem:[#allocation10 + $0x2d0] sm:$0xff]
    %v3450 = vld [vmem:[#allocation10 + $0x2f0] sm:$0xff]
    %v3451 = vld [vmem:[#allocation10 + $0x310] sm:$0xff]
    %v3452 = vld [vmem:[#allocation10 + $0x330] sm:$0xff]
    %v3453 = vld [vmem:[#allocation10 + $0x350] sm:$0xff]
    %v3454 = vld [vmem:[#allocation10 + $0x370] sm:$0xff]
    %v3455 = vld [vmem:[#allocation10 + $0x390] sm:$0xff]
    %v3456 = vld [vmem:[#allocation10 + $0x3b0] sm:$0xff]
    %v3457 = vld [vmem:[#allocation10 + $0x3d0] sm:$0xff]
    %v3458 = vld [vmem:[#allocation10 + $0x3f0] sm:$0xff]
    %v3459 = vld [vmem:[%s11 + $0x15] ss:$0 sm:$0xff]
    %3460 = vmatpush.msra.mxu0 %v3442
    %3461 = vmatpush.msra.mxu0 %v3441
    %3462 = vmatpush.msra.mxu0 %v3440
    %3463 = vmatpush.msra.mxu0 %v3439
    %3464 = vmatpush.msra.mxu0 %v3438
    %3465 = vmatpush.msra.mxu0 %v3437
    %3466 = vmatpush.msra.mxu0 %v3436
    %3467 = vmatpush.msra.mxu0 %v3435
    %3468 = vmatpush.msra.mxu0 %v3434
    %3469 = vmatpush.msra.mxu0 %v3433
    %3470 = vmatpush.msra.mxu0 %v3432
    %3471 = vmatpush.msra.mxu0 %v3431
    %3472 = vmatpush.msra.mxu0 %v3430
    %3473 = vmatpush.msra.mxu0 %v3429
    %3474 = vmatpush.msra.mxu0 %v3428
    %3475 = vmatpush.msra.mxu0 %v3427
    %3476 = vmatmul.f32.gmra.mxu0 %v3275
    %v3477 = vpop.f32.mrf.mxu0
    %v3478 = vadd.f32 %v3459, %v3477
    %3479 = vdwg.mxu0
    %3480 = vmatpush.msra.mxu0 %v3458
    %3481 = vmatpush.msra.mxu0 %v3457
    %3482 = vmatpush.msra.mxu0 %v3456
    %3483 = vmatpush.msra.mxu0 %v3455
    %3484 = vmatpush.msra.mxu0 %v3454
    %3485 = vmatpush.msra.mxu0 %v3453
    %3486 = vmatpush.msra.mxu0 %v3452
    %3487 = vmatpush.msra.mxu0 %v3451
    %3488 = vmatpush.msra.mxu0 %v3450
    %3489 = vmatpush.msra.mxu0 %v3449
    %3490 = vmatpush.msra.mxu0 %v3448
    %3491 = vmatpush.msra.mxu0 %v3447
    %3492 = vmatpush.msra.mxu0 %v3446
    %3493 = vmatpush.msra.mxu0 %v3445
    %3494 = vmatpush.msra.mxu0 %v3444
    %3495 = vmatpush.msra.mxu0 %v3443
    %3496 = vmatmul.f32.gmra.mxu0 %v3276
    %v3497 = vpop.f32.mrf.mxu0
    %v3498 = vadd.f32 %v3478, %v3497
    %3499 = vdwg.mxu0
    %v3500 = vmax.f32 %v3498, 0.0
    %3501 = vst [vmem:[#allocation5 + $0x10] sm:$0xff] %v3500
    %v3502 = vld [vmem:[#allocation10 + $0x18] sm:$0xff]
    %v3503 = vld [vmem:[#allocation10 + $0x38] sm:$0xff]
    %v3504 = vld [vmem:[#allocation10 + $0x58] sm:$0xff]
    %v3505 = vld [vmem:[#allocation10 + $0x78] sm:$0xff]
    %v3506 = vld [vmem:[#allocation10 + $0x98] sm:$0xff]
    %v3507 = vld [vmem:[#allocation10 + $0xb8] sm:$0xff]
    %v3508 = vld [vmem:[#allocation10 + $0xd8] sm:$0xff]
    %v3509 = vld [vmem:[#allocation10 + $0xf8] sm:$0xff]
    %v3510 = vld [vmem:[#allocation10 + $0x118] sm:$0xff]
    %v3511 = vld [vmem:[#allocation10 + $0x138] sm:$0xff]
    %v3512 = vld [vmem:[#allocation10 + $0x158] sm:$0xff]
    %v3513 = vld [vmem:[#allocation10 + $0x178] sm:$0xff]
    %v3514 = vld [vmem:[#allocation10 + $0x198] sm:$0xff]
    %v3515 = vld [vmem:[#allocation10 + $0x1b8] sm:$0xff]
    %v3516 = vld [vmem:[#allocation10 + $0x1d8] sm:$0xff]
    %v3517 = vld [vmem:[#allocation10 + $0x1f8] sm:$0xff]
    %v3518 = vld [vmem:[#allocation10 + $0x218] sm:$0xff]
    %v3519 = vld [vmem:[#allocation10 + $0x238] sm:$0xff]
    %v3520 = vld [vmem:[#allocation10 + $0x258] sm:$0xff]
    %v3521 = vld [vmem:[#allocation10 + $0x278] sm:$0xff]
    %v3522 = vld [vmem:[#allocation10 + $0x298] sm:$0xff]
    %v3523 = vld [vmem:[#allocation10 + $0x2b8] sm:$0xff]
    %v3524 = vld [vmem:[#allocation10 + $0x2d8] sm:$0xff]
    %v3525 = vld [vmem:[#allocation10 + $0x2f8] sm:$0xff]
    %v3526 = vld [vmem:[#allocation10 + $0x318] sm:$0xff]
    %v3527 = vld [vmem:[#allocation10 + $0x338] sm:$0xff]
    %v3528 = vld [vmem:[#allocation10 + $0x358] sm:$0xff]
    %v3529 = vld [vmem:[#allocation10 + $0x378] sm:$0xff]
    %v3530 = vld [vmem:[#allocation10 + $0x398] sm:$0xff]
    %v3531 = vld [vmem:[#allocation10 + $0x3b8] sm:$0xff]
    %v3532 = vld [vmem:[#allocation10 + $0x3d8] sm:$0xff]
    %v3533 = vld [vmem:[#allocation10 + $0x3f8] sm:$0xff]
    %v3534 = vld [vmem:[%s11 + $0x1d] ss:$0 sm:$0xff]
    %3535 = vmatpush.msra.mxu0 %v3517
    %3536 = vmatpush.msra.mxu0 %v3516
    %3537 = vmatpush.msra.mxu0 %v3515
    %3538 = vmatpush.msra.mxu0 %v3514
    %3539 = vmatpush.msra.mxu0 %v3513
    %3540 = vmatpush.msra.mxu0 %v3512
    %3541 = vmatpush.msra.mxu0 %v3511
    %3542 = vmatpush.msra.mxu0 %v3510
    %3543 = vmatpush.msra.mxu0 %v3509
    %3544 = vmatpush.msra.mxu0 %v3508
    %3545 = vmatpush.msra.mxu0 %v3507
    %3546 = vmatpush.msra.mxu0 %v3506
    %3547 = vmatpush.msra.mxu0 %v3505
    %3548 = vmatpush.msra.mxu0 %v3504
    %3549 = vmatpush.msra.mxu0 %v3503
    %3550 = vmatpush.msra.mxu0 %v3502
    %3551 = vmatmul.f32.gmra.mxu0 %v3275
    %v3552 = vpop.f32.mrf.mxu0
    %v3553 = vadd.f32 %v3534, %v3552
    %3554 = vdwg.mxu0
    %3555 = vmatpush.msra.mxu0 %v3533
    %3556 = vmatpush.msra.mxu0 %v3532
    %3557 = vmatpush.msra.mxu0 %v3531
    %3558 = vmatpush.msra.mxu0 %v3530
    %3559 = vmatpush.msra.mxu0 %v3529
    %3560 = vmatpush.msra.mxu0 %v3528
    %3561 = vmatpush.msra.mxu0 %v3527
    %3562 = vmatpush.msra.mxu0 %v3526
    %3563 = vmatpush.msra.mxu0 %v3525
    %3564 = vmatpush.msra.mxu0 %v3524
    %3565 = vmatpush.msra.mxu0 %v3523
    %3566 = vmatpush.msra.mxu0 %v3522
    %3567 = vmatpush.msra.mxu0 %v3521
    %3568 = vmatpush.msra.mxu0 %v3520
    %3569 = vmatpush.msra.mxu0 %v3519
    %3570 = vmatpush.msra.mxu0 %v3518
    %3571 = vmatmul.f32.gmra.mxu0 %v3276
    %v3572 = vpop.f32.mrf.mxu0
    %v3573 = vadd.f32 %v3553, %v3572
    %3574 = vdwg.mxu0
    %v3575 = vmax.f32 %v3573, 0.0
    %3576 = vst [vmem:[#allocation5 + $0x18] sm:$0xff] %v3575
    %v3577 = vld [vmem:[#allocation5] sm:$0xff]
    %v3578 = vld [vmem:[#allocation5 + $0x8] sm:$0xff]
    %v3579 = vld [vmem:[#allocation5 + $0x10] sm:$0xff]
    %v3580 = vld [vmem:[#allocation5 + $0x18] sm:$0xff]
    %v3581 = vld [vmem:[%s7] sm:$0xff]
    %v3582 = vld [vmem:[%s7 + $0x8] sm:$0xff]
    %v3583 = vld [vmem:[%s7 + $0x10] sm:$0xff]
    %v3584 = vld [vmem:[%s7 + $0x18] sm:$0xff]
    %v3585 = vld [vmem:[%s7 + $0x20] sm:$0xff]
    %v3586 = vld [vmem:[%s7 + $0x28] sm:$0xff]
    %v3587 = vld [vmem:[%s7 + $0x30] sm:$0xff]
    %v3588 = vld [vmem:[%s7 + $0x38] sm:$0xff]
    %v3589 = vld [vmem:[%s7 + $0x40] sm:$0xff]
    %v3590 = vld [vmem:[%s7 + $0x48] sm:$0xff]
    %v3591 = vld [vmem:[%s7 + $0x50] sm:$0xff]
    %v3592 = vld [vmem:[%s7 + $0x58] sm:$0xff]
    %v3593 = vld [vmem:[%s7 + $0x60] sm:$0xff]
    %v3594 = vld [vmem:[%s7 + $0x68] sm:$0xff]
    %v3595 = vld [vmem:[%s7 + $0x70] sm:$0xff]
    %v3596 = vld [vmem:[%s7 + $0x78] sm:$0xff]
    %v3597 = vld [vmem:[%s7 + $0x80] sm:$0xff]
    %v3598 = vld [vmem:[%s7 + $0x88] sm:$0xff]
    %v3599 = vld [vmem:[%s7 + $0x90] sm:$0xff]
    %v3600 = vld [vmem:[%s7 + $0x98] sm:$0xff]
    %v3601 = vld [vmem:[%s7 + $0xa0] sm:$0xff]
    %v3602 = vld [vmem:[%s7 + $0xa8] sm:$0xff]
    %v3603 = vld [vmem:[%s7 + $0xb0] sm:$0xff]
    %v3604 = vld [vmem:[%s7 + $0xb8] sm:$0xff]
    %v3605 = vld [vmem:[%s7 + $0xc0] sm:$0xff]
    %v3606 = vld [vmem:[%s7 + $0xc8] sm:$0xff]
    %v3607 = vld [vmem:[%s7 + $0xd0] sm:$0xff]
    %v3608 = vld [vmem:[%s7 + $0xd8] sm:$0xff]
    %v3609 = vld [vmem:[%s7 + $0xe0] sm:$0xff]
    %v3610 = vld [vmem:[%s7 + $0xe8] sm:$0xff]
    %v3611 = vld [vmem:[%s7 + $0xf0] sm:$0xff]
    %v3612 = vld [vmem:[%s7 + $0xf8] sm:$0xff]
    %s3613 = scalar_lea.vmem %s11, 6
    %v3614 = vld [vmem:[%s3613] ss:$8 sm:$0x3]
    %v3616 = vperm.slane %v3614, 0
    %v3617 = vperm.slane %v3614, 1
    %3620 = vmatpush.msra.mxu0 %v3611
    %3621 = vmatpush.msra.mxu0 %v3609
    %3622 = vmatpush.msra.mxu0 %v3607
    %3623 = vmatpush.msra.mxu0 %v3605
    %3624 = vmatpush.msra.mxu0 %v3603
    %3625 = vmatpush.msra.mxu0 %v3601
    %3626 = vmatpush.msra.mxu0 %v3599
    %3627 = vmatpush.msra.mxu0 %v3597
    %3628 = vmatpush.msra.mxu0 %v3595
    %3629 = vmatpush.msra.mxu0 %v3593
    %3630 = vmatpush.msra.mxu0 %v3591
    %3631 = vmatpush.msra.mxu0 %v3589
    %3632 = vmatpush.msra.mxu0 %v3587
    %3633 = vmatpush.msra.mxu0 %v3585
    %3634 = vmatpush.msra.mxu0 %v3583
    %3635 = vmatpush.msra.mxu0 %v3581
    %3636 = vmatmul.f32.gmra.mxu0 %v3577
    %v3637 = vpop.f32.mrf.mxu0
    %v3638 = vadd.f32 %v3616, %v3637
    %3639 = vmatmul.f32.gmra.mxu0 %v3578
    %v3640 = vpop.f32.mrf.mxu0
    %v3641 = vadd.f32 %v3616, %v3640
    %3642 = vmatmul.f32.gmra.mxu0 %v3579
    %v3643 = vpop.f32.mrf.mxu0
    %v3644 = vadd.f32 %v3616, %v3643
    %3645 = vmatmul.f32.gmra.mxu0 %v3580
    %v3646 = vpop.f32.mrf.mxu0
    %v3647 = vadd.f32 %v3616, %v3646
    %3648 = vdwg.mxu0
    %3649 = vmatpush.msra.mxu0 %v3612
    %3650 = vmatpush.msra.mxu0 %v3610
    %3651 = vmatpush.msra.mxu0 %v3608
    %3652 = vmatpush.msra.mxu0 %v3606
    %3653 = vmatpush.msra.mxu0 %v3604
    %3654 = vmatpush.msra.mxu0 %v3602
    %3655 = vmatpush.msra.mxu0 %v3600
    %3656 = vmatpush.msra.mxu0 %v3598
    %3657 = vmatpush.msra.mxu0 %v3596
    %3658 = vmatpush.msra.mxu0 %v3594
    %3659 = vmatpush.msra.mxu0 %v3592
    %3660 = vmatpush.msra.mxu0 %v3590
    %3661 = vmatpush.msra.mxu0 %v3588
    %3662 = vmatpush.msra.mxu0 %v3586
    %3663 = vmatpush.msra.mxu0 %v3584
    %3664 = vmatpush.msra.mxu0 %v3582
    %3665 = vmatmul.f32.gmra.mxu0 %v3577
    %v3666 = vpop.f32.mrf.mxu0
    %v3667 = vadd.f32 %v3617, %v3666
    %3668 = vmatmul.f32.gmra.mxu0 %v3578
    %v3669 = vpop.f32.mrf.mxu0
    %v3670 = vadd.f32 %v3617, %v3669
    %3671 = vmatmul.f32.gmra.mxu0 %v3579
    %v3672 = vpop.f32.mrf.mxu0
    %v3673 = vadd.f32 %v3617, %v3672
    %3674 = vmatmul.f32.gmra.mxu0 %v3580
    %v3675 = vpop.f32.mrf.mxu0
    %v3676 = vadd.f32 %v3617, %v3675
    %3677 = vdwg.mxu0
    %v3678 = vmax.f32 %v3638, 0.0
    %v3679 = vmax.f32 %v3667, 0.0
    %v3680 = vmax.f32 %v3641, 0.0
    %v3681 = vmax.f32 %v3670, 0.0
    %v3682 = vmax.f32 %v3644, 0.0
    %v3683 = vmax.f32 %v3673, 0.0
    %v3684 = vmax.f32 %v3647, 0.0
    %v3685 = vmax.f32 %v3676, 0.0
    %3686 = vst [vmem:[#allocation4] sm:$0xff] %v3678
    %3687 = vst [vmem:[#allocation4 + $0x8] sm:$0xff] %v3679
    %3688 = vst [vmem:[#allocation4 + $0x10] sm:$0xff] %v3680
    %3689 = vst [vmem:[#allocation4 + $0x18] sm:$0xff] %v3681
    %3690 = vst [vmem:[#allocation4 + $0x20] sm:$0xff] %v3682
    %3691 = vst [vmem:[#allocation4 + $0x28] sm:$0xff] %v3683
    %3692 = vst [vmem:[#allocation4 + $0x30] sm:$0xff] %v3684
    %3693 = vst [vmem:[#allocation4 + $0x38] sm:$0xff] %v3685
    %v3694 = vld [vmem:[#allocation4] sm:$0xff]
    %v3695 = vld [vmem:[#allocation4 + $0x8] sm:$0xff]
    %v3696 = vld [vmem:[#allocation4 + $0x10] sm:$0xff]
    %v3697 = vld [vmem:[#allocation4 + $0x18] sm:$0xff]
    %v3698 = vld [vmem:[#allocation4 + $0x20] sm:$0xff]
    %v3699 = vld [vmem:[#allocation4 + $0x28] sm:$0xff]
    %v3700 = vld [vmem:[#allocation4 + $0x30] sm:$0xff]
    %v3701 = vld [vmem:[#allocation4 + $0x38] sm:$0xff]
    %v3702 = vld [vmem:[#allocation11] sm:$0xff]
    %v3703 = vld [vmem:[#allocation11 + $0x8] sm:$0xff]
    %v3704 = vld [vmem:[#allocation11 + $0x10] sm:$0xff]
    %v3705 = vld [vmem:[#allocation11 + $0x18] sm:$0xff]
    %v3706 = vld [vmem:[#allocation11 + $0x20] sm:$0xff]
    %v3707 = vld [vmem:[#allocation11 + $0x28] sm:$0xff]
    %v3708 = vld [vmem:[#allocation11 + $0x30] sm:$0xff]
    %v3709 = vld [vmem:[#allocation11 + $0x38] sm:$0xff]
    %v3710 = vld [vmem:[#allocation11 + $0x40] sm:$0xff]
    %v3711 = vld [vmem:[#allocation11 + $0x48] sm:$0xff]
    %v3712 = vld [vmem:[#allocation11 + $0x50] sm:$0xff]
    %v3713 = vld [vmem:[#allocation11 + $0x58] sm:$0xff]
    %v3714 = vld [vmem:[#allocation11 + $0x60] sm:$0xff]
    %v3715 = vld [vmem:[#allocation11 + $0x68] sm:$0xff]
    %v3716 = vld [vmem:[#allocation11 + $0x70] sm:$0xff]
    %v3717 = vld [vmem:[#allocation11 + $0x78] sm:$0xff]
    %v3718 = vld [vmem:[#allocation11 + $0x80] sm:$0xff]
    %v3719 = vld [vmem:[#allocation11 + $0x88] sm:$0xff]
    %v3720 = vld [vmem:[#allocation11 + $0x90] sm:$0xff]
    %v3721 = vld [vmem:[#allocation11 + $0x98] sm:$0xff]
    %v3722 = vld [vmem:[#allocation11 + $0xa0] sm:$0xff]
    %v3723 = vld [vmem:[#allocation11 + $0xa8] sm:$0xff]
    %v3724 = vld [vmem:[#allocation11 + $0xb0] sm:$0xff]
    %v3725 = vld [vmem:[#allocation11 + $0xb8] sm:$0xff]
    %v3726 = vld [vmem:[#allocation11 + $0xc0] sm:$0xff]
    %v3727 = vld [vmem:[#allocation11 + $0xc8] sm:$0xff]
    %v3728 = vld [vmem:[#allocation11 + $0xd0] sm:$0xff]
    %v3729 = vld [vmem:[#allocation11 + $0xd8] sm:$0xff]
    %v3730 = vld [vmem:[#allocation11 + $0xe0] sm:$0xff]
    %v3731 = vld [vmem:[#allocation11 + $0xe8] sm:$0xff]
    %v3732 = vld [vmem:[#allocation11 + $0xf0] sm:$0xff]
    %v3733 = vld [vmem:[#allocation11 + $0xf8] sm:$0xff]
    %v3734 = vld [vmem:[#allocation11 + $0x100] sm:$0xff]
    %v3735 = vld [vmem:[#allocation11 + $0x108] sm:$0xff]
    %v3736 = vld [vmem:[#allocation11 + $0x110] sm:$0xff]
    %v3737 = vld [vmem:[#allocation11 + $0x118] sm:$0xff]
    %v3738 = vld [vmem:[#allocation11 + $0x120] sm:$0xff]
    %v3739 = vld [vmem:[#allocation11 + $0x128] sm:$0xff]
    %v3740 = vld [vmem:[#allocation11 + $0x130] sm:$0xff]
    %v3741 = vld [vmem:[#allocation11 + $0x138] sm:$0xff]
    %v3742 = vld [vmem:[#allocation11 + $0x140] sm:$0xff]
    %v3743 = vld [vmem:[#allocation11 + $0x148] sm:$0xff]
    %v3744 = vld [vmem:[#allocation11 + $0x150] sm:$0xff]
    %v3745 = vld [vmem:[#allocation11 + $0x158] sm:$0xff]
    %v3746 = vld [vmem:[#allocation11 + $0x160] sm:$0xff]
    %v3747 = vld [vmem:[#allocation11 + $0x168] sm:$0xff]
    %v3748 = vld [vmem:[#allocation11 + $0x170] sm:$0xff]
    %v3749 = vld [vmem:[#allocation11 + $0x178] sm:$0xff]
    %v3750 = vld [vmem:[#allocation11 + $0x180] sm:$0xff]
    %v3751 = vld [vmem:[#allocation11 + $0x188] sm:$0xff]
    %v3752 = vld [vmem:[#allocation11 + $0x190] sm:$0xff]
    %v3753 = vld [vmem:[#allocation11 + $0x198] sm:$0xff]
    %v3754 = vld [vmem:[#allocation11 + $0x1a0] sm:$0xff]
    %v3755 = vld [vmem:[#allocation11 + $0x1a8] sm:$0xff]
    %v3756 = vld [vmem:[#allocation11 + $0x1b0] sm:$0xff]
    %v3757 = vld [vmem:[#allocation11 + $0x1b8] sm:$0xff]
    %v3758 = vld [vmem:[#allocation11 + $0x1c0] sm:$0xff]
    %v3759 = vld [vmem:[#allocation11 + $0x1c8] sm:$0xff]
    %v3760 = vld [vmem:[#allocation11 + $0x1d0] sm:$0xff]
    %v3761 = vld [vmem:[#allocation11 + $0x1d8] sm:$0xff]
    %v3762 = vld [vmem:[#allocation11 + $0x1e0] sm:$0xff]
    %v3763 = vld [vmem:[#allocation11 + $0x1e8] sm:$0xff]
    %v3764 = vld [vmem:[#allocation11 + $0x1f0] sm:$0xff]
    %v3765 = vld [vmem:[#allocation11 + $0x1f8] sm:$0xff]
    %v3766 = vld [vmem:[#allocation11 + $0x200] sm:$0xff]
    %v3767 = vld [vmem:[#allocation11 + $0x208] sm:$0xff]
    %v3768 = vld [vmem:[#allocation11 + $0x210] sm:$0xff]
    %v3769 = vld [vmem:[#allocation11 + $0x218] sm:$0xff]
    %v3770 = vld [vmem:[#allocation11 + $0x220] sm:$0xff]
    %v3771 = vld [vmem:[#allocation11 + $0x228] sm:$0xff]
    %v3772 = vld [vmem:[#allocation11 + $0x230] sm:$0xff]
    %v3773 = vld [vmem:[#allocation11 + $0x238] sm:$0xff]
    %v3774 = vld [vmem:[#allocation11 + $0x240] sm:$0xff]
    %v3775 = vld [vmem:[#allocation11 + $0x248] sm:$0xff]
    %v3776 = vld [vmem:[#allocation11 + $0x250] sm:$0xff]
    %v3777 = vld [vmem:[#allocation11 + $0x258] sm:$0xff]
    %v3778 = vld [vmem:[#allocation11 + $0x260] sm:$0xff]
    %v3779 = vld [vmem:[#allocation11 + $0x268] sm:$0xff]
    %v3780 = vld [vmem:[#allocation11 + $0x270] sm:$0xff]
    %v3781 = vld [vmem:[#allocation11 + $0x278] sm:$0xff]
    %v3782 = vld [vmem:[#allocation11 + $0x280] sm:$0xff]
    %v3783 = vld [vmem:[#allocation11 + $0x288] sm:$0xff]
    %v3784 = vld [vmem:[#allocation11 + $0x290] sm:$0xff]
    %v3785 = vld [vmem:[#allocation11 + $0x298] sm:$0xff]
    %v3786 = vld [vmem:[#allocation11 + $0x2a0] sm:$0xff]
    %v3787 = vld [vmem:[#allocation11 + $0x2a8] sm:$0xff]
    %v3788 = vld [vmem:[#allocation11 + $0x2b0] sm:$0xff]
    %v3789 = vld [vmem:[#allocation11 + $0x2b8] sm:$0xff]
    %v3790 = vld [vmem:[#allocation11 + $0x2c0] sm:$0xff]
    %v3791 = vld [vmem:[#allocation11 + $0x2c8] sm:$0xff]
    %v3792 = vld [vmem:[#allocation11 + $0x2d0] sm:$0xff]
    %v3793 = vld [vmem:[#allocation11 + $0x2d8] sm:$0xff]
    %v3794 = vld [vmem:[#allocation11 + $0x2e0] sm:$0xff]
    %v3795 = vld [vmem:[#allocation11 + $0x2e8] sm:$0xff]
    %v3796 = vld [vmem:[#allocation11 + $0x2f0] sm:$0xff]
    %v3797 = vld [vmem:[#allocation11 + $0x2f8] sm:$0xff]
    %v3798 = vld [vmem:[#allocation11 + $0x300] sm:$0xff]
    %v3799 = vld [vmem:[#allocation11 + $0x308] sm:$0xff]
    %v3800 = vld [vmem:[#allocation11 + $0x310] sm:$0xff]
    %v3801 = vld [vmem:[#allocation11 + $0x318] sm:$0xff]
    %v3802 = vld [vmem:[#allocation11 + $0x320] sm:$0xff]
    %v3803 = vld [vmem:[#allocation11 + $0x328] sm:$0xff]
    %v3804 = vld [vmem:[#allocation11 + $0x330] sm:$0xff]
    %v3805 = vld [vmem:[#allocation11 + $0x338] sm:$0xff]
    %v3806 = vld [vmem:[#allocation11 + $0x340] sm:$0xff]
    %v3807 = vld [vmem:[#allocation11 + $0x348] sm:$0xff]
    %v3808 = vld [vmem:[#allocation11 + $0x350] sm:$0xff]
    %v3809 = vld [vmem:[#allocation11 + $0x358] sm:$0xff]
    %v3810 = vld [vmem:[#allocation11 + $0x360] sm:$0xff]
    %v3811 = vld [vmem:[#allocation11 + $0x368] sm:$0xff]
    %v3812 = vld [vmem:[#allocation11 + $0x370] sm:$0xff]
    %v3813 = vld [vmem:[#allocation11 + $0x378] sm:$0xff]
    %v3814 = vld [vmem:[#allocation11 + $0x380] sm:$0xff]
    %v3815 = vld [vmem:[#allocation11 + $0x388] sm:$0xff]
    %v3816 = vld [vmem:[#allocation11 + $0x390] sm:$0xff]
    %v3817 = vld [vmem:[#allocation11 + $0x398] sm:$0xff]
    %v3818 = vld [vmem:[#allocation11 + $0x3a0] sm:$0xff]
    %v3819 = vld [vmem:[#allocation11 + $0x3a8] sm:$0xff]
    %v3820 = vld [vmem:[#allocation11 + $0x3b0] sm:$0xff]
    %v3821 = vld [vmem:[#allocation11 + $0x3b8] sm:$0xff]
    %v3822 = vld [vmem:[#allocation11 + $0x3c0] sm:$0xff]
    %v3823 = vld [vmem:[#allocation11 + $0x3c8] sm:$0xff]
    %v3824 = vld [vmem:[#allocation11 + $0x3d0] sm:$0xff]
    %v3825 = vld [vmem:[#allocation11 + $0x3d8] sm:$0xff]
    %v3826 = vld [vmem:[#allocation11 + $0x3e0] sm:$0xff]
    %v3827 = vld [vmem:[#allocation11 + $0x3e8] sm:$0xff]
    %v3828 = vld [vmem:[#allocation11 + $0x3f0] sm:$0xff]
    %v3829 = vld [vmem:[#allocation11 + $0x3f8] sm:$0xff]
    %s3830 = scalar_lea.vmem %s11, 7
    %v3831 = vld [vmem:[%s3830] ss:$8 sm:$0xf]
    %v3833 = vperm.slane %v3831, 0
    %v3834 = vperm.slane %v3831, 1
    %v3835 = vperm.slane %v3831, 2
    %v3836 = vperm.slane %v3831, 3
    %3841 = vmatpush.msra.mxu0 %v3762
    %3842 = vmatpush.msra.mxu0 %v3758
    %3843 = vmatpush.msra.mxu0 %v3754
    %3844 = vmatpush.msra.mxu0 %v3750
    %3845 = vmatpush.msra.mxu0 %v3746
    %3846 = vmatpush.msra.mxu0 %v3742
    %3847 = vmatpush.msra.mxu0 %v3738
    %3848 = vmatpush.msra.mxu0 %v3734
    %3849 = vmatpush.msra.mxu0 %v3730
    %3850 = vmatpush.msra.mxu0 %v3726
    %3851 = vmatpush.msra.mxu0 %v3722
    %3852 = vmatpush.msra.mxu0 %v3718
    %3853 = vmatpush.msra.mxu0 %v3714
    %3854 = vmatpush.msra.mxu0 %v3710
    %3855 = vmatpush.msra.mxu0 %v3706
    %3856 = vmatpush.msra.mxu0 %v3702
    %3857 = vmatmul.f32.gmra.mxu0 %v3694
    %v3858 = vpop.f32.mrf.mxu0
    %v3859 = vadd.f32 %v3833, %v3858
    %3860 = vmatmul.f32.gmra.mxu0 %v3696
    %v3861 = vpop.f32.mrf.mxu0
    %v3862 = vadd.f32 %v3833, %v3861
    %3863 = vmatmul.f32.gmra.mxu0 %v3698
    %v3864 = vpop.f32.mrf.mxu0
    %v3865 = vadd.f32 %v3833, %v3864
    %3866 = vmatmul.f32.gmra.mxu0 %v3700
    %v3867 = vpop.f32.mrf.mxu0
    %v3868 = vadd.f32 %v3833, %v3867
    %3869 = vdwg.mxu0
    %3870 = vmatpush.msra.mxu0 %v3826
    %3871 = vmatpush.msra.mxu0 %v3822
    %3872 = vmatpush.msra.mxu0 %v3818
    %3873 = vmatpush.msra.mxu0 %v3814
    %3874 = vmatpush.msra.mxu0 %v3810
    %3875 = vmatpush.msra.mxu0 %v3806
    %3876 = vmatpush.msra.mxu0 %v3802
    %3877 = vmatpush.msra.mxu0 %v3798
    %3878 = vmatpush.msra.mxu0 %v3794
    %3879 = vmatpush.msra.mxu0 %v3790
    %3880 = vmatpush.msra.mxu0 %v3786
    %3881 = vmatpush.msra.mxu0 %v3782
    %3882 = vmatpush.msra.mxu0 %v3778
    %3883 = vmatpush.msra.mxu0 %v3774
    %3884 = vmatpush.msra.mxu0 %v3770
    %3885 = vmatpush.msra.mxu0 %v3766
    %3886 = vmatmul.f32.gmra.mxu0 %v3695
    %v3887 = vpop.f32.mrf.mxu0
    %v3888 = vadd.f32 %v3859, %v3887
    %3889 = vmatmul.f32.gmra.mxu0 %v3697
    %v3890 = vpop.f32.mrf.mxu0
    %v3891 = vadd.f32 %v3862, %v3890
    %3892 = vmatmul.f32.gmra.mxu0 %v3699
    %v3893 = vpop.f32.mrf.mxu0
    %v3894 = vadd.f32 %v3865, %v3893
    %3895 = vmatmul.f32.gmra.mxu0 %v3701
    %v3896 = vpop.f32.mrf.mxu0
    %v3897 = vadd.f32 %v3868, %v3896
    %3898 = vdwg.mxu0
    %3899 = vmatpush.msra.mxu0 %v3763
    %3900 = vmatpush.msra.mxu0 %v3759
    %3901 = vmatpush.msra.mxu0 %v3755
    %3902 = vmatpush.msra.mxu0 %v3751
    %3903 = vmatpush.msra.mxu0 %v3747
    %3904 = vmatpush.msra.mxu0 %v3743
    %3905 = vmatpush.msra.mxu0 %v3739
    %3906 = vmatpush.msra.mxu0 %v3735
    %3907 = vmatpush.msra.mxu0 %v3731
    %3908 = vmatpush.msra.mxu0 %v3727
    %3909 = vmatpush.msra.mxu0 %v3723
    %3910 = vmatpush.msra.mxu0 %v3719
    %3911 = vmatpush.msra.mxu0 %v3715
    %3912 = vmatpush.msra.mxu0 %v3711
    %3913 = vmatpush.msra.mxu0 %v3707
    %3914 = vmatpush.msra.mxu0 %v3703
    %3915 = vmatmul.f32.gmra.mxu0 %v3694
    %v3916 = vpop.f32.mrf.mxu0
    %v3917 = vadd.f32 %v3834, %v3916
    %3918 = vmatmul.f32.gmra.mxu0 %v3696
    %v3919 = vpop.f32.mrf.mxu0
    %v3920 = vadd.f32 %v3834, %v3919
    %3921 = vmatmul.f32.gmra.mxu0 %v3698
    %v3922 = vpop.f32.mrf.mxu0
    %v3923 = vadd.f32 %v3834, %v3922
    %3924 = vmatmul.f32.gmra.mxu0 %v3700
    %v3925 = vpop.f32.mrf.mxu0
    %v3926 = vadd.f32 %v3834, %v3925
    %3927 = vdwg.mxu0
    %3928 = vmatpush.msra.mxu0 %v3827
    %3929 = vmatpush.msra.mxu0 %v3823
    %3930 = vmatpush.msra.mxu0 %v3819
    %3931 = vmatpush.msra.mxu0 %v3815
    %3932 = vmatpush.msra.mxu0 %v3811
    %3933 = vmatpush.msra.mxu0 %v3807
    %3934 = vmatpush.msra.mxu0 %v3803
    %3935 = vmatpush.msra.mxu0 %v3799
    %3936 = vmatpush.msra.mxu0 %v3795
    %3937 = vmatpush.msra.mxu0 %v3791
    %3938 = vmatpush.msra.mxu0 %v3787
    %3939 = vmatpush.msra.mxu0 %v3783
    %3940 = vmatpush.msra.mxu0 %v3779
    %3941 = vmatpush.msra.mxu0 %v3775
    %3942 = vmatpush.msra.mxu0 %v3771
    %3943 = vmatpush.msra.mxu0 %v3767
    %3944 = vmatmul.f32.gmra.mxu0 %v3695
    %v3945 = vpop.f32.mrf.mxu0
    %v3946 = vadd.f32 %v3917, %v3945
    %3947 = vmatmul.f32.gmra.mxu0 %v3697
    %v3948 = vpop.f32.mrf.mxu0
    %v3949 = vadd.f32 %v3920, %v3948
    %3950 = vmatmul.f32.gmra.mxu0 %v3699
    %v3951 = vpop.f32.mrf.mxu0
    %v3952 = vadd.f32 %v3923, %v3951
    %3953 = vmatmul.f32.gmra.mxu0 %v3701
    %v3954 = vpop.f32.mrf.mxu0
    %v3955 = vadd.f32 %v3926, %v3954
    %3956 = vdwg.mxu0
    %3957 = vmatpush.msra.mxu0 %v3764
    %3958 = vmatpush.msra.mxu0 %v3760
    %3959 = vmatpush.msra.mxu0 %v3756
    %3960 = vmatpush.msra.mxu0 %v3752
    %3961 = vmatpush.msra.mxu0 %v3748
    %3962 = vmatpush.msra.mxu0 %v3744
    %3963 = vmatpush.msra.mxu0 %v3740
    %3964 = vmatpush.msra.mxu0 %v3736
    %3965 = vmatpush.msra.mxu0 %v3732
    %3966 = vmatpush.msra.mxu0 %v3728
    %3967 = vmatpush.msra.mxu0 %v3724
    %3968 = vmatpush.msra.mxu0 %v3720
    %3969 = vmatpush.msra.mxu0 %v3716
    %3970 = vmatpush.msra.mxu0 %v3712
    %3971 = vmatpush.msra.mxu0 %v3708
    %3972 = vmatpush.msra.mxu0 %v3704
    %3973 = vmatmul.f32.gmra.mxu0 %v3694
    %v3974 = vpop.f32.mrf.mxu0
    %v3975 = vadd.f32 %v3835, %v3974
    %3976 = vmatmul.f32.gmra.mxu0 %v3696
    %v3977 = vpop.f32.mrf.mxu0
    %v3978 = vadd.f32 %v3835, %v3977
    %3979 = vmatmul.f32.gmra.mxu0 %v3698
    %v3980 = vpop.f32.mrf.mxu0
    %v3981 = vadd.f32 %v3835, %v3980
    %3982 = vmatmul.f32.gmra.mxu0 %v3700
    %v3983 = vpop.f32.mrf.mxu0
    %v3984 = vadd.f32 %v3835, %v3983
    %3985 = vdwg.mxu0
    %3986 = vmatpush.msra.mxu0 %v3828
    %3987 = vmatpush.msra.mxu0 %v3824
    %3988 = vmatpush.msra.mxu0 %v3820
    %3989 = vmatpush.msra.mxu0 %v3816
    %3990 = vmatpush.msra.mxu0 %v3812
    %3991 = vmatpush.msra.mxu0 %v3808
    %3992 = vmatpush.msra.mxu0 %v3804
    %3993 = vmatpush.msra.mxu0 %v3800
    %3994 = vmatpush.msra.mxu0 %v3796
    %3995 = vmatpush.msra.mxu0 %v3792
    %3996 = vmatpush.msra.mxu0 %v3788
    %3997 = vmatpush.msra.mxu0 %v3784
    %3998 = vmatpush.msra.mxu0 %v3780
    %3999 = vmatpush.msra.mxu0 %v3776
    %4000 = vmatpush.msra.mxu0 %v3772
    %4001 = vmatpush.msra.mxu0 %v3768
    %4002 = vmatmul.f32.gmra.mxu0 %v3695
    %v4003 = vpop.f32.mrf.mxu0
    %v4004 = vadd.f32 %v3975, %v4003
    %4005 = vmatmul.f32.gmra.mxu0 %v3697
    %v4006 = vpop.f32.mrf.mxu0
    %v4007 = vadd.f32 %v3978, %v4006
    %4008 = vmatmul.f32.gmra.mxu0 %v3699
    %v4009 = vpop.f32.mrf.mxu0
    %v4010 = vadd.f32 %v3981, %v4009
    %4011 = vmatmul.f32.gmra.mxu0 %v3701
    %v4012 = vpop.f32.mrf.mxu0
    %v4013 = vadd.f32 %v3984, %v4012
    %4014 = vdwg.mxu0
    %4015 = vmatpush.msra.mxu0 %v3765
    %4016 = vmatpush.msra.mxu0 %v3761
    %4017 = vmatpush.msra.mxu0 %v3757
    %4018 = vmatpush.msra.mxu0 %v3753
    %4019 = vmatpush.msra.mxu0 %v3749
    %4020 = vmatpush.msra.mxu0 %v3745
    %4021 = vmatpush.msra.mxu0 %v3741
    %4022 = vmatpush.msra.mxu0 %v3737
    %4023 = vmatpush.msra.mxu0 %v3733
    %4024 = vmatpush.msra.mxu0 %v3729
    %4025 = vmatpush.msra.mxu0 %v3725
    %4026 = vmatpush.msra.mxu0 %v3721
    %4027 = vmatpush.msra.mxu0 %v3717
    %4028 = vmatpush.msra.mxu0 %v3713
    %4029 = vmatpush.msra.mxu0 %v3709
    %4030 = vmatpush.msra.mxu0 %v3705
    %4031 = vmatmul.f32.gmra.mxu0 %v3694
    %v4032 = vpop.f32.mrf.mxu0
    %v4033 = vadd.f32 %v3836, %v4032
    %4034 = vmatmul.f32.gmra.mxu0 %v3696
    %v4035 = vpop.f32.mrf.mxu0
    %v4036 = vadd.f32 %v3836, %v4035
    %4037 = vmatmul.f32.gmra.mxu0 %v3698
    %v4038 = vpop.f32.mrf.mxu0
    %v4039 = vadd.f32 %v3836, %v4038
    %4040 = vmatmul.f32.gmra.mxu0 %v3700
    %v4041 = vpop.f32.mrf.mxu0
    %v4042 = vadd.f32 %v3836, %v4041
    %4043 = vdwg.mxu0
    %4044 = vmatpush.msra.mxu0 %v3829
    %4045 = vmatpush.msra.mxu0 %v3825
    %4046 = vmatpush.msra.mxu0 %v3821
    %4047 = vmatpush.msra.mxu0 %v3817
    %4048 = vmatpush.msra.mxu0 %v3813
    %4049 = vmatpush.msra.mxu0 %v3809
    %4050 = vmatpush.msra.mxu0 %v3805
    %4051 = vmatpush.msra.mxu0 %v3801
    %4052 = vmatpush.msra.mxu0 %v3797
    %4053 = vmatpush.msra.mxu0 %v3793
    %4054 = vmatpush.msra.mxu0 %v3789
    %4055 = vmatpush.msra.mxu0 %v3785
    %4056 = vmatpush.msra.mxu0 %v3781
    %4057 = vmatpush.msra.mxu0 %v3777
    %4058 = vmatpush.msra.mxu0 %v3773
    %4059 = vmatpush.msra.mxu0 %v3769
    %4060 = vmatmul.f32.gmra.mxu0 %v3695
    %v4061 = vpop.f32.mrf.mxu0
    %v4062 = vadd.f32 %v4033, %v4061
    %4063 = vmatmul.f32.gmra.mxu0 %v3697
    %v4064 = vpop.f32.mrf.mxu0
    %v4065 = vadd.f32 %v4036, %v4064
    %4066 = vmatmul.f32.gmra.mxu0 %v3699
    %v4067 = vpop.f32.mrf.mxu0
    %v4068 = vadd.f32 %v4039, %v4067
    %4069 = vmatmul.f32.gmra.mxu0 %v3701
    %v4070 = vpop.f32.mrf.mxu0
    %v4071 = vadd.f32 %v4042, %v4070
    %4072 = vdwg.mxu0
    %v4073 = vmax.f32 %v3888, 0.0
    %v4074 = vmax.f32 %v3946, 0.0
    %v4075 = vmax.f32 %v4004, 0.0
    %v4076 = vmax.f32 %v4062, 0.0
    %v4077 = vmax.f32 %v3891, 0.0
    %v4078 = vmax.f32 %v3949, 0.0
    %v4079 = vmax.f32 %v4007, 0.0
    %v4080 = vmax.f32 %v4065, 0.0
    %v4081 = vmax.f32 %v3894, 0.0
    %v4082 = vmax.f32 %v3952, 0.0
    %v4083 = vmax.f32 %v4010, 0.0
    %v4084 = vmax.f32 %v4068, 0.0
    %v4085 = vmax.f32 %v3897, 0.0
    %v4086 = vmax.f32 %v3955, 0.0
    %v4087 = vmax.f32 %v4013, 0.0
    %v4088 = vmax.f32 %v4071, 0.0
    %4089 = vst [vmem:[#allocation3] sm:$0xff] %v4073
    %4090 = vst [vmem:[#allocation3 + $0x8] sm:$0xff] %v4074
    %4091 = vst [vmem:[#allocation3 + $0x10] sm:$0xff] %v4075
    %4092 = vst [vmem:[#allocation3 + $0x18] sm:$0xff] %v4076
    %4093 = vst [vmem:[#allocation3 + $0x20] sm:$0xff] %v4077
    %4094 = vst [vmem:[#allocation3 + $0x28] sm:$0xff] %v4078
    %4095 = vst [vmem:[#allocation3 + $0x30] sm:$0xff] %v4079
    %4096 = vst [vmem:[#allocation3 + $0x38] sm:$0xff] %v4080
    %4097 = vst [vmem:[#allocation3 + $0x40] sm:$0xff] %v4081
    %4098 = vst [vmem:[#allocation3 + $0x48] sm:$0xff] %v4082
    %4099 = vst [vmem:[#allocation3 + $0x50] sm:$0xff] %v4083
    %4100 = vst [vmem:[#allocation3 + $0x58] sm:$0xff] %v4084
    %4101 = vst [vmem:[#allocation3 + $0x60] sm:$0xff] %v4085
    %4102 = vst [vmem:[#allocation3 + $0x68] sm:$0xff] %v4086
    %4103 = vst [vmem:[#allocation3 + $0x70] sm:$0xff] %v4087
    %4104 = vst [vmem:[#allocation3 + $0x78] sm:$0xff] %v4088
    %v4105 = vld [vmem:[#allocation3] sm:$0xff]
    %v4106 = vld [vmem:[#allocation3 + $0x8] sm:$0xff]
    %v4107 = vld [vmem:[#allocation3 + $0x10] sm:$0xff]
    %v4108 = vld [vmem:[#allocation3 + $0x18] sm:$0xff]
    %v4109 = vld [vmem:[#allocation3 + $0x20] sm:$0xff]
    %v4110 = vld [vmem:[#allocation3 + $0x28] sm:$0xff]
    %v4111 = vld [vmem:[#allocation3 + $0x30] sm:$0xff]
    %v4112 = vld [vmem:[#allocation3 + $0x38] sm:$0xff]
    %v4113 = vld [vmem:[#allocation3 + $0x40] sm:$0xff]
    %v4114 = vld [vmem:[#allocation3 + $0x48] sm:$0xff]
    %v4115 = vld [vmem:[#allocation3 + $0x50] sm:$0xff]
    %v4116 = vld [vmem:[#allocation3 + $0x58] sm:$0xff]
    %v4117 = vld [vmem:[#allocation3 + $0x60] sm:$0xff]
    %v4118 = vld [vmem:[#allocation3 + $0x68] sm:$0xff]
    %v4119 = vld [vmem:[#allocation3 + $0x70] sm:$0xff]
    %v4120 = vld [vmem:[#allocation3 + $0x78] sm:$0xff]
    %v4121 = vld [vmem:[#allocation13] sm:$0xff]
    %v4122 = vld [vmem:[#allocation13 + $0x8] sm:$0xff]
    %v4123 = vld [vmem:[#allocation13 + $0x10] sm:$0xff]
    %v4124 = vld [vmem:[#allocation13 + $0x18] sm:$0xff]
    %v4125 = vld [vmem:[#allocation13 + $0x20] sm:$0xff]
    %v4126 = vld [vmem:[#allocation13 + $0x28] sm:$0xff]
    %v4127 = vld [vmem:[#allocation13 + $0x30] sm:$0xff]
    %v4128 = vld [vmem:[#allocation13 + $0x38] sm:$0xff]
    %v4129 = vld [vmem:[#allocation13 + $0x40] sm:$0xff]
    %v4130 = vld [vmem:[#allocation13 + $0x48] sm:$0xff]
    %v4131 = vld [vmem:[#allocation13 + $0x50] sm:$0xff]
    %v4132 = vld [vmem:[#allocation13 + $0x58] sm:$0xff]
    %v4133 = vld [vmem:[#allocation13 + $0x60] sm:$0xff]
    %v4134 = vld [vmem:[#allocation13 + $0x68] sm:$0xff]
    %v4135 = vld [vmem:[#allocation13 + $0x70] sm:$0xff]
    %v4136 = vld [vmem:[#allocation13 + $0x78] sm:$0xff]
    %v4137 = vld [vmem:[#allocation13 + $0x80] sm:$0xff]
    %v4138 = vld [vmem:[#allocation13 + $0x88] sm:$0xff]
    %v4139 = vld [vmem:[#allocation13 + $0x90] sm:$0xff]
    %v4140 = vld [vmem:[#allocation13 + $0x98] sm:$0xff]
    %v4141 = vld [vmem:[#allocation13 + $0xa0] sm:$0xff]
    %v4142 = vld [vmem:[#allocation13 + $0xa8] sm:$0xff]
    %v4143 = vld [vmem:[#allocation13 + $0xb0] sm:$0xff]
    %v4144 = vld [vmem:[#allocation13 + $0xb8] sm:$0xff]
    %v4145 = vld [vmem:[#allocation13 + $0xc0] sm:$0xff]
    %v4146 = vld [vmem:[#allocation13 + $0xc8] sm:$0xff]
    %v4147 = vld [vmem:[#allocation13 + $0xd0] sm:$0xff]
    %v4148 = vld [vmem:[#allocation13 + $0xd8] sm:$0xff]
    %v4149 = vld [vmem:[#allocation13 + $0xe0] sm:$0xff]
    %v4150 = vld [vmem:[#allocation13 + $0xe8] sm:$0xff]
    %v4151 = vld [vmem:[#allocation13 + $0xf0] sm:$0xff]
    %v4152 = vld [vmem:[#allocation13 + $0xf8] sm:$0xff]
    %v4153 = vld [vmem:[#allocation13 + $0x100] sm:$0xff]
    %v4154 = vld [vmem:[#allocation13 + $0x108] sm:$0xff]
    %v4155 = vld [vmem:[#allocation13 + $0x110] sm:$0xff]
    %v4156 = vld [vmem:[#allocation13 + $0x118] sm:$0xff]
    %v4157 = vld [vmem:[#allocation13 + $0x120] sm:$0xff]
    %v4158 = vld [vmem:[#allocation13 + $0x128] sm:$0xff]
    %v4159 = vld [vmem:[#allocation13 + $0x130] sm:$0xff]
    %v4160 = vld [vmem:[#allocation13 + $0x138] sm:$0xff]
    %v4161 = vld [vmem:[#allocation13 + $0x140] sm:$0xff]
    %v4162 = vld [vmem:[#allocation13 + $0x148] sm:$0xff]
    %v4163 = vld [vmem:[#allocation13 + $0x150] sm:$0xff]
    %v4164 = vld [vmem:[#allocation13 + $0x158] sm:$0xff]
    %v4165 = vld [vmem:[#allocation13 + $0x160] sm:$0xff]
    %v4166 = vld [vmem:[#allocation13 + $0x168] sm:$0xff]
    %v4167 = vld [vmem:[#allocation13 + $0x170] sm:$0xff]
    %v4168 = vld [vmem:[#allocation13 + $0x178] sm:$0xff]
    %v4169 = vld [vmem:[#allocation13 + $0x180] sm:$0xff]
    %v4170 = vld [vmem:[#allocation13 + $0x188] sm:$0xff]
    %v4171 = vld [vmem:[#allocation13 + $0x190] sm:$0xff]
    %v4172 = vld [vmem:[#allocation13 + $0x198] sm:$0xff]
    %v4173 = vld [vmem:[#allocation13 + $0x1a0] sm:$0xff]
    %v4174 = vld [vmem:[#allocation13 + $0x1a8] sm:$0xff]
    %v4175 = vld [vmem:[#allocation13 + $0x1b0] sm:$0xff]
    %v4176 = vld [vmem:[#allocation13 + $0x1b8] sm:$0xff]
    %v4177 = vld [vmem:[#allocation13 + $0x1c0] sm:$0xff]
    %v4178 = vld [vmem:[#allocation13 + $0x1c8] sm:$0xff]
    %v4179 = vld [vmem:[#allocation13 + $0x1d0] sm:$0xff]
    %v4180 = vld [vmem:[#allocation13 + $0x1d8] sm:$0xff]
    %v4181 = vld [vmem:[#allocation13 + $0x1e0] sm:$0xff]
    %v4182 = vld [vmem:[#allocation13 + $0x1e8] sm:$0xff]
    %v4183 = vld [vmem:[#allocation13 + $0x1f0] sm:$0xff]
    %v4184 = vld [vmem:[#allocation13 + $0x1f8] sm:$0xff]
    %v4185 = vld [vmem:[#allocation13 + $0x200] sm:$0xff]
    %v4186 = vld [vmem:[#allocation13 + $0x208] sm:$0xff]
    %v4187 = vld [vmem:[#allocation13 + $0x210] sm:$0xff]
    %v4188 = vld [vmem:[#allocation13 + $0x218] sm:$0xff]
    %v4189 = vld [vmem:[#allocation13 + $0x220] sm:$0xff]
    %v4190 = vld [vmem:[#allocation13 + $0x228] sm:$0xff]
    %v4191 = vld [vmem:[#allocation13 + $0x230] sm:$0xff]
    %v4192 = vld [vmem:[#allocation13 + $0x238] sm:$0xff]
    %v4193 = vld [vmem:[#allocation13 + $0x240] sm:$0xff]
    %v4194 = vld [vmem:[#allocation13 + $0x248] sm:$0xff]
    %v4195 = vld [vmem:[#allocation13 + $0x250] sm:$0xff]
    %v4196 = vld [vmem:[#allocation13 + $0x258] sm:$0xff]
    %v4197 = vld [vmem:[#allocation13 + $0x260] sm:$0xff]
    %v4198 = vld [vmem:[#allocation13 + $0x268] sm:$0xff]
    %v4199 = vld [vmem:[#allocation13 + $0x270] sm:$0xff]
    %v4200 = vld [vmem:[#allocation13 + $0x278] sm:$0xff]
    %v4201 = vld [vmem:[#allocation13 + $0x280] sm:$0xff]
    %v4202 = vld [vmem:[#allocation13 + $0x288] sm:$0xff]
    %v4203 = vld [vmem:[#allocation13 + $0x290] sm:$0xff]
    %v4204 = vld [vmem:[#allocation13 + $0x298] sm:$0xff]
    %v4205 = vld [vmem:[#allocation13 + $0x2a0] sm:$0xff]
    %v4206 = vld [vmem:[#allocation13 + $0x2a8] sm:$0xff]
    %v4207 = vld [vmem:[#allocation13 + $0x2b0] sm:$0xff]
    %v4208 = vld [vmem:[#allocation13 + $0x2b8] sm:$0xff]
    %v4209 = vld [vmem:[#allocation13 + $0x2c0] sm:$0xff]
    %v4210 = vld [vmem:[#allocation13 + $0x2c8] sm:$0xff]
    %v4211 = vld [vmem:[#allocation13 + $0x2d0] sm:$0xff]
    %v4212 = vld [vmem:[#allocation13 + $0x2d8] sm:$0xff]
    %v4213 = vld [vmem:[#allocation13 + $0x2e0] sm:$0xff]
    %v4214 = vld [vmem:[#allocation13 + $0x2e8] sm:$0xff]
    %v4215 = vld [vmem:[#allocation13 + $0x2f0] sm:$0xff]
    %v4216 = vld [vmem:[#allocation13 + $0x2f8] sm:$0xff]
    %v4217 = vld [vmem:[#allocation13 + $0x300] sm:$0xff]
    %v4218 = vld [vmem:[#allocation13 + $0x308] sm:$0xff]
    %v4219 = vld [vmem:[#allocation13 + $0x310] sm:$0xff]
    %v4220 = vld [vmem:[#allocation13 + $0x318] sm:$0xff]
    %v4221 = vld [vmem:[#allocation13 + $0x320] sm:$0xff]
    %v4222 = vld [vmem:[#allocation13 + $0x328] sm:$0xff]
    %v4223 = vld [vmem:[#allocation13 + $0x330] sm:$0xff]
    %v4224 = vld [vmem:[#allocation13 + $0x338] sm:$0xff]
    %v4225 = vld [vmem:[#allocation13 + $0x340] sm:$0xff]
    %v4226 = vld [vmem:[#allocation13 + $0x348] sm:$0xff]
    %v4227 = vld [vmem:[#allocation13 + $0x350] sm:$0xff]
    %v4228 = vld [vmem:[#allocation13 + $0x358] sm:$0xff]
    %v4229 = vld [vmem:[#allocation13 + $0x360] sm:$0xff]
    %v4230 = vld [vmem:[#allocation13 + $0x368] sm:$0xff]
    %v4231 = vld [vmem:[#allocation13 + $0x370] sm:$0xff]
    %v4232 = vld [vmem:[#allocation13 + $0x378] sm:$0xff]
    %v4233 = vld [vmem:[#allocation13 + $0x380] sm:$0xff]
    %v4234 = vld [vmem:[#allocation13 + $0x388] sm:$0xff]
    %v4235 = vld [vmem:[#allocation13 + $0x390] sm:$0xff]
    %v4236 = vld [vmem:[#allocation13 + $0x398] sm:$0xff]
    %v4237 = vld [vmem:[#allocation13 + $0x3a0] sm:$0xff]
    %v4238 = vld [vmem:[#allocation13 + $0x3a8] sm:$0xff]
    %v4239 = vld [vmem:[#allocation13 + $0x3b0] sm:$0xff]
    %v4240 = vld [vmem:[#allocation13 + $0x3b8] sm:$0xff]
    %v4241 = vld [vmem:[#allocation13 + $0x3c0] sm:$0xff]
    %v4242 = vld [vmem:[#allocation13 + $0x3c8] sm:$0xff]
    %v4243 = vld [vmem:[#allocation13 + $0x3d0] sm:$0xff]
    %v4244 = vld [vmem:[#allocation13 + $0x3d8] sm:$0xff]
    %v4245 = vld [vmem:[#allocation13 + $0x3e0] sm:$0xff]
    %v4246 = vld [vmem:[#allocation13 + $0x3e8] sm:$0xff]
    %v4247 = vld [vmem:[#allocation13 + $0x3f0] sm:$0xff]
    %v4248 = vld [vmem:[#allocation13 + $0x3f8] sm:$0xff]
    %v4249 = vld [vmem:[#allocation13 + $0x400] sm:$0xff]
    %v4250 = vld [vmem:[#allocation13 + $0x408] sm:$0xff]
    %v4251 = vld [vmem:[#allocation13 + $0x410] sm:$0xff]
    %v4252 = vld [vmem:[#allocation13 + $0x418] sm:$0xff]
    %v4253 = vld [vmem:[#allocation13 + $0x420] sm:$0xff]
    %v4254 = vld [vmem:[#allocation13 + $0x428] sm:$0xff]
    %v4255 = vld [vmem:[#allocation13 + $0x430] sm:$0xff]
    %v4256 = vld [vmem:[#allocation13 + $0x438] sm:$0xff]
    %v4257 = vld [vmem:[#allocation13 + $0x440] sm:$0xff]
    %v4258 = vld [vmem:[#allocation13 + $0x448] sm:$0xff]
    %v4259 = vld [vmem:[#allocation13 + $0x450] sm:$0xff]
    %v4260 = vld [vmem:[#allocation13 + $0x458] sm:$0xff]
    %v4261 = vld [vmem:[#allocation13 + $0x460] sm:$0xff]
    %v4262 = vld [vmem:[#allocation13 + $0x468] sm:$0xff]
    %v4263 = vld [vmem:[#allocation13 + $0x470] sm:$0xff]
    %v4264 = vld [vmem:[#allocation13 + $0x478] sm:$0xff]
    %v4265 = vld [vmem:[#allocation13 + $0x480] sm:$0xff]
    %v4266 = vld [vmem:[#allocation13 + $0x488] sm:$0xff]
    %v4267 = vld [vmem:[#allocation13 + $0x490] sm:$0xff]
    %v4268 = vld [vmem:[#allocation13 + $0x498] sm:$0xff]
    %v4269 = vld [vmem:[#allocation13 + $0x4a0] sm:$0xff]
    %v4270 = vld [vmem:[#allocation13 + $0x4a8] sm:$0xff]
    %v4271 = vld [vmem:[#allocation13 + $0x4b0] sm:$0xff]
    %v4272 = vld [vmem:[#allocation13 + $0x4b8] sm:$0xff]
    %v4273 = vld [vmem:[#allocation13 + $0x4c0] sm:$0xff]
    %v4274 = vld [vmem:[#allocation13 + $0x4c8] sm:$0xff]
    %v4275 = vld [vmem:[#allocation13 + $0x4d0] sm:$0xff]
    %v4276 = vld [vmem:[#allocation13 + $0x4d8] sm:$0xff]
    %v4277 = vld [vmem:[#allocation13 + $0x4e0] sm:$0xff]
    %v4278 = vld [vmem:[#allocation13 + $0x4e8] sm:$0xff]
    %v4279 = vld [vmem:[#allocation13 + $0x4f0] sm:$0xff]
    %v4280 = vld [vmem:[#allocation13 + $0x4f8] sm:$0xff]
    %v4281 = vld [vmem:[#allocation13 + $0x500] sm:$0xff]
    %v4282 = vld [vmem:[#allocation13 + $0x508] sm:$0xff]
    %v4283 = vld [vmem:[#allocation13 + $0x510] sm:$0xff]
    %v4284 = vld [vmem:[#allocation13 + $0x518] sm:$0xff]
    %v4285 = vld [vmem:[#allocation13 + $0x520] sm:$0xff]
    %v4286 = vld [vmem:[#allocation13 + $0x528] sm:$0xff]
    %v4287 = vld [vmem:[#allocation13 + $0x530] sm:$0xff]
    %v4288 = vld [vmem:[#allocation13 + $0x538] sm:$0xff]
    %v4289 = vld [vmem:[#allocation13 + $0x540] sm:$0xff]
    %v4290 = vld [vmem:[#allocation13 + $0x548] sm:$0xff]
    %v4291 = vld [vmem:[#allocation13 + $0x550] sm:$0xff]
    %v4292 = vld [vmem:[#allocation13 + $0x558] sm:$0xff]
    %v4293 = vld [vmem:[#allocation13 + $0x560] sm:$0xff]
    %v4294 = vld [vmem:[#allocation13 + $0x568] sm:$0xff]
    %v4295 = vld [vmem:[#allocation13 + $0x570] sm:$0xff]
    %v4296 = vld [vmem:[#allocation13 + $0x578] sm:$0xff]
    %v4297 = vld [vmem:[#allocation13 + $0x580] sm:$0xff]
    %v4298 = vld [vmem:[#allocation13 + $0x588] sm:$0xff]
    %v4299 = vld [vmem:[#allocation13 + $0x590] sm:$0xff]
    %v4300 = vld [vmem:[#allocation13 + $0x598] sm:$0xff]
    %v4301 = vld [vmem:[#allocation13 + $0x5a0] sm:$0xff]
    %v4302 = vld [vmem:[#allocation13 + $0x5a8] sm:$0xff]
    %v4303 = vld [vmem:[#allocation13 + $0x5b0] sm:$0xff]
    %v4304 = vld [vmem:[#allocation13 + $0x5b8] sm:$0xff]
    %v4305 = vld [vmem:[#allocation13 + $0x5c0] sm:$0xff]
    %v4306 = vld [vmem:[#allocation13 + $0x5c8] sm:$0xff]
    %v4307 = vld [vmem:[#allocation13 + $0x5d0] sm:$0xff]
    %v4308 = vld [vmem:[#allocation13 + $0x5d8] sm:$0xff]
    %v4309 = vld [vmem:[#allocation13 + $0x5e0] sm:$0xff]
    %v4310 = vld [vmem:[#allocation13 + $0x5e8] sm:$0xff]
    %v4311 = vld [vmem:[#allocation13 + $0x5f0] sm:$0xff]
    %v4312 = vld [vmem:[#allocation13 + $0x5f8] sm:$0xff]
    %v4313 = vld [vmem:[#allocation13 + $0x600] sm:$0xff]
    %v4314 = vld [vmem:[#allocation13 + $0x608] sm:$0xff]
    %v4315 = vld [vmem:[#allocation13 + $0x610] sm:$0xff]
    %v4316 = vld [vmem:[#allocation13 + $0x618] sm:$0xff]
    %v4317 = vld [vmem:[#allocation13 + $0x620] sm:$0xff]
    %v4318 = vld [vmem:[#allocation13 + $0x628] sm:$0xff]
    %v4319 = vld [vmem:[#allocation13 + $0x630] sm:$0xff]
    %v4320 = vld [vmem:[#allocation13 + $0x638] sm:$0xff]
    %v4321 = vld [vmem:[#allocation13 + $0x640] sm:$0xff]
    %v4322 = vld [vmem:[#allocation13 + $0x648] sm:$0xff]
    %v4323 = vld [vmem:[#allocation13 + $0x650] sm:$0xff]
    %v4324 = vld [vmem:[#allocation13 + $0x658] sm:$0xff]
    %v4325 = vld [vmem:[#allocation13 + $0x660] sm:$0xff]
    %v4326 = vld [vmem:[#allocation13 + $0x668] sm:$0xff]
    %v4327 = vld [vmem:[#allocation13 + $0x670] sm:$0xff]
    %v4328 = vld [vmem:[#allocation13 + $0x678] sm:$0xff]
    %v4329 = vld [vmem:[#allocation13 + $0x680] sm:$0xff]
    %v4330 = vld [vmem:[#allocation13 + $0x688] sm:$0xff]
    %v4331 = vld [vmem:[#allocation13 + $0x690] sm:$0xff]
    %v4332 = vld [vmem:[#allocation13 + $0x698] sm:$0xff]
    %v4333 = vld [vmem:[#allocation13 + $0x6a0] sm:$0xff]
    %v4334 = vld [vmem:[#allocation13 + $0x6a8] sm:$0xff]
    %v4335 = vld [vmem:[#allocation13 + $0x6b0] sm:$0xff]
    %v4336 = vld [vmem:[#allocation13 + $0x6b8] sm:$0xff]
    %v4337 = vld [vmem:[#allocation13 + $0x6c0] sm:$0xff]
    %v4338 = vld [vmem:[#allocation13 + $0x6c8] sm:$0xff]
    %v4339 = vld [vmem:[#allocation13 + $0x6d0] sm:$0xff]
    %v4340 = vld [vmem:[#allocation13 + $0x6d8] sm:$0xff]
    %v4341 = vld [vmem:[#allocation13 + $0x6e0] sm:$0xff]
    %v4342 = vld [vmem:[#allocation13 + $0x6e8] sm:$0xff]
    %v4343 = vld [vmem:[#allocation13 + $0x6f0] sm:$0xff]
    %v4344 = vld [vmem:[#allocation13 + $0x6f8] sm:$0xff]
    %v4345 = vld [vmem:[#allocation13 + $0x700] sm:$0xff]
    %v4346 = vld [vmem:[#allocation13 + $0x708] sm:$0xff]
    %v4347 = vld [vmem:[#allocation13 + $0x710] sm:$0xff]
    %v4348 = vld [vmem:[#allocation13 + $0x718] sm:$0xff]
    %v4349 = vld [vmem:[#allocation13 + $0x720] sm:$0xff]
    %v4350 = vld [vmem:[#allocation13 + $0x728] sm:$0xff]
    %v4351 = vld [vmem:[#allocation13 + $0x730] sm:$0xff]
    %v4352 = vld [vmem:[#allocation13 + $0x738] sm:$0xff]
    %v4353 = vld [vmem:[#allocation13 + $0x740] sm:$0xff]
    %v4354 = vld [vmem:[#allocation13 + $0x748] sm:$0xff]
    %v4355 = vld [vmem:[#allocation13 + $0x750] sm:$0xff]
    %v4356 = vld [vmem:[#allocation13 + $0x758] sm:$0xff]
    %v4357 = vld [vmem:[#allocation13 + $0x760] sm:$0xff]
    %v4358 = vld [vmem:[#allocation13 + $0x768] sm:$0xff]
    %v4359 = vld [vmem:[#allocation13 + $0x770] sm:$0xff]
    %v4360 = vld [vmem:[#allocation13 + $0x778] sm:$0xff]
    %v4361 = vld [vmem:[#allocation13 + $0x780] sm:$0xff]
    %v4362 = vld [vmem:[#allocation13 + $0x788] sm:$0xff]
    %v4363 = vld [vmem:[#allocation13 + $0x790] sm:$0xff]
    %v4364 = vld [vmem:[#allocation13 + $0x798] sm:$0xff]
    %v4365 = vld [vmem:[#allocation13 + $0x7a0] sm:$0xff]
    %v4366 = vld [vmem:[#allocation13 + $0x7a8] sm:$0xff]
    %v4367 = vld [vmem:[#allocation13 + $0x7b0] sm:$0xff]
    %v4368 = vld [vmem:[#allocation13 + $0x7b8] sm:$0xff]
    %v4369 = vld [vmem:[#allocation13 + $0x7c0] sm:$0xff]
    %v4370 = vld [vmem:[#allocation13 + $0x7c8] sm:$0xff]
    %v4371 = vld [vmem:[#allocation13 + $0x7d0] sm:$0xff]
    %v4372 = vld [vmem:[#allocation13 + $0x7d8] sm:$0xff]
    %v4373 = vld [vmem:[#allocation13 + $0x7e0] sm:$0xff]
    %v4374 = vld [vmem:[#allocation13 + $0x7e8] sm:$0xff]
    %v4375 = vld [vmem:[#allocation13 + $0x7f0] sm:$0xff]
    %v4376 = vld [vmem:[#allocation13 + $0x7f8] sm:$0xff]
    %v4377 = vld [vmem:[#allocation13 + $0x800] sm:$0xff]
    %v4378 = vld [vmem:[#allocation13 + $0x808] sm:$0xff]
    %v4379 = vld [vmem:[#allocation13 + $0x810] sm:$0xff]
    %v4380 = vld [vmem:[#allocation13 + $0x818] sm:$0xff]
    %v4381 = vld [vmem:[#allocation13 + $0x820] sm:$0xff]
    %v4382 = vld [vmem:[#allocation13 + $0x828] sm:$0xff]
    %v4383 = vld [vmem:[#allocation13 + $0x830] sm:$0xff]
    %v4384 = vld [vmem:[#allocation13 + $0x838] sm:$0xff]
    %v4385 = vld [vmem:[#allocation13 + $0x840] sm:$0xff]
    %v4386 = vld [vmem:[#allocation13 + $0x848] sm:$0xff]
    %v4387 = vld [vmem:[#allocation13 + $0x850] sm:$0xff]
    %v4388 = vld [vmem:[#allocation13 + $0x858] sm:$0xff]
    %v4389 = vld [vmem:[#allocation13 + $0x860] sm:$0xff]
    %v4390 = vld [vmem:[#allocation13 + $0x868] sm:$0xff]
    %v4391 = vld [vmem:[#allocation13 + $0x870] sm:$0xff]
    %v4392 = vld [vmem:[#allocation13 + $0x878] sm:$0xff]
    %v4393 = vld [vmem:[#allocation13 + $0x880] sm:$0xff]
    %v4394 = vld [vmem:[#allocation13 + $0x888] sm:$0xff]
    %v4395 = vld [vmem:[#allocation13 + $0x890] sm:$0xff]
    %v4396 = vld [vmem:[#allocation13 + $0x898] sm:$0xff]
    %v4397 = vld [vmem:[#allocation13 + $0x8a0] sm:$0xff]
    %v4398 = vld [vmem:[#allocation13 + $0x8a8] sm:$0xff]
    %v4399 = vld [vmem:[#allocation13 + $0x8b0] sm:$0xff]
    %v4400 = vld [vmem:[#allocation13 + $0x8b8] sm:$0xff]
    %v4401 = vld [vmem:[#allocation13 + $0x8c0] sm:$0xff]
    %v4402 = vld [vmem:[#allocation13 + $0x8c8] sm:$0xff]
    %v4403 = vld [vmem:[#allocation13 + $0x8d0] sm:$0xff]
    %v4404 = vld [vmem:[#allocation13 + $0x8d8] sm:$0xff]
    %v4405 = vld [vmem:[#allocation13 + $0x8e0] sm:$0xff]
    %v4406 = vld [vmem:[#allocation13 + $0x8e8] sm:$0xff]
    %v4407 = vld [vmem:[#allocation13 + $0x8f0] sm:$0xff]
    %v4408 = vld [vmem:[#allocation13 + $0x8f8] sm:$0xff]
    %v4409 = vld [vmem:[#allocation13 + $0x900] sm:$0xff]
    %v4410 = vld [vmem:[#allocation13 + $0x908] sm:$0xff]
    %v4411 = vld [vmem:[#allocation13 + $0x910] sm:$0xff]
    %v4412 = vld [vmem:[#allocation13 + $0x918] sm:$0xff]
    %v4413 = vld [vmem:[#allocation13 + $0x920] sm:$0xff]
    %v4414 = vld [vmem:[#allocation13 + $0x928] sm:$0xff]
    %v4415 = vld [vmem:[#allocation13 + $0x930] sm:$0xff]
    %v4416 = vld [vmem:[#allocation13 + $0x938] sm:$0xff]
    %v4417 = vld [vmem:[#allocation13 + $0x940] sm:$0xff]
    %v4418 = vld [vmem:[#allocation13 + $0x948] sm:$0xff]
    %v4419 = vld [vmem:[#allocation13 + $0x950] sm:$0xff]
    %v4420 = vld [vmem:[#allocation13 + $0x958] sm:$0xff]
    %v4421 = vld [vmem:[#allocation13 + $0x960] sm:$0xff]
    %v4422 = vld [vmem:[#allocation13 + $0x968] sm:$0xff]
    %v4423 = vld [vmem:[#allocation13 + $0x970] sm:$0xff]
    %v4424 = vld [vmem:[#allocation13 + $0x978] sm:$0xff]
    %v4425 = vld [vmem:[#allocation13 + $0x980] sm:$0xff]
    %v4426 = vld [vmem:[#allocation13 + $0x988] sm:$0xff]
    %v4427 = vld [vmem:[#allocation13 + $0x990] sm:$0xff]
    %v4428 = vld [vmem:[#allocation13 + $0x998] sm:$0xff]
    %v4429 = vld [vmem:[#allocation13 + $0x9a0] sm:$0xff]
    %v4430 = vld [vmem:[#allocation13 + $0x9a8] sm:$0xff]
    %v4431 = vld [vmem:[#allocation13 + $0x9b0] sm:$0xff]
    %v4432 = vld [vmem:[#allocation13 + $0x9b8] sm:$0xff]
    %v4433 = vld [vmem:[#allocation13 + $0x9c0] sm:$0xff]
    %v4434 = vld [vmem:[#allocation13 + $0x9c8] sm:$0xff]
    %v4435 = vld [vmem:[#allocation13 + $0x9d0] sm:$0xff]
    %v4436 = vld [vmem:[#allocation13 + $0x9d8] sm:$0xff]
    %v4437 = vld [vmem:[#allocation13 + $0x9e0] sm:$0xff]
    %v4438 = vld [vmem:[#allocation13 + $0x9e8] sm:$0xff]
    %v4439 = vld [vmem:[#allocation13 + $0x9f0] sm:$0xff]
    %v4440 = vld [vmem:[#allocation13 + $0x9f8] sm:$0xff]
    %v4441 = vld [vmem:[#allocation13 + $0xa00] sm:$0xff]
    %v4442 = vld [vmem:[#allocation13 + $0xa08] sm:$0xff]
    %v4443 = vld [vmem:[#allocation13 + $0xa10] sm:$0xff]
    %v4444 = vld [vmem:[#allocation13 + $0xa18] sm:$0xff]
    %v4445 = vld [vmem:[#allocation13 + $0xa20] sm:$0xff]
    %v4446 = vld [vmem:[#allocation13 + $0xa28] sm:$0xff]
    %v4447 = vld [vmem:[#allocation13 + $0xa30] sm:$0xff]
    %v4448 = vld [vmem:[#allocation13 + $0xa38] sm:$0xff]
    %v4449 = vld [vmem:[#allocation13 + $0xa40] sm:$0xff]
    %v4450 = vld [vmem:[#allocation13 + $0xa48] sm:$0xff]
    %v4451 = vld [vmem:[#allocation13 + $0xa50] sm:$0xff]
    %v4452 = vld [vmem:[#allocation13 + $0xa58] sm:$0xff]
    %v4453 = vld [vmem:[#allocation13 + $0xa60] sm:$0xff]
    %v4454 = vld [vmem:[#allocation13 + $0xa68] sm:$0xff]
    %v4455 = vld [vmem:[#allocation13 + $0xa70] sm:$0xff]
    %v4456 = vld [vmem:[#allocation13 + $0xa78] sm:$0xff]
    %v4457 = vld [vmem:[#allocation13 + $0xa80] sm:$0xff]
    %v4458 = vld [vmem:[#allocation13 + $0xa88] sm:$0xff]
    %v4459 = vld [vmem:[#allocation13 + $0xa90] sm:$0xff]
    %v4460 = vld [vmem:[#allocation13 + $0xa98] sm:$0xff]
    %v4461 = vld [vmem:[#allocation13 + $0xaa0] sm:$0xff]
    %v4462 = vld [vmem:[#allocation13 + $0xaa8] sm:$0xff]
    %v4463 = vld [vmem:[#allocation13 + $0xab0] sm:$0xff]
    %v4464 = vld [vmem:[#allocation13 + $0xab8] sm:$0xff]
    %v4465 = vld [vmem:[#allocation13 + $0xac0] sm:$0xff]
    %v4466 = vld [vmem:[#allocation13 + $0xac8] sm:$0xff]
    %v4467 = vld [vmem:[#allocation13 + $0xad0] sm:$0xff]
    %v4468 = vld [vmem:[#allocation13 + $0xad8] sm:$0xff]
    %v4469 = vld [vmem:[#allocation13 + $0xae0] sm:$0xff]
    %v4470 = vld [vmem:[#allocation13 + $0xae8] sm:$0xff]
    %v4471 = vld [vmem:[#allocation13 + $0xaf0] sm:$0xff]
    %v4472 = vld [vmem:[#allocation13 + $0xaf8] sm:$0xff]
    %v4473 = vld [vmem:[#allocation13 + $0xb00] sm:$0xff]
    %v4474 = vld [vmem:[#allocation13 + $0xb08] sm:$0xff]
    %v4475 = vld [vmem:[#allocation13 + $0xb10] sm:$0xff]
    %v4476 = vld [vmem:[#allocation13 + $0xb18] sm:$0xff]
    %v4477 = vld [vmem:[#allocation13 + $0xb20] sm:$0xff]
    %v4478 = vld [vmem:[#allocation13 + $0xb28] sm:$0xff]
    %v4479 = vld [vmem:[#allocation13 + $0xb30] sm:$0xff]
    %v4480 = vld [vmem:[#allocation13 + $0xb38] sm:$0xff]
    %v4481 = vld [vmem:[#allocation13 + $0xb40] sm:$0xff]
    %v4482 = vld [vmem:[#allocation13 + $0xb48] sm:$0xff]
    %v4483 = vld [vmem:[#allocation13 + $0xb50] sm:$0xff]
    %v4484 = vld [vmem:[#allocation13 + $0xb58] sm:$0xff]
    %v4485 = vld [vmem:[#allocation13 + $0xb60] sm:$0xff]
    %v4486 = vld [vmem:[#allocation13 + $0xb68] sm:$0xff]
    %v4487 = vld [vmem:[#allocation13 + $0xb70] sm:$0xff]
    %v4488 = vld [vmem:[#allocation13 + $0xb78] sm:$0xff]
    %v4489 = vld [vmem:[#allocation13 + $0xb80] sm:$0xff]
    %v4490 = vld [vmem:[#allocation13 + $0xb88] sm:$0xff]
    %v4491 = vld [vmem:[#allocation13 + $0xb90] sm:$0xff]
    %v4492 = vld [vmem:[#allocation13 + $0xb98] sm:$0xff]
    %v4493 = vld [vmem:[#allocation13 + $0xba0] sm:$0xff]
    %v4494 = vld [vmem:[#allocation13 + $0xba8] sm:$0xff]
    %v4495 = vld [vmem:[#allocation13 + $0xbb0] sm:$0xff]
    %v4496 = vld [vmem:[#allocation13 + $0xbb8] sm:$0xff]
    %v4497 = vld [vmem:[#allocation13 + $0xbc0] sm:$0xff]
    %v4498 = vld [vmem:[#allocation13 + $0xbc8] sm:$0xff]
    %v4499 = vld [vmem:[#allocation13 + $0xbd0] sm:$0xff]
    %v4500 = vld [vmem:[#allocation13 + $0xbd8] sm:$0xff]
    %v4501 = vld [vmem:[#allocation13 + $0xbe0] sm:$0xff]
    %v4502 = vld [vmem:[#allocation13 + $0xbe8] sm:$0xff]
    %v4503 = vld [vmem:[#allocation13 + $0xbf0] sm:$0xff]
    %v4504 = vld [vmem:[#allocation13 + $0xbf8] sm:$0xff]
    %v4505 = vld [vmem:[#allocation13 + $0xc00] sm:$0xff]
    %v4506 = vld [vmem:[#allocation13 + $0xc08] sm:$0xff]
    %v4507 = vld [vmem:[#allocation13 + $0xc10] sm:$0xff]
    %v4508 = vld [vmem:[#allocation13 + $0xc18] sm:$0xff]
    %v4509 = vld [vmem:[#allocation13 + $0xc20] sm:$0xff]
    %v4510 = vld [vmem:[#allocation13 + $0xc28] sm:$0xff]
    %v4511 = vld [vmem:[#allocation13 + $0xc30] sm:$0xff]
    %v4512 = vld [vmem:[#allocation13 + $0xc38] sm:$0xff]
    %v4513 = vld [vmem:[#allocation13 + $0xc40] sm:$0xff]
    %v4514 = vld [vmem:[#allocation13 + $0xc48] sm:$0xff]
    %v4515 = vld [vmem:[#allocation13 + $0xc50] sm:$0xff]
    %v4516 = vld [vmem:[#allocation13 + $0xc58] sm:$0xff]
    %v4517 = vld [vmem:[#allocation13 + $0xc60] sm:$0xff]
    %v4518 = vld [vmem:[#allocation13 + $0xc68] sm:$0xff]
    %v4519 = vld [vmem:[#allocation13 + $0xc70] sm:$0xff]
    %v4520 = vld [vmem:[#allocation13 + $0xc78] sm:$0xff]
    %v4521 = vld [vmem:[#allocation13 + $0xc80] sm:$0xff]
    %v4522 = vld [vmem:[#allocation13 + $0xc88] sm:$0xff]
    %v4523 = vld [vmem:[#allocation13 + $0xc90] sm:$0xff]
    %v4524 = vld [vmem:[#allocation13 + $0xc98] sm:$0xff]
    %v4525 = vld [vmem:[#allocation13 + $0xca0] sm:$0xff]
    %v4526 = vld [vmem:[#allocation13 + $0xca8] sm:$0xff]
    %v4527 = vld [vmem:[#allocation13 + $0xcb0] sm:$0xff]
    %v4528 = vld [vmem:[#allocation13 + $0xcb8] sm:$0xff]
    %v4529 = vld [vmem:[#allocation13 + $0xcc0] sm:$0xff]
    %v4530 = vld [vmem:[#allocation13 + $0xcc8] sm:$0xff]
    %v4531 = vld [vmem:[#allocation13 + $0xcd0] sm:$0xff]
    %v4532 = vld [vmem:[#allocation13 + $0xcd8] sm:$0xff]
    %v4533 = vld [vmem:[#allocation13 + $0xce0] sm:$0xff]
    %v4534 = vld [vmem:[#allocation13 + $0xce8] sm:$0xff]
    %v4535 = vld [vmem:[#allocation13 + $0xcf0] sm:$0xff]
    %v4536 = vld [vmem:[#allocation13 + $0xcf8] sm:$0xff]
    %v4537 = vld [vmem:[#allocation13 + $0xd00] sm:$0xff]
    %v4538 = vld [vmem:[#allocation13 + $0xd08] sm:$0xff]
    %v4539 = vld [vmem:[#allocation13 + $0xd10] sm:$0xff]
    %v4540 = vld [vmem:[#allocation13 + $0xd18] sm:$0xff]
    %v4541 = vld [vmem:[#allocation13 + $0xd20] sm:$0xff]
    %v4542 = vld [vmem:[#allocation13 + $0xd28] sm:$0xff]
    %v4543 = vld [vmem:[#allocation13 + $0xd30] sm:$0xff]
    %v4544 = vld [vmem:[#allocation13 + $0xd38] sm:$0xff]
    %v4545 = vld [vmem:[#allocation13 + $0xd40] sm:$0xff]
    %v4546 = vld [vmem:[#allocation13 + $0xd48] sm:$0xff]
    %v4547 = vld [vmem:[#allocation13 + $0xd50] sm:$0xff]
    %v4548 = vld [vmem:[#allocation13 + $0xd58] sm:$0xff]
    %v4549 = vld [vmem:[#allocation13 + $0xd60] sm:$0xff]
    %v4550 = vld [vmem:[#allocation13 + $0xd68] sm:$0xff]
    %v4551 = vld [vmem:[#allocation13 + $0xd70] sm:$0xff]
    %v4552 = vld [vmem:[#allocation13 + $0xd78] sm:$0xff]
    %v4553 = vld [vmem:[#allocation13 + $0xd80] sm:$0xff]
    %v4554 = vld [vmem:[#allocation13 + $0xd88] sm:$0xff]
    %v4555 = vld [vmem:[#allocation13 + $0xd90] sm:$0xff]
    %v4556 = vld [vmem:[#allocation13 + $0xd98] sm:$0xff]
    %v4557 = vld [vmem:[#allocation13 + $0xda0] sm:$0xff]
    %v4558 = vld [vmem:[#allocation13 + $0xda8] sm:$0xff]
    %v4559 = vld [vmem:[#allocation13 + $0xdb0] sm:$0xff]
    %v4560 = vld [vmem:[#allocation13 + $0xdb8] sm:$0xff]
    %v4561 = vld [vmem:[#allocation13 + $0xdc0] sm:$0xff]
    %v4562 = vld [vmem:[#allocation13 + $0xdc8] sm:$0xff]
    %v4563 = vld [vmem:[#allocation13 + $0xdd0] sm:$0xff]
    %v4564 = vld [vmem:[#allocation13 + $0xdd8] sm:$0xff]
    %v4565 = vld [vmem:[#allocation13 + $0xde0] sm:$0xff]
    %v4566 = vld [vmem:[#allocation13 + $0xde8] sm:$0xff]
    %v4567 = vld [vmem:[#allocation13 + $0xdf0] sm:$0xff]
    %v4568 = vld [vmem:[#allocation13 + $0xdf8] sm:$0xff]
    %v4569 = vld [vmem:[#allocation13 + $0xe00] sm:$0xff]
    %v4570 = vld [vmem:[#allocation13 + $0xe08] sm:$0xff]
    %v4571 = vld [vmem:[#allocation13 + $0xe10] sm:$0xff]
    %v4572 = vld [vmem:[#allocation13 + $0xe18] sm:$0xff]
    %v4573 = vld [vmem:[#allocation13 + $0xe20] sm:$0xff]
    %v4574 = vld [vmem:[#allocation13 + $0xe28] sm:$0xff]
    %v4575 = vld [vmem:[#allocation13 + $0xe30] sm:$0xff]
    %v4576 = vld [vmem:[#allocation13 + $0xe38] sm:$0xff]
    %v4577 = vld [vmem:[#allocation13 + $0xe40] sm:$0xff]
    %v4578 = vld [vmem:[#allocation13 + $0xe48] sm:$0xff]
    %v4579 = vld [vmem:[#allocation13 + $0xe50] sm:$0xff]
    %v4580 = vld [vmem:[#allocation13 + $0xe58] sm:$0xff]
    %v4581 = vld [vmem:[#allocation13 + $0xe60] sm:$0xff]
    %v4582 = vld [vmem:[#allocation13 + $0xe68] sm:$0xff]
    %v4583 = vld [vmem:[#allocation13 + $0xe70] sm:$0xff]
    %v4584 = vld [vmem:[#allocation13 + $0xe78] sm:$0xff]
    %v4585 = vld [vmem:[#allocation13 + $0xe80] sm:$0xff]
    %v4586 = vld [vmem:[#allocation13 + $0xe88] sm:$0xff]
    %v4587 = vld [vmem:[#allocation13 + $0xe90] sm:$0xff]
    %v4588 = vld [vmem:[#allocation13 + $0xe98] sm:$0xff]
    %v4589 = vld [vmem:[#allocation13 + $0xea0] sm:$0xff]
    %v4590 = vld [vmem:[#allocation13 + $0xea8] sm:$0xff]
    %v4591 = vld [vmem:[#allocation13 + $0xeb0] sm:$0xff]
    %v4592 = vld [vmem:[#allocation13 + $0xeb8] sm:$0xff]
    %v4593 = vld [vmem:[#allocation13 + $0xec0] sm:$0xff]
    %v4594 = vld [vmem:[#allocation13 + $0xec8] sm:$0xff]
    %v4595 = vld [vmem:[#allocation13 + $0xed0] sm:$0xff]
    %v4596 = vld [vmem:[#allocation13 + $0xed8] sm:$0xff]
    %v4597 = vld [vmem:[#allocation13 + $0xee0] sm:$0xff]
    %v4598 = vld [vmem:[#allocation13 + $0xee8] sm:$0xff]
    %v4599 = vld [vmem:[#allocation13 + $0xef0] sm:$0xff]
    %v4600 = vld [vmem:[#allocation13 + $0xef8] sm:$0xff]
    %v4601 = vld [vmem:[#allocation13 + $0xf00] sm:$0xff]
    %v4602 = vld [vmem:[#allocation13 + $0xf08] sm:$0xff]
    %v4603 = vld [vmem:[#allocation13 + $0xf10] sm:$0xff]
    %v4604 = vld [vmem:[#allocation13 + $0xf18] sm:$0xff]
    %v4605 = vld [vmem:[#allocation13 + $0xf20] sm:$0xff]
    %v4606 = vld [vmem:[#allocation13 + $0xf28] sm:$0xff]
    %v4607 = vld [vmem:[#allocation13 + $0xf30] sm:$0xff]
    %v4608 = vld [vmem:[#allocation13 + $0xf38] sm:$0xff]
    %v4609 = vld [vmem:[#allocation13 + $0xf40] sm:$0xff]
    %v4610 = vld [vmem:[#allocation13 + $0xf48] sm:$0xff]
    %v4611 = vld [vmem:[#allocation13 + $0xf50] sm:$0xff]
    %v4612 = vld [vmem:[#allocation13 + $0xf58] sm:$0xff]
    %v4613 = vld [vmem:[#allocation13 + $0xf60] sm:$0xff]
    %v4614 = vld [vmem:[#allocation13 + $0xf68] sm:$0xff]
    %v4615 = vld [vmem:[#allocation13 + $0xf70] sm:$0xff]
    %v4616 = vld [vmem:[#allocation13 + $0xf78] sm:$0xff]
    %v4617 = vld [vmem:[#allocation13 + $0xf80] sm:$0xff]
    %v4618 = vld [vmem:[#allocation13 + $0xf88] sm:$0xff]
    %v4619 = vld [vmem:[#allocation13 + $0xf90] sm:$0xff]
    %v4620 = vld [vmem:[#allocation13 + $0xf98] sm:$0xff]
    %v4621 = vld [vmem:[#allocation13 + $0xfa0] sm:$0xff]
    %v4622 = vld [vmem:[#allocation13 + $0xfa8] sm:$0xff]
    %v4623 = vld [vmem:[#allocation13 + $0xfb0] sm:$0xff]
    %v4624 = vld [vmem:[#allocation13 + $0xfb8] sm:$0xff]
    %v4625 = vld [vmem:[#allocation13 + $0xfc0] sm:$0xff]
    %v4626 = vld [vmem:[#allocation13 + $0xfc8] sm:$0xff]
    %v4627 = vld [vmem:[#allocation13 + $0xfd0] sm:$0xff]
    %v4628 = vld [vmem:[#allocation13 + $0xfd8] sm:$0xff]
    %v4629 = vld [vmem:[#allocation13 + $0xfe0] sm:$0xff]
    %v4630 = vld [vmem:[#allocation13 + $0xfe8] sm:$0xff]
    %v4631 = vld [vmem:[#allocation13 + $0xff0] sm:$0xff]
    %v4632 = vld [vmem:[#allocation13 + $0xff8] sm:$0xff]
    %s4633 = scalar_lea.vmem %s11, 64
    %v4634 = vld [vmem:[%s4633] ss:$8 sm:$0xf]
    %v4635 = vld [vmem:[%s4633] ss:$8 sm:$0xf0]
    %v4636 = vor.u32 %v4634, %v4635
    %v4638 = vperm.slane %v4636, 0
    %v4639 = vperm.slane %v4636, 1
    %v4640 = vperm.slane %v4636, 2
    %v4641 = vperm.slane %v4636, 3
    %v4642 = vperm.slane %v4636, 4
    %v4643 = vperm.slane %v4636, 5
    %v4644 = vperm.slane %v4636, 6
    %v4645 = vperm.slane %v4636, 7
    %4654 = vmatpush.msra.mxu0 %v4241
    %4655 = vmatpush.msra.mxu0 %v4233
    %4656 = vmatpush.msra.mxu0 %v4225
    %4657 = vmatpush.msra.mxu0 %v4217
    %4658 = vmatpush.msra.mxu0 %v4209
    %4659 = vmatpush.msra.mxu0 %v4201
    %4660 = vmatpush.msra.mxu0 %v4193
    %4661 = vmatpush.msra.mxu0 %v4185
    %4662 = vmatpush.msra.mxu0 %v4177
    %4663 = vmatpush.msra.mxu0 %v4169
    %4664 = vmatpush.msra.mxu0 %v4161
    %4665 = vmatpush.msra.mxu0 %v4153
    %4666 = vmatpush.msra.mxu0 %v4145
    %4667 = vmatpush.msra.mxu0 %v4137
    %4668 = vmatpush.msra.mxu0 %v4129
    %4669 = vmatpush.msra.mxu0 %v4121
    %4670 = vmatmul.f32.gmra.mxu0 %v4105
    %v4671 = vpop.f32.mrf.mxu0
    %v4672 = vadd.f32 %v4638, %v4671
    %4673 = vmatmul.f32.gmra.mxu0 %v4109
    %v4674 = vpop.f32.mrf.mxu0
    %v4675 = vadd.f32 %v4638, %v4674
    %4676 = vmatmul.f32.gmra.mxu0 %v4113
    %v4677 = vpop.f32.mrf.mxu0
    %v4678 = vadd.f32 %v4638, %v4677
    %4679 = vmatmul.f32.gmra.mxu0 %v4117
    %v4680 = vpop.f32.mrf.mxu0
    %v4681 = vadd.f32 %v4638, %v4680
    %4682 = vdwg.mxu0
    %4683 = vmatpush.msra.mxu0 %v4369
    %4684 = vmatpush.msra.mxu0 %v4361
    %4685 = vmatpush.msra.mxu0 %v4353
    %4686 = vmatpush.msra.mxu0 %v4345
    %4687 = vmatpush.msra.mxu0 %v4337
    %4688 = vmatpush.msra.mxu0 %v4329
    %4689 = vmatpush.msra.mxu0 %v4321
    %4690 = vmatpush.msra.mxu0 %v4313
    %4691 = vmatpush.msra.mxu0 %v4305
    %4692 = vmatpush.msra.mxu0 %v4297
    %4693 = vmatpush.msra.mxu0 %v4289
    %4694 = vmatpush.msra.mxu0 %v4281
    %4695 = vmatpush.msra.mxu0 %v4273
    %4696 = vmatpush.msra.mxu0 %v4265
    %4697 = vmatpush.msra.mxu0 %v4257
    %4698 = vmatpush.msra.mxu0 %v4249
    %4699 = vmatmul.f32.gmra.mxu0 %v4106
    %v4700 = vpop.f32.mrf.mxu0
    %v4701 = vadd.f32 %v4672, %v4700
    %4702 = vmatmul.f32.gmra.mxu0 %v4110
    %v4703 = vpop.f32.mrf.mxu0
    %v4704 = vadd.f32 %v4675, %v4703
    %4705 = vmatmul.f32.gmra.mxu0 %v4114
    %v4706 = vpop.f32.mrf.mxu0
    %v4707 = vadd.f32 %v4678, %v4706
    %4708 = vmatmul.f32.gmra.mxu0 %v4118
    %v4709 = vpop.f32.mrf.mxu0
    %v4710 = vadd.f32 %v4681, %v4709
    %4711 = vdwg.mxu0
    %4712 = vmatpush.msra.mxu0 %v4497
    %4713 = vmatpush.msra.mxu0 %v4489
    %4714 = vmatpush.msra.mxu0 %v4481
    %4715 = vmatpush.msra.mxu0 %v4473
    %4716 = vmatpush.msra.mxu0 %v4465
    %4717 = vmatpush.msra.mxu0 %v4457
    %4718 = vmatpush.msra.mxu0 %v4449
    %4719 = vmatpush.msra.mxu0 %v4441
    %4720 = vmatpush.msra.mxu0 %v4433
    %4721 = vmatpush.msra.mxu0 %v4425
    %4722 = vmatpush.msra.mxu0 %v4417
    %4723 = vmatpush.msra.mxu0 %v4409
    %4724 = vmatpush.msra.mxu0 %v4401
    %4725 = vmatpush.msra.mxu0 %v4393
    %4726 = vmatpush.msra.mxu0 %v4385
    %4727 = vmatpush.msra.mxu0 %v4377
    %4728 = vmatmul.f32.gmra.mxu0 %v4107
    %v4729 = vpop.f32.mrf.mxu0
    %v4730 = vadd.f32 %v4701, %v4729
    %4731 = vmatmul.f32.gmra.mxu0 %v4111
    %v4732 = vpop.f32.mrf.mxu0
    %v4733 = vadd.f32 %v4704, %v4732
    %4734 = vmatmul.f32.gmra.mxu0 %v4115
    %v4735 = vpop.f32.mrf.mxu0
    %v4736 = vadd.f32 %v4707, %v4735
    %4737 = vmatmul.f32.gmra.mxu0 %v4119
    %v4738 = vpop.f32.mrf.mxu0
    %v4739 = vadd.f32 %v4710, %v4738
    %4740 = vdwg.mxu0
    %4741 = vmatpush.msra.mxu0 %v4625
    %4742 = vmatpush.msra.mxu0 %v4617
    %4743 = vmatpush.msra.mxu0 %v4609
    %4744 = vmatpush.msra.mxu0 %v4601
    %4745 = vmatpush.msra.mxu0 %v4593
    %4746 = vmatpush.msra.mxu0 %v4585
    %4747 = vmatpush.msra.mxu0 %v4577
    %4748 = vmatpush.msra.mxu0 %v4569
    %4749 = vmatpush.msra.mxu0 %v4561
    %4750 = vmatpush.msra.mxu0 %v4553
    %4751 = vmatpush.msra.mxu0 %v4545
    %4752 = vmatpush.msra.mxu0 %v4537
    %4753 = vmatpush.msra.mxu0 %v4529
    %4754 = vmatpush.msra.mxu0 %v4521
    %4755 = vmatpush.msra.mxu0 %v4513
    %4756 = vmatpush.msra.mxu0 %v4505
    %4757 = vmatmul.f32.gmra.mxu0 %v4108
    %v4758 = vpop.f32.mrf.mxu0
    %v4759 = vadd.f32 %v4730, %v4758
    %4760 = vmatmul.f32.gmra.mxu0 %v4112
    %v4761 = vpop.f32.mrf.mxu0
    %v4762 = vadd.f32 %v4733, %v4761
    %4763 = vmatmul.f32.gmra.mxu0 %v4116
    %v4764 = vpop.f32.mrf.mxu0
    %v4765 = vadd.f32 %v4736, %v4764
    %4766 = vmatmul.f32.gmra.mxu0 %v4120
    %v4767 = vpop.f32.mrf.mxu0
    %v4768 = vadd.f32 %v4739, %v4767
    %4769 = vdwg.mxu0
    %4770 = vmatpush.msra.mxu0 %v4242
    %4771 = vmatpush.msra.mxu0 %v4234
    %4772 = vmatpush.msra.mxu0 %v4226
    %4773 = vmatpush.msra.mxu0 %v4218
    %4774 = vmatpush.msra.mxu0 %v4210
    %4775 = vmatpush.msra.mxu0 %v4202
    %4776 = vmatpush.msra.mxu0 %v4194
    %4777 = vmatpush.msra.mxu0 %v4186
    %4778 = vmatpush.msra.mxu0 %v4178
    %4779 = vmatpush.msra.mxu0 %v4170
    %4780 = vmatpush.msra.mxu0 %v4162
    %4781 = vmatpush.msra.mxu0 %v4154
    %4782 = vmatpush.msra.mxu0 %v4146
    %4783 = vmatpush.msra.mxu0 %v4138
    %4784 = vmatpush.msra.mxu0 %v4130
    %4785 = vmatpush.msra.mxu0 %v4122
    %4786 = vmatmul.f32.gmra.mxu0 %v4105
    %v4787 = vpop.f32.mrf.mxu0
    %v4788 = vadd.f32 %v4639, %v4787
    %4789 = vmatmul.f32.gmra.mxu0 %v4109
    %v4790 = vpop.f32.mrf.mxu0
    %v4791 = vadd.f32 %v4639, %v4790
    %4792 = vmatmul.f32.gmra.mxu0 %v4113
    %v4793 = vpop.f32.mrf.mxu0
    %v4794 = vadd.f32 %v4639, %v4793
    %4795 = vmatmul.f32.gmra.mxu0 %v4117
    %v4796 = vpop.f32.mrf.mxu0
    %v4797 = vadd.f32 %v4639, %v4796
    %4798 = vdwg.mxu0
    %4799 = vmatpush.msra.mxu0 %v4370
    %4800 = vmatpush.msra.mxu0 %v4362
    %4801 = vmatpush.msra.mxu0 %v4354
    %4802 = vmatpush.msra.mxu0 %v4346
    %4803 = vmatpush.msra.mxu0 %v4338
    %4804 = vmatpush.msra.mxu0 %v4330
    %4805 = vmatpush.msra.mxu0 %v4322
    %4806 = vmatpush.msra.mxu0 %v4314
    %4807 = vmatpush.msra.mxu0 %v4306
    %4808 = vmatpush.msra.mxu0 %v4298
    %4809 = vmatpush.msra.mxu0 %v4290
    %4810 = vmatpush.msra.mxu0 %v4282
    %4811 = vmatpush.msra.mxu0 %v4274
    %4812 = vmatpush.msra.mxu0 %v4266
    %4813 = vmatpush.msra.mxu0 %v4258
    %4814 = vmatpush.msra.mxu0 %v4250
    %4815 = vmatmul.f32.gmra.mxu0 %v4106
    %v4816 = vpop.f32.mrf.mxu0
    %v4817 = vadd.f32 %v4788, %v4816
    %4818 = vmatmul.f32.gmra.mxu0 %v4110
    %v4819 = vpop.f32.mrf.mxu0
    %v4820 = vadd.f32 %v4791, %v4819
    %4821 = vmatmul.f32.gmra.mxu0 %v4114
    %v4822 = vpop.f32.mrf.mxu0
    %v4823 = vadd.f32 %v4794, %v4822
    %4824 = vmatmul.f32.gmra.mxu0 %v4118
    %v4825 = vpop.f32.mrf.mxu0
    %v4826 = vadd.f32 %v4797, %v4825
    %4827 = vdwg.mxu0
    %4828 = vmatpush.msra.mxu0 %v4498
    %4829 = vmatpush.msra.mxu0 %v4490
    %4830 = vmatpush.msra.mxu0 %v4482
    %4831 = vmatpush.msra.mxu0 %v4474
    %4832 = vmatpush.msra.mxu0 %v4466
    %4833 = vmatpush.msra.mxu0 %v4458
    %4834 = vmatpush.msra.mxu0 %v4450
    %4835 = vmatpush.msra.mxu0 %v4442
    %4836 = vmatpush.msra.mxu0 %v4434
    %4837 = vmatpush.msra.mxu0 %v4426
    %4838 = vmatpush.msra.mxu0 %v4418
    %4839 = vmatpush.msra.mxu0 %v4410
    %4840 = vmatpush.msra.mxu0 %v4402
    %4841 = vmatpush.msra.mxu0 %v4394
    %4842 = vmatpush.msra.mxu0 %v4386
    %4843 = vmatpush.msra.mxu0 %v4378
    %4844 = vmatmul.f32.gmra.mxu0 %v4107
    %v4845 = vpop.f32.mrf.mxu0
    %v4846 = vadd.f32 %v4817, %v4845
    %4847 = vmatmul.f32.gmra.mxu0 %v4111
    %v4848 = vpop.f32.mrf.mxu0
    %v4849 = vadd.f32 %v4820, %v4848
    %4850 = vmatmul.f32.gmra.mxu0 %v4115
    %v4851 = vpop.f32.mrf.mxu0
    %v4852 = vadd.f32 %v4823, %v4851
    %4853 = vmatmul.f32.gmra.mxu0 %v4119
    %v4854 = vpop.f32.mrf.mxu0
    %v4855 = vadd.f32 %v4826, %v4854
    %4856 = vdwg.mxu0
    %4857 = vmatpush.msra.mxu0 %v4626
    %4858 = vmatpush.msra.mxu0 %v4618
    %4859 = vmatpush.msra.mxu0 %v4610
    %4860 = vmatpush.msra.mxu0 %v4602
    %4861 = vmatpush.msra.mxu0 %v4594
    %4862 = vmatpush.msra.mxu0 %v4586
    %4863 = vmatpush.msra.mxu0 %v4578
    %4864 = vmatpush.msra.mxu0 %v4570
    %4865 = vmatpush.msra.mxu0 %v4562
    %4866 = vmatpush.msra.mxu0 %v4554
    %4867 = vmatpush.msra.mxu0 %v4546
    %4868 = vmatpush.msra.mxu0 %v4538
    %4869 = vmatpush.msra.mxu0 %v4530
    %4870 = vmatpush.msra.mxu0 %v4522
    %4871 = vmatpush.msra.mxu0 %v4514
    %4872 = vmatpush.msra.mxu0 %v4506
    %4873 = vmatmul.f32.gmra.mxu0 %v4108
    %v4874 = vpop.f32.mrf.mxu0
    %v4875 = vadd.f32 %v4846, %v4874
    %4876 = vmatmul.f32.gmra.mxu0 %v4112
    %v4877 = vpop.f32.mrf.mxu0
    %v4878 = vadd.f32 %v4849, %v4877
    %4879 = vmatmul.f32.gmra.mxu0 %v4116
    %v4880 = vpop.f32.mrf.mxu0
    %v4881 = vadd.f32 %v4852, %v4880
    %4882 = vmatmul.f32.gmra.mxu0 %v4120
    %v4883 = vpop.f32.mrf.mxu0
    %v4884 = vadd.f32 %v4855, %v4883
    %4885 = vdwg.mxu0
    %4886 = vmatpush.msra.mxu0 %v4243
    %4887 = vmatpush.msra.mxu0 %v4235
    %4888 = vmatpush.msra.mxu0 %v4227
    %4889 = vmatpush.msra.mxu0 %v4219
    %4890 = vmatpush.msra.mxu0 %v4211
    %4891 = vmatpush.msra.mxu0 %v4203
    %4892 = vmatpush.msra.mxu0 %v4195
    %4893 = vmatpush.msra.mxu0 %v4187
    %4894 = vmatpush.msra.mxu0 %v4179
    %4895 = vmatpush.msra.mxu0 %v4171
    %4896 = vmatpush.msra.mxu0 %v4163
    %4897 = vmatpush.msra.mxu0 %v4155
    %4898 = vmatpush.msra.mxu0 %v4147
    %4899 = vmatpush.msra.mxu0 %v4139
    %4900 = vmatpush.msra.mxu0 %v4131
    %4901 = vmatpush.msra.mxu0 %v4123
    %4902 = vmatmul.f32.gmra.mxu0 %v4105
    %v4903 = vpop.f32.mrf.mxu0
    %v4904 = vadd.f32 %v4640, %v4903
    %4905 = vmatmul.f32.gmra.mxu0 %v4109
    %v4906 = vpop.f32.mrf.mxu0
    %v4907 = vadd.f32 %v4640, %v4906
    %4908 = vmatmul.f32.gmra.mxu0 %v4113
    %v4909 = vpop.f32.mrf.mxu0
    %v4910 = vadd.f32 %v4640, %v4909
    %4911 = vmatmul.f32.gmra.mxu0 %v4117
    %v4912 = vpop.f32.mrf.mxu0
    %v4913 = vadd.f32 %v4640, %v4912
    %4914 = vdwg.mxu0
    %4915 = vmatpush.msra.mxu0 %v4371
    %4916 = vmatpush.msra.mxu0 %v4363
    %4917 = vmatpush.msra.mxu0 %v4355
    %4918 = vmatpush.msra.mxu0 %v4347
    %4919 = vmatpush.msra.mxu0 %v4339
    %4920 = vmatpush.msra.mxu0 %v4331
    %4921 = vmatpush.msra.mxu0 %v4323
    %4922 = vmatpush.msra.mxu0 %v4315
    %4923 = vmatpush.msra.mxu0 %v4307
    %4924 = vmatpush.msra.mxu0 %v4299
    %4925 = vmatpush.msra.mxu0 %v4291
    %4926 = vmatpush.msra.mxu0 %v4283
    %4927 = vmatpush.msra.mxu0 %v4275
    %4928 = vmatpush.msra.mxu0 %v4267
    %4929 = vmatpush.msra.mxu0 %v4259
    %4930 = vmatpush.msra.mxu0 %v4251
    %4931 = vmatmul.f32.gmra.mxu0 %v4106
    %v4932 = vpop.f32.mrf.mxu0
    %v4933 = vadd.f32 %v4904, %v4932
    %4934 = vmatmul.f32.gmra.mxu0 %v4110
    %v4935 = vpop.f32.mrf.mxu0
    %v4936 = vadd.f32 %v4907, %v4935
    %4937 = vmatmul.f32.gmra.mxu0 %v4114
    %v4938 = vpop.f32.mrf.mxu0
    %v4939 = vadd.f32 %v4910, %v4938
    %4940 = vmatmul.f32.gmra.mxu0 %v4118
    %v4941 = vpop.f32.mrf.mxu0
    %v4942 = vadd.f32 %v4913, %v4941
    %4943 = vdwg.mxu0
    %4944 = vmatpush.msra.mxu0 %v4499
    %4945 = vmatpush.msra.mxu0 %v4491
    %4946 = vmatpush.msra.mxu0 %v4483
    %4947 = vmatpush.msra.mxu0 %v4475
    %4948 = vmatpush.msra.mxu0 %v4467
    %4949 = vmatpush.msra.mxu0 %v4459
    %4950 = vmatpush.msra.mxu0 %v4451
    %4951 = vmatpush.msra.mxu0 %v4443
    %4952 = vmatpush.msra.mxu0 %v4435
    %4953 = vmatpush.msra.mxu0 %v4427
    %4954 = vmatpush.msra.mxu0 %v4419
    %4955 = vmatpush.msra.mxu0 %v4411
    %4956 = vmatpush.msra.mxu0 %v4403
    %4957 = vmatpush.msra.mxu0 %v4395
    %4958 = vmatpush.msra.mxu0 %v4387
    %4959 = vmatpush.msra.mxu0 %v4379
    %4960 = vmatmul.f32.gmra.mxu0 %v4107
    %v4961 = vpop.f32.mrf.mxu0
    %v4962 = vadd.f32 %v4933, %v4961
    %4963 = vmatmul.f32.gmra.mxu0 %v4111
    %v4964 = vpop.f32.mrf.mxu0
    %v4965 = vadd.f32 %v4936, %v4964
    %4966 = vmatmul.f32.gmra.mxu0 %v4115
    %v4967 = vpop.f32.mrf.mxu0
    %v4968 = vadd.f32 %v4939, %v4967
    %4969 = vmatmul.f32.gmra.mxu0 %v4119
    %v4970 = vpop.f32.mrf.mxu0
    %v4971 = vadd.f32 %v4942, %v4970
    %4972 = vdwg.mxu0
    %4973 = vmatpush.msra.mxu0 %v4627
    %4974 = vmatpush.msra.mxu0 %v4619
    %4975 = vmatpush.msra.mxu0 %v4611
    %4976 = vmatpush.msra.mxu0 %v4603
    %4977 = vmatpush.msra.mxu0 %v4595
    %4978 = vmatpush.msra.mxu0 %v4587
    %4979 = vmatpush.msra.mxu0 %v4579
    %4980 = vmatpush.msra.mxu0 %v4571
    %4981 = vmatpush.msra.mxu0 %v4563
    %4982 = vmatpush.msra.mxu0 %v4555
    %4983 = vmatpush.msra.mxu0 %v4547
    %4984 = vmatpush.msra.mxu0 %v4539
    %4985 = vmatpush.msra.mxu0 %v4531
    %4986 = vmatpush.msra.mxu0 %v4523
    %4987 = vmatpush.msra.mxu0 %v4515
    %4988 = vmatpush.msra.mxu0 %v4507
    %4989 = vmatmul.f32.gmra.mxu0 %v4108
    %v4990 = vpop.f32.mrf.mxu0
    %v4991 = vadd.f32 %v4962, %v4990
    %4992 = vmatmul.f32.gmra.mxu0 %v4112
    %v4993 = vpop.f32.mrf.mxu0
    %v4994 = vadd.f32 %v4965, %v4993
    %4995 = vmatmul.f32.gmra.mxu0 %v4116
    %v4996 = vpop.f32.mrf.mxu0
    %v4997 = vadd.f32 %v4968, %v4996
    %4998 = vmatmul.f32.gmra.mxu0 %v4120
    %v4999 = vpop.f32.mrf.mxu0
    %v5000 = vadd.f32 %v4971, %v4999
    %5001 = vdwg.mxu0
    %5002 = vmatpush.msra.mxu0 %v4244
    %5003 = vmatpush.msra.mxu0 %v4236
    %5004 = vmatpush.msra.mxu0 %v4228
    %5005 = vmatpush.msra.mxu0 %v4220
    %5006 = vmatpush.msra.mxu0 %v4212
    %5007 = vmatpush.msra.mxu0 %v4204
    %5008 = vmatpush.msra.mxu0 %v4196
    %5009 = vmatpush.msra.mxu0 %v4188
    %5010 = vmatpush.msra.mxu0 %v4180
    %5011 = vmatpush.msra.mxu0 %v4172
    %5012 = vmatpush.msra.mxu0 %v4164
    %5013 = vmatpush.msra.mxu0 %v4156
    %5014 = vmatpush.msra.mxu0 %v4148
    %5015 = vmatpush.msra.mxu0 %v4140
    %5016 = vmatpush.msra.mxu0 %v4132
    %5017 = vmatpush.msra.mxu0 %v4124
    %5018 = vmatmul.f32.gmra.mxu0 %v4105
    %v5019 = vpop.f32.mrf.mxu0
    %v5020 = vadd.f32 %v4641, %v5019
    %5021 = vmatmul.f32.gmra.mxu0 %v4109
    %v5022 = vpop.f32.mrf.mxu0
    %v5023 = vadd.f32 %v4641, %v5022
    %5024 = vmatmul.f32.gmra.mxu0 %v4113
    %v5025 = vpop.f32.mrf.mxu0
    %v5026 = vadd.f32 %v4641, %v5025
    %5027 = vmatmul.f32.gmra.mxu0 %v4117
    %v5028 = vpop.f32.mrf.mxu0
    %v5029 = vadd.f32 %v4641, %v5028
    %5030 = vdwg.mxu0
    %5031 = vmatpush.msra.mxu0 %v4372
    %5032 = vmatpush.msra.mxu0 %v4364
    %5033 = vmatpush.msra.mxu0 %v4356
    %5034 = vmatpush.msra.mxu0 %v4348
    %5035 = vmatpush.msra.mxu0 %v4340
    %5036 = vmatpush.msra.mxu0 %v4332
    %5037 = vmatpush.msra.mxu0 %v4324
    %5038 = vmatpush.msra.mxu0 %v4316
    %5039 = vmatpush.msra.mxu0 %v4308
    %5040 = vmatpush.msra.mxu0 %v4300
    %5041 = vmatpush.msra.mxu0 %v4292
    %5042 = vmatpush.msra.mxu0 %v4284
    %5043 = vmatpush.msra.mxu0 %v4276
    %5044 = vmatpush.msra.mxu0 %v4268
    %5045 = vmatpush.msra.mxu0 %v4260
    %5046 = vmatpush.msra.mxu0 %v4252
    %5047 = vmatmul.f32.gmra.mxu0 %v4106
    %v5048 = vpop.f32.mrf.mxu0
    %v5049 = vadd.f32 %v5020, %v5048
    %5050 = vmatmul.f32.gmra.mxu0 %v4110
    %v5051 = vpop.f32.mrf.mxu0
    %v5052 = vadd.f32 %v5023, %v5051
    %5053 = vmatmul.f32.gmra.mxu0 %v4114
    %v5054 = vpop.f32.mrf.mxu0
    %v5055 = vadd.f32 %v5026, %v5054
    %5056 = vmatmul.f32.gmra.mxu0 %v4118
    %v5057 = vpop.f32.mrf.mxu0
    %v5058 = vadd.f32 %v5029, %v5057
    %5059 = vdwg.mxu0
    %5060 = vmatpush.msra.mxu0 %v4500
    %5061 = vmatpush.msra.mxu0 %v4492
    %5062 = vmatpush.msra.mxu0 %v4484
    %5063 = vmatpush.msra.mxu0 %v4476
    %5064 = vmatpush.msra.mxu0 %v4468
    %5065 = vmatpush.msra.mxu0 %v4460
    %5066 = vmatpush.msra.mxu0 %v4452
    %5067 = vmatpush.msra.mxu0 %v4444
    %5068 = vmatpush.msra.mxu0 %v4436
    %5069 = vmatpush.msra.mxu0 %v4428
    %5070 = vmatpush.msra.mxu0 %v4420
    %5071 = vmatpush.msra.mxu0 %v4412
    %5072 = vmatpush.msra.mxu0 %v4404
    %5073 = vmatpush.msra.mxu0 %v4396
    %5074 = vmatpush.msra.mxu0 %v4388
    %5075 = vmatpush.msra.mxu0 %v4380
    %5076 = vmatmul.f32.gmra.mxu0 %v4107
    %v5077 = vpop.f32.mrf.mxu0
    %v5078 = vadd.f32 %v5049, %v5077
    %5079 = vmatmul.f32.gmra.mxu0 %v4111
    %v5080 = vpop.f32.mrf.mxu0
    %v5081 = vadd.f32 %v5052, %v5080
    %5082 = vmatmul.f32.gmra.mxu0 %v4115
    %v5083 = vpop.f32.mrf.mxu0
    %v5084 = vadd.f32 %v5055, %v5083
    %5085 = vmatmul.f32.gmra.mxu0 %v4119
    %v5086 = vpop.f32.mrf.mxu0
    %v5087 = vadd.f32 %v5058, %v5086
    %5088 = vdwg.mxu0
    %5089 = vmatpush.msra.mxu0 %v4628
    %5090 = vmatpush.msra.mxu0 %v4620
    %5091 = vmatpush.msra.mxu0 %v4612
    %5092 = vmatpush.msra.mxu0 %v4604
    %5093 = vmatpush.msra.mxu0 %v4596
    %5094 = vmatpush.msra.mxu0 %v4588
    %5095 = vmatpush.msra.mxu0 %v4580
    %5096 = vmatpush.msra.mxu0 %v4572
    %5097 = vmatpush.msra.mxu0 %v4564
    %5098 = vmatpush.msra.mxu0 %v4556
    %5099 = vmatpush.msra.mxu0 %v4548
    %5100 = vmatpush.msra.mxu0 %v4540
    %5101 = vmatpush.msra.mxu0 %v4532
    %5102 = vmatpush.msra.mxu0 %v4524
    %5103 = vmatpush.msra.mxu0 %v4516
    %5104 = vmatpush.msra.mxu0 %v4508
    %5105 = vmatmul.f32.gmra.mxu0 %v4108
    %v5106 = vpop.f32.mrf.mxu0
    %v5107 = vadd.f32 %v5078, %v5106
    %5108 = vmatmul.f32.gmra.mxu0 %v4112
    %v5109 = vpop.f32.mrf.mxu0
    %v5110 = vadd.f32 %v5081, %v5109
    %5111 = vmatmul.f32.gmra.mxu0 %v4116
    %v5112 = vpop.f32.mrf.mxu0
    %v5113 = vadd.f32 %v5084, %v5112
    %5114 = vmatmul.f32.gmra.mxu0 %v4120
    %v5115 = vpop.f32.mrf.mxu0
    %v5116 = vadd.f32 %v5087, %v5115
    %5117 = vdwg.mxu0
    %5118 = vmatpush.msra.mxu0 %v4245
    %5119 = vmatpush.msra.mxu0 %v4237
    %5120 = vmatpush.msra.mxu0 %v4229
    %5121 = vmatpush.msra.mxu0 %v4221
    %5122 = vmatpush.msra.mxu0 %v4213
    %5123 = vmatpush.msra.mxu0 %v4205
    %5124 = vmatpush.msra.mxu0 %v4197
    %5125 = vmatpush.msra.mxu0 %v4189
    %5126 = vmatpush.msra.mxu0 %v4181
    %5127 = vmatpush.msra.mxu0 %v4173
    %5128 = vmatpush.msra.mxu0 %v4165
    %5129 = vmatpush.msra.mxu0 %v4157
    %5130 = vmatpush.msra.mxu0 %v4149
    %5131 = vmatpush.msra.mxu0 %v4141
    %5132 = vmatpush.msra.mxu0 %v4133
    %5133 = vmatpush.msra.mxu0 %v4125
    %5134 = vmatmul.f32.gmra.mxu0 %v4105
    %v5135 = vpop.f32.mrf.mxu0
    %v5136 = vadd.f32 %v4642, %v5135
    %5137 = vmatmul.f32.gmra.mxu0 %v4109
    %v5138 = vpop.f32.mrf.mxu0
    %v5139 = vadd.f32 %v4642, %v5138
    %5140 = vmatmul.f32.gmra.mxu0 %v4113
    %v5141 = vpop.f32.mrf.mxu0
    %v5142 = vadd.f32 %v4642, %v5141
    %5143 = vmatmul.f32.gmra.mxu0 %v4117
    %v5144 = vpop.f32.mrf.mxu0
    %v5145 = vadd.f32 %v4642, %v5144
    %5146 = vdwg.mxu0
    %5147 = vmatpush.msra.mxu0 %v4373
    %5148 = vmatpush.msra.mxu0 %v4365
    %5149 = vmatpush.msra.mxu0 %v4357
    %5150 = vmatpush.msra.mxu0 %v4349
    %5151 = vmatpush.msra.mxu0 %v4341
    %5152 = vmatpush.msra.mxu0 %v4333
    %5153 = vmatpush.msra.mxu0 %v4325
    %5154 = vmatpush.msra.mxu0 %v4317
    %5155 = vmatpush.msra.mxu0 %v4309
    %5156 = vmatpush.msra.mxu0 %v4301
    %5157 = vmatpush.msra.mxu0 %v4293
    %5158 = vmatpush.msra.mxu0 %v4285
    %5159 = vmatpush.msra.mxu0 %v4277
    %5160 = vmatpush.msra.mxu0 %v4269
    %5161 = vmatpush.msra.mxu0 %v4261
    %5162 = vmatpush.msra.mxu0 %v4253
    %5163 = vmatmul.f32.gmra.mxu0 %v4106
    %v5164 = vpop.f32.mrf.mxu0
    %v5165 = vadd.f32 %v5136, %v5164
    %5166 = vmatmul.f32.gmra.mxu0 %v4110
    %v5167 = vpop.f32.mrf.mxu0
    %v5168 = vadd.f32 %v5139, %v5167
    %5169 = vmatmul.f32.gmra.mxu0 %v4114
    %v5170 = vpop.f32.mrf.mxu0
    %v5171 = vadd.f32 %v5142, %v5170
    %5172 = vmatmul.f32.gmra.mxu0 %v4118
    %v5173 = vpop.f32.mrf.mxu0
    %v5174 = vadd.f32 %v5145, %v5173
    %5175 = vdwg.mxu0
    %5176 = vmatpush.msra.mxu0 %v4501
    %5177 = vmatpush.msra.mxu0 %v4493
    %5178 = vmatpush.msra.mxu0 %v4485
    %5179 = vmatpush.msra.mxu0 %v4477
    %5180 = vmatpush.msra.mxu0 %v4469
    %5181 = vmatpush.msra.mxu0 %v4461
    %5182 = vmatpush.msra.mxu0 %v4453
    %5183 = vmatpush.msra.mxu0 %v4445
    %5184 = vmatpush.msra.mxu0 %v4437
    %5185 = vmatpush.msra.mxu0 %v4429
    %5186 = vmatpush.msra.mxu0 %v4421
    %5187 = vmatpush.msra.mxu0 %v4413
    %5188 = vmatpush.msra.mxu0 %v4405
    %5189 = vmatpush.msra.mxu0 %v4397
    %5190 = vmatpush.msra.mxu0 %v4389
    %5191 = vmatpush.msra.mxu0 %v4381
    %5192 = vmatmul.f32.gmra.mxu0 %v4107
    %v5193 = vpop.f32.mrf.mxu0
    %v5194 = vadd.f32 %v5165, %v5193
    %5195 = vmatmul.f32.gmra.mxu0 %v4111
    %v5196 = vpop.f32.mrf.mxu0
    %v5197 = vadd.f32 %v5168, %v5196
    %5198 = vmatmul.f32.gmra.mxu0 %v4115
    %v5199 = vpop.f32.mrf.mxu0
    %v5200 = vadd.f32 %v5171, %v5199
    %5201 = vmatmul.f32.gmra.mxu0 %v4119
    %v5202 = vpop.f32.mrf.mxu0
    %v5203 = vadd.f32 %v5174, %v5202
    %5204 = vdwg.mxu0
    %5205 = vmatpush.msra.mxu0 %v4629
    %5206 = vmatpush.msra.mxu0 %v4621
    %5207 = vmatpush.msra.mxu0 %v4613
    %5208 = vmatpush.msra.mxu0 %v4605
    %5209 = vmatpush.msra.mxu0 %v4597
    %5210 = vmatpush.msra.mxu0 %v4589
    %5211 = vmatpush.msra.mxu0 %v4581
    %5212 = vmatpush.msra.mxu0 %v4573
    %5213 = vmatpush.msra.mxu0 %v4565
    %5214 = vmatpush.msra.mxu0 %v4557
    %5215 = vmatpush.msra.mxu0 %v4549
    %5216 = vmatpush.msra.mxu0 %v4541
    %5217 = vmatpush.msra.mxu0 %v4533
    %5218 = vmatpush.msra.mxu0 %v4525
    %5219 = vmatpush.msra.mxu0 %v4517
    %5220 = vmatpush.msra.mxu0 %v4509
    %5221 = vmatmul.f32.gmra.mxu0 %v4108
    %v5222 = vpop.f32.mrf.mxu0
    %v5223 = vadd.f32 %v5194, %v5222
    %5224 = vmatmul.f32.gmra.mxu0 %v4112
    %v5225 = vpop.f32.mrf.mxu0
    %v5226 = vadd.f32 %v5197, %v5225
    %5227 = vmatmul.f32.gmra.mxu0 %v4116
    %v5228 = vpop.f32.mrf.mxu0
    %v5229 = vadd.f32 %v5200, %v5228
    %5230 = vmatmul.f32.gmra.mxu0 %v4120
    %v5231 = vpop.f32.mrf.mxu0
    %v5232 = vadd.f32 %v5203, %v5231
    %5233 = vdwg.mxu0
    %5234 = vmatpush.msra.mxu0 %v4246
    %5235 = vmatpush.msra.mxu0 %v4238
    %5236 = vmatpush.msra.mxu0 %v4230
    %5237 = vmatpush.msra.mxu0 %v4222
    %5238 = vmatpush.msra.mxu0 %v4214
    %5239 = vmatpush.msra.mxu0 %v4206
    %5240 = vmatpush.msra.mxu0 %v4198
    %5241 = vmatpush.msra.mxu0 %v4190
    %5242 = vmatpush.msra.mxu0 %v4182
    %5243 = vmatpush.msra.mxu0 %v4174
    %5244 = vmatpush.msra.mxu0 %v4166
    %5245 = vmatpush.msra.mxu0 %v4158
    %5246 = vmatpush.msra.mxu0 %v4150
    %5247 = vmatpush.msra.mxu0 %v4142
    %5248 = vmatpush.msra.mxu0 %v4134
    %5249 = vmatpush.msra.mxu0 %v4126
    %5250 = vmatmul.f32.gmra.mxu0 %v4105
    %v5251 = vpop.f32.mrf.mxu0
    %v5252 = vadd.f32 %v4643, %v5251
    %5253 = vmatmul.f32.gmra.mxu0 %v4109
    %v5254 = vpop.f32.mrf.mxu0
    %v5255 = vadd.f32 %v4643, %v5254
    %5256 = vmatmul.f32.gmra.mxu0 %v4113
    %v5257 = vpop.f32.mrf.mxu0
    %v5258 = vadd.f32 %v4643, %v5257
    %5259 = vmatmul.f32.gmra.mxu0 %v4117
    %v5260 = vpop.f32.mrf.mxu0
    %v5261 = vadd.f32 %v4643, %v5260
    %5262 = vdwg.mxu0
    %5263 = vmatpush.msra.mxu0 %v4374
    %5264 = vmatpush.msra.mxu0 %v4366
    %5265 = vmatpush.msra.mxu0 %v4358
    %5266 = vmatpush.msra.mxu0 %v4350
    %5267 = vmatpush.msra.mxu0 %v4342
    %5268 = vmatpush.msra.mxu0 %v4334
    %5269 = vmatpush.msra.mxu0 %v4326
    %5270 = vmatpush.msra.mxu0 %v4318
    %5271 = vmatpush.msra.mxu0 %v4310
    %5272 = vmatpush.msra.mxu0 %v4302
    %5273 = vmatpush.msra.mxu0 %v4294
    %5274 = vmatpush.msra.mxu0 %v4286
    %5275 = vmatpush.msra.mxu0 %v4278
    %5276 = vmatpush.msra.mxu0 %v4270
    %5277 = vmatpush.msra.mxu0 %v4262
    %5278 = vmatpush.msra.mxu0 %v4254
    %5279 = vmatmul.f32.gmra.mxu0 %v4106
    %v5280 = vpop.f32.mrf.mxu0
    %v5281 = vadd.f32 %v5252, %v5280
    %5282 = vmatmul.f32.gmra.mxu0 %v4110
    %v5283 = vpop.f32.mrf.mxu0
    %v5284 = vadd.f32 %v5255, %v5283
    %5285 = vmatmul.f32.gmra.mxu0 %v4114
    %v5286 = vpop.f32.mrf.mxu0
    %v5287 = vadd.f32 %v5258, %v5286
    %5288 = vmatmul.f32.gmra.mxu0 %v4118
    %v5289 = vpop.f32.mrf.mxu0
    %v5290 = vadd.f32 %v5261, %v5289
    %5291 = vdwg.mxu0
    %5292 = vmatpush.msra.mxu0 %v4502
    %5293 = vmatpush.msra.mxu0 %v4494
    %5294 = vmatpush.msra.mxu0 %v4486
    %5295 = vmatpush.msra.mxu0 %v4478
    %5296 = vmatpush.msra.mxu0 %v4470
    %5297 = vmatpush.msra.mxu0 %v4462
    %5298 = vmatpush.msra.mxu0 %v4454
    %5299 = vmatpush.msra.mxu0 %v4446
    %5300 = vmatpush.msra.mxu0 %v4438
    %5301 = vmatpush.msra.mxu0 %v4430
    %5302 = vmatpush.msra.mxu0 %v4422
    %5303 = vmatpush.msra.mxu0 %v4414
    %5304 = vmatpush.msra.mxu0 %v4406
    %5305 = vmatpush.msra.mxu0 %v4398
    %5306 = vmatpush.msra.mxu0 %v4390
    %5307 = vmatpush.msra.mxu0 %v4382
    %5308 = vmatmul.f32.gmra.mxu0 %v4107
    %v5309 = vpop.f32.mrf.mxu0
    %v5310 = vadd.f32 %v5281, %v5309
    %5311 = vmatmul.f32.gmra.mxu0 %v4111
    %v5312 = vpop.f32.mrf.mxu0
    %v5313 = vadd.f32 %v5284, %v5312
    %5314 = vmatmul.f32.gmra.mxu0 %v4115
    %v5315 = vpop.f32.mrf.mxu0
    %v5316 = vadd.f32 %v5287, %v5315
    %5317 = vmatmul.f32.gmra.mxu0 %v4119
    %v5318 = vpop.f32.mrf.mxu0
    %v5319 = vadd.f32 %v5290, %v5318
    %5320 = vdwg.mxu0
    %5321 = vmatpush.msra.mxu0 %v4630
    %5322 = vmatpush.msra.mxu0 %v4622
    %5323 = vmatpush.msra.mxu0 %v4614
    %5324 = vmatpush.msra.mxu0 %v4606
    %5325 = vmatpush.msra.mxu0 %v4598
    %5326 = vmatpush.msra.mxu0 %v4590
    %5327 = vmatpush.msra.mxu0 %v4582
    %5328 = vmatpush.msra.mxu0 %v4574
    %5329 = vmatpush.msra.mxu0 %v4566
    %5330 = vmatpush.msra.mxu0 %v4558
    %5331 = vmatpush.msra.mxu0 %v4550
    %5332 = vmatpush.msra.mxu0 %v4542
    %5333 = vmatpush.msra.mxu0 %v4534
    %5334 = vmatpush.msra.mxu0 %v4526
    %5335 = vmatpush.msra.mxu0 %v4518
    %5336 = vmatpush.msra.mxu0 %v4510
    %5337 = vmatmul.f32.gmra.mxu0 %v4108
    %v5338 = vpop.f32.mrf.mxu0
    %v5339 = vadd.f32 %v5310, %v5338
    %5340 = vmatmul.f32.gmra.mxu0 %v4112
    %v5341 = vpop.f32.mrf.mxu0
    %v5342 = vadd.f32 %v5313, %v5341
    %5343 = vmatmul.f32.gmra.mxu0 %v4116
    %v5344 = vpop.f32.mrf.mxu0
    %v5345 = vadd.f32 %v5316, %v5344
    %5346 = vmatmul.f32.gmra.mxu0 %v4120
    %v5347 = vpop.f32.mrf.mxu0
    %v5348 = vadd.f32 %v5319, %v5347
    %5349 = vdwg.mxu0
    %5350 = vmatpush.msra.mxu0 %v4247
    %5351 = vmatpush.msra.mxu0 %v4239
    %5352 = vmatpush.msra.mxu0 %v4231
    %5353 = vmatpush.msra.mxu0 %v4223
    %5354 = vmatpush.msra.mxu0 %v4215
    %5355 = vmatpush.msra.mxu0 %v4207
    %5356 = vmatpush.msra.mxu0 %v4199
    %5357 = vmatpush.msra.mxu0 %v4191
    %5358 = vmatpush.msra.mxu0 %v4183
    %5359 = vmatpush.msra.mxu0 %v4175
    %5360 = vmatpush.msra.mxu0 %v4167
    %5361 = vmatpush.msra.mxu0 %v4159
    %5362 = vmatpush.msra.mxu0 %v4151
    %5363 = vmatpush.msra.mxu0 %v4143
    %5364 = vmatpush.msra.mxu0 %v4135
    %5365 = vmatpush.msra.mxu0 %v4127
    %5366 = vmatmul.f32.gmra.mxu0 %v4105
    %v5367 = vpop.f32.mrf.mxu0
    %v5368 = vadd.f32 %v4644, %v5367
    %5369 = vmatmul.f32.gmra.mxu0 %v4109
    %v5370 = vpop.f32.mrf.mxu0
    %v5371 = vadd.f32 %v4644, %v5370
    %5372 = vmatmul.f32.gmra.mxu0 %v4113
    %v5373 = vpop.f32.mrf.mxu0
    %v5374 = vadd.f32 %v4644, %v5373
    %5375 = vmatmul.f32.gmra.mxu0 %v4117
    %v5376 = vpop.f32.mrf.mxu0
    %v5377 = vadd.f32 %v4644, %v5376
    %5378 = vdwg.mxu0
    %5379 = vmatpush.msra.mxu0 %v4375
    %5380 = vmatpush.msra.mxu0 %v4367
    %5381 = vmatpush.msra.mxu0 %v4359
    %5382 = vmatpush.msra.mxu0 %v4351
    %5383 = vmatpush.msra.mxu0 %v4343
    %5384 = vmatpush.msra.mxu0 %v4335
    %5385 = vmatpush.msra.mxu0 %v4327
    %5386 = vmatpush.msra.mxu0 %v4319
    %5387 = vmatpush.msra.mxu0 %v4311
    %5388 = vmatpush.msra.mxu0 %v4303
    %5389 = vmatpush.msra.mxu0 %v4295
    %5390 = vmatpush.msra.mxu0 %v4287
    %5391 = vmatpush.msra.mxu0 %v4279
    %5392 = vmatpush.msra.mxu0 %v4271
    %5393 = vmatpush.msra.mxu0 %v4263
    %5394 = vmatpush.msra.mxu0 %v4255
    %5395 = vmatmul.f32.gmra.mxu0 %v4106
    %v5396 = vpop.f32.mrf.mxu0
    %v5397 = vadd.f32 %v5368, %v5396
    %5398 = vmatmul.f32.gmra.mxu0 %v4110
    %v5399 = vpop.f32.mrf.mxu0
    %v5400 = vadd.f32 %v5371, %v5399
    %5401 = vmatmul.f32.gmra.mxu0 %v4114
    %v5402 = vpop.f32.mrf.mxu0
    %v5403 = vadd.f32 %v5374, %v5402
    %5404 = vmatmul.f32.gmra.mxu0 %v4118
    %v5405 = vpop.f32.mrf.mxu0
    %v5406 = vadd.f32 %v5377, %v5405
    %5407 = vdwg.mxu0
    %5408 = vmatpush.msra.mxu0 %v4503
    %5409 = vmatpush.msra.mxu0 %v4495
    %5410 = vmatpush.msra.mxu0 %v4487
    %5411 = vmatpush.msra.mxu0 %v4479
    %5412 = vmatpush.msra.mxu0 %v4471
    %5413 = vmatpush.msra.mxu0 %v4463
    %5414 = vmatpush.msra.mxu0 %v4455
    %5415 = vmatpush.msra.mxu0 %v4447
    %5416 = vmatpush.msra.mxu0 %v4439
    %5417 = vmatpush.msra.mxu0 %v4431
    %5418 = vmatpush.msra.mxu0 %v4423
    %5419 = vmatpush.msra.mxu0 %v4415
    %5420 = vmatpush.msra.mxu0 %v4407
    %5421 = vmatpush.msra.mxu0 %v4399
    %5422 = vmatpush.msra.mxu0 %v4391
    %5423 = vmatpush.msra.mxu0 %v4383
    %5424 = vmatmul.f32.gmra.mxu0 %v4107
    %v5425 = vpop.f32.mrf.mxu0
    %v5426 = vadd.f32 %v5397, %v5425
    %5427 = vmatmul.f32.gmra.mxu0 %v4111
    %v5428 = vpop.f32.mrf.mxu0
    %v5429 = vadd.f32 %v5400, %v5428
    %5430 = vmatmul.f32.gmra.mxu0 %v4115
    %v5431 = vpop.f32.mrf.mxu0
    %v5432 = vadd.f32 %v5403, %v5431
    %5433 = vmatmul.f32.gmra.mxu0 %v4119
    %v5434 = vpop.f32.mrf.mxu0
    %v5435 = vadd.f32 %v5406, %v5434
    %5436 = vdwg.mxu0
    %5437 = vmatpush.msra.mxu0 %v4631
    %5438 = vmatpush.msra.mxu0 %v4623
    %5439 = vmatpush.msra.mxu0 %v4615
    %5440 = vmatpush.msra.mxu0 %v4607
    %5441 = vmatpush.msra.mxu0 %v4599
    %5442 = vmatpush.msra.mxu0 %v4591
    %5443 = vmatpush.msra.mxu0 %v4583
    %5444 = vmatpush.msra.mxu0 %v4575
    %5445 = vmatpush.msra.mxu0 %v4567
    %5446 = vmatpush.msra.mxu0 %v4559
    %5447 = vmatpush.msra.mxu0 %v4551
    %5448 = vmatpush.msra.mxu0 %v4543
    %5449 = vmatpush.msra.mxu0 %v4535
    %5450 = vmatpush.msra.mxu0 %v4527
    %5451 = vmatpush.msra.mxu0 %v4519
    %5452 = vmatpush.msra.mxu0 %v4511
    %5453 = vmatmul.f32.gmra.mxu0 %v4108
    %v5454 = vpop.f32.mrf.mxu0
    %v5455 = vadd.f32 %v5426, %v5454
    %5456 = vmatmul.f32.gmra.mxu0 %v4112
    %v5457 = vpop.f32.mrf.mxu0
    %v5458 = vadd.f32 %v5429, %v5457
    %5459 = vmatmul.f32.gmra.mxu0 %v4116
    %v5460 = vpop.f32.mrf.mxu0
    %v5461 = vadd.f32 %v5432, %v5460
    %5462 = vmatmul.f32.gmra.mxu0 %v4120
    %v5463 = vpop.f32.mrf.mxu0
    %v5464 = vadd.f32 %v5435, %v5463
    %5465 = vdwg.mxu0
    %5466 = vmatpush.msra.mxu0 %v4248
    %5467 = vmatpush.msra.mxu0 %v4240
    %5468 = vmatpush.msra.mxu0 %v4232
    %5469 = vmatpush.msra.mxu0 %v4224
    %5470 = vmatpush.msra.mxu0 %v4216
    %5471 = vmatpush.msra.mxu0 %v4208
    %5472 = vmatpush.msra.mxu0 %v4200
    %5473 = vmatpush.msra.mxu0 %v4192
    %5474 = vmatpush.msra.mxu0 %v4184
    %5475 = vmatpush.msra.mxu0 %v4176
    %5476 = vmatpush.msra.mxu0 %v4168
    %5477 = vmatpush.msra.mxu0 %v4160
    %5478 = vmatpush.msra.mxu0 %v4152
    %5479 = vmatpush.msra.mxu0 %v4144
    %5480 = vmatpush.msra.mxu0 %v4136
    %5481 = vmatpush.msra.mxu0 %v4128
    %5482 = vmatmul.f32.gmra.mxu0 %v4105
    %v5483 = vpop.f32.mrf.mxu0
    %v5484 = vadd.f32 %v4645, %v5483
    %5485 = vmatmul.f32.gmra.mxu0 %v4109
    %v5486 = vpop.f32.mrf.mxu0
    %v5487 = vadd.f32 %v4645, %v5486
    %5488 = vmatmul.f32.gmra.mxu0 %v4113
    %v5489 = vpop.f32.mrf.mxu0
    %v5490 = vadd.f32 %v4645, %v5489
    %5491 = vmatmul.f32.gmra.mxu0 %v4117
    %v5492 = vpop.f32.mrf.mxu0
    %v5493 = vadd.f32 %v4645, %v5492
    %5494 = vdwg.mxu0
    %5495 = vmatpush.msra.mxu0 %v4376
    %5496 = vmatpush.msra.mxu0 %v4368
    %5497 = vmatpush.msra.mxu0 %v4360
    %5498 = vmatpush.msra.mxu0 %v4352
    %5499 = vmatpush.msra.mxu0 %v4344
    %5500 = vmatpush.msra.mxu0 %v4336
    %5501 = vmatpush.msra.mxu0 %v4328
    %5502 = vmatpush.msra.mxu0 %v4320
    %5503 = vmatpush.msra.mxu0 %v4312
    %5504 = vmatpush.msra.mxu0 %v4304
    %5505 = vmatpush.msra.mxu0 %v4296
    %5506 = vmatpush.msra.mxu0 %v4288
    %5507 = vmatpush.msra.mxu0 %v4280
    %5508 = vmatpush.msra.mxu0 %v4272
    %5509 = vmatpush.msra.mxu0 %v4264
    %5510 = vmatpush.msra.mxu0 %v4256
    %5511 = vmatmul.f32.gmra.mxu0 %v4106
    %v5512 = vpop.f32.mrf.mxu0
    %v5513 = vadd.f32 %v5484, %v5512
    %5514 = vmatmul.f32.gmra.mxu0 %v4110
    %v5515 = vpop.f32.mrf.mxu0
    %v5516 = vadd.f32 %v5487, %v5515
    %5517 = vmatmul.f32.gmra.mxu0 %v4114
    %v5518 = vpop.f32.mrf.mxu0
    %v5519 = vadd.f32 %v5490, %v5518
    %5520 = vmatmul.f32.gmra.mxu0 %v4118
    %v5521 = vpop.f32.mrf.mxu0
    %v5522 = vadd.f32 %v5493, %v5521
    %5523 = vdwg.mxu0
    %5524 = vmatpush.msra.mxu0 %v4504
    %5525 = vmatpush.msra.mxu0 %v4496
    %5526 = vmatpush.msra.mxu0 %v4488
    %5527 = vmatpush.msra.mxu0 %v4480
    %5528 = vmatpush.msra.mxu0 %v4472
    %5529 = vmatpush.msra.mxu0 %v4464
    %5530 = vmatpush.msra.mxu0 %v4456
    %5531 = vmatpush.msra.mxu0 %v4448
    %5532 = vmatpush.msra.mxu0 %v4440
    %5533 = vmatpush.msra.mxu0 %v4432
    %5534 = vmatpush.msra.mxu0 %v4424
    %5535 = vmatpush.msra.mxu0 %v4416
    %5536 = vmatpush.msra.mxu0 %v4408
    %5537 = vmatpush.msra.mxu0 %v4400
    %5538 = vmatpush.msra.mxu0 %v4392
    %5539 = vmatpush.msra.mxu0 %v4384
    %5540 = vmatmul.f32.gmra.mxu0 %v4107
    %v5541 = vpop.f32.mrf.mxu0
    %v5542 = vadd.f32 %v5513, %v5541
    %5543 = vmatmul.f32.gmra.mxu0 %v4111
    %v5544 = vpop.f32.mrf.mxu0
    %v5545 = vadd.f32 %v5516, %v5544
    %5546 = vmatmul.f32.gmra.mxu0 %v4115
    %v5547 = vpop.f32.mrf.mxu0
    %v5548 = vadd.f32 %v5519, %v5547
    %5549 = vmatmul.f32.gmra.mxu0 %v4119
    %v5550 = vpop.f32.mrf.mxu0
    %v5551 = vadd.f32 %v5522, %v5550
    %5552 = vdwg.mxu0
    %5553 = vmatpush.msra.mxu0 %v4632
    %5554 = vmatpush.msra.mxu0 %v4624
    %5555 = vmatpush.msra.mxu0 %v4616
    %5556 = vmatpush.msra.mxu0 %v4608
    %5557 = vmatpush.msra.mxu0 %v4600
    %5558 = vmatpush.msra.mxu0 %v4592
    %5559 = vmatpush.msra.mxu0 %v4584
    %5560 = vmatpush.msra.mxu0 %v4576
    %5561 = vmatpush.msra.mxu0 %v4568
    %5562 = vmatpush.msra.mxu0 %v4560
    %5563 = vmatpush.msra.mxu0 %v4552
    %5564 = vmatpush.msra.mxu0 %v4544
    %5565 = vmatpush.msra.mxu0 %v4536
    %5566 = vmatpush.msra.mxu0 %v4528
    %5567 = vmatpush.msra.mxu0 %v4520
    %5568 = vmatpush.msra.mxu0 %v4512
    %5569 = vmatmul.f32.gmra.mxu0 %v4108
    %v5570 = vpop.f32.mrf.mxu0
    %v5571 = vadd.f32 %v5542, %v5570
    %5572 = vmatmul.f32.gmra.mxu0 %v4112
    %v5573 = vpop.f32.mrf.mxu0
    %v5574 = vadd.f32 %v5545, %v5573
    %5575 = vmatmul.f32.gmra.mxu0 %v4116
    %v5576 = vpop.f32.mrf.mxu0
    %v5577 = vadd.f32 %v5548, %v5576
    %5578 = vmatmul.f32.gmra.mxu0 %v4120
    %v5579 = vpop.f32.mrf.mxu0
    %v5580 = vadd.f32 %v5551, %v5579
    %5581 = vdwg.mxu0
    %v5582 = vmax.f32 %v4759, 0.0
    %v5583 = vmax.f32 %v4875, 0.0
    %v5584 = vmax.f32 %v4991, 0.0
    %v5585 = vmax.f32 %v5107, 0.0
    %v5586 = vmax.f32 %v5223, 0.0
    %v5587 = vmax.f32 %v5339, 0.0
    %v5588 = vmax.f32 %v5455, 0.0
    %v5589 = vmax.f32 %v5571, 0.0
    %v5590 = vmax.f32 %v4762, 0.0
    %v5591 = vmax.f32 %v4878, 0.0
    %v5592 = vmax.f32 %v4994, 0.0
    %v5593 = vmax.f32 %v5110, 0.0
    %v5594 = vmax.f32 %v5226, 0.0
    %v5595 = vmax.f32 %v5342, 0.0
    %v5596 = vmax.f32 %v5458, 0.0
    %v5597 = vmax.f32 %v5574, 0.0
    %v5598 = vmax.f32 %v4765, 0.0
    %v5599 = vmax.f32 %v4881, 0.0
    %v5600 = vmax.f32 %v4997, 0.0
    %v5601 = vmax.f32 %v5113, 0.0
    %v5602 = vmax.f32 %v5229, 0.0
    %v5603 = vmax.f32 %v5345, 0.0
    %v5604 = vmax.f32 %v5461, 0.0
    %v5605 = vmax.f32 %v5577, 0.0
    %v5606 = vmax.f32 %v4768, 0.0
    %v5607 = vmax.f32 %v4884, 0.0
    %v5608 = vmax.f32 %v5000, 0.0
    %v5609 = vmax.f32 %v5116, 0.0
    %v5610 = vmax.f32 %v5232, 0.0
    %v5611 = vmax.f32 %v5348, 0.0
    %v5612 = vmax.f32 %v5464, 0.0
    %v5613 = vmax.f32 %v5580, 0.0
    %5614 = vst [vmem:[#allocation2] sm:$0xff] %v5582
    %5615 = vst [vmem:[#allocation2 + $0x8] sm:$0xff] %v5583
    %5616 = vst [vmem:[#allocation2 + $0x10] sm:$0xff] %v5584
    %5617 = vst [vmem:[#allocation2 + $0x18] sm:$0xff] %v5585
    %5618 = vst [vmem:[#allocation2 + $0x20] sm:$0xff] %v5586
    %5619 = vst [vmem:[#allocation2 + $0x28] sm:$0xff] %v5587
    %5620 = vst [vmem:[#allocation2 + $0x30] sm:$0xff] %v5588
    %5621 = vst [vmem:[#allocation2 + $0x38] sm:$0xff] %v5589
    %5622 = vst [vmem:[#allocation2 + $0x40] sm:$0xff] %v5590
    %5623 = vst [vmem:[#allocation2 + $0x48] sm:$0xff] %v5591
    %5624 = vst [vmem:[#allocation2 + $0x50] sm:$0xff] %v5592
    %5625 = vst [vmem:[#allocation2 + $0x58] sm:$0xff] %v5593
    %5626 = vst [vmem:[#allocation2 + $0x60] sm:$0xff] %v5594
    %5627 = vst [vmem:[#allocation2 + $0x68] sm:$0xff] %v5595
    %5628 = vst [vmem:[#allocation2 + $0x70] sm:$0xff] %v5596
    %5629 = vst [vmem:[#allocation2 + $0x78] sm:$0xff] %v5597
    %5630 = vst [vmem:[#allocation2 + $0x80] sm:$0xff] %v5598
    %5631 = vst [vmem:[#allocation2 + $0x88] sm:$0xff] %v5599
    %5632 = vst [vmem:[#allocation2 + $0x90] sm:$0xff] %v5600
    %5633 = vst [vmem:[#allocation2 + $0x98] sm:$0xff] %v5601
    %5634 = vst [vmem:[#allocation2 + $0xa0] sm:$0xff] %v5602
    %5635 = vst [vmem:[#allocation2 + $0xa8] sm:$0xff] %v5603
    %5636 = vst [vmem:[#allocation2 + $0xb0] sm:$0xff] %v5604
    %5637 = vst [vmem:[#allocation2 + $0xb8] sm:$0xff] %v5605
    %5638 = vst [vmem:[#allocation2 + $0xc0] sm:$0xff] %v5606
    %5639 = vst [vmem:[#allocation2 + $0xc8] sm:$0xff] %v5607
    %5640 = vst [vmem:[#allocation2 + $0xd0] sm:$0xff] %v5608
    %5641 = vst [vmem:[#allocation2 + $0xd8] sm:$0xff] %v5609
    %5642 = vst [vmem:[#allocation2 + $0xe0] sm:$0xff] %v5610
    %5643 = vst [vmem:[#allocation2 + $0xe8] sm:$0xff] %v5611
    %5644 = vst [vmem:[#allocation2 + $0xf0] sm:$0xff] %v5612
    %5645 = vst [vmem:[#allocation2 + $0xf8] sm:$0xff] %v5613
    %v5646 = vld [vmem:[#allocation2] sm:$0xff]
    %v5647 = vld [vmem:[#allocation2 + $0x8] sm:$0xff]
    %v5648 = vld [vmem:[#allocation2 + $0x10] sm:$0xff]
    %v5649 = vld [vmem:[#allocation2 + $0x18] sm:$0xff]
    %v5650 = vld [vmem:[#allocation2 + $0x20] sm:$0xff]
    %v5651 = vld [vmem:[#allocation2 + $0x28] sm:$0xff]
    %v5652 = vld [vmem:[#allocation2 + $0x30] sm:$0xff]
    %v5653 = vld [vmem:[#allocation2 + $0x38] sm:$0xff]
    %v5654 = vld [vmem:[#allocation2 + $0x40] sm:$0xff]
    %v5655 = vld [vmem:[#allocation2 + $0x48] sm:$0xff]
    %v5656 = vld [vmem:[#allocation2 + $0x50] sm:$0xff]
    %v5657 = vld [vmem:[#allocation2 + $0x58] sm:$0xff]
    %v5658 = vld [vmem:[#allocation2 + $0x60] sm:$0xff]
    %v5659 = vld [vmem:[#allocation2 + $0x68] sm:$0xff]
    %v5660 = vld [vmem:[#allocation2 + $0x70] sm:$0xff]
    %v5661 = vld [vmem:[#allocation2 + $0x78] sm:$0xff]
    %v5662 = vld [vmem:[#allocation2 + $0x80] sm:$0xff]
    %v5663 = vld [vmem:[#allocation2 + $0x88] sm:$0xff]
    %v5664 = vld [vmem:[#allocation2 + $0x90] sm:$0xff]
    %v5665 = vld [vmem:[#allocation2 + $0x98] sm:$0xff]
    %v5666 = vld [vmem:[#allocation2 + $0xa0] sm:$0xff]
    %v5667 = vld [vmem:[#allocation2 + $0xa8] sm:$0xff]
    %v5668 = vld [vmem:[#allocation2 + $0xb0] sm:$0xff]
    %v5669 = vld [vmem:[#allocation2 + $0xb8] sm:$0xff]
    %v5670 = vld [vmem:[#allocation2 + $0xc0] sm:$0xff]
    %v5671 = vld [vmem:[#allocation2 + $0xc8] sm:$0xff]
    %v5672 = vld [vmem:[#allocation2 + $0xd0] sm:$0xff]
    %v5673 = vld [vmem:[#allocation2 + $0xd8] sm:$0xff]
    %v5674 = vld [vmem:[#allocation2 + $0xe0] sm:$0xff]
    %v5675 = vld [vmem:[#allocation2 + $0xe8] sm:$0xff]
    %v5676 = vld [vmem:[#allocation2 + $0xf0] sm:$0xff]
    %v5677 = vld [vmem:[#allocation2 + $0xf8] sm:$0xff]
    %v5678 = vld [vmem:[#allocation14] sm:$0xff]
    %v5679 = vld [vmem:[#allocation14 + $0x8] sm:$0xff]
    %v5680 = vld [vmem:[#allocation14 + $0x10] sm:$0xff]
    %v5681 = vld [vmem:[#allocation14 + $0x18] sm:$0xff]
    %v5682 = vld [vmem:[#allocation14 + $0x20] sm:$0xff]
    %v5683 = vld [vmem:[#allocation14 + $0x28] sm:$0xff]
    %v5684 = vld [vmem:[#allocation14 + $0x30] sm:$0xff]
    %v5685 = vld [vmem:[#allocation14 + $0x38] sm:$0xff]
    %v5686 = vld [vmem:[#allocation14 + $0x40] sm:$0xff]
    %v5687 = vld [vmem:[#allocation14 + $0x48] sm:$0xff]
    %v5688 = vld [vmem:[#allocation14 + $0x50] sm:$0xff]
    %v5689 = vld [vmem:[#allocation14 + $0x58] sm:$0xff]
    %v5690 = vld [vmem:[#allocation14 + $0x60] sm:$0xff]
    %v5691 = vld [vmem:[#allocation14 + $0x68] sm:$0xff]
    %v5692 = vld [vmem:[#allocation14 + $0x70] sm:$0xff]
    %v5693 = vld [vmem:[#allocation14 + $0x78] sm:$0xff]
    %v5694 = vld [vmem:[#allocation14 + $0x80] sm:$0xff]
    %v5695 = vld [vmem:[#allocation14 + $0x88] sm:$0xff]
    %v5696 = vld [vmem:[#allocation14 + $0x90] sm:$0xff]
    %v5697 = vld [vmem:[#allocation14 + $0x98] sm:$0xff]
    %v5698 = vld [vmem:[#allocation14 + $0xa0] sm:$0xff]
    %v5699 = vld [vmem:[#allocation14 + $0xa8] sm:$0xff]
    %v5700 = vld [vmem:[#allocation14 + $0xb0] sm:$0xff]
    %v5701 = vld [vmem:[#allocation14 + $0xb8] sm:$0xff]
    %v5702 = vld [vmem:[#allocation14 + $0xc0] sm:$0xff]
    %v5703 = vld [vmem:[#allocation14 + $0xc8] sm:$0xff]
    %v5704 = vld [vmem:[#allocation14 + $0xd0] sm:$0xff]
    %v5705 = vld [vmem:[#allocation14 + $0xd8] sm:$0xff]
    %v5706 = vld [vmem:[#allocation14 + $0xe0] sm:$0xff]
    %v5707 = vld [vmem:[#allocation14 + $0xe8] sm:$0xff]
    %v5708 = vld [vmem:[#allocation14 + $0xf0] sm:$0xff]
    %v5709 = vld [vmem:[#allocation14 + $0xf8] sm:$0xff]
    %v5710 = vld [vmem:[#allocation14 + $0x100] sm:$0xff]
    %v5711 = vld [vmem:[#allocation14 + $0x108] sm:$0xff]
    %v5712 = vld [vmem:[#allocation14 + $0x110] sm:$0xff]
    %v5713 = vld [vmem:[#allocation14 + $0x118] sm:$0xff]
    %v5714 = vld [vmem:[#allocation14 + $0x120] sm:$0xff]
    %v5715 = vld [vmem:[#allocation14 + $0x128] sm:$0xff]
    %v5716 = vld [vmem:[#allocation14 + $0x130] sm:$0xff]
    %v5717 = vld [vmem:[#allocation14 + $0x138] sm:$0xff]
    %v5718 = vld [vmem:[#allocation14 + $0x140] sm:$0xff]
    %v5719 = vld [vmem:[#allocation14 + $0x148] sm:$0xff]
    %v5720 = vld [vmem:[#allocation14 + $0x150] sm:$0xff]
    %v5721 = vld [vmem:[#allocation14 + $0x158] sm:$0xff]
    %v5722 = vld [vmem:[#allocation14 + $0x160] sm:$0xff]
    %v5723 = vld [vmem:[#allocation14 + $0x168] sm:$0xff]
    %v5724 = vld [vmem:[#allocation14 + $0x170] sm:$0xff]
    %v5725 = vld [vmem:[#allocation14 + $0x178] sm:$0xff]
    %v5726 = vld [vmem:[#allocation14 + $0x180] sm:$0xff]
    %v5727 = vld [vmem:[#allocation14 + $0x188] sm:$0xff]
    %v5728 = vld [vmem:[#allocation14 + $0x190] sm:$0xff]
    %v5729 = vld [vmem:[#allocation14 + $0x198] sm:$0xff]
    %v5730 = vld [vmem:[#allocation14 + $0x1a0] sm:$0xff]
    %v5731 = vld [vmem:[#allocation14 + $0x1a8] sm:$0xff]
    %v5732 = vld [vmem:[#allocation14 + $0x1b0] sm:$0xff]
    %v5733 = vld [vmem:[#allocation14 + $0x1b8] sm:$0xff]
    %v5734 = vld [vmem:[#allocation14 + $0x1c0] sm:$0xff]
    %v5735 = vld [vmem:[#allocation14 + $0x1c8] sm:$0xff]
    %v5736 = vld [vmem:[#allocation14 + $0x1d0] sm:$0xff]
    %v5737 = vld [vmem:[#allocation14 + $0x1d8] sm:$0xff]
    %v5738 = vld [vmem:[#allocation14 + $0x1e0] sm:$0xff]
    %v5739 = vld [vmem:[#allocation14 + $0x1e8] sm:$0xff]
    %v5740 = vld [vmem:[#allocation14 + $0x1f0] sm:$0xff]
    %v5741 = vld [vmem:[#allocation14 + $0x1f8] sm:$0xff]
    %v5742 = vld [vmem:[#allocation14 + $0x200] sm:$0xff]
    %v5743 = vld [vmem:[#allocation14 + $0x208] sm:$0xff]
    %v5744 = vld [vmem:[#allocation14 + $0x210] sm:$0xff]
    %v5745 = vld [vmem:[#allocation14 + $0x218] sm:$0xff]
    %v5746 = vld [vmem:[#allocation14 + $0x220] sm:$0xff]
    %v5747 = vld [vmem:[#allocation14 + $0x228] sm:$0xff]
    %v5748 = vld [vmem:[#allocation14 + $0x230] sm:$0xff]
    %v5749 = vld [vmem:[#allocation14 + $0x238] sm:$0xff]
    %v5750 = vld [vmem:[#allocation14 + $0x240] sm:$0xff]
    %v5751 = vld [vmem:[#allocation14 + $0x248] sm:$0xff]
    %v5752 = vld [vmem:[#allocation14 + $0x250] sm:$0xff]
    %v5753 = vld [vmem:[#allocation14 + $0x258] sm:$0xff]
    %v5754 = vld [vmem:[#allocation14 + $0x260] sm:$0xff]
    %v5755 = vld [vmem:[#allocation14 + $0x268] sm:$0xff]
    %v5756 = vld [vmem:[#allocation14 + $0x270] sm:$0xff]
    %v5757 = vld [vmem:[#allocation14 + $0x278] sm:$0xff]
    %v5758 = vld [vmem:[#allocation14 + $0x280] sm:$0xff]
    %v5759 = vld [vmem:[#allocation14 + $0x288] sm:$0xff]
    %v5760 = vld [vmem:[#allocation14 + $0x290] sm:$0xff]
    %v5761 = vld [vmem:[#allocation14 + $0x298] sm:$0xff]
    %v5762 = vld [vmem:[#allocation14 + $0x2a0] sm:$0xff]
    %v5763 = vld [vmem:[#allocation14 + $0x2a8] sm:$0xff]
    %v5764 = vld [vmem:[#allocation14 + $0x2b0] sm:$0xff]
    %v5765 = vld [vmem:[#allocation14 + $0x2b8] sm:$0xff]
    %v5766 = vld [vmem:[#allocation14 + $0x2c0] sm:$0xff]
    %v5767 = vld [vmem:[#allocation14 + $0x2c8] sm:$0xff]
    %v5768 = vld [vmem:[#allocation14 + $0x2d0] sm:$0xff]
    %v5769 = vld [vmem:[#allocation14 + $0x2d8] sm:$0xff]
    %v5770 = vld [vmem:[#allocation14 + $0x2e0] sm:$0xff]
    %v5771 = vld [vmem:[#allocation14 + $0x2e8] sm:$0xff]
    %v5772 = vld [vmem:[#allocation14 + $0x2f0] sm:$0xff]
    %v5773 = vld [vmem:[#allocation14 + $0x2f8] sm:$0xff]
    %v5774 = vld [vmem:[#allocation14 + $0x300] sm:$0xff]
    %v5775 = vld [vmem:[#allocation14 + $0x308] sm:$0xff]
    %v5776 = vld [vmem:[#allocation14 + $0x310] sm:$0xff]
    %v5777 = vld [vmem:[#allocation14 + $0x318] sm:$0xff]
    %v5778 = vld [vmem:[#allocation14 + $0x320] sm:$0xff]
    %v5779 = vld [vmem:[#allocation14 + $0x328] sm:$0xff]
    %v5780 = vld [vmem:[#allocation14 + $0x330] sm:$0xff]
    %v5781 = vld [vmem:[#allocation14 + $0x338] sm:$0xff]
    %v5782 = vld [vmem:[#allocation14 + $0x340] sm:$0xff]
    %v5783 = vld [vmem:[#allocation14 + $0x348] sm:$0xff]
    %v5784 = vld [vmem:[#allocation14 + $0x350] sm:$0xff]
    %v5785 = vld [vmem:[#allocation14 + $0x358] sm:$0xff]
    %v5786 = vld [vmem:[#allocation14 + $0x360] sm:$0xff]
    %v5787 = vld [vmem:[#allocation14 + $0x368] sm:$0xff]
    %v5788 = vld [vmem:[#allocation14 + $0x370] sm:$0xff]
    %v5789 = vld [vmem:[#allocation14 + $0x378] sm:$0xff]
    %v5790 = vld [vmem:[#allocation14 + $0x380] sm:$0xff]
    %v5791 = vld [vmem:[#allocation14 + $0x388] sm:$0xff]
    %v5792 = vld [vmem:[#allocation14 + $0x390] sm:$0xff]
    %v5793 = vld [vmem:[#allocation14 + $0x398] sm:$0xff]
    %v5794 = vld [vmem:[#allocation14 + $0x3a0] sm:$0xff]
    %v5795 = vld [vmem:[#allocation14 + $0x3a8] sm:$0xff]
    %v5796 = vld [vmem:[#allocation14 + $0x3b0] sm:$0xff]
    %v5797 = vld [vmem:[#allocation14 + $0x3b8] sm:$0xff]
    %v5798 = vld [vmem:[#allocation14 + $0x3c0] sm:$0xff]
    %v5799 = vld [vmem:[#allocation14 + $0x3c8] sm:$0xff]
    %v5800 = vld [vmem:[#allocation14 + $0x3d0] sm:$0xff]
    %v5801 = vld [vmem:[#allocation14 + $0x3d8] sm:$0xff]
    %v5802 = vld [vmem:[#allocation14 + $0x3e0] sm:$0xff]
    %v5803 = vld [vmem:[#allocation14 + $0x3e8] sm:$0xff]
    %v5804 = vld [vmem:[#allocation14 + $0x3f0] sm:$0xff]
    %v5805 = vld [vmem:[#allocation14 + $0x3f8] sm:$0xff]
    %v5806 = vld [vmem:[#allocation14 + $0x400] sm:$0xff]
    %v5807 = vld [vmem:[#allocation14 + $0x408] sm:$0xff]
    %v5808 = vld [vmem:[#allocation14 + $0x410] sm:$0xff]
    %v5809 = vld [vmem:[#allocation14 + $0x418] sm:$0xff]
    %v5810 = vld [vmem:[#allocation14 + $0x420] sm:$0xff]
    %v5811 = vld [vmem:[#allocation14 + $0x428] sm:$0xff]
    %v5812 = vld [vmem:[#allocation14 + $0x430] sm:$0xff]
    %v5813 = vld [vmem:[#allocation14 + $0x438] sm:$0xff]
    %v5814 = vld [vmem:[#allocation14 + $0x440] sm:$0xff]
    %v5815 = vld [vmem:[#allocation14 + $0x448] sm:$0xff]
    %v5816 = vld [vmem:[#allocation14 + $0x450] sm:$0xff]
    %v5817 = vld [vmem:[#allocation14 + $0x458] sm:$0xff]
    %v5818 = vld [vmem:[#allocation14 + $0x460] sm:$0xff]
    %v5819 = vld [vmem:[#allocation14 + $0x468] sm:$0xff]
    %v5820 = vld [vmem:[#allocation14 + $0x470] sm:$0xff]
    %v5821 = vld [vmem:[#allocation14 + $0x478] sm:$0xff]
    %v5822 = vld [vmem:[#allocation14 + $0x480] sm:$0xff]
    %v5823 = vld [vmem:[#allocation14 + $0x488] sm:$0xff]
    %v5824 = vld [vmem:[#allocation14 + $0x490] sm:$0xff]
    %v5825 = vld [vmem:[#allocation14 + $0x498] sm:$0xff]
    %v5826 = vld [vmem:[#allocation14 + $0x4a0] sm:$0xff]
    %v5827 = vld [vmem:[#allocation14 + $0x4a8] sm:$0xff]
    %v5828 = vld [vmem:[#allocation14 + $0x4b0] sm:$0xff]
    %v5829 = vld [vmem:[#allocation14 + $0x4b8] sm:$0xff]
    %v5830 = vld [vmem:[#allocation14 + $0x4c0] sm:$0xff]
    %v5831 = vld [vmem:[#allocation14 + $0x4c8] sm:$0xff]
    %v5832 = vld [vmem:[#allocation14 + $0x4d0] sm:$0xff]
    %v5833 = vld [vmem:[#allocation14 + $0x4d8] sm:$0xff]
    %v5834 = vld [vmem:[#allocation14 + $0x4e0] sm:$0xff]
    %v5835 = vld [vmem:[#allocation14 + $0x4e8] sm:$0xff]
    %v5836 = vld [vmem:[#allocation14 + $0x4f0] sm:$0xff]
    %v5837 = vld [vmem:[#allocation14 + $0x4f8] sm:$0xff]
    %v5838 = vld [vmem:[#allocation14 + $0x500] sm:$0xff]
    %v5839 = vld [vmem:[#allocation14 + $0x508] sm:$0xff]
    %v5840 = vld [vmem:[#allocation14 + $0x510] sm:$0xff]
    %v5841 = vld [vmem:[#allocation14 + $0x518] sm:$0xff]
    %v5842 = vld [vmem:[#allocation14 + $0x520] sm:$0xff]
    %v5843 = vld [vmem:[#allocation14 + $0x528] sm:$0xff]
    %v5844 = vld [vmem:[#allocation14 + $0x530] sm:$0xff]
    %v5845 = vld [vmem:[#allocation14 + $0x538] sm:$0xff]
    %v5846 = vld [vmem:[#allocation14 + $0x540] sm:$0xff]
    %v5847 = vld [vmem:[#allocation14 + $0x548] sm:$0xff]
    %v5848 = vld [vmem:[#allocation14 + $0x550] sm:$0xff]
    %v5849 = vld [vmem:[#allocation14 + $0x558] sm:$0xff]
    %v5850 = vld [vmem:[#allocation14 + $0x560] sm:$0xff]
    %v5851 = vld [vmem:[#allocation14 + $0x568] sm:$0xff]
    %v5852 = vld [vmem:[#allocation14 + $0x570] sm:$0xff]
    %v5853 = vld [vmem:[#allocation14 + $0x578] sm:$0xff]
    %v5854 = vld [vmem:[#allocation14 + $0x580] sm:$0xff]
    %v5855 = vld [vmem:[#allocation14 + $0x588] sm:$0xff]
    %v5856 = vld [vmem:[#allocation14 + $0x590] sm:$0xff]
    %v5857 = vld [vmem:[#allocation14 + $0x598] sm:$0xff]
    %v5858 = vld [vmem:[#allocation14 + $0x5a0] sm:$0xff]
    %v5859 = vld [vmem:[#allocation14 + $0x5a8] sm:$0xff]
    %v5860 = vld [vmem:[#allocation14 + $0x5b0] sm:$0xff]
    %v5861 = vld [vmem:[#allocation14 + $0x5b8] sm:$0xff]
    %v5862 = vld [vmem:[#allocation14 + $0x5c0] sm:$0xff]
    %v5863 = vld [vmem:[#allocation14 + $0x5c8] sm:$0xff]
    %v5864 = vld [vmem:[#allocation14 + $0x5d0] sm:$0xff]
    %v5865 = vld [vmem:[#allocation14 + $0x5d8] sm:$0xff]
    %v5866 = vld [vmem:[#allocation14 + $0x5e0] sm:$0xff]
    %v5867 = vld [vmem:[#allocation14 + $0x5e8] sm:$0xff]
    %v5868 = vld [vmem:[#allocation14 + $0x5f0] sm:$0xff]
    %v5869 = vld [vmem:[#allocation14 + $0x5f8] sm:$0xff]
    %v5870 = vld [vmem:[#allocation14 + $0x600] sm:$0xff]
    %v5871 = vld [vmem:[#allocation14 + $0x608] sm:$0xff]
    %v5872 = vld [vmem:[#allocation14 + $0x610] sm:$0xff]
    %v5873 = vld [vmem:[#allocation14 + $0x618] sm:$0xff]
    %v5874 = vld [vmem:[#allocation14 + $0x620] sm:$0xff]
    %v5875 = vld [vmem:[#allocation14 + $0x628] sm:$0xff]
    %v5876 = vld [vmem:[#allocation14 + $0x630] sm:$0xff]
    %v5877 = vld [vmem:[#allocation14 + $0x638] sm:$0xff]
    %v5878 = vld [vmem:[#allocation14 + $0x640] sm:$0xff]
    %v5879 = vld [vmem:[#allocation14 + $0x648] sm:$0xff]
    %v5880 = vld [vmem:[#allocation14 + $0x650] sm:$0xff]
    %v5881 = vld [vmem:[#allocation14 + $0x658] sm:$0xff]
    %v5882 = vld [vmem:[#allocation14 + $0x660] sm:$0xff]
    %v5883 = vld [vmem:[#allocation14 + $0x668] sm:$0xff]
    %v5884 = vld [vmem:[#allocation14 + $0x670] sm:$0xff]
    %v5885 = vld [vmem:[#allocation14 + $0x678] sm:$0xff]
    %v5886 = vld [vmem:[#allocation14 + $0x680] sm:$0xff]
    %v5887 = vld [vmem:[#allocation14 + $0x688] sm:$0xff]
    %v5888 = vld [vmem:[#allocation14 + $0x690] sm:$0xff]
    %v5889 = vld [vmem:[#allocation14 + $0x698] sm:$0xff]
    %v5890 = vld [vmem:[#allocation14 + $0x6a0] sm:$0xff]
    %v5891 = vld [vmem:[#allocation14 + $0x6a8] sm:$0xff]
    %v5892 = vld [vmem:[#allocation14 + $0x6b0] sm:$0xff]
    %v5893 = vld [vmem:[#allocation14 + $0x6b8] sm:$0xff]
    %v5894 = vld [vmem:[#allocation14 + $0x6c0] sm:$0xff]
    %v5895 = vld [vmem:[#allocation14 + $0x6c8] sm:$0xff]
    %v5896 = vld [vmem:[#allocation14 + $0x6d0] sm:$0xff]
    %v5897 = vld [vmem:[#allocation14 + $0x6d8] sm:$0xff]
    %v5898 = vld [vmem:[#allocation14 + $0x6e0] sm:$0xff]
    %v5899 = vld [vmem:[#allocation14 + $0x6e8] sm:$0xff]
    %v5900 = vld [vmem:[#allocation14 + $0x6f0] sm:$0xff]
    %v5901 = vld [vmem:[#allocation14 + $0x6f8] sm:$0xff]
    %v5902 = vld [vmem:[#allocation14 + $0x700] sm:$0xff]
    %v5903 = vld [vmem:[#allocation14 + $0x708] sm:$0xff]
    %v5904 = vld [vmem:[#allocation14 + $0x710] sm:$0xff]
    %v5905 = vld [vmem:[#allocation14 + $0x718] sm:$0xff]
    %v5906 = vld [vmem:[#allocation14 + $0x720] sm:$0xff]
    %v5907 = vld [vmem:[#allocation14 + $0x728] sm:$0xff]
    %v5908 = vld [vmem:[#allocation14 + $0x730] sm:$0xff]
    %v5909 = vld [vmem:[#allocation14 + $0x738] sm:$0xff]
    %v5910 = vld [vmem:[#allocation14 + $0x740] sm:$0xff]
    %v5911 = vld [vmem:[#allocation14 + $0x748] sm:$0xff]
    %v5912 = vld [vmem:[#allocation14 + $0x750] sm:$0xff]
    %v5913 = vld [vmem:[#allocation14 + $0x758] sm:$0xff]
    %v5914 = vld [vmem:[#allocation14 + $0x760] sm:$0xff]
    %v5915 = vld [vmem:[#allocation14 + $0x768] sm:$0xff]
    %v5916 = vld [vmem:[#allocation14 + $0x770] sm:$0xff]
    %v5917 = vld [vmem:[#allocation14 + $0x778] sm:$0xff]
    %v5918 = vld [vmem:[#allocation14 + $0x780] sm:$0xff]
    %v5919 = vld [vmem:[#allocation14 + $0x788] sm:$0xff]
    %v5920 = vld [vmem:[#allocation14 + $0x790] sm:$0xff]
    %v5921 = vld [vmem:[#allocation14 + $0x798] sm:$0xff]
    %v5922 = vld [vmem:[#allocation14 + $0x7a0] sm:$0xff]
    %v5923 = vld [vmem:[#allocation14 + $0x7a8] sm:$0xff]
    %v5924 = vld [vmem:[#allocation14 + $0x7b0] sm:$0xff]
    %v5925 = vld [vmem:[#allocation14 + $0x7b8] sm:$0xff]
    %v5926 = vld [vmem:[#allocation14 + $0x7c0] sm:$0xff]
    %v5927 = vld [vmem:[#allocation14 + $0x7c8] sm:$0xff]
    %v5928 = vld [vmem:[#allocation14 + $0x7d0] sm:$0xff]
    %v5929 = vld [vmem:[#allocation14 + $0x7d8] sm:$0xff]
    %v5930 = vld [vmem:[#allocation14 + $0x7e0] sm:$0xff]
    %v5931 = vld [vmem:[#allocation14 + $0x7e8] sm:$0xff]
    %v5932 = vld [vmem:[#allocation14 + $0x7f0] sm:$0xff]
    %v5933 = vld [vmem:[#allocation14 + $0x7f8] sm:$0xff]
    %s5934 = scalar_lea.vmem %s11, 65
    %v5935 = vld [vmem:[%s5934] ss:$8 sm:$0x3]
    %v5937 = vperm.slane %v5935, 0
    %v5938 = vperm.slane %v5935, 1
    %5941 = vmatpush.msra.mxu0 %v5708
    %5942 = vmatpush.msra.mxu0 %v5706
    %5943 = vmatpush.msra.mxu0 %v5704
    %5944 = vmatpush.msra.mxu0 %v5702
    %5945 = vmatpush.msra.mxu0 %v5700
    %5946 = vmatpush.msra.mxu0 %v5698
    %5947 = vmatpush.msra.mxu0 %v5696
    %5948 = vmatpush.msra.mxu0 %v5694
    %5949 = vmatpush.msra.mxu0 %v5692
    %5950 = vmatpush.msra.mxu0 %v5690
    %5951 = vmatpush.msra.mxu0 %v5688
    %5952 = vmatpush.msra.mxu0 %v5686
    %5953 = vmatpush.msra.mxu0 %v5684
    %5954 = vmatpush.msra.mxu0 %v5682
    %5955 = vmatpush.msra.mxu0 %v5680
    %5956 = vmatpush.msra.mxu0 %v5678
    %5957 = vmatmul.f32.gmra.mxu0 %v5646
    %v5958 = vpop.f32.mrf.mxu0
    %v5959 = vadd.f32 %v5937, %v5958
    %5960 = vmatmul.f32.gmra.mxu0 %v5654
    %v5961 = vpop.f32.mrf.mxu0
    %v5962 = vadd.f32 %v5937, %v5961
    %5963 = vmatmul.f32.gmra.mxu0 %v5662
    %v5964 = vpop.f32.mrf.mxu0
    %v5965 = vadd.f32 %v5937, %v5964
    %5966 = vmatmul.f32.gmra.mxu0 %v5670
    %v5967 = vpop.f32.mrf.mxu0
    %v5968 = vadd.f32 %v5937, %v5967
    %5969 = vdwg.mxu0
    %5970 = vmatpush.msra.mxu0 %v5740
    %5971 = vmatpush.msra.mxu0 %v5738
    %5972 = vmatpush.msra.mxu0 %v5736
    %5973 = vmatpush.msra.mxu0 %v5734
    %5974 = vmatpush.msra.mxu0 %v5732
    %5975 = vmatpush.msra.mxu0 %v5730
    %5976 = vmatpush.msra.mxu0 %v5728
    %5977 = vmatpush.msra.mxu0 %v5726
    %5978 = vmatpush.msra.mxu0 %v5724
    %5979 = vmatpush.msra.mxu0 %v5722
    %5980 = vmatpush.msra.mxu0 %v5720
    %5981 = vmatpush.msra.mxu0 %v5718
    %5982 = vmatpush.msra.mxu0 %v5716
    %5983 = vmatpush.msra.mxu0 %v5714
    %5984 = vmatpush.msra.mxu0 %v5712
    %5985 = vmatpush.msra.mxu0 %v5710
    %5986 = vmatmul.f32.gmra.mxu0 %v5647
    %v5987 = vpop.f32.mrf.mxu0
    %v5988 = vadd.f32 %v5959, %v5987
    %5989 = vmatmul.f32.gmra.mxu0 %v5655
    %v5990 = vpop.f32.mrf.mxu0
    %v5991 = vadd.f32 %v5962, %v5990
    %5992 = vmatmul.f32.gmra.mxu0 %v5663
    %v5993 = vpop.f32.mrf.mxu0
    %v5994 = vadd.f32 %v5965, %v5993
    %5995 = vmatmul.f32.gmra.mxu0 %v5671
    %v5996 = vpop.f32.mrf.mxu0
    %v5997 = vadd.f32 %v5968, %v5996
    %5998 = vdwg.mxu0
    %5999 = vmatpush.msra.mxu0 %v5772
    %6000 = vmatpush.msra.mxu0 %v5770
    %6001 = vmatpush.msra.mxu0 %v5768
    %6002 = vmatpush.msra.mxu0 %v5766
    %6003 = vmatpush.msra.mxu0 %v5764
    %6004 = vmatpush.msra.mxu0 %v5762
    %6005 = vmatpush.msra.mxu0 %v5760
    %6006 = vmatpush.msra.mxu0 %v5758
    %6007 = vmatpush.msra.mxu0 %v5756
    %6008 = vmatpush.msra.mxu0 %v5754
    %6009 = vmatpush.msra.mxu0 %v5752
    %6010 = vmatpush.msra.mxu0 %v5750
    %6011 = vmatpush.msra.mxu0 %v5748
    %6012 = vmatpush.msra.mxu0 %v5746
    %6013 = vmatpush.msra.mxu0 %v5744
    %6014 = vmatpush.msra.mxu0 %v5742
    %6015 = vmatmul.f32.gmra.mxu0 %v5648
    %v6016 = vpop.f32.mrf.mxu0
    %v6017 = vadd.f32 %v5988, %v6016
    %6018 = vmatmul.f32.gmra.mxu0 %v5656
    %v6019 = vpop.f32.mrf.mxu0
    %v6020 = vadd.f32 %v5991, %v6019
    %6021 = vmatmul.f32.gmra.mxu0 %v5664
    %v6022 = vpop.f32.mrf.mxu0
    %v6023 = vadd.f32 %v5994, %v6022
    %6024 = vmatmul.f32.gmra.mxu0 %v5672
    %v6025 = vpop.f32.mrf.mxu0
    %v6026 = vadd.f32 %v5997, %v6025
    %6027 = vdwg.mxu0
    %6028 = vmatpush.msra.mxu0 %v5804
    %6029 = vmatpush.msra.mxu0 %v5802
    %6030 = vmatpush.msra.mxu0 %v5800
    %6031 = vmatpush.msra.mxu0 %v5798
    %6032 = vmatpush.msra.mxu0 %v5796
    %6033 = vmatpush.msra.mxu0 %v5794
    %6034 = vmatpush.msra.mxu0 %v5792
    %6035 = vmatpush.msra.mxu0 %v5790
    %6036 = vmatpush.msra.mxu0 %v5788
    %6037 = vmatpush.msra.mxu0 %v5786
    %6038 = vmatpush.msra.mxu0 %v5784
    %6039 = vmatpush.msra.mxu0 %v5782
    %6040 = vmatpush.msra.mxu0 %v5780
    %6041 = vmatpush.msra.mxu0 %v5778
    %6042 = vmatpush.msra.mxu0 %v5776
    %6043 = vmatpush.msra.mxu0 %v5774
    %6044 = vmatmul.f32.gmra.mxu0 %v5649
    %v6045 = vpop.f32.mrf.mxu0
    %v6046 = vadd.f32 %v6017, %v6045
    %6047 = vmatmul.f32.gmra.mxu0 %v5657
    %v6048 = vpop.f32.mrf.mxu0
    %v6049 = vadd.f32 %v6020, %v6048
    %6050 = vmatmul.f32.gmra.mxu0 %v5665
    %v6051 = vpop.f32.mrf.mxu0
    %v6052 = vadd.f32 %v6023, %v6051
    %6053 = vmatmul.f32.gmra.mxu0 %v5673
    %v6054 = vpop.f32.mrf.mxu0
    %v6055 = vadd.f32 %v6026, %v6054
    %6056 = vdwg.mxu0
    %6057 = vmatpush.msra.mxu0 %v5836
    %6058 = vmatpush.msra.mxu0 %v5834
    %6059 = vmatpush.msra.mxu0 %v5832
    %6060 = vmatpush.msra.mxu0 %v5830
    %6061 = vmatpush.msra.mxu0 %v5828
    %6062 = vmatpush.msra.mxu0 %v5826
    %6063 = vmatpush.msra.mxu0 %v5824
    %6064 = vmatpush.msra.mxu0 %v5822
    %6065 = vmatpush.msra.mxu0 %v5820
    %6066 = vmatpush.msra.mxu0 %v5818
    %6067 = vmatpush.msra.mxu0 %v5816
    %6068 = vmatpush.msra.mxu0 %v5814
    %6069 = vmatpush.msra.mxu0 %v5812
    %6070 = vmatpush.msra.mxu0 %v5810
    %6071 = vmatpush.msra.mxu0 %v5808
    %6072 = vmatpush.msra.mxu0 %v5806
    %6073 = vmatmul.f32.gmra.mxu0 %v5650
    %v6074 = vpop.f32.mrf.mxu0
    %v6075 = vadd.f32 %v6046, %v6074
    %6076 = vmatmul.f32.gmra.mxu0 %v5658
    %v6077 = vpop.f32.mrf.mxu0
    %v6078 = vadd.f32 %v6049, %v6077
    %6079 = vmatmul.f32.gmra.mxu0 %v5666
    %v6080 = vpop.f32.mrf.mxu0
    %v6081 = vadd.f32 %v6052, %v6080
    %6082 = vmatmul.f32.gmra.mxu0 %v5674
    %v6083 = vpop.f32.mrf.mxu0
    %v6084 = vadd.f32 %v6055, %v6083
    %6085 = vdwg.mxu0
    %6086 = vmatpush.msra.mxu0 %v5868
    %6087 = vmatpush.msra.mxu0 %v5866
    %6088 = vmatpush.msra.mxu0 %v5864
    %6089 = vmatpush.msra.mxu0 %v5862
    %6090 = vmatpush.msra.mxu0 %v5860
    %6091 = vmatpush.msra.mxu0 %v5858
    %6092 = vmatpush.msra.mxu0 %v5856
    %6093 = vmatpush.msra.mxu0 %v5854
    %6094 = vmatpush.msra.mxu0 %v5852
    %6095 = vmatpush.msra.mxu0 %v5850
    %6096 = vmatpush.msra.mxu0 %v5848
    %6097 = vmatpush.msra.mxu0 %v5846
    %6098 = vmatpush.msra.mxu0 %v5844
    %6099 = vmatpush.msra.mxu0 %v5842
    %6100 = vmatpush.msra.mxu0 %v5840
    %6101 = vmatpush.msra.mxu0 %v5838
    %6102 = vmatmul.f32.gmra.mxu0 %v5651
    %v6103 = vpop.f32.mrf.mxu0
    %v6104 = vadd.f32 %v6075, %v6103
    %6105 = vmatmul.f32.gmra.mxu0 %v5659
    %v6106 = vpop.f32.mrf.mxu0
    %v6107 = vadd.f32 %v6078, %v6106
    %6108 = vmatmul.f32.gmra.mxu0 %v5667
    %v6109 = vpop.f32.mrf.mxu0
    %v6110 = vadd.f32 %v6081, %v6109
    %6111 = vmatmul.f32.gmra.mxu0 %v5675
    %v6112 = vpop.f32.mrf.mxu0
    %v6113 = vadd.f32 %v6084, %v6112
    %6114 = vdwg.mxu0
    %6115 = vmatpush.msra.mxu0 %v5900
    %6116 = vmatpush.msra.mxu0 %v5898
    %6117 = vmatpush.msra.mxu0 %v5896
    %6118 = vmatpush.msra.mxu0 %v5894
    %6119 = vmatpush.msra.mxu0 %v5892
    %6120 = vmatpush.msra.mxu0 %v5890
    %6121 = vmatpush.msra.mxu0 %v5888
    %6122 = vmatpush.msra.mxu0 %v5886
    %6123 = vmatpush.msra.mxu0 %v5884
    %6124 = vmatpush.msra.mxu0 %v5882
    %6125 = vmatpush.msra.mxu0 %v5880
    %6126 = vmatpush.msra.mxu0 %v5878
    %6127 = vmatpush.msra.mxu0 %v5876
    %6128 = vmatpush.msra.mxu0 %v5874
    %6129 = vmatpush.msra.mxu0 %v5872
    %6130 = vmatpush.msra.mxu0 %v5870
    %6131 = vmatmul.f32.gmra.mxu0 %v5652
    %v6132 = vpop.f32.mrf.mxu0
    %v6133 = vadd.f32 %v6104, %v6132
    %6134 = vmatmul.f32.gmra.mxu0 %v5660
    %v6135 = vpop.f32.mrf.mxu0
    %v6136 = vadd.f32 %v6107, %v6135
    %6137 = vmatmul.f32.gmra.mxu0 %v5668
    %v6138 = vpop.f32.mrf.mxu0
    %v6139 = vadd.f32 %v6110, %v6138
    %6140 = vmatmul.f32.gmra.mxu0 %v5676
    %v6141 = vpop.f32.mrf.mxu0
    %v6142 = vadd.f32 %v6113, %v6141
    %6143 = vdwg.mxu0
    %6144 = vmatpush.msra.mxu0 %v5932
    %6145 = vmatpush.msra.mxu0 %v5930
    %6146 = vmatpush.msra.mxu0 %v5928
    %6147 = vmatpush.msra.mxu0 %v5926
    %6148 = vmatpush.msra.mxu0 %v5924
    %6149 = vmatpush.msra.mxu0 %v5922
    %6150 = vmatpush.msra.mxu0 %v5920
    %6151 = vmatpush.msra.mxu0 %v5918
    %6152 = vmatpush.msra.mxu0 %v5916
    %6153 = vmatpush.msra.mxu0 %v5914
    %6154 = vmatpush.msra.mxu0 %v5912
    %6155 = vmatpush.msra.mxu0 %v5910
    %6156 = vmatpush.msra.mxu0 %v5908
    %6157 = vmatpush.msra.mxu0 %v5906
    %6158 = vmatpush.msra.mxu0 %v5904
    %6159 = vmatpush.msra.mxu0 %v5902
    %6160 = vmatmul.f32.gmra.mxu0 %v5653
    %v6161 = vpop.f32.mrf.mxu0
    %v6162 = vadd.f32 %v6133, %v6161
    %6163 = vmatmul.f32.gmra.mxu0 %v5661
    %v6164 = vpop.f32.mrf.mxu0
    %v6165 = vadd.f32 %v6136, %v6164
    %6166 = vmatmul.f32.gmra.mxu0 %v5669
    %v6167 = vpop.f32.mrf.mxu0
    %v6168 = vadd.f32 %v6139, %v6167
    %6169 = vmatmul.f32.gmra.mxu0 %v5677
    %v6170 = vpop.f32.mrf.mxu0
    %v6171 = vadd.f32 %v6142, %v6170
    %6172 = vdwg.mxu0
    %6173 = vmatpush.msra.mxu0 %v5709
    %6174 = vmatpush.msra.mxu0 %v5707
    %6175 = vmatpush.msra.mxu0 %v5705
    %6176 = vmatpush.msra.mxu0 %v5703
    %6177 = vmatpush.msra.mxu0 %v5701
    %6178 = vmatpush.msra.mxu0 %v5699
    %6179 = vmatpush.msra.mxu0 %v5697
    %6180 = vmatpush.msra.mxu0 %v5695
    %6181 = vmatpush.msra.mxu0 %v5693
    %6182 = vmatpush.msra.mxu0 %v5691
    %6183 = vmatpush.msra.mxu0 %v5689
    %6184 = vmatpush.msra.mxu0 %v5687
    %6185 = vmatpush.msra.mxu0 %v5685
    %6186 = vmatpush.msra.mxu0 %v5683
    %6187 = vmatpush.msra.mxu0 %v5681
    %6188 = vmatpush.msra.mxu0 %v5679
    %6189 = vmatmul.f32.gmra.mxu0 %v5646
    %v6190 = vpop.f32.mrf.mxu0
    %v6191 = vadd.f32 %v5938, %v6190
    %6192 = vmatmul.f32.gmra.mxu0 %v5654
    %v6193 = vpop.f32.mrf.mxu0
    %v6194 = vadd.f32 %v5938, %v6193
    %6195 = vmatmul.f32.gmra.mxu0 %v5662
    %v6196 = vpop.f32.mrf.mxu0
    %v6197 = vadd.f32 %v5938, %v6196
    %6198 = vmatmul.f32.gmra.mxu0 %v5670
    %v6199 = vpop.f32.mrf.mxu0
    %v6200 = vadd.f32 %v5938, %v6199
    %6201 = vdwg.mxu0
    %6202 = vmatpush.msra.mxu0 %v5741
    %6203 = vmatpush.msra.mxu0 %v5739
    %6204 = vmatpush.msra.mxu0 %v5737
    %6205 = vmatpush.msra.mxu0 %v5735
    %6206 = vmatpush.msra.mxu0 %v5733
    %6207 = vmatpush.msra.mxu0 %v5731
    %6208 = vmatpush.msra.mxu0 %v5729
    %6209 = vmatpush.msra.mxu0 %v5727
    %6210 = vmatpush.msra.mxu0 %v5725
    %6211 = vmatpush.msra.mxu0 %v5723
    %6212 = vmatpush.msra.mxu0 %v5721
    %6213 = vmatpush.msra.mxu0 %v5719
    %6214 = vmatpush.msra.mxu0 %v5717
    %6215 = vmatpush.msra.mxu0 %v5715
    %6216 = vmatpush.msra.mxu0 %v5713
    %6217 = vmatpush.msra.mxu0 %v5711
    %6218 = vmatmul.f32.gmra.mxu0 %v5647
    %v6219 = vpop.f32.mrf.mxu0
    %v6220 = vadd.f32 %v6191, %v6219
    %6221 = vmatmul.f32.gmra.mxu0 %v5655
    %v6222 = vpop.f32.mrf.mxu0
    %v6223 = vadd.f32 %v6194, %v6222
    %6224 = vmatmul.f32.gmra.mxu0 %v5663
    %v6225 = vpop.f32.mrf.mxu0
    %v6226 = vadd.f32 %v6197, %v6225
    %6227 = vmatmul.f32.gmra.mxu0 %v5671
    %v6228 = vpop.f32.mrf.mxu0
    %v6229 = vadd.f32 %v6200, %v6228
    %6230 = vdwg.mxu0
    %6231 = vmatpush.msra.mxu0 %v5773
    %6232 = vmatpush.msra.mxu0 %v5771
    %6233 = vmatpush.msra.mxu0 %v5769
    %6234 = vmatpush.msra.mxu0 %v5767
    %6235 = vmatpush.msra.mxu0 %v5765
    %6236 = vmatpush.msra.mxu0 %v5763
    %6237 = vmatpush.msra.mxu0 %v5761
    %6238 = vmatpush.msra.mxu0 %v5759
    %6239 = vmatpush.msra.mxu0 %v5757
    %6240 = vmatpush.msra.mxu0 %v5755
    %6241 = vmatpush.msra.mxu0 %v5753
    %6242 = vmatpush.msra.mxu0 %v5751
    %6243 = vmatpush.msra.mxu0 %v5749
    %6244 = vmatpush.msra.mxu0 %v5747
    %6245 = vmatpush.msra.mxu0 %v5745
    %6246 = vmatpush.msra.mxu0 %v5743
    %6247 = vmatmul.f32.gmra.mxu0 %v5648
    %v6248 = vpop.f32.mrf.mxu0
    %v6249 = vadd.f32 %v6220, %v6248
    %6250 = vmatmul.f32.gmra.mxu0 %v5656
    %v6251 = vpop.f32.mrf.mxu0
    %v6252 = vadd.f32 %v6223, %v6251
    %6253 = vmatmul.f32.gmra.mxu0 %v5664
    %v6254 = vpop.f32.mrf.mxu0
    %v6255 = vadd.f32 %v6226, %v6254
    %6256 = vmatmul.f32.gmra.mxu0 %v5672
    %v6257 = vpop.f32.mrf.mxu0
    %v6258 = vadd.f32 %v6229, %v6257
    %6259 = vdwg.mxu0
    %6260 = vmatpush.msra.mxu0 %v5805
    %6261 = vmatpush.msra.mxu0 %v5803
    %6262 = vmatpush.msra.mxu0 %v5801
    %6263 = vmatpush.msra.mxu0 %v5799
    %6264 = vmatpush.msra.mxu0 %v5797
    %6265 = vmatpush.msra.mxu0 %v5795
    %6266 = vmatpush.msra.mxu0 %v5793
    %6267 = vmatpush.msra.mxu0 %v5791
    %6268 = vmatpush.msra.mxu0 %v5789
    %6269 = vmatpush.msra.mxu0 %v5787
    %6270 = vmatpush.msra.mxu0 %v5785
    %6271 = vmatpush.msra.mxu0 %v5783
    %6272 = vmatpush.msra.mxu0 %v5781
    %6273 = vmatpush.msra.mxu0 %v5779
    %6274 = vmatpush.msra.mxu0 %v5777
    %6275 = vmatpush.msra.mxu0 %v5775
    %6276 = vmatmul.f32.gmra.mxu0 %v5649
    %v6277 = vpop.f32.mrf.mxu0
    %v6278 = vadd.f32 %v6249, %v6277
    %6279 = vmatmul.f32.gmra.mxu0 %v5657
    %v6280 = vpop.f32.mrf.mxu0
    %v6281 = vadd.f32 %v6252, %v6280
    %6282 = vmatmul.f32.gmra.mxu0 %v5665
    %v6283 = vpop.f32.mrf.mxu0
    %v6284 = vadd.f32 %v6255, %v6283
    %6285 = vmatmul.f32.gmra.mxu0 %v5673
    %v6286 = vpop.f32.mrf.mxu0
    %v6287 = vadd.f32 %v6258, %v6286
    %6288 = vdwg.mxu0
    %6289 = vmatpush.msra.mxu0 %v5837
    %6290 = vmatpush.msra.mxu0 %v5835
    %6291 = vmatpush.msra.mxu0 %v5833
    %6292 = vmatpush.msra.mxu0 %v5831
    %6293 = vmatpush.msra.mxu0 %v5829
    %6294 = vmatpush.msra.mxu0 %v5827
    %6295 = vmatpush.msra.mxu0 %v5825
    %6296 = vmatpush.msra.mxu0 %v5823
    %6297 = vmatpush.msra.mxu0 %v5821
    %6298 = vmatpush.msra.mxu0 %v5819
    %6299 = vmatpush.msra.mxu0 %v5817
    %6300 = vmatpush.msra.mxu0 %v5815
    %6301 = vmatpush.msra.mxu0 %v5813
    %6302 = vmatpush.msra.mxu0 %v5811
    %6303 = vmatpush.msra.mxu0 %v5809
    %6304 = vmatpush.msra.mxu0 %v5807
    %6305 = vmatmul.f32.gmra.mxu0 %v5650
    %v6306 = vpop.f32.mrf.mxu0
    %v6307 = vadd.f32 %v6278, %v6306
    %6308 = vmatmul.f32.gmra.mxu0 %v5658
    %v6309 = vpop.f32.mrf.mxu0
    %v6310 = vadd.f32 %v6281, %v6309
    %6311 = vmatmul.f32.gmra.mxu0 %v5666
    %v6312 = vpop.f32.mrf.mxu0
    %v6313 = vadd.f32 %v6284, %v6312
    %6314 = vmatmul.f32.gmra.mxu0 %v5674
    %v6315 = vpop.f32.mrf.mxu0
    %v6316 = vadd.f32 %v6287, %v6315
    %6317 = vdwg.mxu0
    %6318 = vmatpush.msra.mxu0 %v5869
    %6319 = vmatpush.msra.mxu0 %v5867
    %6320 = vmatpush.msra.mxu0 %v5865
    %6321 = vmatpush.msra.mxu0 %v5863
    %6322 = vmatpush.msra.mxu0 %v5861
    %6323 = vmatpush.msra.mxu0 %v5859
    %6324 = vmatpush.msra.mxu0 %v5857
    %6325 = vmatpush.msra.mxu0 %v5855
    %6326 = vmatpush.msra.mxu0 %v5853
    %6327 = vmatpush.msra.mxu0 %v5851
    %6328 = vmatpush.msra.mxu0 %v5849
    %6329 = vmatpush.msra.mxu0 %v5847
    %6330 = vmatpush.msra.mxu0 %v5845
    %6331 = vmatpush.msra.mxu0 %v5843
    %6332 = vmatpush.msra.mxu0 %v5841
    %6333 = vmatpush.msra.mxu0 %v5839
    %6334 = vmatmul.f32.gmra.mxu0 %v5651
    %v6335 = vpop.f32.mrf.mxu0
    %v6336 = vadd.f32 %v6307, %v6335
    %6337 = vmatmul.f32.gmra.mxu0 %v5659
    %v6338 = vpop.f32.mrf.mxu0
    %v6339 = vadd.f32 %v6310, %v6338
    %6340 = vmatmul.f32.gmra.mxu0 %v5667
    %v6341 = vpop.f32.mrf.mxu0
    %v6342 = vadd.f32 %v6313, %v6341
    %6343 = vmatmul.f32.gmra.mxu0 %v5675
    %v6344 = vpop.f32.mrf.mxu0
    %v6345 = vadd.f32 %v6316, %v6344
    %6346 = vdwg.mxu0
    %6347 = vmatpush.msra.mxu0 %v5901
    %6348 = vmatpush.msra.mxu0 %v5899
    %6349 = vmatpush.msra.mxu0 %v5897
    %6350 = vmatpush.msra.mxu0 %v5895
    %6351 = vmatpush.msra.mxu0 %v5893
    %6352 = vmatpush.msra.mxu0 %v5891
    %6353 = vmatpush.msra.mxu0 %v5889
    %6354 = vmatpush.msra.mxu0 %v5887
    %6355 = vmatpush.msra.mxu0 %v5885
    %6356 = vmatpush.msra.mxu0 %v5883
    %6357 = vmatpush.msra.mxu0 %v5881
    %6358 = vmatpush.msra.mxu0 %v5879
    %6359 = vmatpush.msra.mxu0 %v5877
    %6360 = vmatpush.msra.mxu0 %v5875
    %6361 = vmatpush.msra.mxu0 %v5873
    %6362 = vmatpush.msra.mxu0 %v5871
    %6363 = vmatmul.f32.gmra.mxu0 %v5652
    %v6364 = vpop.f32.mrf.mxu0
    %v6365 = vadd.f32 %v6336, %v6364
    %6366 = vmatmul.f32.gmra.mxu0 %v5660
    %v6367 = vpop.f32.mrf.mxu0
    %v6368 = vadd.f32 %v6339, %v6367
    %6369 = vmatmul.f32.gmra.mxu0 %v5668
    %v6370 = vpop.f32.mrf.mxu0
    %v6371 = vadd.f32 %v6342, %v6370
    %6372 = vmatmul.f32.gmra.mxu0 %v5676
    %v6373 = vpop.f32.mrf.mxu0
    %v6374 = vadd.f32 %v6345, %v6373
    %6375 = vdwg.mxu0
    %6376 = vmatpush.msra.mxu0 %v5933
    %6377 = vmatpush.msra.mxu0 %v5931
    %6378 = vmatpush.msra.mxu0 %v5929
    %6379 = vmatpush.msra.mxu0 %v5927
    %6380 = vmatpush.msra.mxu0 %v5925
    %6381 = vmatpush.msra.mxu0 %v5923
    %6382 = vmatpush.msra.mxu0 %v5921
    %6383 = vmatpush.msra.mxu0 %v5919
    %6384 = vmatpush.msra.mxu0 %v5917
    %6385 = vmatpush.msra.mxu0 %v5915
    %6386 = vmatpush.msra.mxu0 %v5913
    %6387 = vmatpush.msra.mxu0 %v5911
    %6388 = vmatpush.msra.mxu0 %v5909
    %6389 = vmatpush.msra.mxu0 %v5907
    %6390 = vmatpush.msra.mxu0 %v5905
    %6391 = vmatpush.msra.mxu0 %v5903
    %6392 = vmatmul.f32.gmra.mxu0 %v5653
    %v6393 = vpop.f32.mrf.mxu0
    %v6394 = vadd.f32 %v6365, %v6393
    %6395 = vmatmul.f32.gmra.mxu0 %v5661
    %v6396 = vpop.f32.mrf.mxu0
    %v6397 = vadd.f32 %v6368, %v6396
    %6398 = vmatmul.f32.gmra.mxu0 %v5669
    %v6399 = vpop.f32.mrf.mxu0
    %v6400 = vadd.f32 %v6371, %v6399
    %6401 = vmatmul.f32.gmra.mxu0 %v5677
    %v6402 = vpop.f32.mrf.mxu0
    %v6403 = vadd.f32 %v6374, %v6402
    %6404 = vdwg.mxu0
    %6405 = vst [vmem:[%s12] sm:$0xff] %v6162
    %6406 = vst [vmem:[%s12 + $0x8] sm:$0xff] %v6394
    %6407 = vst [vmem:[%s12 + $0x10] sm:$0xff] %v6165
    %6408 = vst [vmem:[%s12 + $0x18] sm:$0xff] %v6397
    %6409 = vst [vmem:[%s12 + $0x20] sm:$0xff] %v6168
    %6410 = vst [vmem:[%s12 + $0x28] sm:$0xff] %v6400
    %6411 = vst [vmem:[%s12 + $0x30] sm:$0xff] %v6171
    %6412 = vst [vmem:[%s12 + $0x38] sm:$0xff] %v6403
    // Predicated region
    $region74: #{conv_autoencoder_forward.1} parent=1 // pred_check
      _
    $region75: #{conv_autoencoder_forward.1} parent=1 // pred_check_branch
      %6414 = sbr.rel (0) target = $region77
    $region76: #{conv_autoencoder_forward.1} parent=1 // pred_region
      _
    $region77: #{conv_autoencoder_forward.1} parent=1 // pred_fallthru
      _
    // Predicated region
    $region78: #{conv_autoencoder_forward.1} parent=1 // pred_check
      _
    $region79: #{conv_autoencoder_forward.1} parent=1 // pred_check_branch
      %6416 = sbr.rel (0) target = $region81
    $region80: #{conv_autoencoder_forward.1} parent=1 // pred_region
      _
    $region81: #{conv_autoencoder_forward.1} parent=1 // pred_fallthru
      _
    %6417 = vsyncpa [#allocation7], 1
    %6418 = vsyncpa [#allocation9], 1
    %6419 = vsyncpa [#allocation12], 1
    %6420 = vsyncpa [#allocation15], 1

</llo_original>
